<compile_context>
chip_gen: v7x
topology: tpu7x:2x2x1
jax: 0.10.0
libtpu: 0.0.40
codegen_flags: <defaults>
</compile_context>

<pallas_src>
import numpy as np
import jax
import jax.numpy as jnp
from jax.experimental import pallas as pl
from jax.experimental.pallas import tpu as pltpu

LANE = 128


def _round_up(x, m):
    return (x + m - 1) // m * m


def _pick_block_n(N, HW, per_n, const_bytes, budget, m_target):
    divisors = [d for d in range(1, N + 1) if N % d == 0]
    valid = [d for d in divisors
             if per_n * d + const_bytes <= budget and d * HW <= m_target]
    if not valid:
        return 1
    if N >= 2:
        multi = [d for d in valid if N // d >= 2]           # >=2 grid steps
        if multi:
            even = [d for d in multi if (N // d) % 2 == 0]  # even grid (v7x megacore)
            return max(even) if even else max(multi)
    return max(valid)


# ---------------------------------------------------------------------------
# Kernel builder
# ---------------------------------------------------------------------------
def _make_kernel(TN, H, W, cin_p, cout_p, cpg_in, cpg_out, eps, shortcut_mode):
    HW = H * W
    M = TN * HW

    def _gn_silu(x3, mask_ref, gamma_ref, beta_ref, cpg):
        # x3: (TN, HW, C) f32.  One-pass stats + fused affine + SiLU.
        inv_den = 1.0 / float(HW * cpg)
        s1 = jnp.sum(x3, axis=1)                              # (TN, C)
        s2 = jnp.sum(x3 * x3, axis=1)                         # (TN, C)
        mask = mask_ref[...]                                  # (C, C) group membership
        mean = jnp.dot(s1, mask, preferred_element_type=jnp.float32) * inv_den
        ex2 = jnp.dot(s2, mask, preferred_element_type=jnp.float32) * inv_den
        var = ex2 - mean * mean
        inv = jax.lax.rsqrt(var + eps)                        # (TN, C)
        scale = inv * gamma_ref[...]                          # padded chans -> 0
        shift = beta_ref[...] - mean * scale
        y = x3 * scale[:, None, :] + shift[:, None, :]
        return y * jax.nn.sigmoid(y)                          # SiLU fused

    def _write_pad(pad_ref, h4_bf16, C):
        # h4_bf16: (TN, H, W, C) -> pad_ref[..., :C]: (TN, H+2, W+2, C) circular pad.
        rows = jnp.concatenate([h4_bf16[:, H - 1:H], h4_bf16, h4_bf16[:, 0:1]], axis=1)
        full = jnp.concatenate([rows[:, :, W - 1:W], rows, rows[:, :, 0:1]], axis=2)
        pad_ref[:, :, :, 0:C] = full                          # one lane-dense store

    def _conv3x3(pad_ref, w3_ref, C, base):
        # 3 MXU dots with K = 3*C (ky-stacked); accumulate as a value chain.
        acc = base
        for kx in range(3):
            colslab = pad_ref[:, :, kx:kx + W, 0:C]           # (TN, H+2, W, C) bf16
            patch = jnp.concatenate(
                [colslab[:, ky:ky + H] for ky in range(3)], axis=-1
            ).reshape(M, 3 * C)                               # (M, 3C) bf16
            d = jnp.dot(patch, w3_ref[kx], preferred_element_type=jnp.float32)
            acc = d if acc is None else acc + d
        return acc                                            # (M, cout_p) f32

    def kernel(x_ref, tproj_ref, gn1w_ref, gn1b_ref, m1_ref, w1_ref,
               gn2w_ref, gn2b_ref, m2_ref, w2_ref, b2_ref, *rest):
        if shortcut_mode == "identity":
            out_ref, pad_ref = rest
        else:
            wsc_ref, out_ref, pad_ref = rest

        # norm1 + SiLU (f32 stats from the bf16 block)
        h = _gn_silu(x_ref[...].astype(jnp.float32).reshape(TN, HW, cin_p),
                     m1_ref, gn1w_ref, gn1b_ref, cpg_in)

        # conv1 (3x3 circular, bf16 MXU, f32 acc); bias folded into tproj
        _write_pad(pad_ref, h.reshape(TN, H, W, cin_p).astype(jnp.bfloat16), cin_p)
        h = _conv3x3(pad_ref, w1_ref, cin_p, None)            # (M, cout_p)
        h = h.reshape(TN, HW, cout_p) + tproj_ref[...]        # + (temb proj + conv1_b)

        # norm2 + SiLU
        h = _gn_silu(h, m2_ref, gn2w_ref, gn2b_ref, cpg_out)
        # TODO(synk): nn.Dropout implemented as identity (eval-mode semantics).

        # shortcut (re-read x_ref; computed first so it seeds conv2's accumulation)
        if shortcut_mode == "identity":
            sc = x_ref[...].astype(jnp.float32).reshape(M, cin_p)
        elif shortcut_mode == "nin":
            sc = jnp.dot(x_ref[...].reshape(M, cin_p), wsc_ref[...],
                         preferred_element_type=jnp.float32)
        else:  # "conv": 3x3 circular conv on raw input (shares pad scratch)
            _write_pad(pad_ref, x_ref[...], cin_p)
            sc = _conv3x3(pad_ref, wsc_ref, cin_p, None)

        # conv2, accumulated on top of (shortcut + folded conv2/shortcut biases)
        _write_pad(pad_ref, h.reshape(TN, H, W, cout_p).astype(jnp.bfloat16), cout_p)
        out = _conv3x3(pad_ref, w2_ref, cout_p, sc + b2_ref[...])
        out_ref[...] = out.reshape(TN, H, W, cout_p).astype(out_ref.dtype)

    return kernel


# ---------------------------------------------------------------------------
# Wrapper (layout, channel padding, weight prep, pallas_call)
# ---------------------------------------------------------------------------
def resnet_block_forward(x_nchw, temb, params, *, num_groups=8, eps=1e-6,
                         conv_shortcut=False):
    N, cin, H, W = x_nchw.shape
    cout = params["conv1_w"].shape[0]
    HW = H * W
    cin_p = _round_up(cin, LANE)
    cout_p = _round_up(cout, LANE)
    cmax = max(cin_p, cout_p)

    if cin != cout:
        shortcut_mode = "conv" if conv_shortcut else "nin"
    else:
        shortcut_mode = "identity"

    # --- hardware-aware budgets ------------------------------------------------
    try:
        vmem_cap = int(pltpu.get_tpu_info().vmem_capacity_bytes)
    except Exception:
        vmem_cap = 64 * 1024 * 1024                           # conservative (v7x)
    if vmem_cap >= 96 * 2**20:                                # v5e / v6e: 128 MiB
        vmem_target, m_target = 100 * 2**20, 4096
    else:                                                     # v7x: 64 MiB
        vmem_target, m_target = 40 * 2**20, 2048

    const_bytes = ((9 * cin_p * cout_p + 9 * cout_p * cout_p) * 2      # bf16 taps
                   + (cin_p * cin_p + cout_p * cout_p) * 4             # f32 GN masks
                   + 8 * cmax * 4)                                     # small vectors
    if shortcut_mode == "nin":
        const_bytes += cin_p * cout_p * 2
    elif shortcut_mode == "conv":
        const_bytes += 9 * cin_p * cout_p * 2

    per_n = (HW * cin_p * 2 * 2                               # input block bf16 x2 buf
             + HW * cout_p * 2 * 2                            # output block bf16 x2 buf
             + cout_p * 4 * 2                                 # tproj block
             + (H + 2) * (W + 2) * cmax * 2                   # pad scratch bf16
             + HW * cmax * 24)                                # live f32/bf16 temporaries
    budget = int(vmem_target * 0.85)
    block_n = _pick_block_n(N, HW, per_n, const_bytes, budget, m_target)
    grid_len = N // block_n
    vmem_limit = int(min(max(vmem_target, (per_n * block_n + const_bytes) * 5 // 4),
                         vmem_cap * 9 // 10))

    # --- input / weight preparation ---------------------------------------------
    # NCHW -> NHWC, bf16 across HBM, pad channels to a lane multiple.
    x = jnp.transpose(x_nchw, (0, 2, 3, 1)).astype(jnp.bfloat16)
    x = jnp.pad(x, ((0, 0), (0, 0), (0, 0), (0, cin_p - cin)))

    # Timestep-embedding projection hoisted to one XLA matmul; conv1 bias folded in.
    t = temb.astype(jnp.float32)
    t = t * jax.nn.sigmoid(t)
    tproj = jnp.dot(t, params["temb_w"].T) + params["temb_b"] + params["conv1_b"]
    tproj = jnp.pad(tproj, ((0, 0), (0, cout_p - cout))).reshape(N, 1, cout_p)

    def taps_kx(w, ci_p, co_p):
        # (cout, cin, 3, 3) -> (3, 3*ci_p, co_p) bf16: per-kx, ky-stacked along K.
        co, ci = w.shape[0], w.shape[1]
        t9 = jnp.transpose(w, (3, 2, 1, 0))                   # (kx, ky, ci, co)
        t9 = jnp.pad(t9, ((0, 0), (0, 0), (0, ci_p - ci), (0, co_p - co)))
        return t9.reshape(3, 3 * ci_p, co_p).astype(jnp.bfloat16)

    def vec(v, cp):
        return jnp.pad(v.astype(jnp.float32), (0, cp - v.shape[0])).reshape(1, cp)

    def gn_mask(c_real, c_pad, groups):
        cpg = c_real // groups
        idx = np.arange(c_pad)
        real = idx < c_real
        grp = idx // max(cpg, 1)
        m = (grp[:, None] == grp[None, :]) & real[:, None] & real[None, :]
        return jnp.asarray(m, jnp.float32)

    # conv2 bias + shortcut bias folded into one vector.
    b2 = params["conv2_b"]
    if shortcut_mode == "nin":
        b2 = b2 + params["nin_b"]
    elif shortcut_mode == "conv":
        b2 = b2 + params["sc_b"]

    inputs = [
        x, tproj,
        vec(params["gn1_w"], cin_p), vec(params["gn1_b"], cin_p),
        gn_mask(cin, cin_p, num_groups),
        taps_kx(params["conv1_w"], cin_p, cout_p),
        vec(params["gn2_w"], cout_p), vec(params["gn2_b"], cout_p),
        gn_mask(cout, cout_p, num_groups),
        taps_kx(params["conv2_w"], cout_p, cout_p),
        vec(b2, cout_p),
    ]
    if shortcut_mode == "nin":
        wn = jnp.transpose(params["nin_w"].reshape(cout, cin))           # (cin, cout)
        wn = jnp.pad(wn, ((0, cin_p - cin), (0, cout_p - cout))).astype(jnp.bfloat16)
        inputs += [wn]
    elif shortcut_mode == "conv":
        inputs += [taps_kx(params["sc_w"], cin_p, cout_p)]

    kernel = _make_kernel(block_n, H, W, cin_p, cout_p,
                          cin // num_groups, cout // num_groups, eps, shortcut_mode)

    def const_spec(a, single_buffer):
        nd = a.ndim
        if single_buffer:
            return pl.BlockSpec(a.shape, lambda n, _nd=nd: (0,) * _nd,
                                pipeline_mode=pl.Buffered(1))
        return pl.BlockSpec(a.shape, lambda n, _nd=nd: (0,) * _nd)

    def run(single_buffer_consts):
        in_specs = [pl.BlockSpec((block_n, H, W, cin_p), lambda n: (n, 0, 0, 0)),
                    pl.BlockSpec((block_n, 1, cout_p), lambda n: (n, 0, 0))]
        in_specs += [const_spec(a, single_buffer_consts) for a in inputs[2:]]
        return pl.pallas_call(
            kernel,
            out_shape=jax.ShapeDtypeStruct((N, H, W, cout_p), jnp.bfloat16),
            grid_spec=pltpu.PrefetchScalarGridSpec(
                num_scalar_prefetch=0,
                grid=(grid_len,),
                in_specs=in_specs,
                out_specs=pl.BlockSpec((block_n, H, W, cout_p),
                                       lambda n: (n, 0, 0, 0)),
                scratch_shapes=[
                    pltpu.VMEM((block_n, H + 2, W + 2, cmax), jnp.bfloat16),
                ],
            ),
            compiler_params=pltpu.CompilerParams(
                dimension_semantics=("parallel",),
                vmem_limit_bytes=vmem_limit),
        )(*inputs)

    try:
        out_nhwc = run(True)          # single-buffered grid-invariant operands
    except Exception:
        out_nhwc = run(False)         # fallback: default double-buffering

    out_nhwc = out_nhwc[..., :cout]                                      # strip pad
    return jnp.transpose(out_nhwc, (0, 3, 1, 2)).astype(x_nchw.dtype)    # NCHW


# ---------------------------------------------------------------------------
# Pure-JAX reference (correctness check only)
# ---------------------------------------------------------------------------
def _reference(x, temb, params, num_groups=8, eps=1e-6):
    prec = jax.lax.Precision.HIGHEST

    def gn(h, g, b):
        n, c, H, W = h.shape
        hg = h.reshape(n, num_groups, c // num_groups, H, W)
        m = hg.mean(axis=(2, 3, 4), keepdims=True)
        v = ((hg - m) ** 2).mean(axis=(2, 3, 4), keepdims=True)
        hn = ((hg - m) / jnp.sqrt(v + eps)).reshape(n, c, H, W)
        return hn * g.reshape(1, c, 1, 1) + b.reshape(1, c, 1, 1)

    def silu(v):
        return v * jax.nn.sigmoid(v)

    def conv3x3(h, w, b):
        hp = jnp.pad(h, ((0, 0), (0, 0), (1, 1), (1, 1)), mode="wrap")
        y = jax.lax.conv_general_dilated(
            hp, w, (1, 1), "VALID",
            dimension_numbers=("NCHW", "OIHW", "NCHW"), precision=prec)
        return y + b.reshape(1, -1, 1, 1)

    h = silu(gn(x, params["gn1_w"], params["gn1_b"]))
    h = conv3x3(h, params["conv1_w"], params["conv1_b"])
    t = jnp.dot(silu(temb), params["temb_w"].T, precision=prec) + params["temb_b"]
    h = h + t[:, :, None, None]
    h = silu(gn(h, params["gn2_w"], params["gn2_b"]))
    h = conv3x3(h, params["conv2_w"], params["conv2_b"])
    sc = jax.lax.conv_general_dilated(
        x, params["nin_w"], (1, 1), "VALID",
        dimension_numbers=("NCHW", "OIHW", "NCHW"), precision=prec)
    sc = sc + params["nin_b"].reshape(1, -1, 1, 1)
    return sc + h


# ---------------------------------------------------------------------------
if __name__ == "__main__":
    key = jax.random.PRNGKey(0)
    N, cin, cout, H, W, tc = 2, 16, 32, 8, 8, 32
    ks = jax.random.split(key, 10)

    params = {
        "gn1_w": jnp.ones((cin,), jnp.float32),
        "gn1_b": jnp.zeros((cin,), jnp.float32),
        "conv1_w": 0.1 * jax.random.normal(ks[0], (cout, cin, 3, 3), jnp.float32),
        "conv1_b": 0.05 * jax.random.normal(ks[1], (cout,), jnp.float32),
        "temb_w": 0.1 * jax.random.normal(ks[2], (cout, tc), jnp.float32),
        "temb_b": 0.05 * jax.random.normal(ks[3], (cout,), jnp.float32),
        "gn2_w": jnp.ones((cout,), jnp.float32),
        "gn2_b": jnp.zeros((cout,), jnp.float32),
        "conv2_w": 0.1 * jax.random.normal(ks[4], (cout, cout, 3, 3), jnp.float32),
        "conv2_b": 0.05 * jax.random.normal(ks[5], (cout,), jnp.float32),
        "nin_w": 0.1 * jax.random.normal(ks[6], (cout, cin, 1, 1), jnp.float32),
        "nin_b": 0.05 * jax.random.normal(ks[7], (cout,), jnp.float32),
    }

    x = jax.random.normal(ks[8], (N, cin, H, W), jnp.float32)
    temb = jax.random.normal(ks[9], (N, tc), jnp.float32)

    out = resnet_block_forward(x, temb, params, conv_shortcut=False)
    out = jax.block_until_ready(out)

    ref = jax.block_until_ready(_reference(x, temb, params))
    assert out.shape == (N, cout, H, W)
    # Activations/weights are bf16 on the MXU and across HBM; tolerance reflects that.
    assert jnp.allclose(out, ref, atol=5e-2, rtol=5e-2), (
        float(jnp.max(jnp.abs(out - ref))))

    print("KERNEL_OK")
</pallas_src>

<mosaic_0001>
module attributes {stable_mosaic.version = 11 : i64} {
  func.func @kernel(%arg0: i32, %arg1: memref<1x8x8x128xbf16, #tpu.memory_space<vmem>>, %arg2: memref<1x1x128xf32, #tpu.memory_space<vmem>>, %arg3: memref<1x128xf32, #tpu.memory_space<vmem>>, %arg4: memref<1x128xf32, #tpu.memory_space<vmem>>, %arg5: memref<128x128xf32, #tpu.memory_space<vmem>>, %arg6: memref<3x384x128xbf16, #tpu.memory_space<vmem>>, %arg7: memref<1x128xf32, #tpu.memory_space<vmem>>, %arg8: memref<1x128xf32, #tpu.memory_space<vmem>>, %arg9: memref<128x128xf32, #tpu.memory_space<vmem>>, %arg10: memref<3x384x128xbf16, #tpu.memory_space<vmem>>, %arg11: memref<1x128xf32, #tpu.memory_space<vmem>>, %arg12: memref<128x128xbf16, #tpu.memory_space<vmem>>, %arg13: memref<1x8x8x128xbf16, #tpu.memory_space<vmem>>, %arg14: memref<1x10x10x128xbf16, #tpu.memory_space<vmem>>) attributes {dimension_semantics = [#tpu.dimension_semantics<parallel>], iteration_bounds = array<i64: 2>, scalar_prefetch = 0 : i64, scratch_operands = 1 : i64, tpu.core_type = #tpu.core_type<tc>, window_params = [{transform_indices = @transform_0, window_bounds = array<i64: 1, 8, 8, 128>}, {transform_indices = @transform_1, window_bounds = array<i64: 1, 1, 128>}, {pipeline_mode = #tpu.pipeline_mode<synchronous>, transform_indices = @transform_2, window_bounds = array<i64: 1, 128>}, {pipeline_mode = #tpu.pipeline_mode<synchronous>, transform_indices = @transform_3, window_bounds = array<i64: 1, 128>}, {pipeline_mode = #tpu.pipeline_mode<synchronous>, transform_indices = @transform_4, window_bounds = array<i64: 128, 128>}, {pipeline_mode = #tpu.pipeline_mode<synchronous>, transform_indices = @transform_5, window_bounds = array<i64: 3, 384, 128>}, {pipeline_mode = #tpu.pipeline_mode<synchronous>, transform_indices = @transform_6, window_bounds = array<i64: 1, 128>}, {pipeline_mode = #tpu.pipeline_mode<synchronous>, transform_indices = @transform_7, window_bounds = array<i64: 1, 128>}, {pipeline_mode = #tpu.pipeline_mode<synchronous>, transform_indices = @transform_8, window_bounds = array<i64: 128, 128>}, {pipeline_mode = #tpu.pipeline_mode<synchronous>, transform_indices = @transform_9, window_bounds = array<i64: 3, 384, 128>}, {pipeline_mode = #tpu.pipeline_mode<synchronous>, transform_indices = @transform_10, window_bounds = array<i64: 1, 128>}, {pipeline_mode = #tpu.pipeline_mode<synchronous>, transform_indices = @transform_11, window_bounds = array<i64: 128, 128>}, {transform_indices = @transform_12, window_bounds = array<i64: 1, 8, 8, 128>}]} {
    %c0 = arith.constant 0 : index
    %c0_0 = arith.constant 0 : index
    %c0_1 = arith.constant 0 : index
    %c0_2 = arith.constant 0 : index
    %0 = vector.load %arg1[%c0, %c0_0, %c0_1, %c0_2] : memref<1x8x8x128xbf16, #tpu.memory_space<vmem>>, vector<1x8x8x128xbf16>
    %1 = arith.extf %0 : vector<1x8x8x128xbf16> to vector<1x8x8x128xf32>
    %2 = vector.shape_cast %1 : vector<1x8x8x128xf32> to vector<1x64x128xf32>
    %cst = arith.constant dense<0.000000e+00> : vector<1x128xf32>
    %3 = vector.multi_reduction <add>, %2, %cst [1] : vector<1x64x128xf32> to vector<1x128xf32>
    %4 = arith.mulf %2, %2 : vector<1x64x128xf32>
    %cst_3 = arith.constant dense<0.000000e+00> : vector<1x128xf32>
    %5 = vector.multi_reduction <add>, %4, %cst_3 [1] : vector<1x64x128xf32> to vector<1x128xf32>
    %c0_4 = arith.constant 0 : index
    %c0_5 = arith.constant 0 : index
    %6 = vector.load %arg5[%c0_4, %c0_5] : memref<128x128xf32, #tpu.memory_space<vmem>>, vector<128x128xf32>
    %cst_6 = arith.constant dense<0.000000e+00> : vector<1x128xf32>
    %7 = tpu.matmul %3, %6, %cst_6 {dimension_numbers = #tpu.dot_dimension_numbers<[1], [0], [0], [1], [0, 0, 1, 1], [], []>} : vector<1x128xf32>, vector<128x128xf32>, vector<1x128xf32> -> vector<1x128xf32>
    %cst_7 = arith.constant 7.812500e-03 : f32
    %8 = vector.broadcast %cst_7 : f32 to vector<1x128xf32>
    %9 = arith.mulf %7, %8 : vector<1x128xf32>
    %cst_8 = arith.constant dense<0.000000e+00> : vector<1x128xf32>
    %10 = tpu.matmul %5, %6, %cst_8 {dimension_numbers = #tpu.dot_dimension_numbers<[1], [0], [0], [1], [0, 0, 1, 1], [], []>} : vector<1x128xf32>, vector<128x128xf32>, vector<1x128xf32> -> vector<1x128xf32>
    %cst_9 = arith.constant 7.812500e-03 : f32
    %11 = vector.broadcast %cst_9 : f32 to vector<1x128xf32>
    %12 = arith.mulf %10, %11 : vector<1x128xf32>
    %13 = arith.mulf %9, %9 : vector<1x128xf32>
    %14 = arith.subf %12, %13 : vector<1x128xf32>
    %cst_10 = arith.constant 9.99999997E-7 : f32
    %15 = vector.broadcast %cst_10 : f32 to vector<1x128xf32>
    %16 = arith.addf %14, %15 : vector<1x128xf32>
    %17 = math.rsqrt %16 : vector<1x128xf32>
    %c0_11 = arith.constant 0 : index
    %c0_12 = arith.constant 0 : index
    %18 = vector.load %arg3[%c0_11, %c0_12] : memref<1x128xf32, #tpu.memory_space<vmem>>, vector<1x128xf32>
    %19 = arith.mulf %17, %18 : vector<1x128xf32>
    %c0_13 = arith.constant 0 : index
    %c0_14 = arith.constant 0 : index
    %20 = vector.load %arg4[%c0_13, %c0_14] : memref<1x128xf32, #tpu.memory_space<vmem>>, vector<1x128xf32>
    %21 = arith.mulf %9, %19 : vector<1x128xf32>
    %22 = arith.subf %20, %21 : vector<1x128xf32>
    %23 = vector.shape_cast %19 : vector<1x128xf32> to vector<1x1x128xf32>
    %24 = vector.broadcast %23 : vector<1x1x128xf32> to vector<1x64x128xf32>
    %25 = arith.mulf %2, %24 : vector<1x64x128xf32>
    %26 = vector.shape_cast %22 : vector<1x128xf32> to vector<1x1x128xf32>
    %27 = vector.broadcast %26 : vector<1x1x128xf32> to vector<1x64x128xf32>
    %28 = arith.addf %25, %27 : vector<1x64x128xf32>
    %29 = arith.negf %28 : vector<1x64x128xf32>
    %30 = math.exp %29 : vector<1x64x128xf32>
    %cst_15 = arith.constant 1.000000e+00 : f32
    %31 = vector.broadcast %cst_15 : f32 to vector<1x64x128xf32>
    %32 = arith.addf %31, %30 : vector<1x64x128xf32>
    %33 = arith.divf %31, %32 : vector<1x64x128xf32>
    %34 = arith.mulf %28, %33 : vector<1x64x128xf32>
    %35 = vector.shape_cast %34 : vector<1x64x128xf32> to vector<1x8x8x128xf32>
    %36 = arith.truncf %35 : vector<1x8x8x128xf32> to vector<1x8x8x128xbf16>
    %37 = vector.extract_strided_slice %36 {offsets = [0, 7, 0, 0], sizes = [1, 1, 8, 128], strides = [1, 1, 1, 1]} : vector<1x8x8x128xbf16> to vector<1x1x8x128xbf16>
    %38 = vector.extract_strided_slice %36 {offsets = [0, 0, 0, 0], sizes = [1, 1, 8, 128], strides = [1, 1, 1, 1]} : vector<1x8x8x128xbf16> to vector<1x1x8x128xbf16>
    %39 = tpu.concatenate %37, %36, %38 in 1 : vector<1x1x8x128xbf16>, vector<1x8x8x128xbf16>, vector<1x1x8x128xbf16> -> vector<1x10x8x128xbf16>
    %40 = vector.extract_strided_slice %39 {offsets = [0, 0, 7, 0], sizes = [1, 10, 1, 128], strides = [1, 1, 1, 1]} : vector<1x10x8x128xbf16> to vector<1x10x1x128xbf16>
    %41 = vector.extract_strided_slice %39 {offsets = [0, 0, 0, 0], sizes = [1, 10, 1, 128], strides = [1, 1, 1, 1]} : vector<1x10x8x128xbf16> to vector<1x10x1x128xbf16>
    %42 = tpu.concatenate %40, %39, %41 in 2 : vector<1x10x1x128xbf16>, vector<1x10x8x128xbf16>, vector<1x10x1x128xbf16> -> vector<1x10x10x128xbf16>
    %c0_16 = arith.constant 0 : index
    %c0_17 = arith.constant 0 : index
    %c0_18 = arith.constant 0 : index
    %c0_19 = arith.constant 0 : index
    %43 = vector.load %arg14[%c0_16, %c0_17, %c0_18, %c0_19] : memref<1x10x10x128xbf16, #tpu.memory_space<vmem>>, vector<1x10x10x128xbf16>
    tpu.vector_store %arg14[%c0_16, %c0_17, %c0_18, %c0_19], %42 {strides = array<i32>} : memref<1x10x10x128xbf16, #tpu.memory_space<vmem>>, vector<1x10x10x128xbf16>,
    %c0_20 = arith.constant 0 : index
    %c0_21 = arith.constant 0 : index
    %c0_22 = arith.constant 0 : index
    %c0_23 = arith.constant 0 : index
    %44 = vector.load %arg14[%c0_20, %c0_21, %c0_22, %c0_23] : memref<1x10x10x128xbf16, #tpu.memory_space<vmem>>, vector<1x10x8x128xbf16>
    %45 = vector.extract_strided_slice %44 {offsets = [0, 0, 0, 0], sizes = [1, 8, 8, 128], strides = [1, 1, 1, 1]} : vector<1x10x8x128xbf16> to vector<1x8x8x128xbf16>
    %46 = vector.extract_strided_slice %44 {offsets = [0, 1, 0, 0], sizes = [1, 8, 8, 128], strides = [1, 1, 1, 1]} : vector<1x10x8x128xbf16> to vector<1x8x8x128xbf16>
    %47 = vector.extract_strided_slice %44 {offsets = [0, 2, 0, 0], sizes = [1, 8, 8, 128], strides = [1, 1, 1, 1]} : vector<1x10x8x128xbf16> to vector<1x8x8x128xbf16>
    %48 = tpu.concatenate %45, %46, %47 in 3 : vector<1x8x8x128xbf16>, vector<1x8x8x128xbf16>, vector<1x8x8x128xbf16> -> vector<1x8x8x384xbf16>
    %49 = vector.shape_cast %48 : vector<1x8x8x384xbf16> to vector<64x384xbf16>
    %c0_24 = arith.constant 0 : index
    %c0_25 = arith.constant 0 : index
    %c0_26 = arith.constant 0 : index
    %50 = vector.load %arg6[%c0_24, %c0_25, %c0_26] : memref<3x384x128xbf16, #tpu.memory_space<vmem>>, vector<1x384x128xbf16>
    %51 = vector.shape_cast %50 : vector<1x384x128xbf16> to vector<384x128xbf16>
    %cst_27 = arith.constant dense<0.000000e+00> : vector<64x128xf32>
    %52 = tpu.matmul %49, %51, %cst_27 {dimension_numbers = #tpu.dot_dimension_numbers<[1], [0], [0], [1], [0, 0, 1, 1], [], []>} : vector<64x384xbf16>, vector<384x128xbf16>, vector<64x128xf32> -> vector<64x128xf32>
    %c0_28 = arith.constant 0 : index
    %c0_29 = arith.constant 0 : index
    %c1 = arith.constant 1 : index
    %c0_30 = arith.constant 0 : index
    %53 = vector.load %arg14[%c0_28, %c0_29, %c1, %c0_30] : memref<1x10x10x128xbf16, #tpu.memory_space<vmem>>, vector<1x10x8x128xbf16>
    %54 = vector.extract_strided_slice %53 {offsets = [0, 0, 0, 0], sizes = [1, 8, 8, 128], strides = [1, 1, 1, 1]} : vector<1x10x8x128xbf16> to vector<1x8x8x128xbf16>
    %55 = vector.extract_strided_slice %53 {offsets = [0, 1, 0, 0], sizes = [1, 8, 8, 128], strides = [1, 1, 1, 1]} : vector<1x10x8x128xbf16> to vector<1x8x8x128xbf16>
    %56 = vector.extract_strided_slice %53 {offsets = [0, 2, 0, 0], sizes = [1, 8, 8, 128], strides = [1, 1, 1, 1]} : vector<1x10x8x128xbf16> to vector<1x8x8x128xbf16>
    %57 = tpu.concatenate %54, %55, %56 in 3 : vector<1x8x8x128xbf16>, vector<1x8x8x128xbf16>, vector<1x8x8x128xbf16> -> vector<1x8x8x384xbf16>
    %58 = vector.shape_cast %57 : vector<1x8x8x384xbf16> to vector<64x384xbf16>
    %c1_31 = arith.constant 1 : index
    %c0_32 = arith.constant 0 : index
    %c0_33 = arith.constant 0 : index
    %59 = vector.load %arg6[%c1_31, %c0_32, %c0_33] : memref<3x384x128xbf16, #tpu.memory_space<vmem>>, vector<1x384x128xbf16>
    %60 = vector.shape_cast %59 : vector<1x384x128xbf16> to vector<384x128xbf16>
    %cst_34 = arith.constant dense<0.000000e+00> : vector<64x128xf32>
    %61 = tpu.matmul %58, %60, %cst_34 {dimension_numbers = #tpu.dot_dimension_numbers<[1], [0], [0], [1], [0, 0, 1, 1], [], []>} : vector<64x384xbf16>, vector<384x128xbf16>, vector<64x128xf32> -> vector<64x128xf32>
    %62 = arith.addf %52, %61 : vector<64x128xf32>
    %c0_35 = arith.constant 0 : index
    %c0_36 = arith.constant 0 : index
    %c2 = arith.constant 2 : index
    %c0_37 = arith.constant 0 : index
    %63 = vector.load %arg14[%c0_35, %c0_36, %c2, %c0_37] : memref<1x10x10x128xbf16, #tpu.memory_space<vmem>>, vector<1x10x8x128xbf16>
    %64 = vector.extract_strided_slice %63 {offsets = [0, 0, 0, 0], sizes = [1, 8, 8, 128], strides = [1, 1, 1, 1]} : vector<1x10x8x128xbf16> to vector<1x8x8x128xbf16>
    %65 = vector.extract_strided_slice %63 {offsets = [0, 1, 0, 0], sizes = [1, 8, 8, 128], strides = [1, 1, 1, 1]} : vector<1x10x8x128xbf16> to vector<1x8x8x128xbf16>
    %66 = vector.extract_strided_slice %63 {offsets = [0, 2, 0, 0], sizes = [1, 8, 8, 128], strides = [1, 1, 1, 1]} : vector<1x10x8x128xbf16> to vector<1x8x8x128xbf16>
    %67 = tpu.concatenate %64, %65, %66 in 3 : vector<1x8x8x128xbf16>, vector<1x8x8x128xbf16>, vector<1x8x8x128xbf16> -> vector<1x8x8x384xbf16>
    %68 = vector.shape_cast %67 : vector<1x8x8x384xbf16> to vector<64x384xbf16>
    %c2_38 = arith.constant 2 : index
    %c0_39 = arith.constant 0 : index
    %c0_40 = arith.constant 0 : index
    %69 = vector.load %arg6[%c2_38, %c0_39, %c0_40] : memref<3x384x128xbf16, #tpu.memory_space<vmem>>, vector<1x384x128xbf16>
    %70 = vector.shape_cast %69 : vector<1x384x128xbf16> to vector<384x128xbf16>
    %cst_41 = arith.constant dense<0.000000e+00> : vector<64x128xf32>
    %71 = tpu.matmul %68, %70, %cst_41 {dimension_numbers = #tpu.dot_dimension_numbers<[1], [0], [0], [1], [0, 0, 1, 1], [], []>} : vector<64x384xbf16>, vector<384x128xbf16>, vector<64x128xf32> -> vector<64x128xf32>
    %72 = arith.addf %62, %71 : vector<64x128xf32>
    %73 = vector.shape_cast %72 : vector<64x128xf32> to vector<1x64x128xf32>
    %c0_42 = arith.constant 0 : index
    %c0_43 = arith.constant 0 : index
    %c0_44 = arith.constant 0 : index
    %74 = vector.load %arg2[%c0_42, %c0_43, %c0_44] : memref<1x1x128xf32, #tpu.memory_space<vmem>>, vector<1x1x128xf32>
    %75 = vector.broadcast %74 : vector<1x1x128xf32> to vector<1x64x128xf32>
    %76 = arith.addf %73, %75 : vector<1x64x128xf32>
    %cst_45 = arith.constant dense<0.000000e+00> : vector<1x128xf32>
    %77 = vector.multi_reduction <add>, %76, %cst_45 [1] : vector<1x64x128xf32> to vector<1x128xf32>
    %78 = arith.mulf %76, %76 : vector<1x64x128xf32>
    %cst_46 = arith.constant dense<0.000000e+00> : vector<1x128xf32>
    %79 = vector.multi_reduction <add>, %78, %cst_46 [1] : vector<1x64x128xf32> to vector<1x128xf32>
    %c0_47 = arith.constant 0 : index
    %c0_48 = arith.constant 0 : index
    %80 = vector.load %arg9[%c0_47, %c0_48] : memref<128x128xf32, #tpu.memory_space<vmem>>, vector<128x128xf32>
    %cst_49 = arith.constant dense<0.000000e+00> : vector<1x128xf32>
    %81 = tpu.matmul %77, %80, %cst_49 {dimension_numbers = #tpu.dot_dimension_numbers<[1], [0], [0], [1], [0, 0, 1, 1], [], []>} : vector<1x128xf32>, vector<128x128xf32>, vector<1x128xf32> -> vector<1x128xf32>
    %cst_50 = arith.constant 3.906250e-03 : f32
    %82 = vector.broadcast %cst_50 : f32 to vector<1x128xf32>
    %83 = arith.mulf %81, %82 : vector<1x128xf32>
    %cst_51 = arith.constant dense<0.000000e+00> : vector<1x128xf32>
    %84 = tpu.matmul %79, %80, %cst_51 {dimension_numbers = #tpu.dot_dimension_numbers<[1], [0], [0], [1], [0, 0, 1, 1], [], []>} : vector<1x128xf32>, vector<128x128xf32>, vector<1x128xf32> -> vector<1x128xf32>
    %cst_52 = arith.constant 3.906250e-03 : f32
    %85 = vector.broadcast %cst_52 : f32 to vector<1x128xf32>
    %86 = arith.mulf %84, %85 : vector<1x128xf32>
    %87 = arith.mulf %83, %83 : vector<1x128xf32>
    %88 = arith.subf %86, %87 : vector<1x128xf32>
    %cst_53 = arith.constant 9.99999997E-7 : f32
    %89 = vector.broadcast %cst_53 : f32 to vector<1x128xf32>
    %90 = arith.addf %88, %89 : vector<1x128xf32>
    %91 = math.rsqrt %90 : vector<1x128xf32>
    %c0_54 = arith.constant 0 : index
    %c0_55 = arith.constant 0 : index
    %92 = vector.load %arg7[%c0_54, %c0_55] : memref<1x128xf32, #tpu.memory_space<vmem>>, vector<1x128xf32>
    %93 = arith.mulf %91, %92 : vector<1x128xf32>
    %c0_56 = arith.constant 0 : index
    %c0_57 = arith.constant 0 : index
    %94 = vector.load %arg8[%c0_56, %c0_57] : memref<1x128xf32, #tpu.memory_space<vmem>>, vector<1x128xf32>
    %95 = arith.mulf %83, %93 : vector<1x128xf32>
    %96 = arith.subf %94, %95 : vector<1x128xf32>
    %97 = vector.shape_cast %93 : vector<1x128xf32> to vector<1x1x128xf32>
    %98 = vector.broadcast %97 : vector<1x1x128xf32> to vector<1x64x128xf32>
    %99 = arith.mulf %76, %98 : vector<1x64x128xf32>
    %100 = vector.shape_cast %96 : vector<1x128xf32> to vector<1x1x128xf32>
    %101 = vector.broadcast %100 : vector<1x1x128xf32> to vector<1x64x128xf32>
    %102 = arith.addf %99, %101 : vector<1x64x128xf32>
    %103 = arith.negf %102 : vector<1x64x128xf32>
    %104 = math.exp %103 : vector<1x64x128xf32>
    %cst_58 = arith.constant 1.000000e+00 : f32
    %105 = vector.broadcast %cst_58 : f32 to vector<1x64x128xf32>
    %106 = arith.addf %105, %104 : vector<1x64x128xf32>
    %107 = arith.divf %105, %106 : vector<1x64x128xf32>
    %108 = arith.mulf %102, %107 : vector<1x64x128xf32>
    %c0_59 = arith.constant 0 : index
    %c0_60 = arith.constant 0 : index
    %c0_61 = arith.constant 0 : index
    %c0_62 = arith.constant 0 : index
    %109 = vector.load %arg1[%c0_59, %c0_60, %c0_61, %c0_62] : memref<1x8x8x128xbf16, #tpu.memory_space<vmem>>, vector<1x8x8x128xbf16>
    %110 = vector.shape_cast %109 : vector<1x8x8x128xbf16> to vector<64x128xbf16>
    %c0_63 = arith.constant 0 : index
    %c0_64 = arith.constant 0 : index
    %111 = vector.load %arg12[%c0_63, %c0_64] : memref<128x128xbf16, #tpu.memory_space<vmem>>, vector<128x128xbf16>
    %cst_65 = arith.constant dense<0.000000e+00> : vector<64x128xf32>
    %112 = tpu.matmul %110, %111, %cst_65 {dimension_numbers = #tpu.dot_dimension_numbers<[1], [0], [0], [1], [0, 0, 1, 1], [], []>} : vector<64x128xbf16>, vector<128x128xbf16>, vector<64x128xf32> -> vector<64x128xf32>
    %113 = vector.shape_cast %108 : vector<1x64x128xf32> to vector<1x8x8x128xf32>
    %114 = arith.truncf %113 : vector<1x8x8x128xf32> to vector<1x8x8x128xbf16>
    %115 = vector.extract_strided_slice %114 {offsets = [0, 7, 0, 0], sizes = [1, 1, 8, 128], strides = [1, 1, 1, 1]} : vector<1x8x8x128xbf16> to vector<1x1x8x128xbf16>
    %116 = vector.extract_strided_slice %114 {offsets = [0, 0, 0, 0], sizes = [1, 1, 8, 128], strides = [1, 1, 1, 1]} : vector<1x8x8x128xbf16> to vector<1x1x8x128xbf16>
    %117 = tpu.concatenate %115, %114, %116 in 1 : vector<1x1x8x128xbf16>, vector<1x8x8x128xbf16>, vector<1x1x8x128xbf16> -> vector<1x10x8x128xbf16>
    %118 = vector.extract_strided_slice %117 {offsets = [0, 0, 7, 0], sizes = [1, 10, 1, 128], strides = [1, 1, 1, 1]} : vector<1x10x8x128xbf16> to vector<1x10x1x128xbf16>
    %119 = vector.extract_strided_slice %117 {offsets = [0, 0, 0, 0], sizes = [1, 10, 1, 128], strides = [1, 1, 1, 1]} : vector<1x10x8x128xbf16> to vector<1x10x1x128xbf16>
    %120 = tpu.concatenate %118, %117, %119 in 2 : vector<1x10x1x128xbf16>, vector<1x10x8x128xbf16>, vector<1x10x1x128xbf16> -> vector<1x10x10x128xbf16>
    %c0_66 = arith.constant 0 : index
    %c0_67 = arith.constant 0 : index
    %c0_68 = arith.constant 0 : index
    %c0_69 = arith.constant 0 : index
    %121 = vector.load %arg14[%c0_66, %c0_67, %c0_68, %c0_69] : memref<1x10x10x128xbf16, #tpu.memory_space<vmem>>, vector<1x10x10x128xbf16>
    tpu.vector_store %arg14[%c0_66, %c0_67, %c0_68, %c0_69], %120 {strides = array<i32>} : memref<1x10x10x128xbf16, #tpu.memory_space<vmem>>, vector<1x10x10x128xbf16>,
    %c0_70 = arith.constant 0 : index
    %c0_71 = arith.constant 0 : index
    %122 = vector.load %arg11[%c0_70, %c0_71] : memref<1x128xf32, #tpu.memory_space<vmem>>, vector<1x128xf32>
    %123 = vector.broadcast %122 : vector<1x128xf32> to vector<64x128xf32>
    %124 = arith.addf %112, %123 : vector<64x128xf32>
    %c0_72 = arith.constant 0 : index
    %c0_73 = arith.constant 0 : index
    %c0_74 = arith.constant 0 : index
    %c0_75 = arith.constant 0 : index
    %125 = vector.load %arg14[%c0_72, %c0_73, %c0_74, %c0_75] : memref<1x10x10x128xbf16, #tpu.memory_space<vmem>>, vector<1x10x8x128xbf16>
    %126 = vector.extract_strided_slice %125 {offsets = [0, 0, 0, 0], sizes = [1, 8, 8, 128], strides = [1, 1, 1, 1]} : vector<1x10x8x128xbf16> to vector<1x8x8x128xbf16>
    %127 = vector.extract_strided_slice %125 {offsets = [0, 1, 0, 0], sizes = [1, 8, 8, 128], strides = [1, 1, 1, 1]} : vector<1x10x8x128xbf16> to vector<1x8x8x128xbf16>
    %128 = vector.extract_strided_slice %125 {offsets = [0, 2, 0, 0], sizes = [1, 8, 8, 128], strides = [1, 1, 1, 1]} : vector<1x10x8x128xbf16> to vector<1x8x8x128xbf16>
    %129 = tpu.concatenate %126, %127, %128 in 3 : vector<1x8x8x128xbf16>, vector<1x8x8x128xbf16>, vector<1x8x8x128xbf16> -> vector<1x8x8x384xbf16>
    %130 = vector.shape_cast %129 : vector<1x8x8x384xbf16> to vector<64x384xbf16>
    %c0_76 = arith.constant 0 : index
    %c0_77 = arith.constant 0 : index
    %c0_78 = arith.constant 0 : index
    %131 = vector.load %arg10[%c0_76, %c0_77, %c0_78] : memref<3x384x128xbf16, #tpu.memory_space<vmem>>, vector<1x384x128xbf16>
    %132 = vector.shape_cast %131 : vector<1x384x128xbf16> to vector<384x128xbf16>
    %cst_79 = arith.constant dense<0.000000e+00> : vector<64x128xf32>
    %133 = tpu.matmul %130, %132, %cst_79 {dimension_numbers = #tpu.dot_dimension_numbers<[1], [0], [0], [1], [0, 0, 1, 1], [], []>} : vector<64x384xbf16>, vector<384x128xbf16>, vector<64x128xf32> -> vector<64x128xf32>
    %134 = arith.addf %124, %133 : vector<64x128xf32>
    %c0_80 = arith.constant 0 : index
    %c0_81 = arith.constant 0 : index
    %c1_82 = arith.constant 1 : index
    %c0_83 = arith.constant 0 : index
    %135 = vector.load %arg14[%c0_80, %c0_81, %c1_82, %c0_83] : memref<1x10x10x128xbf16, #tpu.memory_space<vmem>>, vector<1x10x8x128xbf16>
    %136 = vector.extract_strided_slice %135 {offsets = [0, 0, 0, 0], sizes = [1, 8, 8, 128], strides = [1, 1, 1, 1]} : vector<1x10x8x128xbf16> to vector<1x8x8x128xbf16>
    %137 = vector.extract_strided_slice %135 {offsets = [0, 1, 0, 0], sizes = [1, 8, 8, 128], strides = [1, 1, 1, 1]} : vector<1x10x8x128xbf16> to vector<1x8x8x128xbf16>
    %138 = vector.extract_strided_slice %135 {offsets = [0, 2, 0, 0], sizes = [1, 8, 8, 128], strides = [1, 1, 1, 1]} : vector<1x10x8x128xbf16> to vector<1x8x8x128xbf16>
    %139 = tpu.concatenate %136, %137, %138 in 3 : vector<1x8x8x128xbf16>, vector<1x8x8x128xbf16>, vector<1x8x8x128xbf16> -> vector<1x8x8x384xbf16>
    %140 = vector.shape_cast %139 : vector<1x8x8x384xbf16> to vector<64x384xbf16>
    %c1_84 = arith.constant 1 : index
    %c0_85 = arith.constant 0 : index
    %c0_86 = arith.constant 0 : index
    %141 = vector.load %arg10[%c1_84, %c0_85, %c0_86] : memref<3x384x128xbf16, #tpu.memory_space<vmem>>, vector<1x384x128xbf16>
    %142 = vector.shape_cast %141 : vector<1x384x128xbf16> to vector<384x128xbf16>
    %cst_87 = arith.constant dense<0.000000e+00> : vector<64x128xf32>
    %143 = tpu.matmul %140, %142, %cst_87 {dimension_numbers = #tpu.dot_dimension_numbers<[1], [0], [0], [1], [0, 0, 1, 1], [], []>} : vector<64x384xbf16>, vector<384x128xbf16>, vector<64x128xf32> -> vector<64x128xf32>
    %144 = arith.addf %134, %143 : vector<64x128xf32>
    %c0_88 = arith.constant 0 : index
    %c0_89 = arith.constant 0 : index
    %c2_90 = arith.constant 2 : index
    %c0_91 = arith.constant 0 : index
    %145 = vector.load %arg14[%c0_88, %c0_89, %c2_90, %c0_91] : memref<1x10x10x128xbf16, #tpu.memory_space<vmem>>, vector<1x10x8x128xbf16>
    %146 = vector.extract_strided_slice %145 {offsets = [0, 0, 0, 0], sizes = [1, 8, 8, 128], strides = [1, 1, 1, 1]} : vector<1x10x8x128xbf16> to vector<1x8x8x128xbf16>
    %147 = vector.extract_strided_slice %145 {offsets = [0, 1, 0, 0], sizes = [1, 8, 8, 128], strides = [1, 1, 1, 1]} : vector<1x10x8x128xbf16> to vector<1x8x8x128xbf16>
    %148 = vector.extract_strided_slice %145 {offsets = [0, 2, 0, 0], sizes = [1, 8, 8, 128], strides = [1, 1, 1, 1]} : vector<1x10x8x128xbf16> to vector<1x8x8x128xbf16>
    %149 = tpu.concatenate %146, %147, %148 in 3 : vector<1x8x8x128xbf16>, vector<1x8x8x128xbf16>, vector<1x8x8x128xbf16> -> vector<1x8x8x384xbf16>
    %150 = vector.shape_cast %149 : vector<1x8x8x384xbf16> to vector<64x384xbf16>
    %c2_92 = arith.constant 2 : index
    %c0_93 = arith.constant 0 : index
    %c0_94 = arith.constant 0 : index
    %151 = vector.load %arg10[%c2_92, %c0_93, %c0_94] : memref<3x384x128xbf16, #tpu.memory_space<vmem>>, vector<1x384x128xbf16>
    %152 = vector.shape_cast %151 : vector<1x384x128xbf16> to vector<384x128xbf16>
    %cst_95 = arith.constant dense<0.000000e+00> : vector<64x128xf32>
    %153 = tpu.matmul %150, %152, %cst_95 {dimension_numbers = #tpu.dot_dimension_numbers<[1], [0], [0], [1], [0, 0, 1, 1], [], []>} : vector<64x384xbf16>, vector<384x128xbf16>, vector<64x128xf32> -> vector<64x128xf32>
    %154 = arith.addf %144, %153 : vector<64x128xf32>
    %155 = vector.shape_cast %154 : vector<64x128xf32> to vector<1x8x8x128xf32>
    %156 = arith.truncf %155 : vector<1x8x8x128xf32> to vector<1x8x8x128xbf16>
    %c0_96 = arith.constant 0 : index
    %c0_97 = arith.constant 0 : index
    %c0_98 = arith.constant 0 : index
    %c0_99 = arith.constant 0 : index
    %157 = vector.load %arg13[%c0_96, %c0_97, %c0_98, %c0_99] : memref<1x8x8x128xbf16, #tpu.memory_space<vmem>>, vector<1x8x8x128xbf16>
    tpu.vector_store %arg13[%c0_96, %c0_97, %c0_98, %c0_99], %156 {strides = array<i32>} : memref<1x8x8x128xbf16, #tpu.memory_space<vmem>>, vector<1x8x8x128xbf16>,
    return
  }
  func.func @transform_0(%arg0: i32) -> (i32, i32, i32, i32) {
    %c0_i32 = arith.constant 0 : i32
    %c0_i32_0 = arith.constant 0 : i32
    %c0_i32_1 = arith.constant 0 : i32
    %c0_i32_2 = arith.constant 0 : i32
    return %arg0, %c0_i32, %c0_i32_0, %c0_i32_1 : i32, i32, i32, i32
  }
  func.func @transform_1(%arg0: i32) -> (i32, i32, i32) {
    %c0_i32 = arith.constant 0 : i32
    %c0_i32_0 = arith.constant 0 : i32
    %c0_i32_1 = arith.constant 0 : i32
    return %arg0, %c0_i32, %c0_i32_0 : i32, i32, i32
  }
  func.func @transform_2(%arg0: i32) -> (i32, i32) {
    %c0_i32 = arith.constant 0 : i32
    %c0_i32_0 = arith.constant 0 : i32
    %c0_i32_1 = arith.constant 0 : i32
    return %c0_i32, %c0_i32_0 : i32, i32
  }
  func.func @transform_3(%arg0: i32) -> (i32, i32) {
    %c0_i32 = arith.constant 0 : i32
    %c0_i32_0 = arith.constant 0 : i32
    %c0_i32_1 = arith.constant 0 : i32
    return %c0_i32, %c0_i32_0 : i32, i32
  }
  func.func @transform_4(%arg0: i32) -> (i32, i32) {
    %c0_i32 = arith.constant 0 : i32
    %c0_i32_0 = arith.constant 0 : i32
    %c0_i32_1 = arith.constant 0 : i32
    return %c0_i32, %c0_i32_0 : i32, i32
  }
  func.func @transform_5(%arg0: i32) -> (i32, i32, i32) {
    %c0_i32 = arith.constant 0 : i32
    %c0_i32_0 = arith.constant 0 : i32
    %c0_i32_1 = arith.constant 0 : i32
    %c0_i32_2 = arith.constant 0 : i32
    return %c0_i32, %c0_i32_0, %c0_i32_1 : i32, i32, i32
  }
  func.func @transform_6(%arg0: i32) -> (i32, i32) {
    %c0_i32 = arith.constant 0 : i32
    %c0_i32_0 = arith.constant 0 : i32
    %c0_i32_1 = arith.constant 0 : i32
    return %c0_i32, %c0_i32_0 : i32, i32
  }
  func.func @transform_7(%arg0: i32) -> (i32, i32) {
    %c0_i32 = arith.constant 0 : i32
    %c0_i32_0 = arith.constant 0 : i32
    %c0_i32_1 = arith.constant 0 : i32
    return %c0_i32, %c0_i32_0 : i32, i32
  }
  func.func @transform_8(%arg0: i32) -> (i32, i32) {
    %c0_i32 = arith.constant 0 : i32
    %c0_i32_0 = arith.constant 0 : i32
    %c0_i32_1 = arith.constant 0 : i32
    return %c0_i32, %c0_i32_0 : i32, i32
  }
  func.func @transform_9(%arg0: i32) -> (i32, i32, i32) {
    %c0_i32 = arith.constant 0 : i32
    %c0_i32_0 = arith.constant 0 : i32
    %c0_i32_1 = arith.constant 0 : i32
    %c0_i32_2 = arith.constant 0 : i32
    return %c0_i32, %c0_i32_0, %c0_i32_1 : i32, i32, i32
  }
  func.func @transform_10(%arg0: i32) -> (i32, i32) {
    %c0_i32 = arith.constant 0 : i32
    %c0_i32_0 = arith.constant 0 : i32
    %c0_i32_1 = arith.constant 0 : i32
    return %c0_i32, %c0_i32_0 : i32, i32
  }
  func.func @transform_11(%arg0: i32) -> (i32, i32) {
    %c0_i32 = arith.constant 0 : i32
    %c0_i32_0 = arith.constant 0 : i32
    %c0_i32_1 = arith.constant 0 : i32
    return %c0_i32, %c0_i32_0 : i32, i32
  }
  func.func @transform_12(%arg0: i32) -> (i32, i32, i32, i32) {
    %c0_i32 = arith.constant 0 : i32
    %c0_i32_0 = arith.constant 0 : i32
    %c0_i32_1 = arith.constant 0 : i32
    %c0_i32_2 = arith.constant 0 : i32
    return %arg0, %c0_i32, %c0_i32_0, %c0_i32_1 : i32, i32, i32, i32
  }
}

module attributes {stable_mosaic.version = 11 : i64} {
  func.func @kernel(%arg0: i32, %arg1: memref<1x8x8x128xbf16, #tpu.memory_space<vmem>>, %arg2: memref<1x1x128xf32, #tpu.memory_space<vmem>>, %arg3: memref<1x128xf32, #tpu.memory_space<vmem>>, %arg4: memref<1x128xf32, #tpu.memory_space<vmem>>, %arg5: memref<128x128xf32, #tpu.memory_space<vmem>>, %arg6: memref<3x384x128xbf16, #tpu.memory_space<vmem>>, %arg7: memref<1x128xf32, #tpu.memory_space<vmem>>, %arg8: memref<1x128xf32, #tpu.memory_space<vmem>>, %arg9: memref<128x128xf32, #tpu.memory_space<vmem>>, %arg10: memref<3x384x128xbf16, #tpu.memory_space<vmem>>, %arg11: memref<1x128xf32, #tpu.memory_space<vmem>>, %arg12: memref<128x128xbf16, #tpu.memory_space<vmem>>, %arg13: memref<1x8x8x128xbf16, #tpu.memory_space<vmem>>, %arg14: memref<1x10x10x128xbf16, #tpu.memory_space<vmem>>) attributes {dimension_semantics = [#tpu.dimension_semantics<parallel>], iteration_bounds = array<i64: 2>, scalar_prefetch = 0 : i64, scratch_operands = 1 : i64, tpu.core_type = #tpu.core_type<tc>, window_params = [{transform_indices = @transform_0, window_bounds = array<i64: 1, 8, 8, 128>}, {transform_indices = @transform_1, window_bounds = array<i64: 1, 1, 128>}, {pipeline_mode = #tpu.pipeline_mode<synchronous>, transform_indices = @transform_2, window_bounds = array<i64: 1, 128>}, {pipeline_mode = #tpu.pipeline_mode<synchronous>, transform_indices = @transform_3, window_bounds = array<i64: 1, 128>}, {pipeline_mode = #tpu.pipeline_mode<synchronous>, transform_indices = @transform_4, window_bounds = array<i64: 128, 128>}, {pipeline_mode = #tpu.pipeline_mode<synchronous>, transform_indices = @transform_5, window_bounds = array<i64: 3, 384, 128>}, {pipeline_mode = #tpu.pipeline_mode<synchronous>, transform_indices = @transform_6, window_bounds = array<i64: 1, 128>}, {pipeline_mode = #tpu.pipeline_mode<synchronous>, transform_indices = @transform_7, window_bounds = array<i64: 1, 128>}, {pipeline_mode = #tpu.pipeline_mode<synchronous>, transform_indices = @transform_8, window_bounds = array<i64: 128, 128>}, {pipeline_mode = #tpu.pipeline_mode<synchronous>, transform_indices = @transform_9, window_bounds = array<i64: 3, 384, 128>}, {pipeline_mode = #tpu.pipeline_mode<synchronous>, transform_indices = @transform_10, window_bounds = array<i64: 1, 128>}, {pipeline_mode = #tpu.pipeline_mode<synchronous>, transform_indices = @transform_11, window_bounds = array<i64: 128, 128>}, {transform_indices = @transform_12, window_bounds = array<i64: 1, 8, 8, 128>}]} {
    %c0 = arith.constant 0 : index
    %c0_0 = arith.constant 0 : index
    %c0_1 = arith.constant 0 : index
    %c0_2 = arith.constant 0 : index
    %0 = vector.load %arg1[%c0, %c0_0, %c0_1, %c0_2] : memref<1x8x8x128xbf16, #tpu.memory_space<vmem>>, vector<1x8x8x128xbf16>
    %1 = arith.extf %0 : vector<1x8x8x128xbf16> to vector<1x8x8x128xf32>
    %2 = vector.shape_cast %1 : vector<1x8x8x128xf32> to vector<1x64x128xf32>
    %cst = arith.constant dense<0.000000e+00> : vector<1x128xf32>
    %3 = vector.multi_reduction <add>, %2, %cst [1] : vector<1x64x128xf32> to vector<1x128xf32>
    %4 = arith.mulf %2, %2 : vector<1x64x128xf32>
    %cst_3 = arith.constant dense<0.000000e+00> : vector<1x128xf32>
    %5 = vector.multi_reduction <add>, %4, %cst_3 [1] : vector<1x64x128xf32> to vector<1x128xf32>
    %c0_4 = arith.constant 0 : index
    %c0_5 = arith.constant 0 : index
    %6 = vector.load %arg5[%c0_4, %c0_5] : memref<128x128xf32, #tpu.memory_space<vmem>>, vector<128x128xf32>
    %cst_6 = arith.constant dense<0.000000e+00> : vector<1x128xf32>
    %7 = tpu.matmul %3, %6, %cst_6 {dimension_numbers = #tpu.dot_dimension_numbers<[1], [0], [0], [1], [0, 0, 1, 1], [], []>} : vector<1x128xf32>, vector<128x128xf32>, vector<1x128xf32> -> vector<1x128xf32>
    %cst_7 = arith.constant 7.812500e-03 : f32
    %8 = vector.broadcast %cst_7 : f32 to vector<1x128xf32>
    %9 = arith.mulf %7, %8 : vector<1x128xf32>
    %cst_8 = arith.constant dense<0.000000e+00> : vector<1x128xf32>
    %10 = tpu.matmul %5, %6, %cst_8 {dimension_numbers = #tpu.dot_dimension_numbers<[1], [0], [0], [1], [0, 0, 1, 1], [], []>} : vector<1x128xf32>, vector<128x128xf32>, vector<1x128xf32> -> vector<1x128xf32>
    %cst_9 = arith.constant 7.812500e-03 : f32
    %11 = vector.broadcast %cst_9 : f32 to vector<1x128xf32>
    %12 = arith.mulf %10, %11 : vector<1x128xf32>
    %13 = arith.mulf %9, %9 : vector<1x128xf32>
    %14 = arith.subf %12, %13 : vector<1x128xf32>
    %cst_10 = arith.constant 9.99999997E-7 : f32
    %15 = vector.broadcast %cst_10 : f32 to vector<1x128xf32>
    %16 = arith.addf %14, %15 : vector<1x128xf32>
    %17 = math.rsqrt %16 : vector<1x128xf32>
    %c0_11 = arith.constant 0 : index
    %c0_12 = arith.constant 0 : index
    %18 = vector.load %arg3[%c0_11, %c0_12] : memref<1x128xf32, #tpu.memory_space<vmem>>, vector<1x128xf32>
    %19 = arith.mulf %17, %18 : vector<1x128xf32>
    %c0_13 = arith.constant 0 : index
    %c0_14 = arith.constant 0 : index
    %20 = vector.load %arg4[%c0_13, %c0_14] : memref<1x128xf32, #tpu.memory_space<vmem>>, vector<1x128xf32>
    %21 = arith.mulf %9, %19 : vector<1x128xf32>
    %22 = arith.subf %20, %21 : vector<1x128xf32>
    %23 = vector.shape_cast %19 : vector<1x128xf32> to vector<1x1x128xf32>
    %24 = vector.broadcast %23 : vector<1x1x128xf32> to vector<1x64x128xf32>
    %25 = arith.mulf %2, %24 : vector<1x64x128xf32>
    %26 = vector.shape_cast %22 : vector<1x128xf32> to vector<1x1x128xf32>
    %27 = vector.broadcast %26 : vector<1x1x128xf32> to vector<1x64x128xf32>
    %28 = arith.addf %25, %27 : vector<1x64x128xf32>
    %29 = arith.negf %28 : vector<1x64x128xf32>
    %30 = math.exp %29 : vector<1x64x128xf32>
    %cst_15 = arith.constant 1.000000e+00 : f32
    %31 = vector.broadcast %cst_15 : f32 to vector<1x64x128xf32>
    %32 = arith.addf %31, %30 : vector<1x64x128xf32>
    %33 = arith.divf %31, %32 : vector<1x64x128xf32>
    %34 = arith.mulf %28, %33 : vector<1x64x128xf32>
    %35 = vector.shape_cast %34 : vector<1x64x128xf32> to vector<1x8x8x128xf32>
    %36 = arith.truncf %35 : vector<1x8x8x128xf32> to vector<1x8x8x128xbf16>
    %37 = vector.extract_strided_slice %36 {offsets = [0, 7, 0, 0], sizes = [1, 1, 8, 128], strides = [1, 1, 1, 1]} : vector<1x8x8x128xbf16> to vector<1x1x8x128xbf16>
    %38 = vector.extract_strided_slice %36 {offsets = [0, 0, 0, 0], sizes = [1, 1, 8, 128], strides = [1, 1, 1, 1]} : vector<1x8x8x128xbf16> to vector<1x1x8x128xbf16>
    %39 = tpu.concatenate %37, %36, %38 in 1 : vector<1x1x8x128xbf16>, vector<1x8x8x128xbf16>, vector<1x1x8x128xbf16> -> vector<1x10x8x128xbf16>
    %40 = vector.extract_strided_slice %39 {offsets = [0, 0, 7, 0], sizes = [1, 10, 1, 128], strides = [1, 1, 1, 1]} : vector<1x10x8x128xbf16> to vector<1x10x1x128xbf16>
    %41 = vector.extract_strided_slice %39 {offsets = [0, 0, 0, 0], sizes = [1, 10, 1, 128], strides = [1, 1, 1, 1]} : vector<1x10x8x128xbf16> to vector<1x10x1x128xbf16>
    %42 = tpu.concatenate %40, %39, %41 in 2 : vector<1x10x1x128xbf16>, vector<1x10x8x128xbf16>, vector<1x10x1x128xbf16> -> vector<1x10x10x128xbf16>
    %c0_16 = arith.constant 0 : index
    %c0_17 = arith.constant 0 : index
    %c0_18 = arith.constant 0 : index
    %c0_19 = arith.constant 0 : index
    %43 = vector.load %arg14[%c0_16, %c0_17, %c0_18, %c0_19] : memref<1x10x10x128xbf16, #tpu.memory_space<vmem>>, vector<1x10x10x128xbf16>
    tpu.vector_store %arg14[%c0_16, %c0_17, %c0_18, %c0_19], %42 {strides = array<i32>} : memref<1x10x10x128xbf16, #tpu.memory_space<vmem>>, vector<1x10x10x128xbf16>,
    %c0_20 = arith.constant 0 : index
    %c0_21 = arith.constant 0 : index
    %c0_22 = arith.constant 0 : index
    %c0_23 = arith.constant 0 : index
    %44 = vector.load %arg14[%c0_20, %c0_21, %c0_22, %c0_23] : memref<1x10x10x128xbf16, #tpu.memory_space<vmem>>, vector<1x10x8x128xbf16>
    %45 = vector.extract_strided_slice %44 {offsets = [0, 0, 0, 0], sizes = [1, 8, 8, 128], strides = [1, 1, 1, 1]} : vector<1x10x8x128xbf16> to vector<1x8x8x128xbf16>
    %46 = vector.extract_strided_slice %44 {offsets = [0, 1, 0, 0], sizes = [1, 8, 8, 128], strides = [1, 1, 1, 1]} : vector<1x10x8x128xbf16> to vector<1x8x8x128xbf16>
    %47 = vector.extract_strided_slice %44 {offsets = [0, 2, 0, 0], sizes = [1, 8, 8, 128], strides = [1, 1, 1, 1]} : vector<1x10x8x128xbf16> to vector<1x8x8x128xbf16>
    %48 = tpu.concatenate %45, %46, %47 in 3 : vector<1x8x8x128xbf16>, vector<1x8x8x128xbf16>, vector<1x8x8x128xbf16> -> vector<1x8x8x384xbf16>
    %49 = vector.shape_cast %48 : vector<1x8x8x384xbf16> to vector<64x384xbf16>
    %c0_24 = arith.constant 0 : index
    %c0_25 = arith.constant 0 : index
    %c0_26 = arith.constant 0 : index
    %50 = vector.load %arg6[%c0_24, %c0_25, %c0_26] : memref<3x384x128xbf16, #tpu.memory_space<vmem>>, vector<1x384x128xbf16>
    %51 = vector.shape_cast %50 : vector<1x384x128xbf16> to vector<384x128xbf16>
    %cst_27 = arith.constant dense<0.000000e+00> : vector<64x128xf32>
    %52 = tpu.matmul %49, %51, %cst_27 {dimension_numbers = #tpu.dot_dimension_numbers<[1], [0], [0], [1], [0, 0, 1, 1], [], []>} : vector<64x384xbf16>, vector<384x128xbf16>, vector<64x128xf32> -> vector<64x128xf32>
    %c0_28 = arith.constant 0 : index
    %c0_29 = arith.constant 0 : index
    %c1 = arith.constant 1 : index
    %c0_30 = arith.constant 0 : index
    %53 = vector.load %arg14[%c0_28, %c0_29, %c1, %c0_30] : memref<1x10x10x128xbf16, #tpu.memory_space<vmem>>, vector<1x10x8x128xbf16>
    %54 = vector.extract_strided_slice %53 {offsets = [0, 0, 0, 0], sizes = [1, 8, 8, 128], strides = [1, 1, 1, 1]} : vector<1x10x8x128xbf16> to vector<1x8x8x128xbf16>
    %55 = vector.extract_strided_slice %53 {offsets = [0, 1, 0, 0], sizes = [1, 8, 8, 128], strides = [1, 1, 1, 1]} : vector<1x10x8x128xbf16> to vector<1x8x8x128xbf16>
    %56 = vector.extract_strided_slice %53 {offsets = [0, 2, 0, 0], sizes = [1, 8, 8, 128], strides = [1, 1, 1, 1]} : vector<1x10x8x128xbf16> to vector<1x8x8x128xbf16>
    %57 = tpu.concatenate %54, %55, %56 in 3 : vector<1x8x8x128xbf16>, vector<1x8x8x128xbf16>, vector<1x8x8x128xbf16> -> vector<1x8x8x384xbf16>
    %58 = vector.shape_cast %57 : vector<1x8x8x384xbf16> to vector<64x384xbf16>
    %c1_31 = arith.constant 1 : index
    %c0_32 = arith.constant 0 : index
    %c0_33 = arith.constant 0 : index
    %59 = vector.load %arg6[%c1_31, %c0_32, %c0_33] : memref<3x384x128xbf16, #tpu.memory_space<vmem>>, vector<1x384x128xbf16>
    %60 = vector.shape_cast %59 : vector<1x384x128xbf16> to vector<384x128xbf16>
    %cst_34 = arith.constant dense<0.000000e+00> : vector<64x128xf32>
    %61 = tpu.matmul %58, %60, %cst_34 {dimension_numbers = #tpu.dot_dimension_numbers<[1], [0], [0], [1], [0, 0, 1, 1], [], []>} : vector<64x384xbf16>, vector<384x128xbf16>, vector<64x128xf32> -> vector<64x128xf32>
    %62 = arith.addf %52, %61 : vector<64x128xf32>
    %c0_35 = arith.constant 0 : index
    %c0_36 = arith.constant 0 : index
    %c2 = arith.constant 2 : index
    %c0_37 = arith.constant 0 : index
    %63 = vector.load %arg14[%c0_35, %c0_36, %c2, %c0_37] : memref<1x10x10x128xbf16, #tpu.memory_space<vmem>>, vector<1x10x8x128xbf16>
    %64 = vector.extract_strided_slice %63 {offsets = [0, 0, 0, 0], sizes = [1, 8, 8, 128], strides = [1, 1, 1, 1]} : vector<1x10x8x128xbf16> to vector<1x8x8x128xbf16>
    %65 = vector.extract_strided_slice %63 {offsets = [0, 1, 0, 0], sizes = [1, 8, 8, 128], strides = [1, 1, 1, 1]} : vector<1x10x8x128xbf16> to vector<1x8x8x128xbf16>
    %66 = vector.extract_strided_slice %63 {offsets = [0, 2, 0, 0], sizes = [1, 8, 8, 128], strides = [1, 1, 1, 1]} : vector<1x10x8x128xbf16> to vector<1x8x8x128xbf16>
    %67 = tpu.concatenate %64, %65, %66 in 3 : vector<1x8x8x128xbf16>, vector<1x8x8x128xbf16>, vector<1x8x8x128xbf16> -> vector<1x8x8x384xbf16>
    %68 = vector.shape_cast %67 : vector<1x8x8x384xbf16> to vector<64x384xbf16>
    %c2_38 = arith.constant 2 : index
    %c0_39 = arith.constant 0 : index
    %c0_40 = arith.constant 0 : index
    %69 = vector.load %arg6[%c2_38, %c0_39, %c0_40] : memref<3x384x128xbf16, #tpu.memory_space<vmem>>, vector<1x384x128xbf16>
    %70 = vector.shape_cast %69 : vector<1x384x128xbf16> to vector<384x128xbf16>
    %cst_41 = arith.constant dense<0.000000e+00> : vector<64x128xf32>
    %71 = tpu.matmul %68, %70, %cst_41 {dimension_numbers = #tpu.dot_dimension_numbers<[1], [0], [0], [1], [0, 0, 1, 1], [], []>} : vector<64x384xbf16>, vector<384x128xbf16>, vector<64x128xf32> -> vector<64x128xf32>
    %72 = arith.addf %62, %71 : vector<64x128xf32>
    %73 = vector.shape_cast %72 : vector<64x128xf32> to vector<1x64x128xf32>
    %c0_42 = arith.constant 0 : index
    %c0_43 = arith.constant 0 : index
    %c0_44 = arith.constant 0 : index
    %74 = vector.load %arg2[%c0_42, %c0_43, %c0_44] : memref<1x1x128xf32, #tpu.memory_space<vmem>>, vector<1x1x128xf32>
    %75 = vector.broadcast %74 : vector<1x1x128xf32> to vector<1x64x128xf32>
    %76 = arith.addf %73, %75 : vector<1x64x128xf32>
    %cst_45 = arith.constant dense<0.000000e+00> : vector<1x128xf32>
    %77 = vector.multi_reduction <add>, %76, %cst_45 [1] : vector<1x64x128xf32> to vector<1x128xf32>
    %78 = arith.mulf %76, %76 : vector<1x64x128xf32>
    %cst_46 = arith.constant dense<0.000000e+00> : vector<1x128xf32>
    %79 = vector.multi_reduction <add>, %78, %cst_46 [1] : vector<1x64x128xf32> to vector<1x128xf32>
    %c0_47 = arith.constant 0 : index
    %c0_48 = arith.constant 0 : index
    %80 = vector.load %arg9[%c0_47, %c0_48] : memref<128x128xf32, #tpu.memory_space<vmem>>, vector<128x128xf32>
    %cst_49 = arith.constant dense<0.000000e+00> : vector<1x128xf32>
    %81 = tpu.matmul %77, %80, %cst_49 {dimension_numbers = #tpu.dot_dimension_numbers<[1], [0], [0], [1], [0, 0, 1, 1], [], []>} : vector<1x128xf32>, vector<128x128xf32>, vector<1x128xf32> -> vector<1x128xf32>
    %cst_50 = arith.constant 3.906250e-03 : f32
    %82 = vector.broadcast %cst_50 : f32 to vector<1x128xf32>
    %83 = arith.mulf %81, %82 : vector<1x128xf32>
    %cst_51 = arith.constant dense<0.000000e+00> : vector<1x128xf32>
    %84 = tpu.matmul %79, %80, %cst_51 {dimension_numbers = #tpu.dot_dimension_numbers<[1], [0], [0], [1], [0, 0, 1, 1], [], []>} : vector<1x128xf32>, vector<128x128xf32>, vector<1x128xf32> -> vector<1x128xf32>
    %cst_52 = arith.constant 3.906250e-03 : f32
    %85 = vector.broadcast %cst_52 : f32 to vector<1x128xf32>
    %86 = arith.mulf %84, %85 : vector<1x128xf32>
    %87 = arith.mulf %83, %83 : vector<1x128xf32>
    %88 = arith.subf %86, %87 : vector<1x128xf32>
    %cst_53 = arith.constant 9.99999997E-7 : f32
    %89 = vector.broadcast %cst_53 : f32 to vector<1x128xf32>
    %90 = arith.addf %88, %89 : vector<1x128xf32>
    %91 = math.rsqrt %90 : vector<1x128xf32>
    %c0_54 = arith.constant 0 : index
    %c0_55 = arith.constant 0 : index
    %92 = vector.load %arg7[%c0_54, %c0_55] : memref<1x128xf32, #tpu.memory_space<vmem>>, vector<1x128xf32>
    %93 = arith.mulf %91, %92 : vector<1x128xf32>
    %c0_56 = arith.constant 0 : index
    %c0_57 = arith.constant 0 : index
    %94 = vector.load %arg8[%c0_56, %c0_57] : memref<1x128xf32, #tpu.memory_space<vmem>>, vector<1x128xf32>
    %95 = arith.mulf %83, %93 : vector<1x128xf32>
    %96 = arith.subf %94, %95 : vector<1x128xf32>
    %97 = vector.shape_cast %93 : vector<1x128xf32> to vector<1x1x128xf32>
    %98 = vector.broadcast %97 : vector<1x1x128xf32> to vector<1x64x128xf32>
    %99 = arith.mulf %76, %98 : vector<1x64x128xf32>
    %100 = vector.shape_cast %96 : vector<1x128xf32> to vector<1x1x128xf32>
    %101 = vector.broadcast %100 : vector<1x1x128xf32> to vector<1x64x128xf32>
    %102 = arith.addf %99, %101 : vector<1x64x128xf32>
    %103 = arith.negf %102 : vector<1x64x128xf32>
    %104 = math.exp %103 : vector<1x64x128xf32>
    %cst_58 = arith.constant 1.000000e+00 : f32
    %105 = vector.broadcast %cst_58 : f32 to vector<1x64x128xf32>
    %106 = arith.addf %105, %104 : vector<1x64x128xf32>
    %107 = arith.divf %105, %106 : vector<1x64x128xf32>
    %108 = arith.mulf %102, %107 : vector<1x64x128xf32>
    %c0_59 = arith.constant 0 : index
    %c0_60 = arith.constant 0 : index
    %c0_61 = arith.constant 0 : index
    %c0_62 = arith.constant 0 : index
    %109 = vector.load %arg1[%c0_59, %c0_60, %c0_61, %c0_62] : memref<1x8x8x128xbf16, #tpu.memory_space<vmem>>, vector<1x8x8x128xbf16>
    %110 = vector.shape_cast %109 : vector<1x8x8x128xbf16> to vector<64x128xbf16>
    %c0_63 = arith.constant 0 : index
    %c0_64 = arith.constant 0 : index
    %111 = vector.load %arg12[%c0_63, %c0_64] : memref<128x128xbf16, #tpu.memory_space<vmem>>, vector<128x128xbf16>
    %cst_65 = arith.constant dense<0.000000e+00> : vector<64x128xf32>
    %112 = tpu.matmul %110, %111, %cst_65 {dimension_numbers = #tpu.dot_dimension_numbers<[1], [0], [0], [1], [0, 0, 1, 1], [], []>} : vector<64x128xbf16>, vector<128x128xbf16>, vector<64x128xf32> -> vector<64x128xf32>
    %113 = vector.shape_cast %108 : vector<1x64x128xf32> to vector<1x8x8x128xf32>
    %114 = arith.truncf %113 : vector<1x8x8x128xf32> to vector<1x8x8x128xbf16>
    %115 = vector.extract_strided_slice %114 {offsets = [0, 7, 0, 0], sizes = [1, 1, 8, 128], strides = [1, 1, 1, 1]} : vector<1x8x8x128xbf16> to vector<1x1x8x128xbf16>
    %116 = vector.extract_strided_slice %114 {offsets = [0, 0, 0, 0], sizes = [1, 1, 8, 128], strides = [1, 1, 1, 1]} : vector<1x8x8x128xbf16> to vector<1x1x8x128xbf16>
    %117 = tpu.concatenate %115, %114, %116 in 1 : vector<1x1x8x128xbf16>, vector<1x8x8x128xbf16>, vector<1x1x8x128xbf16> -> vector<1x10x8x128xbf16>
    %118 = vector.extract_strided_slice %117 {offsets = [0, 0, 7, 0], sizes = [1, 10, 1, 128], strides = [1, 1, 1, 1]} : vector<1x10x8x128xbf16> to vector<1x10x1x128xbf16>
    %119 = vector.extract_strided_slice %117 {offsets = [0, 0, 0, 0], sizes = [1, 10, 1, 128], strides = [1, 1, 1, 1]} : vector<1x10x8x128xbf16> to vector<1x10x1x128xbf16>
    %120 = tpu.concatenate %118, %117, %119 in 2 : vector<1x10x1x128xbf16>, vector<1x10x8x128xbf16>, vector<1x10x1x128xbf16> -> vector<1x10x10x128xbf16>
    %c0_66 = arith.constant 0 : index
    %c0_67 = arith.constant 0 : index
    %c0_68 = arith.constant 0 : index
    %c0_69 = arith.constant 0 : index
    %121 = vector.load %arg14[%c0_66, %c0_67, %c0_68, %c0_69] : memref<1x10x10x128xbf16, #tpu.memory_space<vmem>>, vector<1x10x10x128xbf16>
    tpu.vector_store %arg14[%c0_66, %c0_67, %c0_68, %c0_69], %120 {strides = array<i32>} : memref<1x10x10x128xbf16, #tpu.memory_space<vmem>>, vector<1x10x10x128xbf16>,
    %c0_70 = arith.constant 0 : index
    %c0_71 = arith.constant 0 : index
    %122 = vector.load %arg11[%c0_70, %c0_71] : memref<1x128xf32, #tpu.memory_space<vmem>>, vector<1x128xf32>
    %123 = vector.broadcast %122 : vector<1x128xf32> to vector<64x128xf32>
    %124 = arith.addf %112, %123 : vector<64x128xf32>
    %c0_72 = arith.constant 0 : index
    %c0_73 = arith.constant 0 : index
    %c0_74 = arith.constant 0 : index
    %c0_75 = arith.constant 0 : index
    %125 = vector.load %arg14[%c0_72, %c0_73, %c0_74, %c0_75] : memref<1x10x10x128xbf16, #tpu.memory_space<vmem>>, vector<1x10x8x128xbf16>
    %126 = vector.extract_strided_slice %125 {offsets = [0, 0, 0, 0], sizes = [1, 8, 8, 128], strides = [1, 1, 1, 1]} : vector<1x10x8x128xbf16> to vector<1x8x8x128xbf16>
    %127 = vector.extract_strided_slice %125 {offsets = [0, 1, 0, 0], sizes = [1, 8, 8, 128], strides = [1, 1, 1, 1]} : vector<1x10x8x128xbf16> to vector<1x8x8x128xbf16>
    %128 = vector.extract_strided_slice %125 {offsets = [0, 2, 0, 0], sizes = [1, 8, 8, 128], strides = [1, 1, 1, 1]} : vector<1x10x8x128xbf16> to vector<1x8x8x128xbf16>
    %129 = tpu.concatenate %126, %127, %128 in 3 : vector<1x8x8x128xbf16>, vector<1x8x8x128xbf16>, vector<1x8x8x128xbf16> -> vector<1x8x8x384xbf16>
    %130 = vector.shape_cast %129 : vector<1x8x8x384xbf16> to vector<64x384xbf16>
    %c0_76 = arith.constant 0 : index
    %c0_77 = arith.constant 0 : index
    %c0_78 = arith.constant 0 : index
    %131 = vector.load %arg10[%c0_76, %c0_77, %c0_78] : memref<3x384x128xbf16, #tpu.memory_space<vmem>>, vector<1x384x128xbf16>
    %132 = vector.shape_cast %131 : vector<1x384x128xbf16> to vector<384x128xbf16>
    %cst_79 = arith.constant dense<0.000000e+00> : vector<64x128xf32>
    %133 = tpu.matmul %130, %132, %cst_79 {dimension_numbers = #tpu.dot_dimension_numbers<[1], [0], [0], [1], [0, 0, 1, 1], [], []>} : vector<64x384xbf16>, vector<384x128xbf16>, vector<64x128xf32> -> vector<64x128xf32>
    %134 = arith.addf %124, %133 : vector<64x128xf32>
    %c0_80 = arith.constant 0 : index
    %c0_81 = arith.constant 0 : index
    %c1_82 = arith.constant 1 : index
    %c0_83 = arith.constant 0 : index
    %135 = vector.load %arg14[%c0_80, %c0_81, %c1_82, %c0_83] : memref<1x10x10x128xbf16, #tpu.memory_space<vmem>>, vector<1x10x8x128xbf16>
    %136 = vector.extract_strided_slice %135 {offsets = [0, 0, 0, 0], sizes = [1, 8, 8, 128], strides = [1, 1, 1, 1]} : vector<1x10x8x128xbf16> to vector<1x8x8x128xbf16>
    %137 = vector.extract_strided_slice %135 {offsets = [0, 1, 0, 0], sizes = [1, 8, 8, 128], strides = [1, 1, 1, 1]} : vector<1x10x8x128xbf16> to vector<1x8x8x128xbf16>
    %138 = vector.extract_strided_slice %135 {offsets = [0, 2, 0, 0], sizes = [1, 8, 8, 128], strides = [1, 1, 1, 1]} : vector<1x10x8x128xbf16> to vector<1x8x8x128xbf16>
    %139 = tpu.concatenate %136, %137, %138 in 3 : vector<1x8x8x128xbf16>, vector<1x8x8x128xbf16>, vector<1x8x8x128xbf16> -> vector<1x8x8x384xbf16>
    %140 = vector.shape_cast %139 : vector<1x8x8x384xbf16> to vector<64x384xbf16>
    %c1_84 = arith.constant 1 : index
    %c0_85 = arith.constant 0 : index
    %c0_86 = arith.constant 0 : index
    %141 = vector.load %arg10[%c1_84, %c0_85, %c0_86] : memref<3x384x128xbf16, #tpu.memory_space<vmem>>, vector<1x384x128xbf16>
    %142 = vector.shape_cast %141 : vector<1x384x128xbf16> to vector<384x128xbf16>
    %cst_87 = arith.constant dense<0.000000e+00> : vector<64x128xf32>
    %143 = tpu.matmul %140, %142, %cst_87 {dimension_numbers = #tpu.dot_dimension_numbers<[1], [0], [0], [1], [0, 0, 1, 1], [], []>} : vector<64x384xbf16>, vector<384x128xbf16>, vector<64x128xf32> -> vector<64x128xf32>
    %144 = arith.addf %134, %143 : vector<64x128xf32>
    %c0_88 = arith.constant 0 : index
    %c0_89 = arith.constant 0 : index
    %c2_90 = arith.constant 2 : index
    %c0_91 = arith.constant 0 : index
    %145 = vector.load %arg14[%c0_88, %c0_89, %c2_90, %c0_91] : memref<1x10x10x128xbf16, #tpu.memory_space<vmem>>, vector<1x10x8x128xbf16>
    %146 = vector.extract_strided_slice %145 {offsets = [0, 0, 0, 0], sizes = [1, 8, 8, 128], strides = [1, 1, 1, 1]} : vector<1x10x8x128xbf16> to vector<1x8x8x128xbf16>
    %147 = vector.extract_strided_slice %145 {offsets = [0, 1, 0, 0], sizes = [1, 8, 8, 128], strides = [1, 1, 1, 1]} : vector<1x10x8x128xbf16> to vector<1x8x8x128xbf16>
    %148 = vector.extract_strided_slice %145 {offsets = [0, 2, 0, 0], sizes = [1, 8, 8, 128], strides = [1, 1, 1, 1]} : vector<1x10x8x128xbf16> to vector<1x8x8x128xbf16>
    %149 = tpu.concatenate %146, %147, %148 in 3 : vector<1x8x8x128xbf16>, vector<1x8x8x128xbf16>, vector<1x8x8x128xbf16> -> vector<1x8x8x384xbf16>
    %150 = vector.shape_cast %149 : vector<1x8x8x384xbf16> to vector<64x384xbf16>
    %c2_92 = arith.constant 2 : index
    %c0_93 = arith.constant 0 : index
    %c0_94 = arith.constant 0 : index
    %151 = vector.load %arg10[%c2_92, %c0_93, %c0_94] : memref<3x384x128xbf16, #tpu.memory_space<vmem>>, vector<1x384x128xbf16>
    %152 = vector.shape_cast %151 : vector<1x384x128xbf16> to vector<384x128xbf16>
    %cst_95 = arith.constant dense<0.000000e+00> : vector<64x128xf32>
    %153 = tpu.matmul %150, %152, %cst_95 {dimension_numbers = #tpu.dot_dimension_numbers<[1], [0], [0], [1], [0, 0, 1, 1], [], []>} : vector<64x384xbf16>, vector<384x128xbf16>, vector<64x128xf32> -> vector<64x128xf32>
    %154 = arith.addf %144, %153 : vector<64x128xf32>
    %155 = vector.shape_cast %154 : vector<64x128xf32> to vector<1x8x8x128xf32>
    %156 = arith.truncf %155 : vector<1x8x8x128xf32> to vector<1x8x8x128xbf16>
    %c0_96 = arith.constant 0 : index
    %c0_97 = arith.constant 0 : index
    %c0_98 = arith.constant 0 : index
    %c0_99 = arith.constant 0 : index
    %157 = vector.load %arg13[%c0_96, %c0_97, %c0_98, %c0_99] : memref<1x8x8x128xbf16, #tpu.memory_space<vmem>>, vector<1x8x8x128xbf16>
    tpu.vector_store %arg13[%c0_96, %c0_97, %c0_98, %c0_99], %156 {strides = array<i32>} : memref<1x8x8x128xbf16, #tpu.memory_space<vmem>>, vector<1x8x8x128xbf16>,
    return
  }
  func.func @transform_0(%arg0: i32) -> (i32, i32, i32, i32) {
    %c0_i32 = arith.constant 0 : i32
    %c0_i32_0 = arith.constant 0 : i32
    %c0_i32_1 = arith.constant 0 : i32
    %c0_i32_2 = arith.constant 0 : i32
    return %arg0, %c0_i32, %c0_i32_0, %c0_i32_1 : i32, i32, i32, i32
  }
  func.func @transform_1(%arg0: i32) -> (i32, i32, i32) {
    %c0_i32 = arith.constant 0 : i32
    %c0_i32_0 = arith.constant 0 : i32
    %c0_i32_1 = arith.constant 0 : i32
    return %arg0, %c0_i32, %c0_i32_0 : i32, i32, i32
  }
  func.func @transform_2(%arg0: i32) -> (i32, i32) {
    %c0_i32 = arith.constant 0 : i32
    %c0_i32_0 = arith.constant 0 : i32
    %c0_i32_1 = arith.constant 0 : i32
    return %c0_i32, %c0_i32_0 : i32, i32
  }
  func.func @transform_3(%arg0: i32) -> (i32, i32) {
    %c0_i32 = arith.constant 0 : i32
    %c0_i32_0 = arith.constant 0 : i32
    %c0_i32_1 = arith.constant 0 : i32
    return %c0_i32, %c0_i32_0 : i32, i32
  }
  func.func @transform_4(%arg0: i32) -> (i32, i32) {
    %c0_i32 = arith.constant 0 : i32
    %c0_i32_0 = arith.constant 0 : i32
    %c0_i32_1 = arith.constant 0 : i32
    return %c0_i32, %c0_i32_0 : i32, i32
  }
  func.func @transform_5(%arg0: i32) -> (i32, i32, i32) {
    %c0_i32 = arith.constant 0 : i32
    %c0_i32_0 = arith.constant 0 : i32
    %c0_i32_1 = arith.constant 0 : i32
    %c0_i32_2 = arith.constant 0 : i32
    return %c0_i32, %c0_i32_0, %c0_i32_1 : i32, i32, i32
  }
  func.func @transform_6(%arg0: i32) -> (i32, i32) {
    %c0_i32 = arith.constant 0 : i32
    %c0_i32_0 = arith.constant 0 : i32
    %c0_i32_1 = arith.constant 0 : i32
    return %c0_i32, %c0_i32_0 : i32, i32
  }
  func.func @transform_7(%arg0: i32) -> (i32, i32) {
    %c0_i32 = arith.constant 0 : i32
    %c0_i32_0 = arith.constant 0 : i32
    %c0_i32_1 = arith.constant 0 : i32
    return %c0_i32, %c0_i32_0 : i32, i32
  }
  func.func @transform_8(%arg0: i32) -> (i32, i32) {
    %c0_i32 = arith.constant 0 : i32
    %c0_i32_0 = arith.constant 0 : i32
    %c0_i32_1 = arith.constant 0 : i32
    return %c0_i32, %c0_i32_0 : i32, i32
  }
  func.func @transform_9(%arg0: i32) -> (i32, i32, i32) {
    %c0_i32 = arith.constant 0 : i32
    %c0_i32_0 = arith.constant 0 : i32
    %c0_i32_1 = arith.constant 0 : i32
    %c0_i32_2 = arith.constant 0 : i32
    return %c0_i32, %c0_i32_0, %c0_i32_1 : i32, i32, i32
  }
  func.func @transform_10(%arg0: i32) -> (i32, i32) {
    %c0_i32 = arith.constant 0 : i32
    %c0_i32_0 = arith.constant 0 : i32
    %c0_i32_1 = arith.constant 0 : i32
    return %c0_i32, %c0_i32_0 : i32, i32
  }
  func.func @transform_11(%arg0: i32) -> (i32, i32) {
    %c0_i32 = arith.constant 0 : i32
    %c0_i32_0 = arith.constant 0 : i32
    %c0_i32_1 = arith.constant 0 : i32
    return %c0_i32, %c0_i32_0 : i32, i32
  }
  func.func @transform_12(%arg0: i32) -> (i32, i32, i32, i32) {
    %c0_i32 = arith.constant 0 : i32
    %c0_i32_0 = arith.constant 0 : i32
    %c0_i32_1 = arith.constant 0 : i32
    %c0_i32_2 = arith.constant 0 : i32
    return %arg0, %c0_i32, %c0_i32_0, %c0_i32_1 : i32, i32, i32, i32
  }
}

</mosaic_0001>

<llo_original>
// kernel: tpu_custom_call.1
$region0: #{tpu_custom_call.1}
  #allocation0 [shape = 'u32[]', space=smem, size = 0x4, offset = 0x4, fixed_abs, tag = 'smem constant byte address 0x4 - core index']
  #allocation1 [shape = 'u32[144,128]{1,0:T(1,128)}', space=vmem, size = 0x12000, scoped, tag = 'internal scratch']
  #allocation2 [shape = 'bf16[1,10,10,128]{3,2,1,0:T(8,128)(2,1)}', space=vmem, size = 0xa000, scoped, tag = 'scratch operand']
  %s0 = inlined_call_operand.hbm [shape: bf16[2,8,8,128], index: 0, kind: input, shape index: {}]
  %s1 = inlined_call_operand.vmem [shape: f32[2,1,128], index: 1, kind: input, shape index: {}]
  %s2 = inlined_call_operand.vmem [shape: f32[1,128], index: 2, kind: input, shape index: {}]
  %s3 = inlined_call_operand.vmem [shape: f32[1,128], index: 3, kind: input, shape index: {}]
  %s4 = inlined_call_operand.hbm [shape: f32[128,128], index: 4, kind: input, shape index: {}]
  %s5 = inlined_call_operand.hbm [shape: bf16[3,384,128], index: 5, kind: input, shape index: {}]
  %s6 = inlined_call_operand.vmem [shape: f32[1,128], index: 6, kind: input, shape index: {}]
  %s7 = inlined_call_operand.vmem [shape: f32[1,128], index: 7, kind: input, shape index: {}]
  %s8 = inlined_call_operand.hbm [shape: f32[128,128], index: 8, kind: input, shape index: {}]
  %s9 = inlined_call_operand.hbm [shape: bf16[3,384,128], index: 9, kind: input, shape index: {}]
  %s10 = inlined_call_operand.vmem [shape: f32[1,128], index: 10, kind: input, shape index: {}]
  %s11 = inlined_call_operand.hbm [shape: bf16[128,128], index: 11, kind: input, shape index: {}]
  %s12 = inlined_call_operand.hbm [shape: bf16[2,8,8,128], index: 12, kind: output, shape index: {}]
  %s13 = sld [smem:[#allocation0]]
  $region105: #{tpu_custom_call.1} parent=0
    _
  %s15 = ssub.s32 1, %s13
  %s16 = scalar_select 0, %s15, %s13
  $region1: #{tpu_custom_call.1} parent=0
    #allocation3 [shape = 'u8[32768]{0}', space=vmem, size = 0x8000, scoped, tag = 'input window, operand 0']
    #allocation4 [shape = 's32[2]{0}', space=sflag, size = 0x8, scoped, tag = 'scoped memory for tpu_custom_call.1']
    #allocation5 [shape = 's32[2]{0}', space=sflag, size = 0x8, scoped, tag = 'scoped memory for tpu_custom_call.1']
    #allocation6 [shape = 'u8[65536]{0}', space=vmem, size = 0x10000, scoped, tag = 'input window, operand 4, single buffered']
    #allocation7 [shape = 's32[1]{0}', space=sflag, size = 0x4, scoped, tag = 'scoped memory for tpu_custom_call.1']
    #allocation8 [shape = 'u8[294912]{0}', space=vmem, size = 0x48000, scoped, tag = 'input window, operand 5, single buffered']
    #allocation9 [shape = 'u8[65536]{0}', space=vmem, size = 0x10000, scoped, tag = 'input window, operand 8, single buffered']
    #allocation10 [shape = 's32[1]{0}', space=sflag, size = 0x4, scoped, tag = 'scoped memory for tpu_custom_call.1']
    #allocation11 [shape = 'u8[294912]{0}', space=vmem, size = 0x48000, scoped, tag = 'input window, operand 9, single buffered']
    #allocation12 [shape = 'u8[32768]{0}', space=vmem, size = 0x8000, scoped, tag = 'input window, operand 11, single buffered']
    #allocation13 [shape = 's32[1]{0}', space=sflag, size = 0x4, scoped, tag = 'scoped memory for tpu_custom_call.1']
    #allocation14 [shape = 'u8[32768]{0}', space=vmem, size = 0x8000, scoped, tag = 'output window, operand 0']
    %17 = vsyncpa [#allocation4], 0
    %s18 = scalar_lea.sflag [#allocation4], 1
    %19 = vsyncpa %s18, 0
    %20 = vsyncpa [#allocation7], 0
    %21 = vsyncpa [#allocation10], 0
    %22 = vsyncpa [#allocation13], 0
    %23 = vsyncpa [#allocation5], 0
    %s24 = scalar_lea.sflag [#allocation5], 1
    %25 = vsyncpa %s24, 0
    loop: start=0, step=1, limit=4
    $region2: #{tpu_custom_call.1} parent=1 // loop_pre_header
      _
    $region3: #{tpu_custom_call.1} parent=1 // loop_header
      %s27 = sphi 0, %s31
      %p28 = scmp.ge.s32.totalorder %s27, 4
      %s37 = sphi 0, %s39
      %s40 = sphi 0, %s37
      %s41 = sphi 0, %s40
      %s57 = sphi 0, %s41
      %s63 = sphi 0, %s65
      %s66 = sphi 0, %s63
      %s67 = sphi 0, %s66
      %s83 = sphi 0, %s67
      %s87 = sphi 0, %s87
      %s89 = sphi 0, %s87
      %s90 = sphi 0, %s89
      %s104 = sphi 0, %s90
      %s108 = sphi 0, %s108
      %s110 = sphi 0, %s108
      %s111 = sphi 0, %s110
      %s125 = sphi 0, %s111
      %s129 = sphi 0, %s129
      %s131 = sphi 0, %s129
      %s132 = sphi 0, %s131
      %s146 = sphi 0, %s132
      %s150 = sphi 0, %s150
      %s152 = sphi 0, %s150
      %s153 = sphi 0, %s152
      %s167 = sphi 0, %s153
      %s171 = sphi 0, %s171
      %s173 = sphi 0, %s171
      %s174 = sphi 0, %s173
      %s188 = sphi 0, %s174
      %s192 = sphi 0, %s192
      %s194 = sphi 0, %s192
      %s195 = sphi 0, %s194
      %s209 = sphi 0, %s195
      %s213 = sphi 0, %s213
      %s215 = sphi 0, %s213
      %s216 = sphi 0, %s215
      %s230 = sphi 0, %s216
      %s234 = sphi 0, %s234
      %s236 = sphi 0, %s234
      %s237 = sphi 0, %s236
      %s251 = sphi 0, %s237
      %s255 = sphi 0, %s255
      %s257 = sphi 0, %s255
      %s258 = sphi 0, %s257
      %s272 = sphi 0, %s258
      %s276 = sphi 0, %s276
      %s278 = sphi 0, %s276
      %s279 = sphi 0, %s278
      %s293 = sphi 0, %s279
      %s299 = sphi 0, %s301
      %s302 = sphi 0, %s299
      %s303 = sphi 0, %s302
      %s319 = sphi 0, %s303
    $region4: #{tpu_custom_call.1} parent=1 // loop_header_branch
      %30 = sbr.rel (%p28) target = $region8
    $region5: #{tpu_custom_call.1} parent=1 // loop_body
      %s32 = ssub.s32 %s27, 1
      %s33 = ssub.s32 %s27, 2
      %s34 = sadd.s32 %s27, 1
      %s35 = ssub.s32 %s27, %s34
      %p36 = scmp.eq.s32.totalorder %s35, 0
      %s38 = sadd.s32 %s37, 1
      %s39 = scalar_select %p36, %s37, %s38
      %p42 = pneg %p36
      %p43 = scmp.eq.s32.totalorder %s27, 1
      %p44 = por %p42, %p43
      %p45 = scmp.ne.s32.totalorder %s37, %s40
      %p46 = scmp.eq.s32.totalorder %s27, 0
      %p47 = por %p45, %p46
      %p48 = scmp.ne.s32.totalorder %s37, %s40
      %p49 = scmp.eq.s32.totalorder %s32, 1
      %p50 = por %p48, %p49
      %p51 = scmp.ne.s32.totalorder %s40, %s41
      %p52 = scmp.eq.s32.totalorder %s32, 0
      %p53 = por %p51, %p52
      %p54 = scmp.ne.s32.totalorder %s40, %s41
      %p55 = scmp.eq.s32.totalorder %s33, 1
      %p56 = por %p54, %p55
      %p58 = scmp.ne.s32.totalorder %s41, %s57
      %p59 = scmp.eq.s32.totalorder %s33, 0
      %p60 = por %p58, %p59
      %s61 = ssub.s32 %s27, %s34
      %p62 = scmp.eq.s32.totalorder %s61, 0
      %s64 = sadd.s32 %s63, 1
      %s65 = scalar_select %p62, %s63, %s64
      %p68 = pneg %p62
      %p69 = scmp.eq.s32.totalorder %s27, 1
      %p70 = por %p68, %p69
      %p71 = scmp.ne.s32.totalorder %s63, %s66
      %p72 = scmp.eq.s32.totalorder %s27, 0
      %p73 = por %p71, %p72
      %p74 = scmp.ne.s32.totalorder %s63, %s66
      %p75 = scmp.eq.s32.totalorder %s32, 1
      %p76 = por %p74, %p75
      %p77 = scmp.ne.s32.totalorder %s66, %s67
      %p78 = scmp.eq.s32.totalorder %s32, 0
      %p79 = por %p77, %p78
      %p80 = scmp.ne.s32.totalorder %s66, %s67
      %p81 = scmp.eq.s32.totalorder %s33, 1
      %p82 = por %p80, %p81
      %p84 = scmp.ne.s32.totalorder %s67, %s83
      %p85 = scmp.eq.s32.totalorder %s33, 0
      %p86 = por %p84, %p85
      %s88 = sadd.s32 %s87, 1
      %p91 = scmp.eq.s32.totalorder %s27, 1
      %p92 = scmp.ne.s32.totalorder %s87, %s89
      %p93 = scmp.eq.s32.totalorder %s27, 0
      %p94 = por %p92, %p93
      %p95 = scmp.ne.s32.totalorder %s87, %s89
      %p96 = scmp.eq.s32.totalorder %s32, 1
      %p97 = por %p95, %p96
      %p98 = scmp.ne.s32.totalorder %s89, %s90
      %p99 = scmp.eq.s32.totalorder %s32, 0
      %p100 = por %p98, %p99
      %p101 = scmp.ne.s32.totalorder %s89, %s90
      %p102 = scmp.eq.s32.totalorder %s33, 1
      %p103 = por %p101, %p102
      %p105 = scmp.ne.s32.totalorder %s90, %s104
      %p106 = scmp.eq.s32.totalorder %s33, 0
      %p107 = por %p105, %p106
      %s109 = sadd.s32 %s108, 1
      %p112 = scmp.eq.s32.totalorder %s27, 1
      %p113 = scmp.ne.s32.totalorder %s108, %s110
      %p114 = scmp.eq.s32.totalorder %s27, 0
      %p115 = por %p113, %p114
      %p116 = scmp.ne.s32.totalorder %s108, %s110
      %p117 = scmp.eq.s32.totalorder %s32, 1
      %p118 = por %p116, %p117
      %p119 = scmp.ne.s32.totalorder %s110, %s111
      %p120 = scmp.eq.s32.totalorder %s32, 0
      %p121 = por %p119, %p120
      %p122 = scmp.ne.s32.totalorder %s110, %s111
      %p123 = scmp.eq.s32.totalorder %s33, 1
      %p124 = por %p122, %p123
      %p126 = scmp.ne.s32.totalorder %s111, %s125
      %p127 = scmp.eq.s32.totalorder %s33, 0
      %p128 = por %p126, %p127
      %s130 = sadd.s32 %s129, 1
      %p133 = scmp.eq.s32.totalorder %s27, 1
      %p134 = scmp.ne.s32.totalorder %s129, %s131
      %p135 = scmp.eq.s32.totalorder %s27, 0
      %p136 = por %p134, %p135
      %p137 = scmp.ne.s32.totalorder %s129, %s131
      %p138 = scmp.eq.s32.totalorder %s32, 1
      %p139 = por %p137, %p138
      %p140 = scmp.ne.s32.totalorder %s131, %s132
      %p141 = scmp.eq.s32.totalorder %s32, 0
      %p142 = por %p140, %p141
      %p143 = scmp.ne.s32.totalorder %s131, %s132
      %p144 = scmp.eq.s32.totalorder %s33, 1
      %p145 = por %p143, %p144
      %p147 = scmp.ne.s32.totalorder %s132, %s146
      %p148 = scmp.eq.s32.totalorder %s33, 0
      %p149 = por %p147, %p148
      %s151 = sadd.s32 %s150, 1
      %p154 = scmp.eq.s32.totalorder %s27, 1
      %p155 = scmp.ne.s32.totalorder %s150, %s152
      %p156 = scmp.eq.s32.totalorder %s27, 0
      %p157 = por %p155, %p156
      %p158 = scmp.ne.s32.totalorder %s150, %s152
      %p159 = scmp.eq.s32.totalorder %s32, 1
      %p160 = por %p158, %p159
      %p161 = scmp.ne.s32.totalorder %s152, %s153
      %p162 = scmp.eq.s32.totalorder %s32, 0
      %p163 = por %p161, %p162
      %p164 = scmp.ne.s32.totalorder %s152, %s153
      %p165 = scmp.eq.s32.totalorder %s33, 1
      %p166 = por %p164, %p165
      %p168 = scmp.ne.s32.totalorder %s153, %s167
      %p169 = scmp.eq.s32.totalorder %s33, 0
      %p170 = por %p168, %p169
      %s172 = sadd.s32 %s171, 1
      %p175 = scmp.eq.s32.totalorder %s27, 1
      %p176 = scmp.ne.s32.totalorder %s171, %s173
      %p177 = scmp.eq.s32.totalorder %s27, 0
      %p178 = por %p176, %p177
      %p179 = scmp.ne.s32.totalorder %s171, %s173
      %p180 = scmp.eq.s32.totalorder %s32, 1
      %p181 = por %p179, %p180
      %p182 = scmp.ne.s32.totalorder %s173, %s174
      %p183 = scmp.eq.s32.totalorder %s32, 0
      %p184 = por %p182, %p183
      %p185 = scmp.ne.s32.totalorder %s173, %s174
      %p186 = scmp.eq.s32.totalorder %s33, 1
      %p187 = por %p185, %p186
      %p189 = scmp.ne.s32.totalorder %s174, %s188
      %p190 = scmp.eq.s32.totalorder %s33, 0
      %p191 = por %p189, %p190
      %s193 = sadd.s32 %s192, 1
      %p196 = scmp.eq.s32.totalorder %s27, 1
      %p197 = scmp.ne.s32.totalorder %s192, %s194
      %p198 = scmp.eq.s32.totalorder %s27, 0
      %p199 = por %p197, %p198
      %p200 = scmp.ne.s32.totalorder %s192, %s194
      %p201 = scmp.eq.s32.totalorder %s32, 1
      %p202 = por %p200, %p201
      %p203 = scmp.ne.s32.totalorder %s194, %s195
      %p204 = scmp.eq.s32.totalorder %s32, 0
      %p205 = por %p203, %p204
      %p206 = scmp.ne.s32.totalorder %s194, %s195
      %p207 = scmp.eq.s32.totalorder %s33, 1
      %p208 = por %p206, %p207
      %p210 = scmp.ne.s32.totalorder %s195, %s209
      %p211 = scmp.eq.s32.totalorder %s33, 0
      %p212 = por %p210, %p211
      %s214 = sadd.s32 %s213, 1
      %p217 = scmp.eq.s32.totalorder %s27, 1
      %p218 = scmp.ne.s32.totalorder %s213, %s215
      %p219 = scmp.eq.s32.totalorder %s27, 0
      %p220 = por %p218, %p219
      %p221 = scmp.ne.s32.totalorder %s213, %s215
      %p222 = scmp.eq.s32.totalorder %s32, 1
      %p223 = por %p221, %p222
      %p224 = scmp.ne.s32.totalorder %s215, %s216
      %p225 = scmp.eq.s32.totalorder %s32, 0
      %p226 = por %p224, %p225
      %p227 = scmp.ne.s32.totalorder %s215, %s216
      %p228 = scmp.eq.s32.totalorder %s33, 1
      %p229 = por %p227, %p228
      %p231 = scmp.ne.s32.totalorder %s216, %s230
      %p232 = scmp.eq.s32.totalorder %s33, 0
      %p233 = por %p231, %p232
      %s235 = sadd.s32 %s234, 1
      %p238 = scmp.eq.s32.totalorder %s27, 1
      %p239 = scmp.ne.s32.totalorder %s234, %s236
      %p240 = scmp.eq.s32.totalorder %s27, 0
      %p241 = por %p239, %p240
      %p242 = scmp.ne.s32.totalorder %s234, %s236
      %p243 = scmp.eq.s32.totalorder %s32, 1
      %p244 = por %p242, %p243
      %p245 = scmp.ne.s32.totalorder %s236, %s237
      %p246 = scmp.eq.s32.totalorder %s32, 0
      %p247 = por %p245, %p246
      %p248 = scmp.ne.s32.totalorder %s236, %s237
      %p249 = scmp.eq.s32.totalorder %s33, 1
      %p250 = por %p248, %p249
      %p252 = scmp.ne.s32.totalorder %s237, %s251
      %p253 = scmp.eq.s32.totalorder %s33, 0
      %p254 = por %p252, %p253
      %s256 = sadd.s32 %s255, 1
      %p259 = scmp.eq.s32.totalorder %s27, 1
      %p260 = scmp.ne.s32.totalorder %s255, %s257
      %p261 = scmp.eq.s32.totalorder %s27, 0
      %p262 = por %p260, %p261
      %p263 = scmp.ne.s32.totalorder %s255, %s257
      %p264 = scmp.eq.s32.totalorder %s32, 1
      %p265 = por %p263, %p264
      %p266 = scmp.ne.s32.totalorder %s257, %s258
      %p267 = scmp.eq.s32.totalorder %s32, 0
      %p268 = por %p266, %p267
      %p269 = scmp.ne.s32.totalorder %s257, %s258
      %p270 = scmp.eq.s32.totalorder %s33, 1
      %p271 = por %p269, %p270
      %p273 = scmp.ne.s32.totalorder %s258, %s272
      %p274 = scmp.eq.s32.totalorder %s33, 0
      %p275 = por %p273, %p274
      %s277 = sadd.s32 %s276, 1
      %p280 = scmp.eq.s32.totalorder %s27, 1
      %p281 = scmp.ne.s32.totalorder %s276, %s278
      %p282 = scmp.eq.s32.totalorder %s27, 0
      %p283 = por %p281, %p282
      %p284 = scmp.ne.s32.totalorder %s276, %s278
      %p285 = scmp.eq.s32.totalorder %s32, 1
      %p286 = por %p284, %p285
      %p287 = scmp.ne.s32.totalorder %s278, %s279
      %p288 = scmp.eq.s32.totalorder %s32, 0
      %p289 = por %p287, %p288
      %p290 = scmp.ne.s32.totalorder %s278, %s279
      %p291 = scmp.eq.s32.totalorder %s33, 1
      %p292 = por %p290, %p291
      %p294 = scmp.ne.s32.totalorder %s279, %s293
      %p295 = scmp.eq.s32.totalorder %s33, 0
      %p296 = por %p294, %p295
      %s297 = ssub.s32 %s27, %s34
      %p298 = scmp.eq.s32.totalorder %s297, 0
      %s300 = sadd.s32 %s299, 1
      %s301 = scalar_select %p298, %s299, %s300
      %p304 = pneg %p298
      %p305 = scmp.eq.s32.totalorder %s27, 1
      %p306 = por %p304, %p305
      %p307 = scmp.ne.s32.totalorder %s299, %s302
      %p308 = scmp.eq.s32.totalorder %s27, 0
      %p309 = por %p307, %p308
      %p310 = scmp.ne.s32.totalorder %s299, %s302
      %p311 = scmp.eq.s32.totalorder %s32, 1
      %p312 = por %p310, %p311
      %p313 = scmp.ne.s32.totalorder %s302, %s303
      %p314 = scmp.eq.s32.totalorder %s32, 0
      %p315 = por %p313, %p314
      %p316 = scmp.ne.s32.totalorder %s302, %s303
      %p317 = scmp.eq.s32.totalorder %s33, 1
      %p318 = por %p316, %p317
      %p320 = scmp.ne.s32.totalorder %s303, %s319
      %p321 = scmp.eq.s32.totalorder %s33, 0
      %p322 = por %p320, %p321
      %p323 = scmp.le.s32.totalorder 1, %s27
      %p324 = scmp.lt.s32.totalorder %s27, 3
      %p325 = pnand %p323, %p324
      %p326 = pneg %p325
      // Predicated region
      $region9: #{tpu_custom_call.1} parent=5 // pred_check
        _
      $region10: #{tpu_custom_call.1} parent=5 // pred_check_branch
        %328 = sbr.rel (%p325) target = $region12
      $region11: #{tpu_custom_call.1} parent=5 // pred_region
        %s329 = ssub.s32 %s27, 1
        // Predicated region
        $region13: #{tpu_custom_call.1} parent=11 // pred_check
          %p330 = pneg %p100
        $region14: #{tpu_custom_call.1} parent=11 // pred_check_branch
          %332 = sbr.rel (%p330) target = $region16
        $region15: #{tpu_custom_call.1} parent=11 // pred_region
          _
        $region16: #{tpu_custom_call.1} parent=11 // pred_fallthru
          _
        // Predicated region
        $region17: #{tpu_custom_call.1} parent=11 // pred_check
          %p333 = pneg %p121
        $region18: #{tpu_custom_call.1} parent=11 // pred_check_branch
          %335 = sbr.rel (%p333) target = $region20
        $region19: #{tpu_custom_call.1} parent=11 // pred_region
          _
        $region20: #{tpu_custom_call.1} parent=11 // pred_fallthru
          _
        // Predicated region
        $region21: #{tpu_custom_call.1} parent=11 // pred_check
          %p336 = pneg %p142
        $region22: #{tpu_custom_call.1} parent=11 // pred_check_branch
          %338 = sbr.rel (%p336) target = $region24
        $region23: #{tpu_custom_call.1} parent=11 // pred_region
          %s340 = ssub.s32 2048, 2048
          %341 = vsyncadd [#allocation7], %s340
          %s342 = sshll.u32 [#allocation6], 4
          %s343 = int_to_ptr.vmem [resolvable:$true] %s342
          %348 = dma.hbm_to_vmem [thread:$0]  %s4, 2048, %s343, [#allocation7], 128, 128, 8
        $region24: #{tpu_custom_call.1} parent=11 // pred_fallthru
          _
        // Predicated region
        $region25: #{tpu_custom_call.1} parent=11 // pred_check
          %p349 = pneg %p163
        $region26: #{tpu_custom_call.1} parent=11 // pred_check_branch
          %351 = sbr.rel (%p349) target = $region28
        $region27: #{tpu_custom_call.1} parent=11 // pred_region
          %s353 = ssub.s32 9216, 9216
          %354 = vsyncadd [#allocation7], %s353
          %s355 = sshll.u32 [#allocation8], 4
          %s356 = int_to_ptr.vmem [resolvable:$true] %s355
          %361 = dma.hbm_to_vmem [thread:$0]  %s5, 9216, %s356, [#allocation7], 64, 64, 4
        $region28: #{tpu_custom_call.1} parent=11 // pred_fallthru
          _
        // Predicated region
        $region29: #{tpu_custom_call.1} parent=11 // pred_check
          %p362 = pneg %p184
        $region30: #{tpu_custom_call.1} parent=11 // pred_check_branch
          %364 = sbr.rel (%p362) target = $region32
        $region31: #{tpu_custom_call.1} parent=11 // pred_region
          _
        $region32: #{tpu_custom_call.1} parent=11 // pred_fallthru
          _
        // Predicated region
        $region33: #{tpu_custom_call.1} parent=11 // pred_check
          %p365 = pneg %p205
        $region34: #{tpu_custom_call.1} parent=11 // pred_check_branch
          %367 = sbr.rel (%p365) target = $region36
        $region35: #{tpu_custom_call.1} parent=11 // pred_region
          _
        $region36: #{tpu_custom_call.1} parent=11 // pred_fallthru
          _
        // Predicated region
        $region37: #{tpu_custom_call.1} parent=11 // pred_check
          %p368 = pneg %p226
        $region38: #{tpu_custom_call.1} parent=11 // pred_check_branch
          %370 = sbr.rel (%p368) target = $region40
        $region39: #{tpu_custom_call.1} parent=11 // pred_region
          %s372 = ssub.s32 2048, 2048
          %373 = vsyncadd [#allocation10], %s372
          %s374 = sshll.u32 [#allocation9], 4
          %s375 = int_to_ptr.vmem [resolvable:$true] %s374
          %380 = dma.hbm_to_vmem [thread:$0]  %s8, 2048, %s375, [#allocation10], 128, 128, 8
        $region40: #{tpu_custom_call.1} parent=11 // pred_fallthru
          _
        // Predicated region
        $region41: #{tpu_custom_call.1} parent=11 // pred_check
          %p381 = pneg %p247
        $region42: #{tpu_custom_call.1} parent=11 // pred_check_branch
          %383 = sbr.rel (%p381) target = $region44
        $region43: #{tpu_custom_call.1} parent=11 // pred_region
          %s385 = ssub.s32 9216, 9216
          %386 = vsyncadd [#allocation10], %s385
          %s387 = sshll.u32 [#allocation11], 4
          %s388 = int_to_ptr.vmem [resolvable:$true] %s387
          %393 = dma.hbm_to_vmem [thread:$0]  %s9, 9216, %s388, [#allocation10], 64, 64, 4
        $region44: #{tpu_custom_call.1} parent=11 // pred_fallthru
          _
        // Predicated region
        $region45: #{tpu_custom_call.1} parent=11 // pred_check
          %p394 = pneg %p268
        $region46: #{tpu_custom_call.1} parent=11 // pred_check_branch
          %396 = sbr.rel (%p394) target = $region48
        $region47: #{tpu_custom_call.1} parent=11 // pred_region
          _
        $region48: #{tpu_custom_call.1} parent=11 // pred_fallthru
          _
        // Predicated region
        $region49: #{tpu_custom_call.1} parent=11 // pred_check
          %p397 = pneg %p289
        $region50: #{tpu_custom_call.1} parent=11 // pred_check_branch
          %399 = sbr.rel (%p397) target = $region52
        $region51: #{tpu_custom_call.1} parent=11 // pred_region
          %s401 = ssub.s32 1024, 1024
          %402 = vsyncadd [#allocation13], %s401
          %s403 = sshll.u32 [#allocation12], 4
          %s404 = int_to_ptr.vmem [resolvable:$true] %s403
          %409 = dma.hbm_to_vmem [thread:$0]  %s11, 1024, %s404, [#allocation13], 64, 64, 4
        $region52: #{tpu_custom_call.1} parent=11 // pred_fallthru
          _
      $region12: #{tpu_custom_call.1} parent=5 // pred_fallthru
        _
      %p410 = scmp.lt.s32.totalorder %s27, 2
      // Predicated region
      $region53: #{tpu_custom_call.1} parent=5 // pred_check
        %p411 = pneg %p410
      $region54: #{tpu_custom_call.1} parent=5 // pred_check_branch
        %413 = sbr.rel (%p411) target = $region56
      $region55: #{tpu_custom_call.1} parent=5 // pred_region
        // Predicated region
        $region57: #{tpu_custom_call.1} parent=55 // pred_check
          %p414 = pneg %p47
        $region58: #{tpu_custom_call.1} parent=55 // pred_check_branch
          %416 = sbr.rel (%p414) target = $region60
        $region59: #{tpu_custom_call.1} parent=55 // pred_region
          %s417 = sand.u32 %s37, 1
          %s418 = scalar_lea.sflag [#allocation4], %s417
          %s419 = sand.u32 %s37, 1
          %s420 = smul.addr %s419, 32
          %s421 = scalar_lea.vmem [#allocation3], %s420
          %s423 = ssub.s32 512, 512
          %424 = vsyncadd %s418, %s423
          %s425 = smul.addr %s27, 8
          %s426 = smul.addr %s425, 64
          %s427 = scalar_lea.hbm %s0, %s426
          %s428 = sshll.u32 %s421, 4
          %s429 = int_to_ptr.vmem [resolvable:$true] %s428
          %434 = dma.hbm_to_vmem [thread:$0]  %s427, 512, %s429, %s418, 64, 64, 4
        $region60: #{tpu_custom_call.1} parent=55 // pred_fallthru
          _
        // Predicated region
        $region61: #{tpu_custom_call.1} parent=55 // pred_check
          %p435 = pneg %p73
        $region62: #{tpu_custom_call.1} parent=55 // pred_check_branch
          %437 = sbr.rel (%p435) target = $region64
        $region63: #{tpu_custom_call.1} parent=55 // pred_region
          %p438 = scmp.lt.s32.totalorder %s27, 1
          %s439 = scalar_select %p438, %s27, 1
          %s440 = scalar_lea.vmem %s1, %s439
        $region64: #{tpu_custom_call.1} parent=55 // pred_fallthru
          _
      $region56: #{tpu_custom_call.1} parent=5 // pred_fallthru
        _
      %p441 = scmp.le.s32.totalorder 1, %s27
      %p442 = scmp.lt.s32.totalorder %s27, 3
      %p443 = pnand %p441, %p442
      %p444 = pneg %p443
      // Predicated region
      $region65: #{tpu_custom_call.1} parent=5 // pred_check
        _
      $region66: #{tpu_custom_call.1} parent=5 // pred_check_branch
        %446 = sbr.rel (%p443) target = $region68
      $region67: #{tpu_custom_call.1} parent=5 // pred_region
        %s447 = ssub.s32 %s27, 1
        %s448 = sand.u32 %s40, 1
        %s449 = scalar_lea.sflag [#allocation4], %s448
        %s450 = sand.u32 %s40, 1
        %s451 = smul.addr %s450, 32
        %s452 = scalar_lea.vmem [#allocation3], %s451
        // Predicated region
        $region69: #{tpu_custom_call.1} parent=67 // pred_check
          %p453 = pneg %p53
        $region70: #{tpu_custom_call.1} parent=67 // pred_check_branch
          %455 = sbr.rel (%p453) target = $region72
        $region71: #{tpu_custom_call.1} parent=67 // pred_region
          %456 = dma.done %s449, 512
        $region72: #{tpu_custom_call.1} parent=67 // pred_fallthru
          _
        // Predicated region
        $region73: #{tpu_custom_call.1} parent=67 // pred_check
          %p457 = pneg %p142
        $region74: #{tpu_custom_call.1} parent=67 // pred_check_branch
          %459 = sbr.rel (%p457) target = $region76
        $region75: #{tpu_custom_call.1} parent=67 // pred_region
          %460 = dma.done [#allocation7], 2048
        $region76: #{tpu_custom_call.1} parent=67 // pred_fallthru
          _
        // Predicated region
        $region77: #{tpu_custom_call.1} parent=67 // pred_check
          %p461 = pneg %p163
        $region78: #{tpu_custom_call.1} parent=67 // pred_check_branch
          %463 = sbr.rel (%p461) target = $region80
        $region79: #{tpu_custom_call.1} parent=67 // pred_region
          %464 = dma.done [#allocation7], 9216
        $region80: #{tpu_custom_call.1} parent=67 // pred_fallthru
          _
        // Predicated region
        $region81: #{tpu_custom_call.1} parent=67 // pred_check
          %p465 = pneg %p226
        $region82: #{tpu_custom_call.1} parent=67 // pred_check_branch
          %467 = sbr.rel (%p465) target = $region84
        $region83: #{tpu_custom_call.1} parent=67 // pred_region
          %468 = dma.done [#allocation10], 2048
        $region84: #{tpu_custom_call.1} parent=67 // pred_fallthru
          _
        // Predicated region
        $region85: #{tpu_custom_call.1} parent=67 // pred_check
          %p469 = pneg %p247
        $region86: #{tpu_custom_call.1} parent=67 // pred_check_branch
          %471 = sbr.rel (%p469) target = $region88
        $region87: #{tpu_custom_call.1} parent=67 // pred_region
          %472 = dma.done [#allocation10], 9216
        $region88: #{tpu_custom_call.1} parent=67 // pred_fallthru
          _
        // Predicated region
        $region89: #{tpu_custom_call.1} parent=67 // pred_check
          %p473 = pneg %p289
        $region90: #{tpu_custom_call.1} parent=67 // pred_check_branch
          %475 = sbr.rel (%p473) target = $region92
        $region91: #{tpu_custom_call.1} parent=67 // pred_region
          %476 = dma.done [#allocation13], 1024
        $region92: #{tpu_custom_call.1} parent=67 // pred_fallthru
          _
        %s477 = sand.u32 %s40, 1
        %s478 = scalar_lea.sflag [#allocation4], %s477
        %s479 = sand.u32 %s40, 1
        %s480 = smul.addr %s479, 32
        %s481 = scalar_lea.vmem [#allocation3], %s480
        %p482 = pneg %p53
        %p483 = pneg %p50
        %p484 = scmp.lt.s32.totalorder %s32, 1
        %s485 = scalar_select %p484, %s32, 1
        %s486 = scalar_lea.vmem %s1, %s485
        %p487 = pneg %p79
        %p488 = pneg %p76
        %p489 = pneg %p100
        %p490 = pneg %p97
        %p491 = pneg %p121
        %p492 = pneg %p118
        %p493 = pneg %p142
        %p494 = pneg %p139
        %p495 = pneg %p163
        %p496 = pneg %p160
        %p497 = pneg %p184
        %p498 = pneg %p181
        %p499 = pneg %p205
        %p500 = pneg %p202
        %p501 = pneg %p226
        %p502 = pneg %p223
        %p503 = pneg %p247
        %p504 = pneg %p244
        %p505 = pneg %p268
        %p506 = pneg %p265
        %p507 = pneg %p289
        %p508 = pneg %p286
        %p509 = pneg %p315
        %p510 = pneg %p312
        %s511 = sand.u32 %s302, 1
        %s512 = scalar_lea.sflag [#allocation5], %s511
        %s513 = sand.u32 %s302, 1
        %s514 = smul.addr %s513, 32
        %s515 = scalar_lea.vmem [#allocation14], %s514
        %p516 = scmp.lt.s32.totalorder %s32, 1
        %s517 = scalar_select %p516, %s32, 1
        %s518 = scalar_lea.vmem %s1, %s517
        %v520 = vld [vmem:[%s452] sm:$0xf]
        %v521 = vld [vmem:[%s452 + $0x4] sm:$0xf]
        %v522 = vld [vmem:[%s452 + $0x8] sm:$0xf]
        %v523 = vld [vmem:[%s452 + $0xc] sm:$0xf]
        %v524 = vld [vmem:[%s452 + $0x10] sm:$0xf]
        %v525 = vld [vmem:[%s452 + $0x14] sm:$0xf]
        %v526 = vld [vmem:[%s452 + $0x18] sm:$0xf]
        %v527 = vld [vmem:[%s452 + $0x1c] sm:$0xf]
        %v528 = vunpack.c.l.bf16 %v520
        %v529 = vunpack.c.l.bf16 %v521
        %v530 = vunpack.c.l.bf16 %v522
        %v531 = vunpack.c.l.bf16 %v523
        %v532 = vunpack.c.l.bf16 %v524
        %v533 = vunpack.c.l.bf16 %v525
        %v534 = vunpack.c.l.bf16 %v526
        %v535 = vunpack.c.l.bf16 %v527
        %v536 = vadd.f32 %v528, %v529
        %v537 = vadd.f32 %v536, %v530
        %v538 = vadd.f32 %v537, %v531
        %v539 = vadd.f32 %v538, %v532
        %v540 = vadd.f32 %v539, %v533
        %v541 = vadd.f32 %v540, %v534
        %v542 = vadd.f32 %v541, %v535
        %v543 = vrot.slane %v542, 4
        %v544 = vadd.f32 %v542, %v543
        %v545 = vrot.slane %v544, 2
        %v546 = vadd.f32 %v544, %v545
        %v547 = vrot.slane %v546, 1
        %v548 = vadd.f32 %v546, %v547
        %v549 = vmul.f32 %v528, %v528
        %v550 = vmul.f32 %v529, %v529
        %v551 = vmul.f32 %v530, %v530
        %v552 = vmul.f32 %v531, %v531
        %v553 = vmul.f32 %v532, %v532
        %v554 = vmul.f32 %v533, %v533
        %v555 = vmul.f32 %v534, %v534
        %v556 = vmul.f32 %v535, %v535
        %v557 = vadd.f32 %v549, %v550
        %v558 = vadd.f32 %v557, %v551
        %v559 = vadd.f32 %v558, %v552
        %v560 = vadd.f32 %v559, %v553
        %v561 = vadd.f32 %v560, %v554
        %v562 = vadd.f32 %v561, %v555
        %v563 = vadd.f32 %v562, %v556
        %v564 = vrot.slane %v563, 4
        %v565 = vadd.f32 %v563, %v564
        %v566 = vrot.slane %v565, 2
        %v567 = vadd.f32 %v565, %v566
        %v568 = vrot.slane %v567, 1
        %v569 = vadd.f32 %v567, %v568
        %v570 = vld [vmem:[#allocation6] sm:$0xff]
        %v571 = vld [vmem:[#allocation6 + $0x8] sm:$0xff]
        %v572 = vld [vmem:[#allocation6 + $0x10] sm:$0xff]
        %v573 = vld [vmem:[#allocation6 + $0x18] sm:$0xff]
        %v574 = vld [vmem:[#allocation6 + $0x20] sm:$0xff]
        %v575 = vld [vmem:[#allocation6 + $0x28] sm:$0xff]
        %v576 = vld [vmem:[#allocation6 + $0x30] sm:$0xff]
        %v577 = vld [vmem:[#allocation6 + $0x38] sm:$0xff]
        %v578 = vld [vmem:[#allocation6 + $0x40] sm:$0xff]
        %v579 = vld [vmem:[#allocation6 + $0x48] sm:$0xff]
        %v580 = vld [vmem:[#allocation6 + $0x50] sm:$0xff]
        %v581 = vld [vmem:[#allocation6 + $0x58] sm:$0xff]
        %v582 = vld [vmem:[#allocation6 + $0x60] sm:$0xff]
        %v583 = vld [vmem:[#allocation6 + $0x68] sm:$0xff]
        %v584 = vld [vmem:[#allocation6 + $0x70] sm:$0xff]
        %v585 = vld [vmem:[#allocation6 + $0x78] sm:$0xff]
        %586 = vmatprep.subr.mxu0 0.0
        %587 = vmatpush1.msra.mxu0 %v570
        %588 = vmatprep.subr.mxu0 0.0
        %589 = vmatpush1.msra.mxu0 %v571
        %590 = vmatprep.subr.mxu0 0.0
        %591 = vmatpush1.msra.mxu0 %v572
        %592 = vmatprep.subr.mxu0 0.0
        %593 = vmatpush1.msra.mxu0 %v573
        %594 = vmatprep.subr.mxu0 0.0
        %595 = vmatpush1.msra.mxu0 %v574
        %596 = vmatprep.subr.mxu0 0.0
        %597 = vmatpush1.msra.mxu0 %v575
        %598 = vmatprep.subr.mxu0 0.0
        %599 = vmatpush1.msra.mxu0 %v576
        %600 = vmatprep.subr.mxu0 0.0
        %601 = vmatpush1.msra.mxu0 %v577
        %602 = vmatprep.subr.mxu0 0.0
        %603 = vmatpush1.msra.mxu0 %v578
        %604 = vmatprep.subr.mxu0 0.0
        %605 = vmatpush1.msra.mxu0 %v579
        %606 = vmatprep.subr.mxu0 0.0
        %607 = vmatpush1.msra.mxu0 %v580
        %608 = vmatprep.subr.mxu0 0.0
        %609 = vmatpush1.msra.mxu0 %v581
        %610 = vmatprep.subr.mxu0 0.0
        %611 = vmatpush1.msra.mxu0 %v582
        %612 = vmatprep.subr.mxu0 0.0
        %613 = vmatpush1.msra.mxu0 %v583
        %614 = vmatprep.subr.mxu0 0.0
        %615 = vmatpush1.msra.mxu0 %v584
        %616 = vmatprep.subr.mxu0 0.0
        %617 = vmatpush1.msra.mxu0 %v585
        %618 = vmatprep.subr.mxu0 0.0
        %619 = vmatpush1.msra.mxu0 0.0
        %620 = vmatprep.subr.mxu0 0.0
        %621 = vmatpush1.msra.mxu0 0.0
        %622 = vmatprep.subr.mxu0 0.0
        %623 = vmatpush1.msra.mxu0 0.0
        %624 = vmatprep.subr.mxu0 0.0
        %625 = vmatpush1.msra.mxu0 0.0
        %626 = vmatprep.subr.mxu0 0.0
        %627 = vmatpush1.msra.mxu0 0.0
        %628 = vmatprep.subr.mxu0 0.0
        %629 = vmatpush1.msra.mxu0 0.0
        %630 = vmatprep.subr.mxu0 0.0
        %631 = vmatpush1.msra.mxu0 0.0
        %632 = vmatprep.subr.mxu0 0.0
        %633 = vmatpush1.msra.mxu0 0.0
        %634 = vmatprep.subr.mxu0 0.0
        %635 = vmatpush1.msra.mxu0 0.0
        %636 = vmatprep.subr.mxu0 0.0
        %637 = vmatpush1.msra.mxu0 0.0
        %638 = vmatprep.subr.mxu0 0.0
        %639 = vmatpush1.msra.mxu0 0.0
        %640 = vmatprep.subr.mxu0 0.0
        %641 = vmatpush1.msra.mxu0 0.0
        %642 = vmatprep.subr.mxu0 0.0
        %643 = vmatpush1.msra.mxu0 0.0
        %644 = vmatprep.subr.mxu0 0.0
        %645 = vmatpush1.msra.mxu0 0.0
        %646 = vmatprep.subr.mxu0 0.0
        %647 = vmatpush1.msra.mxu0 0.0
        %648 = vmatprep.subr.mxu0 0.0
        %649 = vmatpush1.msra.mxu0 0.0
        %650 = vmatprep.mubr.f32.mxu0 0.0
        %651 = vmatmul.mubr.f32.gmra.mrb[0].mxu0 %v548
        %v652 = vpop.f32.mrb[0].mxu0
        %v653 = vadd.f32 0.0, %v652
        %v654 = vpop.f32.mrb[0].mxu0
        %655 = vdwg.mxu0
        %v656 = vmul.f32 %v653, 0.0078125
        %657 = vmatprep.subr.mxu0 0.0
        %658 = vmatpush1.msra.mxu0 %v570
        %659 = vmatprep.subr.mxu0 0.0
        %660 = vmatpush1.msra.mxu0 %v571
        %661 = vmatprep.subr.mxu0 0.0
        %662 = vmatpush1.msra.mxu0 %v572
        %663 = vmatprep.subr.mxu0 0.0
        %664 = vmatpush1.msra.mxu0 %v573
        %665 = vmatprep.subr.mxu0 0.0
        %666 = vmatpush1.msra.mxu0 %v574
        %667 = vmatprep.subr.mxu0 0.0
        %668 = vmatpush1.msra.mxu0 %v575
        %669 = vmatprep.subr.mxu0 0.0
        %670 = vmatpush1.msra.mxu0 %v576
        %671 = vmatprep.subr.mxu0 0.0
        %672 = vmatpush1.msra.mxu0 %v577
        %673 = vmatprep.subr.mxu0 0.0
        %674 = vmatpush1.msra.mxu0 %v578
        %675 = vmatprep.subr.mxu0 0.0
        %676 = vmatpush1.msra.mxu0 %v579
        %677 = vmatprep.subr.mxu0 0.0
        %678 = vmatpush1.msra.mxu0 %v580
        %679 = vmatprep.subr.mxu0 0.0
        %680 = vmatpush1.msra.mxu0 %v581
        %681 = vmatprep.subr.mxu0 0.0
        %682 = vmatpush1.msra.mxu0 %v582
        %683 = vmatprep.subr.mxu0 0.0
        %684 = vmatpush1.msra.mxu0 %v583
        %685 = vmatprep.subr.mxu0 0.0
        %686 = vmatpush1.msra.mxu0 %v584
        %687 = vmatprep.subr.mxu0 0.0
        %688 = vmatpush1.msra.mxu0 %v585
        %689 = vmatprep.subr.mxu0 0.0
        %690 = vmatpush1.msra.mxu0 0.0
        %691 = vmatprep.subr.mxu0 0.0
        %692 = vmatpush1.msra.mxu0 0.0
        %693 = vmatprep.subr.mxu0 0.0
        %694 = vmatpush1.msra.mxu0 0.0
        %695 = vmatprep.subr.mxu0 0.0
        %696 = vmatpush1.msra.mxu0 0.0
        %697 = vmatprep.subr.mxu0 0.0
        %698 = vmatpush1.msra.mxu0 0.0
        %699 = vmatprep.subr.mxu0 0.0
        %700 = vmatpush1.msra.mxu0 0.0
        %701 = vmatprep.subr.mxu0 0.0
        %702 = vmatpush1.msra.mxu0 0.0
        %703 = vmatprep.subr.mxu0 0.0
        %704 = vmatpush1.msra.mxu0 0.0
        %705 = vmatprep.subr.mxu0 0.0
        %706 = vmatpush1.msra.mxu0 0.0
        %707 = vmatprep.subr.mxu0 0.0
        %708 = vmatpush1.msra.mxu0 0.0
        %709 = vmatprep.subr.mxu0 0.0
        %710 = vmatpush1.msra.mxu0 0.0
        %711 = vmatprep.subr.mxu0 0.0
        %712 = vmatpush1.msra.mxu0 0.0
        %713 = vmatprep.subr.mxu0 0.0
        %714 = vmatpush1.msra.mxu0 0.0
        %715 = vmatprep.subr.mxu0 0.0
        %716 = vmatpush1.msra.mxu0 0.0
        %717 = vmatprep.subr.mxu0 0.0
        %718 = vmatpush1.msra.mxu0 0.0
        %719 = vmatprep.subr.mxu0 0.0
        %720 = vmatpush1.msra.mxu0 0.0
        %721 = vmatprep.mubr.f32.mxu0 0.0
        %722 = vmatmul.mubr.f32.gmra.mrb[0].mxu0 %v569
        %v723 = vpop.f32.mrb[0].mxu0
        %v724 = vadd.f32 0.0, %v723
        %v725 = vpop.f32.mrb[0].mxu0
        %726 = vdwg.mxu0
        %v727 = vmul.f32 %v724, 0.0078125
        %v728 = vmul.f32 %v656, %v656
        %v729 = vsub.f32 %v727, %v728
        %v730 = vadd.f32 %v729, 1e-06
        %v731 = vrsqrt.pop %v730
        %v732 = vld [vmem:[%s2] sm:$0x1]
        %v733 = vmul.f32 %v731, %v732
        %v734 = vld [vmem:[%s3] sm:$0x1]
        %v735 = vmul.f32 %v656, %v733
        %v736 = vsub.f32 %v734, %v735
        %v737 = vlaneseq
        %v738 = vshrl.u32 %v737, 7
        %v739 = vsub.s32 0, %v738
        %v740 = vrot.slane %v733, %v739
        %v741 = vmul.f32 %v528, %v740
        %v742 = vmul.f32 %v529, %v740
        %v743 = vmul.f32 %v530, %v740
        %v744 = vmul.f32 %v531, %v740
        %v745 = vmul.f32 %v532, %v740
        %v746 = vmul.f32 %v533, %v740
        %v747 = vmul.f32 %v534, %v740
        %v748 = vmul.f32 %v535, %v740
        %v750 = vlaneseq
        %v751 = vshrl.u32 %v750, 7
        %v752 = vsub.s32 0, %v751
        %v753 = vrot.slane %v736, %v752
        %v755 = vadd.f32 %v741, %v753
        %v756 = vadd.f32 %v742, %v753
        %v757 = vadd.f32 %v743, %v753
        %v758 = vadd.f32 %v744, %v753
        %v759 = vadd.f32 %v745, %v753
        %v760 = vadd.f32 %v746, %v753
        %v761 = vadd.f32 %v747, %v753
        %v762 = vadd.f32 %v748, %v753
        %v763 = vxor.u32 %v755, 2147483648
        %v764 = vxor.u32 %v756, 2147483648
        %v765 = vxor.u32 %v757, 2147483648
        %v766 = vxor.u32 %v758, 2147483648
        %v767 = vxor.u32 %v759, 2147483648
        %v768 = vxor.u32 %v760, 2147483648
        %v769 = vxor.u32 %v761, 2147483648
        %v770 = vxor.u32 %v762, 2147483648
        %v771 = vmul.f32 %v763, 1.442695
        %v772 = vpow.pop %v771
        %v773 = vmul.f32 %v764, 1.442695
        %v774 = vpow.pop %v773
        %v775 = vmul.f32 %v765, 1.442695
        %v776 = vpow.pop %v775
        %v777 = vmul.f32 %v766, 1.442695
        %v778 = vpow.pop %v777
        %v779 = vmul.f32 %v767, 1.442695
        %v780 = vpow.pop %v779
        %v781 = vmul.f32 %v768, 1.442695
        %v782 = vpow.pop %v781
        %v783 = vmul.f32 %v769, 1.442695
        %v784 = vpow.pop %v783
        %v785 = vmul.f32 %v770, 1.442695
        %v786 = vpow.pop %v785
        %v787 = vadd.f32 %v772, 1.0
        %v788 = vadd.f32 %v774, 1.0
        %v789 = vadd.f32 %v776, 1.0
        %v790 = vadd.f32 %v778, 1.0
        %v791 = vadd.f32 %v780, 1.0
        %v792 = vadd.f32 %v782, 1.0
        %v793 = vadd.f32 %v784, 1.0
        %v794 = vadd.f32 %v786, 1.0
        %v795 = vrcp.pop %v787
        %v796 = vmul.f32 1.0, %v795
        %v797 = vrcp.pop %v788
        %v798 = vmul.f32 1.0, %v797
        %v799 = vrcp.pop %v789
        %v800 = vmul.f32 1.0, %v799
        %v801 = vrcp.pop %v790
        %v802 = vmul.f32 1.0, %v801
        %v803 = vrcp.pop %v791
        %v804 = vmul.f32 1.0, %v803
        %v805 = vrcp.pop %v792
        %v806 = vmul.f32 1.0, %v805
        %v807 = vrcp.pop %v793
        %v808 = vmul.f32 1.0, %v807
        %v809 = vrcp.pop %v794
        %v810 = vmul.f32 1.0, %v809
        %v811 = vmul.f32 %v755, %v796
        %v812 = vmul.f32 %v756, %v798
        %v813 = vmul.f32 %v757, %v800
        %v814 = vmul.f32 %v758, %v802
        %v815 = vmul.f32 %v759, %v804
        %v816 = vmul.f32 %v760, %v806
        %v817 = vmul.f32 %v761, %v808
        %v818 = vmul.f32 %v762, %v810
        %v819 = vpack.c.bf16 %v811, %v811
        %v820 = vpack.c.bf16 %v812, %v812
        %v821 = vpack.c.bf16 %v813, %v813
        %v822 = vpack.c.bf16 %v814, %v814
        %v823 = vpack.c.bf16 %v815, %v815
        %v824 = vpack.c.bf16 %v816, %v816
        %v825 = vpack.c.bf16 %v817, %v817
        %v826 = vpack.c.bf16 %v818, %v818
        %v828 = vshrl.u32 %v826, 16
        %v830 = vrot.slane %v828, 3
        %v832 = vshrl.u32 %v819, 16
        %v834 = vrot.slane %v832, 3
        %v836 = vshrl.u32 %v820, 16
        %v838 = vrot.slane %v836, 3
        %v840 = vshrl.u32 %v821, 16
        %v842 = vrot.slane %v840, 3
        %v844 = vshrl.u32 %v822, 16
        %v846 = vrot.slane %v844, 3
        %v848 = vshrl.u32 %v823, 16
        %v850 = vrot.slane %v848, 3
        %v852 = vshrl.u32 %v824, 16
        %v854 = vrot.slane %v852, 3
        %v856 = vshrl.u32 %v825, 16
        %v858 = vrot.slane %v856, 3
        %v867 = vrot.slane %v828, 7
        %v868 = vshll.u32 %v826, 16
        %v870 = vor.u32 %v867, %v868
        %v871 = vrot.slane %v832, 7
        %v872 = vshll.u32 %v819, 16
        %v874 = vor.u32 %v871, %v872
        %v875 = vrot.slane %v836, 7
        %v876 = vshll.u32 %v820, 16
        %v878 = vor.u32 %v875, %v876
        %v879 = vrot.slane %v840, 7
        %v880 = vshll.u32 %v821, 16
        %v882 = vor.u32 %v879, %v880
        %v883 = vrot.slane %v844, 7
        %v884 = vshll.u32 %v822, 16
        %v886 = vor.u32 %v883, %v884
        %v887 = vrot.slane %v848, 7
        %v888 = vshll.u32 %v823, 16
        %v890 = vor.u32 %v887, %v888
        %v891 = vrot.slane %v852, 7
        %v892 = vshll.u32 %v824, 16
        %v894 = vor.u32 %v891, %v892
        %v895 = vrot.slane %v856, 7
        %v896 = vshll.u32 %v825, 16
        %v898 = vor.u32 %v895, %v896
        %v907 = vrot.slane %v868, 4
        %v908 = vrot.slane %v872, 4
        %v909 = vrot.slane %v876, 4
        %v910 = vrot.slane %v880, 4
        %v911 = vrot.slane %v884, 4
        %v912 = vrot.slane %v888, 4
        %v913 = vrot.slane %v892, 4
        %v914 = vrot.slane %v896, 4
        %vm923 = vcmask 1040384
        %vm924 = vsmask.f32 256
        %vm925 = vmand %vm923, %vm924
        %v926 = vsel %vm925, %v830, %v870
        %v927 = vsel %vm925, %v834, %v874
        %v928 = vsel %vm925, %v838, %v878
        %v929 = vsel %vm925, %v842, %v882
        %v930 = vsel %vm925, %v846, %v886
        %v931 = vsel %vm925, %v850, %v890
        %v932 = vsel %vm925, %v854, %v894
        %v933 = vsel %vm925, %v858, %v898
        %vm934 = vcmask 1044480
        %vm935 = vsmask.f32 4352
        %vm936 = vmand %vm934, %vm935
        %v937 = vsel %vm936, %v926, %v907
        %v938 = vsel %vm936, %v927, %v908
        %v939 = vsel %vm936, %v928, %v909
        %v940 = vsel %vm936, %v929, %v910
        %v941 = vsel %vm936, %v930, %v911
        %v942 = vsel %vm936, %v931, %v912
        %v943 = vsel %vm936, %v932, %v913
        %v944 = vsel %vm936, %v933, %v914
        %v953 = vunpack.c.l.b16 %v937
        %v954 = vunpack.c.h.b16 %v937
        %v955 = vunpack.c.l.b16 %v938
        %v956 = vunpack.c.h.b16 %v938
        %v957 = vunpack.c.l.b16 %v939
        %v958 = vunpack.c.h.b16 %v939
        %v959 = vunpack.c.l.b16 %v940
        %v960 = vunpack.c.h.b16 %v940
        %v961 = vunpack.c.l.b16 %v941
        %v962 = vunpack.c.h.b16 %v941
        %v963 = vunpack.c.l.b16 %v942
        %v964 = vunpack.c.h.b16 %v942
        %v965 = vunpack.c.l.b16 %v943
        %v966 = vunpack.c.h.b16 %v943
        %v967 = vunpack.c.l.b16 %v944
        %v968 = vunpack.c.h.b16 %v944
        %v969 = vpack.c.b16 %v953, %v953
        %v970 = vpack.c.b16 %v954, %v954
        %v971 = vpack.c.b16 %v955, %v955
        %v972 = vpack.c.b16 %v956, %v956
        %v973 = vpack.c.b16 %v957, %v957
        %v974 = vpack.c.b16 %v958, %v958
        %v975 = vpack.c.b16 %v959, %v959
        %v976 = vpack.c.b16 %v960, %v960
        %v977 = vpack.c.b16 %v961, %v961
        %v978 = vpack.c.b16 %v962, %v962
        %v979 = vpack.c.b16 %v963, %v963
        %v980 = vpack.c.b16 %v964, %v964
        %v981 = vpack.c.b16 %v965, %v965
        %v982 = vpack.c.b16 %v966, %v966
        %v983 = vpack.c.b16 %v967, %v967
        %v984 = vpack.c.b16 %v968, %v968
        %1001 = vst [vmem:[#allocation2] sm:$0xf] %v969
        %1002 = vst [vmem:[#allocation2 + $0x4] sm:$0x1] %v970
        %1003 = vst [vmem:[#allocation2 + $0x8] sm:$0xf] %v971
        %1004 = vst [vmem:[#allocation2 + $0xc] sm:$0x1] %v972
        %1005 = vst [vmem:[#allocation2 + $0x10] sm:$0xf] %v973
        %1006 = vst [vmem:[#allocation2 + $0x14] sm:$0x1] %v974
        %1007 = vst [vmem:[#allocation2 + $0x18] sm:$0xf] %v975
        %1008 = vst [vmem:[#allocation2 + $0x1c] sm:$0x1] %v976
        %1009 = vst [vmem:[#allocation2 + $0x20] sm:$0xf] %v977
        %1010 = vst [vmem:[#allocation2 + $0x24] sm:$0x1] %v978
        %1011 = vst [vmem:[#allocation2 + $0x28] sm:$0xf] %v979
        %1012 = vst [vmem:[#allocation2 + $0x2c] sm:$0x1] %v980
        %1013 = vst [vmem:[#allocation2 + $0x30] sm:$0xf] %v981
        %1014 = vst [vmem:[#allocation2 + $0x34] sm:$0x1] %v982
        %1015 = vst [vmem:[#allocation2 + $0x38] sm:$0xf] %v983
        %1016 = vst [vmem:[#allocation2 + $0x3c] sm:$0x1] %v984
        %1017 = vst [vmem:[#allocation2 + $0x40] sm:$0xf] %v969
        %1018 = vst [vmem:[#allocation2 + $0x44] sm:$0x1] %v970
        %1019 = vst [vmem:[#allocation2 + $0x48] sm:$0xf] %v971
        %1020 = vst [vmem:[#allocation2 + $0x4c] sm:$0x1] %v972
        %v1021 = vld [vmem:[#allocation2] sm:$0xf]
        %v1022 = vld [vmem:[#allocation2 + $0x8] sm:$0xf]
        %v1023 = vld [vmem:[#allocation2 + $0x10] sm:$0xf]
        %v1024 = vld [vmem:[#allocation2 + $0x18] sm:$0xf]
        %v1025 = vld [vmem:[#allocation2 + $0x20] sm:$0xf]
        %v1026 = vld [vmem:[#allocation2 + $0x28] sm:$0xf]
        %v1027 = vld [vmem:[#allocation2 + $0x30] sm:$0xf]
        %v1028 = vld [vmem:[#allocation2 + $0x38] sm:$0xf]
        %v1029 = vld [vmem:[#allocation2 + $0x40] sm:$0xf]
        %v1030 = vld [vmem:[#allocation2 + $0x48] sm:$0xf]
        %v1041 = vunpack.c.l.b16 %v1021
        %v1042 = vunpack.c.l.b16 %v1022
        %v1043 = vunpack.c.l.b16 %v1023
        %v1044 = vunpack.c.l.b16 %v1024
        %v1045 = vunpack.c.l.b16 %v1025
        %v1046 = vunpack.c.l.b16 %v1026
        %v1047 = vunpack.c.l.b16 %v1027
        %v1048 = vunpack.c.l.b16 %v1028
        %v1049 = vunpack.c.l.b16 %v1029
        %v1050 = vunpack.c.l.b16 %v1030
        %v1051 = vld [vmem:[#allocation8] sm:$0xf]
        %v1052 = vld [vmem:[#allocation8 + $0x4] sm:$0xf]
        %v1053 = vld [vmem:[#allocation8 + $0x8] sm:$0xf]
        %v1054 = vld [vmem:[#allocation8 + $0xc] sm:$0xf]
        %v1055 = vld [vmem:[#allocation8 + $0x10] sm:$0xf]
        %v1056 = vld [vmem:[#allocation8 + $0x14] sm:$0xf]
        %v1057 = vld [vmem:[#allocation8 + $0x18] sm:$0xf]
        %v1058 = vld [vmem:[#allocation8 + $0x1c] sm:$0xf]
        %v1059 = vld [vmem:[#allocation8 + $0x20] sm:$0xf]
        %v1060 = vld [vmem:[#allocation8 + $0x24] sm:$0xf]
        %v1061 = vld [vmem:[#allocation8 + $0x28] sm:$0xf]
        %v1062 = vld [vmem:[#allocation8 + $0x2c] sm:$0xf]
        %v1063 = vld [vmem:[#allocation8 + $0x30] sm:$0xf]
        %v1064 = vld [vmem:[#allocation8 + $0x34] sm:$0xf]
        %v1065 = vld [vmem:[#allocation8 + $0x38] sm:$0xf]
        %v1066 = vld [vmem:[#allocation8 + $0x3c] sm:$0xf]
        %v1067 = vld [vmem:[#allocation8 + $0x40] sm:$0xf]
        %v1068 = vld [vmem:[#allocation8 + $0x44] sm:$0xf]
        %v1069 = vld [vmem:[#allocation8 + $0x48] sm:$0xf]
        %v1070 = vld [vmem:[#allocation8 + $0x4c] sm:$0xf]
        %v1071 = vld [vmem:[#allocation8 + $0x50] sm:$0xf]
        %v1072 = vld [vmem:[#allocation8 + $0x54] sm:$0xf]
        %v1073 = vld [vmem:[#allocation8 + $0x58] sm:$0xf]
        %v1074 = vld [vmem:[#allocation8 + $0x5c] sm:$0xf]
        %v1075 = vld [vmem:[#allocation8 + $0x60] sm:$0xf]
        %v1076 = vld [vmem:[#allocation8 + $0x64] sm:$0xf]
        %v1077 = vld [vmem:[#allocation8 + $0x68] sm:$0xf]
        %v1078 = vld [vmem:[#allocation8 + $0x6c] sm:$0xf]
        %v1079 = vld [vmem:[#allocation8 + $0x70] sm:$0xf]
        %v1080 = vld [vmem:[#allocation8 + $0x74] sm:$0xf]
        %v1081 = vld [vmem:[#allocation8 + $0x78] sm:$0xf]
        %v1082 = vld [vmem:[#allocation8 + $0x7c] sm:$0xf]
        %v1083 = vld [vmem:[#allocation8 + $0x80] sm:$0xf]
        %v1084 = vld [vmem:[#allocation8 + $0x84] sm:$0xf]
        %v1085 = vld [vmem:[#allocation8 + $0x88] sm:$0xf]
        %v1086 = vld [vmem:[#allocation8 + $0x8c] sm:$0xf]
        %v1087 = vld [vmem:[#allocation8 + $0x90] sm:$0xf]
        %v1088 = vld [vmem:[#allocation8 + $0x94] sm:$0xf]
        %v1089 = vld [vmem:[#allocation8 + $0x98] sm:$0xf]
        %v1090 = vld [vmem:[#allocation8 + $0x9c] sm:$0xf]
        %v1091 = vld [vmem:[#allocation8 + $0xa0] sm:$0xf]
        %v1092 = vld [vmem:[#allocation8 + $0xa4] sm:$0xf]
        %v1093 = vld [vmem:[#allocation8 + $0xa8] sm:$0xf]
        %v1094 = vld [vmem:[#allocation8 + $0xac] sm:$0xf]
        %v1095 = vld [vmem:[#allocation8 + $0xb0] sm:$0xf]
        %v1096 = vld [vmem:[#allocation8 + $0xb4] sm:$0xf]
        %v1097 = vld [vmem:[#allocation8 + $0xb8] sm:$0xf]
        %v1098 = vld [vmem:[#allocation8 + $0xbc] sm:$0xf]
        %v1099 = vld [vmem:[#allocation2 + $0x4] sm:$0x1]
        %v1100 = vld [vmem:[#allocation2 + $0xc] sm:$0x1]
        %v1101 = vld [vmem:[#allocation2 + $0x14] sm:$0x1]
        %v1102 = vld [vmem:[#allocation2 + $0x1c] sm:$0x1]
        %v1103 = vld [vmem:[#allocation2 + $0x24] sm:$0x1]
        %v1104 = vld [vmem:[#allocation2 + $0x2c] sm:$0x1]
        %v1105 = vld [vmem:[#allocation2 + $0x34] sm:$0x1]
        %v1106 = vld [vmem:[#allocation2 + $0x3c] sm:$0x1]
        %v1107 = vld [vmem:[#allocation2 + $0x44] sm:$0x1]
        %v1108 = vld [vmem:[#allocation2 + $0x4c] sm:$0x1]
        %v1117 = vunpack.c.l.b16 %v1099
        %v1118 = vunpack.c.l.b16 %v1100
        %v1119 = vunpack.c.l.b16 %v1101
        %v1120 = vunpack.c.l.b16 %v1102
        %v1121 = vunpack.c.l.b16 %v1103
        %v1122 = vunpack.c.l.b16 %v1104
        %v1123 = vunpack.c.l.b16 %v1105
        %v1124 = vunpack.c.l.b16 %v1106
        %v1126 = vunpack.c.l.b16 %v1107
        %v1128 = vunpack.c.l.b16 %v1108
        %v1129 = vpack.c.b16 %v1042, %v1041
        %v1130 = vpack.c.b16 %v1043, %v1043
        %v1131 = vpack.c.b16 %v1118, %v1117
        %v1132 = vpack.c.b16 %v1119, %v1119
        %v1133 = vpack.c.b16 %v1043, %v1042
        %v1134 = vpack.c.b16 %v1044, %v1044
        %v1135 = vpack.c.b16 %v1119, %v1118
        %v1136 = vpack.c.b16 %v1120, %v1120
        %v1137 = vpack.c.b16 %v1044, %v1043
        %v1138 = vpack.c.b16 %v1045, %v1045
        %v1139 = vpack.c.b16 %v1120, %v1119
        %v1140 = vpack.c.b16 %v1121, %v1121
        %v1141 = vpack.c.b16 %v1045, %v1044
        %v1142 = vpack.c.b16 %v1046, %v1046
        %v1143 = vpack.c.b16 %v1121, %v1120
        %v1144 = vpack.c.b16 %v1122, %v1122
        %v1145 = vpack.c.b16 %v1046, %v1045
        %v1146 = vpack.c.b16 %v1047, %v1047
        %v1147 = vpack.c.b16 %v1122, %v1121
        %v1148 = vpack.c.b16 %v1123, %v1123
        %v1149 = vpack.c.b16 %v1047, %v1046
        %v1150 = vpack.c.b16 %v1048, %v1048
        %v1151 = vpack.c.b16 %v1123, %v1122
        %v1152 = vpack.c.b16 %v1124, %v1124
        %v1153 = vpack.c.b16 %v1048, %v1047
        %v1154 = vpack.c.b16 %v1049, %v1049
        %v1155 = vpack.c.b16 %v1124, %v1123
        %v1156 = vpack.c.b16 %v1126, %v1126
        %v1157 = vpack.c.b16 %v1049, %v1048
        %v1158 = vpack.c.b16 %v1050, %v1050
        %v1159 = vpack.c.b16 %v1126, %v1124
        %v1160 = vpack.c.b16 %v1128, %v1128
        %vm1161 = vsmask.f32 3328
        %vm1162 = vsmask.f32 7440
        %vm1163 = vmor %vm1161, %vm1162
        %v1165 = vshrl.u32 %v1129, 16
        %v1167 = vrot.slane %v1165, 4
        %v1168 = vshll.u32 %v1129, 16
        %v1170 = vrot.slane %v1168, 5
        %v1171 = vor.u32 %v1167, %v1170
        %v1172 = vrot.slane %v1171, 4
        %v1174 = vshll.u32 %v1131, 16
        %v1176 = vrot.slane %v1174, 5
        %v1177 = vsel %vm1163, %v1172, %v1176
        %v1179 = vshrl.u32 %v1130, 16
        %v1181 = vrot.slane %v1179, 4
        %v1182 = vshll.u32 %v1130, 16
        %v1184 = vrot.slane %v1182, 5
        %v1185 = vor.u32 %v1181, %v1184
        %v1186 = vrot.slane %v1185, 4
        %v1188 = vshll.u32 %v1132, 16
        %v1190 = vrot.slane %v1188, 5
        %v1191 = vsel %vm1163, %v1186, %v1190
        %v1193 = vshrl.u32 %v1133, 16
        %v1195 = vrot.slane %v1193, 4
        %v1196 = vshll.u32 %v1133, 16
        %v1198 = vrot.slane %v1196, 5
        %v1199 = vor.u32 %v1195, %v1198
        %v1200 = vrot.slane %v1199, 4
        %v1202 = vshll.u32 %v1135, 16
        %v1204 = vrot.slane %v1202, 5
        %v1205 = vsel %vm1163, %v1200, %v1204
        %v1207 = vshrl.u32 %v1134, 16
        %v1209 = vrot.slane %v1207, 4
        %v1210 = vshll.u32 %v1134, 16
        %v1212 = vrot.slane %v1210, 5
        %v1213 = vor.u32 %v1209, %v1212
        %v1214 = vrot.slane %v1213, 4
        %v1216 = vshll.u32 %v1136, 16
        %v1218 = vrot.slane %v1216, 5
        %v1219 = vsel %vm1163, %v1214, %v1218
        %v1221 = vshrl.u32 %v1137, 16
        %v1223 = vrot.slane %v1221, 4
        %v1224 = vshll.u32 %v1137, 16
        %v1226 = vrot.slane %v1224, 5
        %v1227 = vor.u32 %v1223, %v1226
        %v1228 = vrot.slane %v1227, 4
        %v1230 = vshll.u32 %v1139, 16
        %v1232 = vrot.slane %v1230, 5
        %v1233 = vsel %vm1163, %v1228, %v1232
        %v1235 = vshrl.u32 %v1138, 16
        %v1237 = vrot.slane %v1235, 4
        %v1238 = vshll.u32 %v1138, 16
        %v1240 = vrot.slane %v1238, 5
        %v1241 = vor.u32 %v1237, %v1240
        %v1242 = vrot.slane %v1241, 4
        %v1244 = vshll.u32 %v1140, 16
        %v1246 = vrot.slane %v1244, 5
        %v1247 = vsel %vm1163, %v1242, %v1246
        %v1249 = vshrl.u32 %v1141, 16
        %v1251 = vrot.slane %v1249, 4
        %v1252 = vshll.u32 %v1141, 16
        %v1254 = vrot.slane %v1252, 5
        %v1255 = vor.u32 %v1251, %v1254
        %v1256 = vrot.slane %v1255, 4
        %v1258 = vshll.u32 %v1143, 16
        %v1260 = vrot.slane %v1258, 5
        %v1261 = vsel %vm1163, %v1256, %v1260
        %v1263 = vshrl.u32 %v1142, 16
        %v1265 = vrot.slane %v1263, 4
        %v1266 = vshll.u32 %v1142, 16
        %v1268 = vrot.slane %v1266, 5
        %v1269 = vor.u32 %v1265, %v1268
        %v1270 = vrot.slane %v1269, 4
        %v1272 = vshll.u32 %v1144, 16
        %v1274 = vrot.slane %v1272, 5
        %v1275 = vsel %vm1163, %v1270, %v1274
        %v1277 = vshrl.u32 %v1145, 16
        %v1279 = vrot.slane %v1277, 4
        %v1280 = vshll.u32 %v1145, 16
        %v1282 = vrot.slane %v1280, 5
        %v1283 = vor.u32 %v1279, %v1282
        %v1284 = vrot.slane %v1283, 4
        %v1286 = vshll.u32 %v1147, 16
        %v1288 = vrot.slane %v1286, 5
        %v1289 = vsel %vm1163, %v1284, %v1288
        %v1291 = vshrl.u32 %v1146, 16
        %v1293 = vrot.slane %v1291, 4
        %v1294 = vshll.u32 %v1146, 16
        %v1296 = vrot.slane %v1294, 5
        %v1297 = vor.u32 %v1293, %v1296
        %v1298 = vrot.slane %v1297, 4
        %v1300 = vshll.u32 %v1148, 16
        %v1302 = vrot.slane %v1300, 5
        %v1303 = vsel %vm1163, %v1298, %v1302
        %v1305 = vshrl.u32 %v1149, 16
        %v1307 = vrot.slane %v1305, 4
        %v1308 = vshll.u32 %v1149, 16
        %v1310 = vrot.slane %v1308, 5
        %v1311 = vor.u32 %v1307, %v1310
        %v1312 = vrot.slane %v1311, 4
        %v1314 = vshll.u32 %v1151, 16
        %v1316 = vrot.slane %v1314, 5
        %v1317 = vsel %vm1163, %v1312, %v1316
        %v1319 = vshrl.u32 %v1150, 16
        %v1321 = vrot.slane %v1319, 4
        %v1322 = vshll.u32 %v1150, 16
        %v1324 = vrot.slane %v1322, 5
        %v1325 = vor.u32 %v1321, %v1324
        %v1326 = vrot.slane %v1325, 4
        %v1328 = vshll.u32 %v1152, 16
        %v1330 = vrot.slane %v1328, 5
        %v1331 = vsel %vm1163, %v1326, %v1330
        %v1333 = vshrl.u32 %v1153, 16
        %v1335 = vrot.slane %v1333, 4
        %v1336 = vshll.u32 %v1153, 16
        %v1338 = vrot.slane %v1336, 5
        %v1339 = vor.u32 %v1335, %v1338
        %v1340 = vrot.slane %v1339, 4
        %v1342 = vshll.u32 %v1155, 16
        %v1344 = vrot.slane %v1342, 5
        %v1345 = vsel %vm1163, %v1340, %v1344
        %v1347 = vshrl.u32 %v1154, 16
        %v1349 = vrot.slane %v1347, 4
        %v1350 = vshll.u32 %v1154, 16
        %v1352 = vrot.slane %v1350, 5
        %v1353 = vor.u32 %v1349, %v1352
        %v1354 = vrot.slane %v1353, 4
        %v1356 = vshll.u32 %v1156, 16
        %v1358 = vrot.slane %v1356, 5
        %v1359 = vsel %vm1163, %v1354, %v1358
        %v1361 = vshrl.u32 %v1157, 16
        %v1363 = vrot.slane %v1361, 4
        %v1364 = vshll.u32 %v1157, 16
        %v1366 = vrot.slane %v1364, 5
        %v1367 = vor.u32 %v1363, %v1366
        %v1368 = vrot.slane %v1367, 4
        %v1370 = vshll.u32 %v1159, 16
        %v1372 = vrot.slane %v1370, 5
        %v1373 = vsel %vm1163, %v1368, %v1372
        %v1375 = vshrl.u32 %v1158, 16
        %v1377 = vrot.slane %v1375, 4
        %v1378 = vshll.u32 %v1158, 16
        %v1380 = vrot.slane %v1378, 5
        %v1381 = vor.u32 %v1377, %v1380
        %v1382 = vrot.slane %v1381, 4
        %v1384 = vshll.u32 %v1160, 16
        %v1386 = vrot.slane %v1384, 5
        %v1387 = vsel %vm1163, %v1382, %v1386
        %s1388 = scalar_lea.vmem [#allocation8], 192
        %v1389 = vld [vmem:[%s1388] sm:$0xf]
        %v1390 = vld [vmem:[%s1388 + $0x4] sm:$0xf]
        %v1391 = vld [vmem:[%s1388 + $0x8] sm:$0xf]
        %v1392 = vld [vmem:[%s1388 + $0xc] sm:$0xf]
        %v1393 = vld [vmem:[%s1388 + $0x10] sm:$0xf]
        %v1394 = vld [vmem:[%s1388 + $0x14] sm:$0xf]
        %v1395 = vld [vmem:[%s1388 + $0x18] sm:$0xf]
        %v1396 = vld [vmem:[%s1388 + $0x1c] sm:$0xf]
        %v1397 = vld [vmem:[%s1388 + $0x20] sm:$0xf]
        %v1398 = vld [vmem:[%s1388 + $0x24] sm:$0xf]
        %v1399 = vld [vmem:[%s1388 + $0x28] sm:$0xf]
        %v1400 = vld [vmem:[%s1388 + $0x2c] sm:$0xf]
        %v1401 = vld [vmem:[%s1388 + $0x30] sm:$0xf]
        %v1402 = vld [vmem:[%s1388 + $0x34] sm:$0xf]
        %v1403 = vld [vmem:[%s1388 + $0x38] sm:$0xf]
        %v1404 = vld [vmem:[%s1388 + $0x3c] sm:$0xf]
        %v1405 = vld [vmem:[%s1388 + $0x40] sm:$0xf]
        %v1406 = vld [vmem:[%s1388 + $0x44] sm:$0xf]
        %v1407 = vld [vmem:[%s1388 + $0x48] sm:$0xf]
        %v1408 = vld [vmem:[%s1388 + $0x4c] sm:$0xf]
        %v1409 = vld [vmem:[%s1388 + $0x50] sm:$0xf]
        %v1410 = vld [vmem:[%s1388 + $0x54] sm:$0xf]
        %v1411 = vld [vmem:[%s1388 + $0x58] sm:$0xf]
        %v1412 = vld [vmem:[%s1388 + $0x5c] sm:$0xf]
        %v1413 = vld [vmem:[%s1388 + $0x60] sm:$0xf]
        %v1414 = vld [vmem:[%s1388 + $0x64] sm:$0xf]
        %v1415 = vld [vmem:[%s1388 + $0x68] sm:$0xf]
        %v1416 = vld [vmem:[%s1388 + $0x6c] sm:$0xf]
        %v1417 = vld [vmem:[%s1388 + $0x70] sm:$0xf]
        %v1418 = vld [vmem:[%s1388 + $0x74] sm:$0xf]
        %v1419 = vld [vmem:[%s1388 + $0x78] sm:$0xf]
        %v1420 = vld [vmem:[%s1388 + $0x7c] sm:$0xf]
        %v1421 = vld [vmem:[%s1388 + $0x80] sm:$0xf]
        %v1422 = vld [vmem:[%s1388 + $0x84] sm:$0xf]
        %v1423 = vld [vmem:[%s1388 + $0x88] sm:$0xf]
        %v1424 = vld [vmem:[%s1388 + $0x8c] sm:$0xf]
        %v1425 = vld [vmem:[%s1388 + $0x90] sm:$0xf]
        %v1426 = vld [vmem:[%s1388 + $0x94] sm:$0xf]
        %v1427 = vld [vmem:[%s1388 + $0x98] sm:$0xf]
        %v1428 = vld [vmem:[%s1388 + $0x9c] sm:$0xf]
        %v1429 = vld [vmem:[%s1388 + $0xa0] sm:$0xf]
        %v1430 = vld [vmem:[%s1388 + $0xa4] sm:$0xf]
        %v1431 = vld [vmem:[%s1388 + $0xa8] sm:$0xf]
        %v1432 = vld [vmem:[%s1388 + $0xac] sm:$0xf]
        %v1433 = vld [vmem:[%s1388 + $0xb0] sm:$0xf]
        %v1434 = vld [vmem:[%s1388 + $0xb4] sm:$0xf]
        %v1435 = vld [vmem:[%s1388 + $0xb8] sm:$0xf]
        %v1436 = vld [vmem:[%s1388 + $0xbc] sm:$0xf]
        %v1437 = vunpack.c.l.b16 %v1177
        %v1438 = vunpack.c.h.b16 %v1177
        %v1439 = vunpack.c.l.b16 %v1191
        %v1440 = vunpack.c.l.b16 %v1205
        %v1441 = vunpack.c.h.b16 %v1205
        %v1442 = vunpack.c.l.b16 %v1219
        %v1443 = vunpack.c.l.b16 %v1233
        %v1444 = vunpack.c.h.b16 %v1233
        %v1445 = vunpack.c.l.b16 %v1247
        %v1446 = vunpack.c.l.b16 %v1261
        %v1447 = vunpack.c.h.b16 %v1261
        %v1448 = vunpack.c.l.b16 %v1275
        %v1449 = vunpack.c.l.b16 %v1289
        %v1450 = vunpack.c.h.b16 %v1289
        %v1451 = vunpack.c.l.b16 %v1303
        %v1452 = vunpack.c.l.b16 %v1317
        %v1453 = vunpack.c.h.b16 %v1317
        %v1454 = vunpack.c.l.b16 %v1331
        %v1455 = vunpack.c.l.b16 %v1345
        %v1456 = vunpack.c.h.b16 %v1345
        %v1457 = vunpack.c.l.b16 %v1359
        %v1458 = vunpack.c.l.b16 %v1373
        %v1459 = vunpack.c.h.b16 %v1373
        %v1460 = vunpack.c.l.b16 %v1387
        %v1461 = vpack.c.b16 %v1440, %v1437
        %v1462 = vpack.c.b16 %v1441, %v1438
        %v1463 = vpack.c.b16 %v1442, %v1439
        %v1464 = vpack.c.b16 %v1446, %v1443
        %v1465 = vpack.c.b16 %v1447, %v1444
        %v1466 = vpack.c.b16 %v1448, %v1445
        %v1467 = vpack.c.b16 %v1452, %v1449
        %v1468 = vpack.c.b16 %v1453, %v1450
        %v1469 = vpack.c.b16 %v1454, %v1451
        %v1470 = vpack.c.b16 %v1458, %v1455
        %v1471 = vpack.c.b16 %v1459, %v1456
        %v1472 = vpack.c.b16 %v1460, %v1457
        %v1533 = vunpack.c.l.b16 %v1389
        %v1534 = vunpack.c.l.b16 %v1390
        %v1535 = vunpack.c.l.b16 %v1391
        %v1536 = vunpack.c.l.b16 %v1392
        %v1537 = vunpack.c.l.b16 %v1393
        %v1538 = vunpack.c.l.b16 %v1394
        %v1539 = vunpack.c.l.b16 %v1395
        %v1540 = vunpack.c.l.b16 %v1396
        %v1541 = vunpack.c.l.b16 %v1397
        %v1542 = vunpack.c.l.b16 %v1398
        %v1543 = vunpack.c.l.b16 %v1399
        %v1544 = vunpack.c.l.b16 %v1400
        %v1545 = vunpack.c.l.b16 %v1401
        %v1546 = vunpack.c.l.b16 %v1402
        %v1547 = vunpack.c.l.b16 %v1403
        %v1548 = vunpack.c.l.b16 %v1404
        %v1549 = vunpack.c.l.b16 %v1405
        %v1550 = vunpack.c.l.b16 %v1406
        %v1551 = vunpack.c.l.b16 %v1407
        %v1552 = vunpack.c.l.b16 %v1408
        %v1553 = vunpack.c.l.b16 %v1409
        %v1554 = vunpack.c.l.b16 %v1410
        %v1555 = vunpack.c.l.b16 %v1411
        %v1556 = vunpack.c.l.b16 %v1412
        %v1557 = vunpack.c.l.b16 %v1413
        %v1558 = vunpack.c.l.b16 %v1414
        %v1559 = vunpack.c.l.b16 %v1415
        %v1560 = vunpack.c.l.b16 %v1416
        %v1561 = vunpack.c.l.b16 %v1417
        %v1562 = vunpack.c.l.b16 %v1418
        %v1563 = vunpack.c.l.b16 %v1419
        %v1564 = vunpack.c.l.b16 %v1420
        %v1565 = vunpack.c.l.b16 %v1421
        %v1566 = vunpack.c.l.b16 %v1422
        %v1567 = vunpack.c.l.b16 %v1423
        %v1568 = vunpack.c.l.b16 %v1424
        %v1569 = vunpack.c.l.b16 %v1425
        %v1570 = vunpack.c.l.b16 %v1426
        %v1571 = vunpack.c.l.b16 %v1427
        %v1572 = vunpack.c.l.b16 %v1428
        %v1573 = vunpack.c.l.b16 %v1429
        %v1574 = vunpack.c.l.b16 %v1430
        %v1575 = vunpack.c.l.b16 %v1431
        %v1576 = vunpack.c.l.b16 %v1432
        %v1577 = vunpack.c.l.b16 %v1433
        %v1578 = vunpack.c.l.b16 %v1434
        %v1579 = vunpack.c.l.b16 %v1435
        %v1580 = vunpack.c.l.b16 %v1436
        %v1581 = vpack.c.b16 %v1534, %v1533
        %v1582 = vpack.c.b16 %v1536, %v1535
        %v1583 = vpack.c.b16 %v1538, %v1537
        %v1584 = vpack.c.b16 %v1540, %v1539
        %v1585 = vpack.c.b16 %v1542, %v1541
        %v1586 = vpack.c.b16 %v1544, %v1543
        %v1587 = vpack.c.b16 %v1546, %v1545
        %v1588 = vpack.c.b16 %v1548, %v1547
        %v1589 = vpack.c.b16 %v1550, %v1549
        %v1590 = vpack.c.b16 %v1552, %v1551
        %v1591 = vpack.c.b16 %v1554, %v1553
        %v1592 = vpack.c.b16 %v1556, %v1555
        %v1593 = vpack.c.b16 %v1558, %v1557
        %v1594 = vpack.c.b16 %v1560, %v1559
        %v1595 = vpack.c.b16 %v1562, %v1561
        %v1596 = vpack.c.b16 %v1564, %v1563
        %v1597 = vpack.c.b16 %v1566, %v1565
        %v1598 = vpack.c.b16 %v1568, %v1567
        %v1599 = vpack.c.b16 %v1570, %v1569
        %v1600 = vpack.c.b16 %v1572, %v1571
        %v1601 = vpack.c.b16 %v1574, %v1573
        %v1602 = vpack.c.b16 %v1576, %v1575
        %v1603 = vpack.c.b16 %v1578, %v1577
        %v1604 = vpack.c.b16 %v1580, %v1579
        %1629 = vmatprep.subr.bf16.mxu0 0
        %1630 = vmatpush1.bf16.msra.mxu0 %v1581
        %1631 = vmatprep.subr.bf16.mxu0 0
        %1632 = vmatpush1.bf16.msra.mxu0 %v1582
        %1633 = vmatprep.subr.bf16.mxu0 0
        %1634 = vmatpush1.bf16.msra.mxu0 %v1583
        %1635 = vmatprep.subr.bf16.mxu0 0
        %1636 = vmatpush1.bf16.msra.mxu0 %v1584
        %1637 = vmatprep.subr.bf16.mxu0 0
        %1638 = vmatpush1.bf16.msra.mxu0 %v1585
        %1639 = vmatprep.subr.bf16.mxu0 0
        %1640 = vmatpush1.bf16.msra.mxu0 %v1586
        %1641 = vmatprep.subr.bf16.mxu0 0
        %1642 = vmatpush1.bf16.msra.mxu0 %v1587
        %1643 = vmatprep.subr.bf16.mxu0 0
        %1644 = vmatpush1.bf16.msra.mxu0 %v1588
        %1645 = vmatprep.subr.bf16.mxu0 0
        %1646 = vmatpush1.bf16.msra.mxu0 %v1589
        %1647 = vmatprep.subr.bf16.mxu0 0
        %1648 = vmatpush1.bf16.msra.mxu0 %v1590
        %1649 = vmatprep.subr.bf16.mxu0 0
        %1650 = vmatpush1.bf16.msra.mxu0 %v1591
        %1651 = vmatprep.subr.bf16.mxu0 0
        %1652 = vmatpush1.bf16.msra.mxu0 %v1592
        %1653 = vmatprep.subr.bf16.mxu0 0
        %1654 = vmatpush1.bf16.msra.mxu0 %v1593
        %1655 = vmatprep.subr.bf16.mxu0 0
        %1656 = vmatpush1.bf16.msra.mxu0 %v1594
        %1657 = vmatprep.subr.bf16.mxu0 0
        %1658 = vmatpush1.bf16.msra.mxu0 %v1595
        %1659 = vmatprep.subr.bf16.mxu0 0
        %1660 = vmatpush1.bf16.msra.mxu0 %v1596
        %1661 = vmatprep.mubr.bf16.mxu0 %v1462
        %1662 = vmatmul.mubr.bf16.gmra.mrb[0].mxu0 %v1461
        %v1663 = vpop.f32.mrb[0].mxu0
        %v1664 = vadd.f32 0.0, %v1663
        %v1665 = vpop.f32.mrb[0].mxu0
        %v1666 = vpop.f32.mrb[0].mxu0
        %v1667 = vadd.f32 0.0, %v1666
        %v1668 = vpop.f32.mrb[0].mxu0
        %1669 = vmatprep.mubr.bf16.mxu0 %v1465
        %1670 = vmatmul.mubr.bf16.gmra.mrb[0].mxu0 %v1464
        %v1671 = vpop.f32.mrb[0].mxu0
        %v1672 = vadd.f32 0.0, %v1671
        %v1673 = vpop.f32.mrb[0].mxu0
        %v1674 = vpop.f32.mrb[0].mxu0
        %v1675 = vadd.f32 0.0, %v1674
        %v1676 = vpop.f32.mrb[0].mxu0
        %1677 = vmatprep.mubr.bf16.mxu0 %v1468
        %1678 = vmatmul.mubr.bf16.gmra.mrb[0].mxu0 %v1467
        %v1679 = vpop.f32.mrb[0].mxu0
        %v1680 = vadd.f32 0.0, %v1679
        %v1681 = vpop.f32.mrb[0].mxu0
        %v1682 = vpop.f32.mrb[0].mxu0
        %v1683 = vadd.f32 0.0, %v1682
        %v1684 = vpop.f32.mrb[0].mxu0
        %1685 = vmatprep.mubr.bf16.mxu0 %v1471
        %1686 = vmatmul.mubr.bf16.gmra.mrb[0].mxu0 %v1470
        %v1687 = vpop.f32.mrb[0].mxu0
        %v1688 = vadd.f32 0.0, %v1687
        %v1689 = vpop.f32.mrb[0].mxu0
        %v1690 = vpop.f32.mrb[0].mxu0
        %v1691 = vadd.f32 0.0, %v1690
        %v1692 = vpop.f32.mrb[0].mxu0
        %1693 = vdwg.mxu0
        %1694 = vmatprep.subr.bf16.mxu0 0
        %1695 = vmatpush1.bf16.msra.mxu0 %v1597
        %1696 = vmatprep.subr.bf16.mxu0 0
        %1697 = vmatpush1.bf16.msra.mxu0 %v1598
        %1698 = vmatprep.subr.bf16.mxu0 0
        %1699 = vmatpush1.bf16.msra.mxu0 %v1599
        %1700 = vmatprep.subr.bf16.mxu0 0
        %1701 = vmatpush1.bf16.msra.mxu0 %v1600
        %1702 = vmatprep.subr.bf16.mxu0 0
        %1703 = vmatpush1.bf16.msra.mxu0 %v1601
        %1704 = vmatprep.subr.bf16.mxu0 0
        %1705 = vmatpush1.bf16.msra.mxu0 %v1602
        %1706 = vmatprep.subr.bf16.mxu0 0
        %1707 = vmatpush1.bf16.msra.mxu0 %v1603
        %1708 = vmatprep.subr.bf16.mxu0 0
        %1709 = vmatpush1.bf16.msra.mxu0 %v1604
        %1710 = vmatprep.subr.bf16.mxu0 0
        %1711 = vmatpush1.bf16.msra.mxu0 0
        %1712 = vmatprep.subr.bf16.mxu0 0
        %1713 = vmatpush1.bf16.msra.mxu0 0
        %1714 = vmatprep.subr.bf16.mxu0 0
        %1715 = vmatpush1.bf16.msra.mxu0 0
        %1716 = vmatprep.subr.bf16.mxu0 0
        %1717 = vmatpush1.bf16.msra.mxu0 0
        %1718 = vmatprep.subr.bf16.mxu0 0
        %1719 = vmatpush1.bf16.msra.mxu0 0
        %1720 = vmatprep.subr.bf16.mxu0 0
        %1721 = vmatpush1.bf16.msra.mxu0 0
        %1722 = vmatprep.subr.bf16.mxu0 0
        %1723 = vmatpush1.bf16.msra.mxu0 0
        %1724 = vmatprep.subr.bf16.mxu0 0
        %1725 = vmatpush1.bf16.msra.mxu0 0
        %1726 = vmatprep.mubr.bf16.mxu0 0
        %1727 = vmatmul.mubr.bf16.gmra.mrb[0].mxu0 %v1463
        %v1728 = vpop.f32.mrb[0].mxu0
        %v1729 = vadd.f32 %v1664, %v1728
        %v1730 = vpop.f32.mrb[0].mxu0
        %v1731 = vpop.f32.mrb[0].mxu0
        %v1732 = vadd.f32 %v1667, %v1731
        %v1733 = vpop.f32.mrb[0].mxu0
        %1734 = vmatprep.mubr.bf16.mxu0 0
        %1735 = vmatmul.mubr.bf16.gmra.mrb[0].mxu0 %v1466
        %v1736 = vpop.f32.mrb[0].mxu0
        %v1737 = vadd.f32 %v1672, %v1736
        %v1738 = vpop.f32.mrb[0].mxu0
        %v1739 = vpop.f32.mrb[0].mxu0
        %v1740 = vadd.f32 %v1675, %v1739
        %v1741 = vpop.f32.mrb[0].mxu0
        %1742 = vmatprep.mubr.bf16.mxu0 0
        %1743 = vmatmul.mubr.bf16.gmra.mrb[0].mxu0 %v1469
        %v1744 = vpop.f32.mrb[0].mxu0
        %v1745 = vadd.f32 %v1680, %v1744
        %v1746 = vpop.f32.mrb[0].mxu0
        %v1747 = vpop.f32.mrb[0].mxu0
        %v1748 = vadd.f32 %v1683, %v1747
        %v1749 = vpop.f32.mrb[0].mxu0
        %1750 = vmatprep.mubr.bf16.mxu0 0
        %1751 = vmatmul.mubr.bf16.gmra.mrb[0].mxu0 %v1472
        %v1752 = vpop.f32.mrb[0].mxu0
        %v1753 = vadd.f32 %v1688, %v1752
        %v1754 = vpop.f32.mrb[0].mxu0
        %v1755 = vpop.f32.mrb[0].mxu0
        %v1756 = vadd.f32 %v1691, %v1755
        %v1757 = vpop.f32.mrb[0].mxu0
        %1758 = vdwg.mxu0
        %v1759 = vpack.c.b16 %v1050, %v1049
        %v1817 = vunpack.c.l.b16 %v1051
        %v1818 = vunpack.c.l.b16 %v1052
        %v1819 = vunpack.c.l.b16 %v1053
        %v1820 = vunpack.c.l.b16 %v1054
        %v1821 = vunpack.c.l.b16 %v1055
        %v1822 = vunpack.c.l.b16 %v1056
        %v1823 = vunpack.c.l.b16 %v1057
        %v1824 = vunpack.c.l.b16 %v1058
        %v1825 = vunpack.c.l.b16 %v1059
        %v1826 = vunpack.c.l.b16 %v1060
        %v1827 = vunpack.c.l.b16 %v1061
        %v1828 = vunpack.c.l.b16 %v1062
        %v1829 = vunpack.c.l.b16 %v1063
        %v1830 = vunpack.c.l.b16 %v1064
        %v1831 = vunpack.c.l.b16 %v1065
        %v1832 = vunpack.c.l.b16 %v1066
        %v1833 = vunpack.c.l.b16 %v1067
        %v1834 = vunpack.c.l.b16 %v1068
        %v1835 = vunpack.c.l.b16 %v1069
        %v1836 = vunpack.c.l.b16 %v1070
        %v1837 = vunpack.c.l.b16 %v1071
        %v1838 = vunpack.c.l.b16 %v1072
        %v1839 = vunpack.c.l.b16 %v1073
        %v1840 = vunpack.c.l.b16 %v1074
        %v1841 = vunpack.c.l.b16 %v1075
        %v1842 = vunpack.c.l.b16 %v1076
        %v1843 = vunpack.c.l.b16 %v1077
        %v1844 = vunpack.c.l.b16 %v1078
        %v1845 = vunpack.c.l.b16 %v1079
        %v1846 = vunpack.c.l.b16 %v1080
        %v1847 = vunpack.c.l.b16 %v1081
        %v1848 = vunpack.c.l.b16 %v1082
        %v1849 = vunpack.c.l.b16 %v1083
        %v1850 = vunpack.c.l.b16 %v1084
        %v1851 = vunpack.c.l.b16 %v1085
        %v1852 = vunpack.c.l.b16 %v1086
        %v1853 = vunpack.c.l.b16 %v1087
        %v1854 = vunpack.c.l.b16 %v1088
        %v1855 = vunpack.c.l.b16 %v1089
        %v1856 = vunpack.c.l.b16 %v1090
        %v1857 = vunpack.c.l.b16 %v1091
        %v1858 = vunpack.c.l.b16 %v1092
        %v1859 = vunpack.c.l.b16 %v1093
        %v1860 = vunpack.c.l.b16 %v1094
        %v1861 = vunpack.c.l.b16 %v1095
        %v1862 = vunpack.c.l.b16 %v1096
        %v1863 = vunpack.c.l.b16 %v1097
        %v1864 = vunpack.c.l.b16 %v1098
        %v1865 = vpack.c.b16 %v1818, %v1817
        %v1866 = vpack.c.b16 %v1820, %v1819
        %v1867 = vpack.c.b16 %v1822, %v1821
        %v1868 = vpack.c.b16 %v1824, %v1823
        %v1869 = vpack.c.b16 %v1826, %v1825
        %v1870 = vpack.c.b16 %v1828, %v1827
        %v1871 = vpack.c.b16 %v1830, %v1829
        %v1872 = vpack.c.b16 %v1832, %v1831
        %v1873 = vpack.c.b16 %v1834, %v1833
        %v1874 = vpack.c.b16 %v1836, %v1835
        %v1875 = vpack.c.b16 %v1838, %v1837
        %v1876 = vpack.c.b16 %v1840, %v1839
        %v1877 = vpack.c.b16 %v1842, %v1841
        %v1878 = vpack.c.b16 %v1844, %v1843
        %v1879 = vpack.c.b16 %v1846, %v1845
        %v1880 = vpack.c.b16 %v1848, %v1847
        %v1881 = vpack.c.b16 %v1850, %v1849
        %v1882 = vpack.c.b16 %v1852, %v1851
        %v1883 = vpack.c.b16 %v1854, %v1853
        %v1884 = vpack.c.b16 %v1856, %v1855
        %v1885 = vpack.c.b16 %v1858, %v1857
        %v1886 = vpack.c.b16 %v1860, %v1859
        %v1887 = vpack.c.b16 %v1862, %v1861
        %v1888 = vpack.c.b16 %v1864, %v1863
        %1913 = vmatprep.subr.bf16.mxu0 0
        %1914 = vmatpush1.bf16.msra.mxu0 %v1865
        %1915 = vmatprep.subr.bf16.mxu0 0
        %1916 = vmatpush1.bf16.msra.mxu0 %v1866
        %1917 = vmatprep.subr.bf16.mxu0 0
        %1918 = vmatpush1.bf16.msra.mxu0 %v1867
        %1919 = vmatprep.subr.bf16.mxu0 0
        %1920 = vmatpush1.bf16.msra.mxu0 %v1868
        %1921 = vmatprep.subr.bf16.mxu0 0
        %1922 = vmatpush1.bf16.msra.mxu0 %v1869
        %1923 = vmatprep.subr.bf16.mxu0 0
        %1924 = vmatpush1.bf16.msra.mxu0 %v1870
        %1925 = vmatprep.subr.bf16.mxu0 0
        %1926 = vmatpush1.bf16.msra.mxu0 %v1871
        %1927 = vmatprep.subr.bf16.mxu0 0
        %1928 = vmatpush1.bf16.msra.mxu0 %v1872
        %1929 = vmatprep.subr.bf16.mxu0 0
        %1930 = vmatpush1.bf16.msra.mxu0 %v1873
        %1931 = vmatprep.subr.bf16.mxu0 0
        %1932 = vmatpush1.bf16.msra.mxu0 %v1874
        %1933 = vmatprep.subr.bf16.mxu0 0
        %1934 = vmatpush1.bf16.msra.mxu0 %v1875
        %1935 = vmatprep.subr.bf16.mxu0 0
        %1936 = vmatpush1.bf16.msra.mxu0 %v1876
        %1937 = vmatprep.subr.bf16.mxu0 0
        %1938 = vmatpush1.bf16.msra.mxu0 %v1877
        %1939 = vmatprep.subr.bf16.mxu0 0
        %1940 = vmatpush1.bf16.msra.mxu0 %v1878
        %1941 = vmatprep.subr.bf16.mxu0 0
        %1942 = vmatpush1.bf16.msra.mxu0 %v1879
        %1943 = vmatprep.subr.bf16.mxu0 0
        %1944 = vmatpush1.bf16.msra.mxu0 %v1880
        %1945 = vmatprep.mubr.bf16.mxu0 %v1133
        %1946 = vmatmul.mubr.bf16.gmra.mrb[0].mxu0 %v1129
        %v1947 = vpop.f32.mrb[0].mxu0
        %v1948 = vadd.f32 %v1729, %v1947
        %v1949 = vpop.f32.mrb[0].mxu0
        %v1950 = vpop.f32.mrb[0].mxu0
        %v1951 = vadd.f32 %v1732, %v1950
        %v1952 = vpop.f32.mrb[0].mxu0
        %1953 = vmatprep.mubr.bf16.mxu0 %v1141
        %1954 = vmatmul.mubr.bf16.gmra.mrb[0].mxu0 %v1137
        %v1955 = vpop.f32.mrb[0].mxu0
        %v1956 = vadd.f32 %v1737, %v1955
        %v1957 = vpop.f32.mrb[0].mxu0
        %v1958 = vpop.f32.mrb[0].mxu0
        %v1959 = vadd.f32 %v1740, %v1958
        %v1960 = vpop.f32.mrb[0].mxu0
        %1961 = vmatprep.mubr.bf16.mxu0 %v1149
        %1962 = vmatmul.mubr.bf16.gmra.mrb[0].mxu0 %v1145
        %v1963 = vpop.f32.mrb[0].mxu0
        %v1964 = vadd.f32 %v1745, %v1963
        %v1965 = vpop.f32.mrb[0].mxu0
        %v1966 = vpop.f32.mrb[0].mxu0
        %v1967 = vadd.f32 %v1748, %v1966
        %v1968 = vpop.f32.mrb[0].mxu0
        %1969 = vmatprep.mubr.bf16.mxu0 %v1157
        %1970 = vmatmul.mubr.bf16.gmra.mrb[0].mxu0 %v1153
        %v1971 = vpop.f32.mrb[0].mxu0
        %v1972 = vadd.f32 %v1753, %v1971
        %v1973 = vpop.f32.mrb[0].mxu0
        %v1974 = vpop.f32.mrb[0].mxu0
        %v1975 = vadd.f32 %v1756, %v1974
        %v1976 = vpop.f32.mrb[0].mxu0
        %1977 = vdwg.mxu0
        %1978 = vmatprep.subr.bf16.mxu0 0
        %1979 = vmatpush1.bf16.msra.mxu0 %v1881
        %1980 = vmatprep.subr.bf16.mxu0 0
        %1981 = vmatpush1.bf16.msra.mxu0 %v1882
        %1982 = vmatprep.subr.bf16.mxu0 0
        %1983 = vmatpush1.bf16.msra.mxu0 %v1883
        %1984 = vmatprep.subr.bf16.mxu0 0
        %1985 = vmatpush1.bf16.msra.mxu0 %v1884
        %1986 = vmatprep.subr.bf16.mxu0 0
        %1987 = vmatpush1.bf16.msra.mxu0 %v1885
        %1988 = vmatprep.subr.bf16.mxu0 0
        %1989 = vmatpush1.bf16.msra.mxu0 %v1886
        %1990 = vmatprep.subr.bf16.mxu0 0
        %1991 = vmatpush1.bf16.msra.mxu0 %v1887
        %1992 = vmatprep.subr.bf16.mxu0 0
        %1993 = vmatpush1.bf16.msra.mxu0 %v1888
        %1994 = vmatprep.subr.bf16.mxu0 0
        %1995 = vmatpush1.bf16.msra.mxu0 0
        %1996 = vmatprep.subr.bf16.mxu0 0
        %1997 = vmatpush1.bf16.msra.mxu0 0
        %1998 = vmatprep.subr.bf16.mxu0 0
        %1999 = vmatpush1.bf16.msra.mxu0 0
        %2000 = vmatprep.subr.bf16.mxu0 0
        %2001 = vmatpush1.bf16.msra.mxu0 0
        %2002 = vmatprep.subr.bf16.mxu0 0
        %2003 = vmatpush1.bf16.msra.mxu0 0
        %2004 = vmatprep.subr.bf16.mxu0 0
        %2005 = vmatpush1.bf16.msra.mxu0 0
        %2006 = vmatprep.subr.bf16.mxu0 0
        %2007 = vmatpush1.bf16.msra.mxu0 0
        %2008 = vmatprep.subr.bf16.mxu0 0
        %2009 = vmatpush1.bf16.msra.mxu0 0
        %2010 = vmatprep.mubr.bf16.mxu0 0
        %2011 = vmatmul.mubr.bf16.gmra.mrb[0].mxu0 %v1137
        %v2012 = vpop.f32.mrb[0].mxu0
        %v2013 = vadd.f32 %v1948, %v2012
        %v2014 = vpop.f32.mrb[0].mxu0
        %v2015 = vpop.f32.mrb[0].mxu0
        %v2016 = vadd.f32 %v1951, %v2015
        %v2017 = vpop.f32.mrb[0].mxu0
        %2018 = vmatprep.mubr.bf16.mxu0 0
        %2019 = vmatmul.mubr.bf16.gmra.mrb[0].mxu0 %v1145
        %v2020 = vpop.f32.mrb[0].mxu0
        %v2021 = vadd.f32 %v1956, %v2020
        %v2022 = vpop.f32.mrb[0].mxu0
        %v2023 = vpop.f32.mrb[0].mxu0
        %v2024 = vadd.f32 %v1959, %v2023
        %v2025 = vpop.f32.mrb[0].mxu0
        %2026 = vmatprep.mubr.bf16.mxu0 0
        %2027 = vmatmul.mubr.bf16.gmra.mrb[0].mxu0 %v1153
        %v2028 = vpop.f32.mrb[0].mxu0
        %v2029 = vadd.f32 %v1964, %v2028
        %v2030 = vpop.f32.mrb[0].mxu0
        %v2031 = vpop.f32.mrb[0].mxu0
        %v2032 = vadd.f32 %v1967, %v2031
        %v2033 = vpop.f32.mrb[0].mxu0
        %2034 = vmatprep.mubr.bf16.mxu0 0
        %2035 = vmatmul.mubr.bf16.gmra.mrb[0].mxu0 %v1759
        %v2036 = vpop.f32.mrb[0].mxu0
        %v2037 = vadd.f32 %v1972, %v2036
        %v2038 = vpop.f32.mrb[0].mxu0
        %v2039 = vpop.f32.mrb[0].mxu0
        %v2040 = vadd.f32 %v1975, %v2039
        %v2041 = vpop.f32.mrb[0].mxu0
        %2042 = vdwg.mxu0
        %v2043 = vld [vmem:[#allocation2] sm:$0xe]
        %v2044 = vld [vmem:[#allocation2 + $0x8] sm:$0xe]
        %v2045 = vld [vmem:[#allocation2 + $0x10] sm:$0xe]
        %v2046 = vld [vmem:[#allocation2 + $0x18] sm:$0xe]
        %v2047 = vld [vmem:[#allocation2 + $0x20] sm:$0xe]
        %v2048 = vld [vmem:[#allocation2 + $0x28] sm:$0xe]
        %v2049 = vld [vmem:[#allocation2 + $0x30] sm:$0xe]
        %v2050 = vld [vmem:[#allocation2 + $0x38] sm:$0xe]
        %v2051 = vld [vmem:[#allocation2 + $0x40] sm:$0xe]
        %v2052 = vld [vmem:[#allocation2 + $0x48] sm:$0xe]
        %v2061 = vunpack.c.l.b16 %v2043
        %v2062 = vunpack.c.l.b16 %v2044
        %v2063 = vunpack.c.l.b16 %v2045
        %v2064 = vunpack.c.l.b16 %v2046
        %v2065 = vunpack.c.l.b16 %v2047
        %v2066 = vunpack.c.l.b16 %v2048
        %v2067 = vunpack.c.l.b16 %v2049
        %v2068 = vunpack.c.l.b16 %v2050
        %v2070 = vunpack.c.l.b16 %v2051
        %v2072 = vunpack.c.l.b16 %v2052
        %v2073 = vpack.c.b16 %v2062, %v2061
        %v2074 = vpack.c.b16 %v2063, %v2063
        %v2075 = vpack.c.b16 %v2063, %v2062
        %v2076 = vpack.c.b16 %v2064, %v2064
        %v2077 = vpack.c.b16 %v2064, %v2063
        %v2078 = vpack.c.b16 %v2065, %v2065
        %v2079 = vpack.c.b16 %v2065, %v2064
        %v2080 = vpack.c.b16 %v2066, %v2066
        %v2081 = vpack.c.b16 %v2066, %v2065
        %v2082 = vpack.c.b16 %v2067, %v2067
        %v2083 = vpack.c.b16 %v2067, %v2066
        %v2084 = vpack.c.b16 %v2068, %v2068
        %v2085 = vpack.c.b16 %v2068, %v2067
        %v2086 = vpack.c.b16 %v2070, %v2070
        %v2087 = vpack.c.b16 %v2070, %v2068
        %v2088 = vpack.c.b16 %v2072, %v2072
        %vm2089 = vcmask 1042432
        %vm2090 = vcmask 1046532
        %vm2091 = vmor %vm2089, %vm2090
        %v2092 = vrot.slane %v2073, 5
        %v2093 = vrot.slane %v2092, 4
        %v2094 = vrot.slane %v1131, 5
        %v2095 = vsel %vm2091, %v2093, %v2094
        %v2096 = vrot.slane %v2074, 5
        %v2097 = vrot.slane %v2096, 4
        %v2098 = vrot.slane %v1132, 5
        %v2099 = vsel %vm2091, %v2097, %v2098
        %v2100 = vrot.slane %v2075, 5
        %v2101 = vrot.slane %v2100, 4
        %v2102 = vrot.slane %v1135, 5
        %v2103 = vsel %vm2091, %v2101, %v2102
        %v2104 = vrot.slane %v2076, 5
        %v2105 = vrot.slane %v2104, 4
        %v2106 = vrot.slane %v1136, 5
        %v2107 = vsel %vm2091, %v2105, %v2106
        %v2108 = vrot.slane %v2077, 5
        %v2109 = vrot.slane %v2108, 4
        %v2110 = vrot.slane %v1139, 5
        %v2111 = vsel %vm2091, %v2109, %v2110
        %v2112 = vrot.slane %v2078, 5
        %v2113 = vrot.slane %v2112, 4
        %v2114 = vrot.slane %v1140, 5
        %v2115 = vsel %vm2091, %v2113, %v2114
        %v2116 = vrot.slane %v2079, 5
        %v2117 = vrot.slane %v2116, 4
        %v2118 = vrot.slane %v1143, 5
        %v2119 = vsel %vm2091, %v2117, %v2118
        %v2120 = vrot.slane %v2080, 5
        %v2121 = vrot.slane %v2120, 4
        %v2122 = vrot.slane %v1144, 5
        %v2123 = vsel %vm2091, %v2121, %v2122
        %v2124 = vrot.slane %v2081, 5
        %v2125 = vrot.slane %v2124, 4
        %v2126 = vrot.slane %v1147, 5
        %v2127 = vsel %vm2091, %v2125, %v2126
        %v2128 = vrot.slane %v2082, 5
        %v2129 = vrot.slane %v2128, 4
        %v2130 = vrot.slane %v1148, 5
        %v2131 = vsel %vm2091, %v2129, %v2130
        %v2132 = vrot.slane %v2083, 5
        %v2133 = vrot.slane %v2132, 4
        %v2134 = vrot.slane %v1151, 5
        %v2135 = vsel %vm2091, %v2133, %v2134
        %v2136 = vrot.slane %v2084, 5
        %v2137 = vrot.slane %v2136, 4
        %v2138 = vrot.slane %v1152, 5
        %v2139 = vsel %vm2091, %v2137, %v2138
        %v2140 = vrot.slane %v2085, 5
        %v2141 = vrot.slane %v2140, 4
        %v2142 = vrot.slane %v1155, 5
        %v2143 = vsel %vm2091, %v2141, %v2142
        %v2144 = vrot.slane %v2086, 5
        %v2145 = vrot.slane %v2144, 4
        %v2146 = vrot.slane %v1156, 5
        %v2147 = vsel %vm2091, %v2145, %v2146
        %v2148 = vrot.slane %v2087, 5
        %v2149 = vrot.slane %v2148, 4
        %v2150 = vrot.slane %v1159, 5
        %v2151 = vsel %vm2091, %v2149, %v2150
        %v2152 = vrot.slane %v2088, 5
        %v2153 = vrot.slane %v2152, 4
        %v2154 = vrot.slane %v1160, 5
        %v2155 = vsel %vm2091, %v2153, %v2154
        %s2156 = scalar_lea.vmem [#allocation8], 384
        %v2157 = vld [vmem:[%s2156] sm:$0xf]
        %v2158 = vld [vmem:[%s2156 + $0x4] sm:$0xf]
        %v2159 = vld [vmem:[%s2156 + $0x8] sm:$0xf]
        %v2160 = vld [vmem:[%s2156 + $0xc] sm:$0xf]
        %v2161 = vld [vmem:[%s2156 + $0x10] sm:$0xf]
        %v2162 = vld [vmem:[%s2156 + $0x14] sm:$0xf]
        %v2163 = vld [vmem:[%s2156 + $0x18] sm:$0xf]
        %v2164 = vld [vmem:[%s2156 + $0x1c] sm:$0xf]
        %v2165 = vld [vmem:[%s2156 + $0x20] sm:$0xf]
        %v2166 = vld [vmem:[%s2156 + $0x24] sm:$0xf]
        %v2167 = vld [vmem:[%s2156 + $0x28] sm:$0xf]
        %v2168 = vld [vmem:[%s2156 + $0x2c] sm:$0xf]
        %v2169 = vld [vmem:[%s2156 + $0x30] sm:$0xf]
        %v2170 = vld [vmem:[%s2156 + $0x34] sm:$0xf]
        %v2171 = vld [vmem:[%s2156 + $0x38] sm:$0xf]
        %v2172 = vld [vmem:[%s2156 + $0x3c] sm:$0xf]
        %v2173 = vld [vmem:[%s2156 + $0x40] sm:$0xf]
        %v2174 = vld [vmem:[%s2156 + $0x44] sm:$0xf]
        %v2175 = vld [vmem:[%s2156 + $0x48] sm:$0xf]
        %v2176 = vld [vmem:[%s2156 + $0x4c] sm:$0xf]
        %v2177 = vld [vmem:[%s2156 + $0x50] sm:$0xf]
        %v2178 = vld [vmem:[%s2156 + $0x54] sm:$0xf]
        %v2179 = vld [vmem:[%s2156 + $0x58] sm:$0xf]
        %v2180 = vld [vmem:[%s2156 + $0x5c] sm:$0xf]
        %v2181 = vld [vmem:[%s2156 + $0x60] sm:$0xf]
        %v2182 = vld [vmem:[%s2156 + $0x64] sm:$0xf]
        %v2183 = vld [vmem:[%s2156 + $0x68] sm:$0xf]
        %v2184 = vld [vmem:[%s2156 + $0x6c] sm:$0xf]
        %v2185 = vld [vmem:[%s2156 + $0x70] sm:$0xf]
        %v2186 = vld [vmem:[%s2156 + $0x74] sm:$0xf]
        %v2187 = vld [vmem:[%s2156 + $0x78] sm:$0xf]
        %v2188 = vld [vmem:[%s2156 + $0x7c] sm:$0xf]
        %v2189 = vld [vmem:[%s2156 + $0x80] sm:$0xf]
        %v2190 = vld [vmem:[%s2156 + $0x84] sm:$0xf]
        %v2191 = vld [vmem:[%s2156 + $0x88] sm:$0xf]
        %v2192 = vld [vmem:[%s2156 + $0x8c] sm:$0xf]
        %v2193 = vld [vmem:[%s2156 + $0x90] sm:$0xf]
        %v2194 = vld [vmem:[%s2156 + $0x94] sm:$0xf]
        %v2195 = vld [vmem:[%s2156 + $0x98] sm:$0xf]
        %v2196 = vld [vmem:[%s2156 + $0x9c] sm:$0xf]
        %v2197 = vld [vmem:[%s2156 + $0xa0] sm:$0xf]
        %v2198 = vld [vmem:[%s2156 + $0xa4] sm:$0xf]
        %v2199 = vld [vmem:[%s2156 + $0xa8] sm:$0xf]
        %v2200 = vld [vmem:[%s2156 + $0xac] sm:$0xf]
        %v2201 = vld [vmem:[%s2156 + $0xb0] sm:$0xf]
        %v2202 = vld [vmem:[%s2156 + $0xb4] sm:$0xf]
        %v2203 = vld [vmem:[%s2156 + $0xb8] sm:$0xf]
        %v2204 = vld [vmem:[%s2156 + $0xbc] sm:$0xf]
        %v2205 = vunpack.c.l.b16 %v2095
        %v2206 = vunpack.c.h.b16 %v2095
        %v2207 = vunpack.c.l.b16 %v2099
        %v2208 = vunpack.c.l.b16 %v2103
        %v2209 = vunpack.c.h.b16 %v2103
        %v2210 = vunpack.c.l.b16 %v2107
        %v2211 = vunpack.c.l.b16 %v2111
        %v2212 = vunpack.c.h.b16 %v2111
        %v2213 = vunpack.c.l.b16 %v2115
        %v2214 = vunpack.c.l.b16 %v2119
        %v2215 = vunpack.c.h.b16 %v2119
        %v2216 = vunpack.c.l.b16 %v2123
        %v2217 = vunpack.c.l.b16 %v2127
        %v2218 = vunpack.c.h.b16 %v2127
        %v2219 = vunpack.c.l.b16 %v2131
        %v2220 = vunpack.c.l.b16 %v2135
        %v2221 = vunpack.c.h.b16 %v2135
        %v2222 = vunpack.c.l.b16 %v2139
        %v2223 = vunpack.c.l.b16 %v2143
        %v2224 = vunpack.c.h.b16 %v2143
        %v2225 = vunpack.c.l.b16 %v2147
        %v2226 = vunpack.c.l.b16 %v2151
        %v2227 = vunpack.c.h.b16 %v2151
        %v2228 = vunpack.c.l.b16 %v2155
        %v2229 = vpack.c.b16 %v2208, %v2205
        %v2230 = vpack.c.b16 %v2209, %v2206
        %v2231 = vpack.c.b16 %v2210, %v2207
        %v2232 = vpack.c.b16 %v2214, %v2211
        %v2233 = vpack.c.b16 %v2215, %v2212
        %v2234 = vpack.c.b16 %v2216, %v2213
        %v2235 = vpack.c.b16 %v2220, %v2217
        %v2236 = vpack.c.b16 %v2221, %v2218
        %v2237 = vpack.c.b16 %v2222, %v2219
        %v2238 = vpack.c.b16 %v2226, %v2223
        %v2239 = vpack.c.b16 %v2227, %v2224
        %v2240 = vpack.c.b16 %v2228, %v2225
        %v2301 = vunpack.c.l.b16 %v2157
        %v2302 = vunpack.c.l.b16 %v2158
        %v2303 = vunpack.c.l.b16 %v2159
        %v2304 = vunpack.c.l.b16 %v2160
        %v2305 = vunpack.c.l.b16 %v2161
        %v2306 = vunpack.c.l.b16 %v2162
        %v2307 = vunpack.c.l.b16 %v2163
        %v2308 = vunpack.c.l.b16 %v2164
        %v2309 = vunpack.c.l.b16 %v2165
        %v2310 = vunpack.c.l.b16 %v2166
        %v2311 = vunpack.c.l.b16 %v2167
        %v2312 = vunpack.c.l.b16 %v2168
        %v2313 = vunpack.c.l.b16 %v2169
        %v2314 = vunpack.c.l.b16 %v2170
        %v2315 = vunpack.c.l.b16 %v2171
        %v2316 = vunpack.c.l.b16 %v2172
        %v2317 = vunpack.c.l.b16 %v2173
        %v2318 = vunpack.c.l.b16 %v2174
        %v2319 = vunpack.c.l.b16 %v2175
        %v2320 = vunpack.c.l.b16 %v2176
        %v2321 = vunpack.c.l.b16 %v2177
        %v2322 = vunpack.c.l.b16 %v2178
        %v2323 = vunpack.c.l.b16 %v2179
        %v2324 = vunpack.c.l.b16 %v2180
        %v2325 = vunpack.c.l.b16 %v2181
        %v2326 = vunpack.c.l.b16 %v2182
        %v2327 = vunpack.c.l.b16 %v2183
        %v2328 = vunpack.c.l.b16 %v2184
        %v2329 = vunpack.c.l.b16 %v2185
        %v2330 = vunpack.c.l.b16 %v2186
        %v2331 = vunpack.c.l.b16 %v2187
        %v2332 = vunpack.c.l.b16 %v2188
        %v2333 = vunpack.c.l.b16 %v2189
        %v2334 = vunpack.c.l.b16 %v2190
        %v2335 = vunpack.c.l.b16 %v2191
        %v2336 = vunpack.c.l.b16 %v2192
        %v2337 = vunpack.c.l.b16 %v2193
        %v2338 = vunpack.c.l.b16 %v2194
        %v2339 = vunpack.c.l.b16 %v2195
        %v2340 = vunpack.c.l.b16 %v2196
        %v2341 = vunpack.c.l.b16 %v2197
        %v2342 = vunpack.c.l.b16 %v2198
        %v2343 = vunpack.c.l.b16 %v2199
        %v2344 = vunpack.c.l.b16 %v2200
        %v2345 = vunpack.c.l.b16 %v2201
        %v2346 = vunpack.c.l.b16 %v2202
        %v2347 = vunpack.c.l.b16 %v2203
        %v2348 = vunpack.c.l.b16 %v2204
        %v2349 = vpack.c.b16 %v2302, %v2301
        %v2350 = vpack.c.b16 %v2304, %v2303
        %v2351 = vpack.c.b16 %v2306, %v2305
        %v2352 = vpack.c.b16 %v2308, %v2307
        %v2353 = vpack.c.b16 %v2310, %v2309
        %v2354 = vpack.c.b16 %v2312, %v2311
        %v2355 = vpack.c.b16 %v2314, %v2313
        %v2356 = vpack.c.b16 %v2316, %v2315
        %v2357 = vpack.c.b16 %v2318, %v2317
        %v2358 = vpack.c.b16 %v2320, %v2319
        %v2359 = vpack.c.b16 %v2322, %v2321
        %v2360 = vpack.c.b16 %v2324, %v2323
        %v2361 = vpack.c.b16 %v2326, %v2325
        %v2362 = vpack.c.b16 %v2328, %v2327
        %v2363 = vpack.c.b16 %v2330, %v2329
        %v2364 = vpack.c.b16 %v2332, %v2331
        %v2365 = vpack.c.b16 %v2334, %v2333
        %v2366 = vpack.c.b16 %v2336, %v2335
        %v2367 = vpack.c.b16 %v2338, %v2337
        %v2368 = vpack.c.b16 %v2340, %v2339
        %v2369 = vpack.c.b16 %v2342, %v2341
        %v2370 = vpack.c.b16 %v2344, %v2343
        %v2371 = vpack.c.b16 %v2346, %v2345
        %v2372 = vpack.c.b16 %v2348, %v2347
        %2397 = vmatprep.subr.bf16.mxu0 0
        %2398 = vmatpush1.bf16.msra.mxu0 %v2349
        %2399 = vmatprep.subr.bf16.mxu0 0
        %2400 = vmatpush1.bf16.msra.mxu0 %v2350
        %2401 = vmatprep.subr.bf16.mxu0 0
        %2402 = vmatpush1.bf16.msra.mxu0 %v2351
        %2403 = vmatprep.subr.bf16.mxu0 0
        %2404 = vmatpush1.bf16.msra.mxu0 %v2352
        %2405 = vmatprep.subr.bf16.mxu0 0
        %2406 = vmatpush1.bf16.msra.mxu0 %v2353
        %2407 = vmatprep.subr.bf16.mxu0 0
        %2408 = vmatpush1.bf16.msra.mxu0 %v2354
        %2409 = vmatprep.subr.bf16.mxu0 0
        %2410 = vmatpush1.bf16.msra.mxu0 %v2355
        %2411 = vmatprep.subr.bf16.mxu0 0
        %2412 = vmatpush1.bf16.msra.mxu0 %v2356
        %2413 = vmatprep.subr.bf16.mxu0 0
        %2414 = vmatpush1.bf16.msra.mxu0 %v2357
        %2415 = vmatprep.subr.bf16.mxu0 0
        %2416 = vmatpush1.bf16.msra.mxu0 %v2358
        %2417 = vmatprep.subr.bf16.mxu0 0
        %2418 = vmatpush1.bf16.msra.mxu0 %v2359
        %2419 = vmatprep.subr.bf16.mxu0 0
        %2420 = vmatpush1.bf16.msra.mxu0 %v2360
        %2421 = vmatprep.subr.bf16.mxu0 0
        %2422 = vmatpush1.bf16.msra.mxu0 %v2361
        %2423 = vmatprep.subr.bf16.mxu0 0
        %2424 = vmatpush1.bf16.msra.mxu0 %v2362
        %2425 = vmatprep.subr.bf16.mxu0 0
        %2426 = vmatpush1.bf16.msra.mxu0 %v2363
        %2427 = vmatprep.subr.bf16.mxu0 0
        %2428 = vmatpush1.bf16.msra.mxu0 %v2364
        %2429 = vmatprep.mubr.bf16.mxu0 %v2230
        %2430 = vmatmul.mubr.bf16.gmra.mrb[0].mxu0 %v2229
        %v2431 = vpop.f32.mrb[0].mxu0
        %v2432 = vadd.f32 0.0, %v2431
        %v2433 = vpop.f32.mrb[0].mxu0
        %v2434 = vpop.f32.mrb[0].mxu0
        %v2435 = vadd.f32 0.0, %v2434
        %v2436 = vpop.f32.mrb[0].mxu0
        %2437 = vmatprep.mubr.bf16.mxu0 %v2233
        %2438 = vmatmul.mubr.bf16.gmra.mrb[0].mxu0 %v2232
        %v2439 = vpop.f32.mrb[0].mxu0
        %v2440 = vadd.f32 0.0, %v2439
        %v2441 = vpop.f32.mrb[0].mxu0
        %v2442 = vpop.f32.mrb[0].mxu0
        %v2443 = vadd.f32 0.0, %v2442
        %v2444 = vpop.f32.mrb[0].mxu0
        %2445 = vmatprep.mubr.bf16.mxu0 %v2236
        %2446 = vmatmul.mubr.bf16.gmra.mrb[0].mxu0 %v2235
        %v2447 = vpop.f32.mrb[0].mxu0
        %v2448 = vadd.f32 0.0, %v2447
        %v2449 = vpop.f32.mrb[0].mxu0
        %v2450 = vpop.f32.mrb[0].mxu0
        %v2451 = vadd.f32 0.0, %v2450
        %v2452 = vpop.f32.mrb[0].mxu0
        %2453 = vmatprep.mubr.bf16.mxu0 %v2239
        %2454 = vmatmul.mubr.bf16.gmra.mrb[0].mxu0 %v2238
        %v2455 = vpop.f32.mrb[0].mxu0
        %v2456 = vadd.f32 0.0, %v2455
        %v2457 = vpop.f32.mrb[0].mxu0
        %v2458 = vpop.f32.mrb[0].mxu0
        %v2459 = vadd.f32 0.0, %v2458
        %v2460 = vpop.f32.mrb[0].mxu0
        %2461 = vdwg.mxu0
        %2462 = vmatprep.subr.bf16.mxu0 0
        %2463 = vmatpush1.bf16.msra.mxu0 %v2365
        %2464 = vmatprep.subr.bf16.mxu0 0
        %2465 = vmatpush1.bf16.msra.mxu0 %v2366
        %2466 = vmatprep.subr.bf16.mxu0 0
        %2467 = vmatpush1.bf16.msra.mxu0 %v2367
        %2468 = vmatprep.subr.bf16.mxu0 0
        %2469 = vmatpush1.bf16.msra.mxu0 %v2368
        %2470 = vmatprep.subr.bf16.mxu0 0
        %2471 = vmatpush1.bf16.msra.mxu0 %v2369
        %2472 = vmatprep.subr.bf16.mxu0 0
        %2473 = vmatpush1.bf16.msra.mxu0 %v2370
        %2474 = vmatprep.subr.bf16.mxu0 0
        %2475 = vmatpush1.bf16.msra.mxu0 %v2371
        %2476 = vmatprep.subr.bf16.mxu0 0
        %2477 = vmatpush1.bf16.msra.mxu0 %v2372
        %2478 = vmatprep.subr.bf16.mxu0 0
        %2479 = vmatpush1.bf16.msra.mxu0 0
        %2480 = vmatprep.subr.bf16.mxu0 0
        %2481 = vmatpush1.bf16.msra.mxu0 0
        %2482 = vmatprep.subr.bf16.mxu0 0
        %2483 = vmatpush1.bf16.msra.mxu0 0
        %2484 = vmatprep.subr.bf16.mxu0 0
        %2485 = vmatpush1.bf16.msra.mxu0 0
        %2486 = vmatprep.subr.bf16.mxu0 0
        %2487 = vmatpush1.bf16.msra.mxu0 0
        %2488 = vmatprep.subr.bf16.mxu0 0
        %2489 = vmatpush1.bf16.msra.mxu0 0
        %2490 = vmatprep.subr.bf16.mxu0 0
        %2491 = vmatpush1.bf16.msra.mxu0 0
        %2492 = vmatprep.subr.bf16.mxu0 0
        %2493 = vmatpush1.bf16.msra.mxu0 0
        %2494 = vmatprep.mubr.bf16.mxu0 0
        %2495 = vmatmul.mubr.bf16.gmra.mrb[0].mxu0 %v2231
        %v2496 = vpop.f32.mrb[0].mxu0
        %v2497 = vadd.f32 %v2432, %v2496
        %v2498 = vpop.f32.mrb[0].mxu0
        %v2499 = vpop.f32.mrb[0].mxu0
        %v2500 = vadd.f32 %v2435, %v2499
        %v2501 = vpop.f32.mrb[0].mxu0
        %2502 = vmatprep.mubr.bf16.mxu0 0
        %2503 = vmatmul.mubr.bf16.gmra.mrb[0].mxu0 %v2234
        %v2504 = vpop.f32.mrb[0].mxu0
        %v2505 = vadd.f32 %v2440, %v2504
        %v2506 = vpop.f32.mrb[0].mxu0
        %v2507 = vpop.f32.mrb[0].mxu0
        %v2508 = vadd.f32 %v2443, %v2507
        %v2509 = vpop.f32.mrb[0].mxu0
        %2510 = vmatprep.mubr.bf16.mxu0 0
        %2511 = vmatmul.mubr.bf16.gmra.mrb[0].mxu0 %v2237
        %v2512 = vpop.f32.mrb[0].mxu0
        %v2513 = vadd.f32 %v2448, %v2512
        %v2514 = vpop.f32.mrb[0].mxu0
        %v2515 = vpop.f32.mrb[0].mxu0
        %v2516 = vadd.f32 %v2451, %v2515
        %v2517 = vpop.f32.mrb[0].mxu0
        %2518 = vmatprep.mubr.bf16.mxu0 0
        %2519 = vmatmul.mubr.bf16.gmra.mrb[0].mxu0 %v2240
        %v2520 = vpop.f32.mrb[0].mxu0
        %v2521 = vadd.f32 %v2456, %v2520
        %v2522 = vpop.f32.mrb[0].mxu0
        %v2523 = vpop.f32.mrb[0].mxu0
        %v2524 = vadd.f32 %v2459, %v2523
        %v2525 = vpop.f32.mrb[0].mxu0
        %2526 = vdwg.mxu0
        %v2527 = vadd.f32 %v2013, %v2497
        %v2528 = vadd.f32 %v2016, %v2500
        %v2529 = vadd.f32 %v2021, %v2505
        %v2530 = vadd.f32 %v2024, %v2508
        %v2531 = vadd.f32 %v2029, %v2513
        %v2532 = vadd.f32 %v2032, %v2516
        %v2533 = vadd.f32 %v2037, %v2521
        %v2534 = vadd.f32 %v2040, %v2524
        %v2535 = vld [vmem:[%s518] sm:$0x1]
        %v2537 = vlaneseq
        %v2538 = vshrl.u32 %v2537, 7
        %v2539 = vsub.s32 0, %v2538
        %v2540 = vrot.slane %v2535, %v2539
        %v2542 = vadd.f32 %v2527, %v2540
        %v2543 = vadd.f32 %v2528, %v2540
        %v2544 = vadd.f32 %v2529, %v2540
        %v2545 = vadd.f32 %v2530, %v2540
        %v2546 = vadd.f32 %v2531, %v2540
        %v2547 = vadd.f32 %v2532, %v2540
        %v2548 = vadd.f32 %v2533, %v2540
        %v2549 = vadd.f32 %v2534, %v2540
        %v2550 = vadd.f32 %v2542, %v2543
        %v2551 = vadd.f32 %v2550, %v2544
        %v2552 = vadd.f32 %v2551, %v2545
        %v2553 = vadd.f32 %v2552, %v2546
        %v2554 = vadd.f32 %v2553, %v2547
        %v2555 = vadd.f32 %v2554, %v2548
        %v2556 = vadd.f32 %v2555, %v2549
        %v2557 = vrot.slane %v2556, 4
        %v2558 = vadd.f32 %v2556, %v2557
        %v2559 = vrot.slane %v2558, 2
        %v2560 = vadd.f32 %v2558, %v2559
        %v2561 = vrot.slane %v2560, 1
        %v2562 = vadd.f32 %v2560, %v2561
        %v2563 = vmul.f32 %v2542, %v2542
        %v2564 = vmul.f32 %v2543, %v2543
        %v2565 = vmul.f32 %v2544, %v2544
        %v2566 = vmul.f32 %v2545, %v2545
        %v2567 = vmul.f32 %v2546, %v2546
        %v2568 = vmul.f32 %v2547, %v2547
        %v2569 = vmul.f32 %v2548, %v2548
        %v2570 = vmul.f32 %v2549, %v2549
        %v2571 = vadd.f32 %v2563, %v2564
        %v2572 = vadd.f32 %v2571, %v2565
        %v2573 = vadd.f32 %v2572, %v2566
        %v2574 = vadd.f32 %v2573, %v2567
        %v2575 = vadd.f32 %v2574, %v2568
        %v2576 = vadd.f32 %v2575, %v2569
        %v2577 = vadd.f32 %v2576, %v2570
        %v2578 = vrot.slane %v2577, 4
        %v2579 = vadd.f32 %v2577, %v2578
        %v2580 = vrot.slane %v2579, 2
        %v2581 = vadd.f32 %v2579, %v2580
        %v2582 = vrot.slane %v2581, 1
        %v2583 = vadd.f32 %v2581, %v2582
        %v2584 = vld [vmem:[#allocation9] sm:$0xff]
        %v2585 = vld [vmem:[#allocation9 + $0x8] sm:$0xff]
        %v2586 = vld [vmem:[#allocation9 + $0x10] sm:$0xff]
        %v2587 = vld [vmem:[#allocation9 + $0x18] sm:$0xff]
        %v2588 = vld [vmem:[#allocation9 + $0x20] sm:$0xff]
        %v2589 = vld [vmem:[#allocation9 + $0x28] sm:$0xff]
        %v2590 = vld [vmem:[#allocation9 + $0x30] sm:$0xff]
        %v2591 = vld [vmem:[#allocation9 + $0x38] sm:$0xff]
        %v2592 = vld [vmem:[#allocation9 + $0x40] sm:$0xff]
        %v2593 = vld [vmem:[#allocation9 + $0x48] sm:$0xff]
        %v2594 = vld [vmem:[#allocation9 + $0x50] sm:$0xff]
        %v2595 = vld [vmem:[#allocation9 + $0x58] sm:$0xff]
        %v2596 = vld [vmem:[#allocation9 + $0x60] sm:$0xff]
        %v2597 = vld [vmem:[#allocation9 + $0x68] sm:$0xff]
        %v2598 = vld [vmem:[#allocation9 + $0x70] sm:$0xff]
        %v2599 = vld [vmem:[#allocation9 + $0x78] sm:$0xff]
        %2600 = vmatprep.subr.mxu0 0.0
        %2601 = vmatpush1.msra.mxu0 %v2584
        %2602 = vmatprep.subr.mxu0 0.0
        %2603 = vmatpush1.msra.mxu0 %v2585
        %2604 = vmatprep.subr.mxu0 0.0
        %2605 = vmatpush1.msra.mxu0 %v2586
        %2606 = vmatprep.subr.mxu0 0.0
        %2607 = vmatpush1.msra.mxu0 %v2587
        %2608 = vmatprep.subr.mxu0 0.0
        %2609 = vmatpush1.msra.mxu0 %v2588
        %2610 = vmatprep.subr.mxu0 0.0
        %2611 = vmatpush1.msra.mxu0 %v2589
        %2612 = vmatprep.subr.mxu0 0.0
        %2613 = vmatpush1.msra.mxu0 %v2590
        %2614 = vmatprep.subr.mxu0 0.0
        %2615 = vmatpush1.msra.mxu0 %v2591
        %2616 = vmatprep.subr.mxu0 0.0
        %2617 = vmatpush1.msra.mxu0 %v2592
        %2618 = vmatprep.subr.mxu0 0.0
        %2619 = vmatpush1.msra.mxu0 %v2593
        %2620 = vmatprep.subr.mxu0 0.0
        %2621 = vmatpush1.msra.mxu0 %v2594
        %2622 = vmatprep.subr.mxu0 0.0
        %2623 = vmatpush1.msra.mxu0 %v2595
        %2624 = vmatprep.subr.mxu0 0.0
        %2625 = vmatpush1.msra.mxu0 %v2596
        %2626 = vmatprep.subr.mxu0 0.0
        %2627 = vmatpush1.msra.mxu0 %v2597
        %2628 = vmatprep.subr.mxu0 0.0
        %2629 = vmatpush1.msra.mxu0 %v2598
        %2630 = vmatprep.subr.mxu0 0.0
        %2631 = vmatpush1.msra.mxu0 %v2599
        %2632 = vmatprep.subr.mxu0 0.0
        %2633 = vmatpush1.msra.mxu0 0.0
        %2634 = vmatprep.subr.mxu0 0.0
        %2635 = vmatpush1.msra.mxu0 0.0
        %2636 = vmatprep.subr.mxu0 0.0
        %2637 = vmatpush1.msra.mxu0 0.0
        %2638 = vmatprep.subr.mxu0 0.0
        %2639 = vmatpush1.msra.mxu0 0.0
        %2640 = vmatprep.subr.mxu0 0.0
        %2641 = vmatpush1.msra.mxu0 0.0
        %2642 = vmatprep.subr.mxu0 0.0
        %2643 = vmatpush1.msra.mxu0 0.0
        %2644 = vmatprep.subr.mxu0 0.0
        %2645 = vmatpush1.msra.mxu0 0.0
        %2646 = vmatprep.subr.mxu0 0.0
        %2647 = vmatpush1.msra.mxu0 0.0
        %2648 = vmatprep.subr.mxu0 0.0
        %2649 = vmatpush1.msra.mxu0 0.0
        %2650 = vmatprep.subr.mxu0 0.0
        %2651 = vmatpush1.msra.mxu0 0.0
        %2652 = vmatprep.subr.mxu0 0.0
        %2653 = vmatpush1.msra.mxu0 0.0
        %2654 = vmatprep.subr.mxu0 0.0
        %2655 = vmatpush1.msra.mxu0 0.0
        %2656 = vmatprep.subr.mxu0 0.0
        %2657 = vmatpush1.msra.mxu0 0.0
        %2658 = vmatprep.subr.mxu0 0.0
        %2659 = vmatpush1.msra.mxu0 0.0
        %2660 = vmatprep.subr.mxu0 0.0
        %2661 = vmatpush1.msra.mxu0 0.0
        %2662 = vmatprep.subr.mxu0 0.0
        %2663 = vmatpush1.msra.mxu0 0.0
        %2664 = vmatprep.mubr.f32.mxu0 0.0
        %2665 = vmatmul.mubr.f32.gmra.mrb[0].mxu0 %v2562
        %v2666 = vpop.f32.mrb[0].mxu0
        %v2667 = vadd.f32 0.0, %v2666
        %v2668 = vpop.f32.mrb[0].mxu0
        %2669 = vdwg.mxu0
        %v2670 = vmul.f32 %v2667, 0.00390625
        %2671 = vmatprep.subr.mxu0 0.0
        %2672 = vmatpush1.msra.mxu0 %v2584
        %2673 = vmatprep.subr.mxu0 0.0
        %2674 = vmatpush1.msra.mxu0 %v2585
        %2675 = vmatprep.subr.mxu0 0.0
        %2676 = vmatpush1.msra.mxu0 %v2586
        %2677 = vmatprep.subr.mxu0 0.0
        %2678 = vmatpush1.msra.mxu0 %v2587
        %2679 = vmatprep.subr.mxu0 0.0
        %2680 = vmatpush1.msra.mxu0 %v2588
        %2681 = vmatprep.subr.mxu0 0.0
        %2682 = vmatpush1.msra.mxu0 %v2589
        %2683 = vmatprep.subr.mxu0 0.0
        %2684 = vmatpush1.msra.mxu0 %v2590
        %2685 = vmatprep.subr.mxu0 0.0
        %2686 = vmatpush1.msra.mxu0 %v2591
        %2687 = vmatprep.subr.mxu0 0.0
        %2688 = vmatpush1.msra.mxu0 %v2592
        %2689 = vmatprep.subr.mxu0 0.0
        %2690 = vmatpush1.msra.mxu0 %v2593
        %2691 = vmatprep.subr.mxu0 0.0
        %2692 = vmatpush1.msra.mxu0 %v2594
        %2693 = vmatprep.subr.mxu0 0.0
        %2694 = vmatpush1.msra.mxu0 %v2595
        %2695 = vmatprep.subr.mxu0 0.0
        %2696 = vmatpush1.msra.mxu0 %v2596
        %2697 = vmatprep.subr.mxu0 0.0
        %2698 = vmatpush1.msra.mxu0 %v2597
        %2699 = vmatprep.subr.mxu0 0.0
        %2700 = vmatpush1.msra.mxu0 %v2598
        %2701 = vmatprep.subr.mxu0 0.0
        %2702 = vmatpush1.msra.mxu0 %v2599
        %2703 = vmatprep.subr.mxu0 0.0
        %2704 = vmatpush1.msra.mxu0 0.0
        %2705 = vmatprep.subr.mxu0 0.0
        %2706 = vmatpush1.msra.mxu0 0.0
        %2707 = vmatprep.subr.mxu0 0.0
        %2708 = vmatpush1.msra.mxu0 0.0
        %2709 = vmatprep.subr.mxu0 0.0
        %2710 = vmatpush1.msra.mxu0 0.0
        %2711 = vmatprep.subr.mxu0 0.0
        %2712 = vmatpush1.msra.mxu0 0.0
        %2713 = vmatprep.subr.mxu0 0.0
        %2714 = vmatpush1.msra.mxu0 0.0
        %2715 = vmatprep.subr.mxu0 0.0
        %2716 = vmatpush1.msra.mxu0 0.0
        %2717 = vmatprep.subr.mxu0 0.0
        %2718 = vmatpush1.msra.mxu0 0.0
        %2719 = vmatprep.subr.mxu0 0.0
        %2720 = vmatpush1.msra.mxu0 0.0
        %2721 = vmatprep.subr.mxu0 0.0
        %2722 = vmatpush1.msra.mxu0 0.0
        %2723 = vmatprep.subr.mxu0 0.0
        %2724 = vmatpush1.msra.mxu0 0.0
        %2725 = vmatprep.subr.mxu0 0.0
        %2726 = vmatpush1.msra.mxu0 0.0
        %2727 = vmatprep.subr.mxu0 0.0
        %2728 = vmatpush1.msra.mxu0 0.0
        %2729 = vmatprep.subr.mxu0 0.0
        %2730 = vmatpush1.msra.mxu0 0.0
        %2731 = vmatprep.subr.mxu0 0.0
        %2732 = vmatpush1.msra.mxu0 0.0
        %2733 = vmatprep.subr.mxu0 0.0
        %2734 = vmatpush1.msra.mxu0 0.0
        %2735 = vmatprep.mubr.f32.mxu0 0.0
        %2736 = vmatmul.mubr.f32.gmra.mrb[0].mxu0 %v2583
        %v2737 = vpop.f32.mrb[0].mxu0
        %v2738 = vadd.f32 0.0, %v2737
        %v2739 = vpop.f32.mrb[0].mxu0
        %2740 = vdwg.mxu0
        %v2741 = vmul.f32 %v2738, 0.00390625
        %v2742 = vmul.f32 %v2670, %v2670
        %v2743 = vsub.f32 %v2741, %v2742
        %v2744 = vadd.f32 %v2743, 1e-06
        %v2745 = vrsqrt.pop %v2744
        %v2746 = vld [vmem:[%s6] sm:$0x1]
        %v2747 = vmul.f32 %v2745, %v2746
        %v2748 = vld [vmem:[%s7] sm:$0x1]
        %v2749 = vmul.f32 %v2670, %v2747
        %v2750 = vsub.f32 %v2748, %v2749
        %v2751 = vlaneseq
        %v2752 = vshrl.u32 %v2751, 7
        %v2753 = vsub.s32 0, %v2752
        %v2754 = vrot.slane %v2747, %v2753
        %v2755 = vmul.f32 %v2542, %v2754
        %v2756 = vmul.f32 %v2543, %v2754
        %v2757 = vmul.f32 %v2544, %v2754
        %v2758 = vmul.f32 %v2545, %v2754
        %v2759 = vmul.f32 %v2546, %v2754
        %v2760 = vmul.f32 %v2547, %v2754
        %v2761 = vmul.f32 %v2548, %v2754
        %v2762 = vmul.f32 %v2549, %v2754
        %v2764 = vlaneseq
        %v2765 = vshrl.u32 %v2764, 7
        %v2766 = vsub.s32 0, %v2765
        %v2767 = vrot.slane %v2750, %v2766
        %v2769 = vadd.f32 %v2755, %v2767
        %v2770 = vadd.f32 %v2756, %v2767
        %v2771 = vadd.f32 %v2757, %v2767
        %v2772 = vadd.f32 %v2758, %v2767
        %v2773 = vadd.f32 %v2759, %v2767
        %v2774 = vadd.f32 %v2760, %v2767
        %v2775 = vadd.f32 %v2761, %v2767
        %v2776 = vadd.f32 %v2762, %v2767
        %v2777 = vxor.u32 %v2769, 2147483648
        %v2778 = vxor.u32 %v2770, 2147483648
        %v2779 = vxor.u32 %v2771, 2147483648
        %v2780 = vxor.u32 %v2772, 2147483648
        %v2781 = vxor.u32 %v2773, 2147483648
        %v2782 = vxor.u32 %v2774, 2147483648
        %v2783 = vxor.u32 %v2775, 2147483648
        %v2784 = vxor.u32 %v2776, 2147483648
        %v2785 = vmul.f32 %v2777, 1.442695
        %v2786 = vpow.pop %v2785
        %v2787 = vmul.f32 %v2778, 1.442695
        %v2788 = vpow.pop %v2787
        %v2789 = vmul.f32 %v2779, 1.442695
        %v2790 = vpow.pop %v2789
        %v2791 = vmul.f32 %v2780, 1.442695
        %v2792 = vpow.pop %v2791
        %v2793 = vmul.f32 %v2781, 1.442695
        %v2794 = vpow.pop %v2793
        %v2795 = vmul.f32 %v2782, 1.442695
        %v2796 = vpow.pop %v2795
        %v2797 = vmul.f32 %v2783, 1.442695
        %v2798 = vpow.pop %v2797
        %v2799 = vmul.f32 %v2784, 1.442695
        %v2800 = vpow.pop %v2799
        %v2801 = vadd.f32 %v2786, 1.0
        %v2802 = vadd.f32 %v2788, 1.0
        %v2803 = vadd.f32 %v2790, 1.0
        %v2804 = vadd.f32 %v2792, 1.0
        %v2805 = vadd.f32 %v2794, 1.0
        %v2806 = vadd.f32 %v2796, 1.0
        %v2807 = vadd.f32 %v2798, 1.0
        %v2808 = vadd.f32 %v2800, 1.0
        %v2809 = vrcp.pop %v2801
        %v2810 = vmul.f32 1.0, %v2809
        %v2811 = vrcp.pop %v2802
        %v2812 = vmul.f32 1.0, %v2811
        %v2813 = vrcp.pop %v2803
        %v2814 = vmul.f32 1.0, %v2813
        %v2815 = vrcp.pop %v2804
        %v2816 = vmul.f32 1.0, %v2815
        %v2817 = vrcp.pop %v2805
        %v2818 = vmul.f32 1.0, %v2817
        %v2819 = vrcp.pop %v2806
        %v2820 = vmul.f32 1.0, %v2819
        %v2821 = vrcp.pop %v2807
        %v2822 = vmul.f32 1.0, %v2821
        %v2823 = vrcp.pop %v2808
        %v2824 = vmul.f32 1.0, %v2823
        %v2825 = vmul.f32 %v2769, %v2810
        %v2826 = vmul.f32 %v2770, %v2812
        %v2827 = vmul.f32 %v2771, %v2814
        %v2828 = vmul.f32 %v2772, %v2816
        %v2829 = vmul.f32 %v2773, %v2818
        %v2830 = vmul.f32 %v2774, %v2820
        %v2831 = vmul.f32 %v2775, %v2822
        %v2832 = vmul.f32 %v2776, %v2824
        %v2833 = vld [vmem:[%s452] sm:$0xf]
        %v2834 = vld [vmem:[%s452 + $0x4] sm:$0xf]
        %v2835 = vld [vmem:[%s452 + $0x8] sm:$0xf]
        %v2836 = vld [vmem:[%s452 + $0xc] sm:$0xf]
        %v2837 = vld [vmem:[%s452 + $0x10] sm:$0xf]
        %v2838 = vld [vmem:[%s452 + $0x14] sm:$0xf]
        %v2839 = vld [vmem:[%s452 + $0x18] sm:$0xf]
        %v2840 = vld [vmem:[%s452 + $0x1c] sm:$0xf]
        %v2841 = vld [vmem:[#allocation12] sm:$0xf]
        %v2842 = vld [vmem:[#allocation12 + $0x4] sm:$0xf]
        %v2843 = vld [vmem:[#allocation12 + $0x8] sm:$0xf]
        %v2844 = vld [vmem:[#allocation12 + $0xc] sm:$0xf]
        %v2845 = vld [vmem:[#allocation12 + $0x10] sm:$0xf]
        %v2846 = vld [vmem:[#allocation12 + $0x14] sm:$0xf]
        %v2847 = vld [vmem:[#allocation12 + $0x18] sm:$0xf]
        %v2848 = vld [vmem:[#allocation12 + $0x1c] sm:$0xf]
        %v2849 = vld [vmem:[#allocation12 + $0x20] sm:$0xf]
        %v2850 = vld [vmem:[#allocation12 + $0x24] sm:$0xf]
        %v2851 = vld [vmem:[#allocation12 + $0x28] sm:$0xf]
        %v2852 = vld [vmem:[#allocation12 + $0x2c] sm:$0xf]
        %v2853 = vld [vmem:[#allocation12 + $0x30] sm:$0xf]
        %v2854 = vld [vmem:[#allocation12 + $0x34] sm:$0xf]
        %v2855 = vld [vmem:[#allocation12 + $0x38] sm:$0xf]
        %v2856 = vld [vmem:[#allocation12 + $0x3c] sm:$0xf]
        %v2857 = vpack.c.bf16 %v2825, %v2825
        %v2858 = vpack.c.bf16 %v2826, %v2826
        %v2859 = vpack.c.bf16 %v2827, %v2827
        %v2860 = vpack.c.bf16 %v2828, %v2828
        %v2861 = vpack.c.bf16 %v2829, %v2829
        %v2862 = vpack.c.bf16 %v2830, %v2830
        %v2863 = vpack.c.bf16 %v2831, %v2831
        %v2864 = vpack.c.bf16 %v2832, %v2832
        %v2866 = vshrl.u32 %v2864, 16
        %v2868 = vrot.slane %v2866, 3
        %v2870 = vshrl.u32 %v2857, 16
        %v2872 = vrot.slane %v2870, 3
        %v2874 = vshrl.u32 %v2858, 16
        %v2876 = vrot.slane %v2874, 3
        %v2878 = vshrl.u32 %v2859, 16
        %v2880 = vrot.slane %v2878, 3
        %v2882 = vshrl.u32 %v2860, 16
        %v2884 = vrot.slane %v2882, 3
        %v2886 = vshrl.u32 %v2861, 16
        %v2888 = vrot.slane %v2886, 3
        %v2890 = vshrl.u32 %v2862, 16
        %v2892 = vrot.slane %v2890, 3
        %v2894 = vshrl.u32 %v2863, 16
        %v2896 = vrot.slane %v2894, 3
        %v2905 = vrot.slane %v2866, 7
        %v2906 = vshll.u32 %v2864, 16
        %v2908 = vor.u32 %v2905, %v2906
        %v2909 = vrot.slane %v2870, 7
        %v2910 = vshll.u32 %v2857, 16
        %v2912 = vor.u32 %v2909, %v2910
        %v2913 = vrot.slane %v2874, 7
        %v2914 = vshll.u32 %v2858, 16
        %v2916 = vor.u32 %v2913, %v2914
        %v2917 = vrot.slane %v2878, 7
        %v2918 = vshll.u32 %v2859, 16
        %v2920 = vor.u32 %v2917, %v2918
        %v2921 = vrot.slane %v2882, 7
        %v2922 = vshll.u32 %v2860, 16
        %v2924 = vor.u32 %v2921, %v2922
        %v2925 = vrot.slane %v2886, 7
        %v2926 = vshll.u32 %v2861, 16
        %v2928 = vor.u32 %v2925, %v2926
        %v2929 = vrot.slane %v2890, 7
        %v2930 = vshll.u32 %v2862, 16
        %v2932 = vor.u32 %v2929, %v2930
        %v2933 = vrot.slane %v2894, 7
        %v2934 = vshll.u32 %v2863, 16
        %v2936 = vor.u32 %v2933, %v2934
        %v2945 = vrot.slane %v2906, 4
        %v2946 = vrot.slane %v2910, 4
        %v2947 = vrot.slane %v2914, 4
        %v2948 = vrot.slane %v2918, 4
        %v2949 = vrot.slane %v2922, 4
        %v2950 = vrot.slane %v2926, 4
        %v2951 = vrot.slane %v2930, 4
        %v2952 = vrot.slane %v2934, 4
        %v2961 = vsel %vm925, %v2868, %v2908
        %v2962 = vsel %vm925, %v2872, %v2912
        %v2963 = vsel %vm925, %v2876, %v2916
        %v2964 = vsel %vm925, %v2880, %v2920
        %v2965 = vsel %vm925, %v2884, %v2924
        %v2966 = vsel %vm925, %v2888, %v2928
        %v2967 = vsel %vm925, %v2892, %v2932
        %v2968 = vsel %vm925, %v2896, %v2936
        %v2969 = vsel %vm936, %v2961, %v2945
        %v2970 = vsel %vm936, %v2962, %v2946
        %v2971 = vsel %vm936, %v2963, %v2947
        %v2972 = vsel %vm936, %v2964, %v2948
        %v2973 = vsel %vm936, %v2965, %v2949
        %v2974 = vsel %vm936, %v2966, %v2950
        %v2975 = vsel %vm936, %v2967, %v2951
        %v2976 = vsel %vm936, %v2968, %v2952
        %v2985 = vunpack.c.l.b16 %v2969
        %v2986 = vunpack.c.h.b16 %v2969
        %v2987 = vunpack.c.l.b16 %v2970
        %v2988 = vunpack.c.h.b16 %v2970
        %v2989 = vunpack.c.l.b16 %v2971
        %v2990 = vunpack.c.h.b16 %v2971
        %v2991 = vunpack.c.l.b16 %v2972
        %v2992 = vunpack.c.h.b16 %v2972
        %v2993 = vunpack.c.l.b16 %v2973
        %v2994 = vunpack.c.h.b16 %v2973
        %v2995 = vunpack.c.l.b16 %v2974
        %v2996 = vunpack.c.h.b16 %v2974
        %v2997 = vunpack.c.l.b16 %v2975
        %v2998 = vunpack.c.h.b16 %v2975
        %v2999 = vunpack.c.l.b16 %v2976
        %v3000 = vunpack.c.h.b16 %v2976
        %v3001 = vpack.c.b16 %v2985, %v2985
        %v3002 = vpack.c.b16 %v2986, %v2986
        %v3003 = vpack.c.b16 %v2987, %v2987
        %v3004 = vpack.c.b16 %v2988, %v2988
        %v3005 = vpack.c.b16 %v2989, %v2989
        %v3006 = vpack.c.b16 %v2990, %v2990
        %v3007 = vpack.c.b16 %v2991, %v2991
        %v3008 = vpack.c.b16 %v2992, %v2992
        %v3009 = vpack.c.b16 %v2993, %v2993
        %v3010 = vpack.c.b16 %v2994, %v2994
        %v3011 = vpack.c.b16 %v2995, %v2995
        %v3012 = vpack.c.b16 %v2996, %v2996
        %v3013 = vpack.c.b16 %v2997, %v2997
        %v3014 = vpack.c.b16 %v2998, %v2998
        %v3015 = vpack.c.b16 %v2999, %v2999
        %v3016 = vpack.c.b16 %v3000, %v3000
        %3033 = vst [vmem:[#allocation2] sm:$0xf] %v3001
        %3034 = vst [vmem:[#allocation2 + $0x4] sm:$0x1] %v3002
        %3035 = vst [vmem:[#allocation2 + $0x8] sm:$0xf] %v3003
        %3036 = vst [vmem:[#allocation2 + $0xc] sm:$0x1] %v3004
        %3037 = vst [vmem:[#allocation2 + $0x10] sm:$0xf] %v3005
        %3038 = vst [vmem:[#allocation2 + $0x14] sm:$0x1] %v3006
        %3039 = vst [vmem:[#allocation2 + $0x18] sm:$0xf] %v3007
        %3040 = vst [vmem:[#allocation2 + $0x1c] sm:$0x1] %v3008
        %3041 = vst [vmem:[#allocation2 + $0x20] sm:$0xf] %v3009
        %3042 = vst [vmem:[#allocation2 + $0x24] sm:$0x1] %v3010
        %3043 = vst [vmem:[#allocation2 + $0x28] sm:$0xf] %v3011
        %3044 = vst [vmem:[#allocation2 + $0x2c] sm:$0x1] %v3012
        %3045 = vst [vmem:[#allocation2 + $0x30] sm:$0xf] %v3013
        %3046 = vst [vmem:[#allocation2 + $0x34] sm:$0x1] %v3014
        %3047 = vst [vmem:[#allocation2 + $0x38] sm:$0xf] %v3015
        %3048 = vst [vmem:[#allocation2 + $0x3c] sm:$0x1] %v3016
        %3049 = vst [vmem:[#allocation2 + $0x40] sm:$0xf] %v3001
        %3050 = vst [vmem:[#allocation2 + $0x44] sm:$0x1] %v3002
        %3051 = vst [vmem:[#allocation2 + $0x48] sm:$0xf] %v3003
        %3052 = vst [vmem:[#allocation2 + $0x4c] sm:$0x1] %v3004
        %v3053 = vld [vmem:[%s10] sm:$0x1]
        %v3055 = vlaneseq
        %v3056 = vshrl.u32 %v3055, 7
        %v3057 = vsub.s32 0, %v3056
        %v3058 = vrot.slane %v3053, %v3057
        %v3068 = vunpack.c.l.b16 %v2833
        %v3069 = vunpack.c.l.b16 %v2834
        %v3070 = vunpack.c.l.b16 %v2835
        %v3071 = vunpack.c.l.b16 %v2836
        %v3072 = vunpack.c.l.b16 %v2837
        %v3073 = vunpack.c.l.b16 %v2838
        %v3074 = vunpack.c.l.b16 %v2839
        %v3075 = vunpack.c.l.b16 %v2840
        %v3076 = vpack.c.b16 %v3069, %v3068
        %v3077 = vpack.c.b16 %v3071, %v3070
        %v3078 = vpack.c.b16 %v3073, %v3072
        %v3079 = vpack.c.b16 %v3075, %v3074
        %v3100 = vunpack.c.l.b16 %v2841
        %v3101 = vunpack.c.l.b16 %v2842
        %v3102 = vunpack.c.l.b16 %v2843
        %v3103 = vunpack.c.l.b16 %v2844
        %v3104 = vunpack.c.l.b16 %v2845
        %v3105 = vunpack.c.l.b16 %v2846
        %v3106 = vunpack.c.l.b16 %v2847
        %v3107 = vunpack.c.l.b16 %v2848
        %v3108 = vunpack.c.l.b16 %v2849
        %v3109 = vunpack.c.l.b16 %v2850
        %v3110 = vunpack.c.l.b16 %v2851
        %v3111 = vunpack.c.l.b16 %v2852
        %v3112 = vunpack.c.l.b16 %v2853
        %v3113 = vunpack.c.l.b16 %v2854
        %v3114 = vunpack.c.l.b16 %v2855
        %v3115 = vunpack.c.l.b16 %v2856
        %v3116 = vpack.c.b16 %v3101, %v3100
        %v3117 = vpack.c.b16 %v3103, %v3102
        %v3118 = vpack.c.b16 %v3105, %v3104
        %v3119 = vpack.c.b16 %v3107, %v3106
        %v3120 = vpack.c.b16 %v3109, %v3108
        %v3121 = vpack.c.b16 %v3111, %v3110
        %v3122 = vpack.c.b16 %v3113, %v3112
        %v3123 = vpack.c.b16 %v3115, %v3114
        %3132 = vmatprep.subr.bf16.mxu0 0
        %3133 = vmatpush1.bf16.msra.mxu0 %v3116
        %3134 = vmatprep.subr.bf16.mxu0 0
        %3135 = vmatpush1.bf16.msra.mxu0 %v3117
        %3136 = vmatprep.subr.bf16.mxu0 0
        %3137 = vmatpush1.bf16.msra.mxu0 %v3118
        %3138 = vmatprep.subr.bf16.mxu0 0
        %3139 = vmatpush1.bf16.msra.mxu0 %v3119
        %3140 = vmatprep.subr.bf16.mxu0 0
        %3141 = vmatpush1.bf16.msra.mxu0 %v3120
        %3142 = vmatprep.subr.bf16.mxu0 0
        %3143 = vmatpush1.bf16.msra.mxu0 %v3121
        %3144 = vmatprep.subr.bf16.mxu0 0
        %3145 = vmatpush1.bf16.msra.mxu0 %v3122
        %3146 = vmatprep.subr.bf16.mxu0 0
        %3147 = vmatpush1.bf16.msra.mxu0 %v3123
        %3148 = vmatprep.subr.bf16.mxu0 0
        %3149 = vmatpush1.bf16.msra.mxu0 0
        %3150 = vmatprep.subr.bf16.mxu0 0
        %3151 = vmatpush1.bf16.msra.mxu0 0
        %3152 = vmatprep.subr.bf16.mxu0 0
        %3153 = vmatpush1.bf16.msra.mxu0 0
        %3154 = vmatprep.subr.bf16.mxu0 0
        %3155 = vmatpush1.bf16.msra.mxu0 0
        %3156 = vmatprep.subr.bf16.mxu0 0
        %3157 = vmatpush1.bf16.msra.mxu0 0
        %3158 = vmatprep.subr.bf16.mxu0 0
        %3159 = vmatpush1.bf16.msra.mxu0 0
        %3160 = vmatprep.subr.bf16.mxu0 0
        %3161 = vmatpush1.bf16.msra.mxu0 0
        %3162 = vmatprep.subr.bf16.mxu0 0
        %3163 = vmatpush1.bf16.msra.mxu0 0
        %3164 = vmatprep.mubr.bf16.mxu0 0
        %3165 = vmatmul.mubr.bf16.gmra.mrb[0].mxu0 %v3076
        %v3166 = vpop.f32.mrb[0].mxu0
        %v3167 = vadd.f32 %v3058, %v3166
        %v3168 = vpop.f32.mrb[0].mxu0
        %v3169 = vpop.f32.mrb[0].mxu0
        %v3170 = vadd.f32 %v3058, %v3169
        %v3171 = vpop.f32.mrb[0].mxu0
        %3172 = vmatprep.mubr.bf16.mxu0 0
        %3173 = vmatmul.mubr.bf16.gmra.mrb[0].mxu0 %v3077
        %v3174 = vpop.f32.mrb[0].mxu0
        %v3175 = vadd.f32 %v3058, %v3174
        %v3176 = vpop.f32.mrb[0].mxu0
        %v3177 = vpop.f32.mrb[0].mxu0
        %v3178 = vadd.f32 %v3058, %v3177
        %v3179 = vpop.f32.mrb[0].mxu0
        %3180 = vmatprep.mubr.bf16.mxu0 0
        %3181 = vmatmul.mubr.bf16.gmra.mrb[0].mxu0 %v3078
        %v3182 = vpop.f32.mrb[0].mxu0
        %v3183 = vadd.f32 %v3058, %v3182
        %v3184 = vpop.f32.mrb[0].mxu0
        %v3185 = vpop.f32.mrb[0].mxu0
        %v3186 = vadd.f32 %v3058, %v3185
        %v3187 = vpop.f32.mrb[0].mxu0
        %3188 = vmatprep.mubr.bf16.mxu0 0
        %3189 = vmatmul.mubr.bf16.gmra.mrb[0].mxu0 %v3079
        %v3190 = vpop.f32.mrb[0].mxu0
        %v3191 = vadd.f32 %v3058, %v3190
        %v3192 = vpop.f32.mrb[0].mxu0
        %v3193 = vpop.f32.mrb[0].mxu0
        %v3194 = vadd.f32 %v3058, %v3193
        %v3195 = vpop.f32.mrb[0].mxu0
        %3196 = vdwg.mxu0
        %v3197 = vld [vmem:[#allocation2] sm:$0xf]
        %v3198 = vld [vmem:[#allocation2 + $0x8] sm:$0xf]
        %v3199 = vld [vmem:[#allocation2 + $0x10] sm:$0xf]
        %v3200 = vld [vmem:[#allocation2 + $0x18] sm:$0xf]
        %v3201 = vld [vmem:[#allocation2 + $0x20] sm:$0xf]
        %v3202 = vld [vmem:[#allocation2 + $0x28] sm:$0xf]
        %v3203 = vld [vmem:[#allocation2 + $0x30] sm:$0xf]
        %v3204 = vld [vmem:[#allocation2 + $0x38] sm:$0xf]
        %v3205 = vld [vmem:[#allocation2 + $0x40] sm:$0xf]
        %v3206 = vld [vmem:[#allocation2 + $0x48] sm:$0xf]
        %v3217 = vunpack.c.l.b16 %v3197
        %v3218 = vunpack.c.l.b16 %v3198
        %v3219 = vunpack.c.l.b16 %v3199
        %v3220 = vunpack.c.l.b16 %v3200
        %v3221 = vunpack.c.l.b16 %v3201
        %v3222 = vunpack.c.l.b16 %v3202
        %v3223 = vunpack.c.l.b16 %v3203
        %v3224 = vunpack.c.l.b16 %v3204
        %v3225 = vunpack.c.l.b16 %v3205
        %v3226 = vunpack.c.l.b16 %v3206
        %v3227 = vld [vmem:[#allocation11] sm:$0xf]
        %v3228 = vld [vmem:[#allocation11 + $0x4] sm:$0xf]
        %v3229 = vld [vmem:[#allocation11 + $0x8] sm:$0xf]
        %v3230 = vld [vmem:[#allocation11 + $0xc] sm:$0xf]
        %v3231 = vld [vmem:[#allocation11 + $0x10] sm:$0xf]
        %v3232 = vld [vmem:[#allocation11 + $0x14] sm:$0xf]
        %v3233 = vld [vmem:[#allocation11 + $0x18] sm:$0xf]
        %v3234 = vld [vmem:[#allocation11 + $0x1c] sm:$0xf]
        %v3235 = vld [vmem:[#allocation11 + $0x20] sm:$0xf]
        %v3236 = vld [vmem:[#allocation11 + $0x24] sm:$0xf]
        %v3237 = vld [vmem:[#allocation11 + $0x28] sm:$0xf]
        %v3238 = vld [vmem:[#allocation11 + $0x2c] sm:$0xf]
        %v3239 = vld [vmem:[#allocation11 + $0x30] sm:$0xf]
        %v3240 = vld [vmem:[#allocation11 + $0x34] sm:$0xf]
        %v3241 = vld [vmem:[#allocation11 + $0x38] sm:$0xf]
        %v3242 = vld [vmem:[#allocation11 + $0x3c] sm:$0xf]
        %v3243 = vld [vmem:[#allocation11 + $0x40] sm:$0xf]
        %v3244 = vld [vmem:[#allocation11 + $0x44] sm:$0xf]
        %v3245 = vld [vmem:[#allocation11 + $0x48] sm:$0xf]
        %v3246 = vld [vmem:[#allocation11 + $0x4c] sm:$0xf]
        %v3247 = vld [vmem:[#allocation11 + $0x50] sm:$0xf]
        %v3248 = vld [vmem:[#allocation11 + $0x54] sm:$0xf]
        %v3249 = vld [vmem:[#allocation11 + $0x58] sm:$0xf]
        %v3250 = vld [vmem:[#allocation11 + $0x5c] sm:$0xf]
        %v3251 = vld [vmem:[#allocation11 + $0x60] sm:$0xf]
        %v3252 = vld [vmem:[#allocation11 + $0x64] sm:$0xf]
        %v3253 = vld [vmem:[#allocation11 + $0x68] sm:$0xf]
        %v3254 = vld [vmem:[#allocation11 + $0x6c] sm:$0xf]
        %v3255 = vld [vmem:[#allocation11 + $0x70] sm:$0xf]
        %v3256 = vld [vmem:[#allocation11 + $0x74] sm:$0xf]
        %v3257 = vld [vmem:[#allocation11 + $0x78] sm:$0xf]
        %v3258 = vld [vmem:[#allocation11 + $0x7c] sm:$0xf]
        %v3259 = vld [vmem:[#allocation11 + $0x80] sm:$0xf]
        %v3260 = vld [vmem:[#allocation11 + $0x84] sm:$0xf]
        %v3261 = vld [vmem:[#allocation11 + $0x88] sm:$0xf]
        %v3262 = vld [vmem:[#allocation11 + $0x8c] sm:$0xf]
        %v3263 = vld [vmem:[#allocation11 + $0x90] sm:$0xf]
        %v3264 = vld [vmem:[#allocation11 + $0x94] sm:$0xf]
        %v3265 = vld [vmem:[#allocation11 + $0x98] sm:$0xf]
        %v3266 = vld [vmem:[#allocation11 + $0x9c] sm:$0xf]
        %v3267 = vld [vmem:[#allocation11 + $0xa0] sm:$0xf]
        %v3268 = vld [vmem:[#allocation11 + $0xa4] sm:$0xf]
        %v3269 = vld [vmem:[#allocation11 + $0xa8] sm:$0xf]
        %v3270 = vld [vmem:[#allocation11 + $0xac] sm:$0xf]
        %v3271 = vld [vmem:[#allocation11 + $0xb0] sm:$0xf]
        %v3272 = vld [vmem:[#allocation11 + $0xb4] sm:$0xf]
        %v3273 = vld [vmem:[#allocation11 + $0xb8] sm:$0xf]
        %v3274 = vld [vmem:[#allocation11 + $0xbc] sm:$0xf]
        %v3275 = vpack.c.b16 %v3218, %v3217
        %v3276 = vpack.c.b16 %v3219, %v3218
        %v3277 = vpack.c.b16 %v3220, %v3219
        %v3278 = vpack.c.b16 %v3221, %v3220
        %v3279 = vpack.c.b16 %v3222, %v3221
        %v3280 = vpack.c.b16 %v3223, %v3222
        %v3281 = vpack.c.b16 %v3224, %v3223
        %v3282 = vpack.c.b16 %v3225, %v3224
        %v3283 = vpack.c.b16 %v3226, %v3225
        %v3341 = vunpack.c.l.b16 %v3227
        %v3342 = vunpack.c.l.b16 %v3228
        %v3343 = vunpack.c.l.b16 %v3229
        %v3344 = vunpack.c.l.b16 %v3230
        %v3345 = vunpack.c.l.b16 %v3231
        %v3346 = vunpack.c.l.b16 %v3232
        %v3347 = vunpack.c.l.b16 %v3233
        %v3348 = vunpack.c.l.b16 %v3234
        %v3349 = vunpack.c.l.b16 %v3235
        %v3350 = vunpack.c.l.b16 %v3236
        %v3351 = vunpack.c.l.b16 %v3237
        %v3352 = vunpack.c.l.b16 %v3238
        %v3353 = vunpack.c.l.b16 %v3239
        %v3354 = vunpack.c.l.b16 %v3240
        %v3355 = vunpack.c.l.b16 %v3241
        %v3356 = vunpack.c.l.b16 %v3242
        %v3357 = vunpack.c.l.b16 %v3243
        %v3358 = vunpack.c.l.b16 %v3244
        %v3359 = vunpack.c.l.b16 %v3245
        %v3360 = vunpack.c.l.b16 %v3246
        %v3361 = vunpack.c.l.b16 %v3247
        %v3362 = vunpack.c.l.b16 %v3248
        %v3363 = vunpack.c.l.b16 %v3249
        %v3364 = vunpack.c.l.b16 %v3250
        %v3365 = vunpack.c.l.b16 %v3251
        %v3366 = vunpack.c.l.b16 %v3252
        %v3367 = vunpack.c.l.b16 %v3253
        %v3368 = vunpack.c.l.b16 %v3254
        %v3369 = vunpack.c.l.b16 %v3255
        %v3370 = vunpack.c.l.b16 %v3256
        %v3371 = vunpack.c.l.b16 %v3257
        %v3372 = vunpack.c.l.b16 %v3258
        %v3373 = vunpack.c.l.b16 %v3259
        %v3374 = vunpack.c.l.b16 %v3260
        %v3375 = vunpack.c.l.b16 %v3261
        %v3376 = vunpack.c.l.b16 %v3262
        %v3377 = vunpack.c.l.b16 %v3263
        %v3378 = vunpack.c.l.b16 %v3264
        %v3379 = vunpack.c.l.b16 %v3265
        %v3380 = vunpack.c.l.b16 %v3266
        %v3381 = vunpack.c.l.b16 %v3267
        %v3382 = vunpack.c.l.b16 %v3268
        %v3383 = vunpack.c.l.b16 %v3269
        %v3384 = vunpack.c.l.b16 %v3270
        %v3385 = vunpack.c.l.b16 %v3271
        %v3386 = vunpack.c.l.b16 %v3272
        %v3387 = vunpack.c.l.b16 %v3273
        %v3388 = vunpack.c.l.b16 %v3274
        %v3389 = vpack.c.b16 %v3342, %v3341
        %v3390 = vpack.c.b16 %v3344, %v3343
        %v3391 = vpack.c.b16 %v3346, %v3345
        %v3392 = vpack.c.b16 %v3348, %v3347
        %v3393 = vpack.c.b16 %v3350, %v3349
        %v3394 = vpack.c.b16 %v3352, %v3351
        %v3395 = vpack.c.b16 %v3354, %v3353
        %v3396 = vpack.c.b16 %v3356, %v3355
        %v3397 = vpack.c.b16 %v3358, %v3357
        %v3398 = vpack.c.b16 %v3360, %v3359
        %v3399 = vpack.c.b16 %v3362, %v3361
        %v3400 = vpack.c.b16 %v3364, %v3363
        %v3401 = vpack.c.b16 %v3366, %v3365
        %v3402 = vpack.c.b16 %v3368, %v3367
        %v3403 = vpack.c.b16 %v3370, %v3369
        %v3404 = vpack.c.b16 %v3372, %v3371
        %v3405 = vpack.c.b16 %v3374, %v3373
        %v3406 = vpack.c.b16 %v3376, %v3375
        %v3407 = vpack.c.b16 %v3378, %v3377
        %v3408 = vpack.c.b16 %v3380, %v3379
        %v3409 = vpack.c.b16 %v3382, %v3381
        %v3410 = vpack.c.b16 %v3384, %v3383
        %v3411 = vpack.c.b16 %v3386, %v3385
        %v3412 = vpack.c.b16 %v3388, %v3387
        %3437 = vmatprep.subr.bf16.mxu0 0
        %3438 = vmatpush1.bf16.msra.mxu0 %v3389
        %3439 = vmatprep.subr.bf16.mxu0 0
        %3440 = vmatpush1.bf16.msra.mxu0 %v3390
        %3441 = vmatprep.subr.bf16.mxu0 0
        %3442 = vmatpush1.bf16.msra.mxu0 %v3391
        %3443 = vmatprep.subr.bf16.mxu0 0
        %3444 = vmatpush1.bf16.msra.mxu0 %v3392
        %3445 = vmatprep.subr.bf16.mxu0 0
        %3446 = vmatpush1.bf16.msra.mxu0 %v3393
        %3447 = vmatprep.subr.bf16.mxu0 0
        %3448 = vmatpush1.bf16.msra.mxu0 %v3394
        %3449 = vmatprep.subr.bf16.mxu0 0
        %3450 = vmatpush1.bf16.msra.mxu0 %v3395
        %3451 = vmatprep.subr.bf16.mxu0 0
        %3452 = vmatpush1.bf16.msra.mxu0 %v3396
        %3453 = vmatprep.subr.bf16.mxu0 0
        %3454 = vmatpush1.bf16.msra.mxu0 %v3397
        %3455 = vmatprep.subr.bf16.mxu0 0
        %3456 = vmatpush1.bf16.msra.mxu0 %v3398
        %3457 = vmatprep.subr.bf16.mxu0 0
        %3458 = vmatpush1.bf16.msra.mxu0 %v3399
        %3459 = vmatprep.subr.bf16.mxu0 0
        %3460 = vmatpush1.bf16.msra.mxu0 %v3400
        %3461 = vmatprep.subr.bf16.mxu0 0
        %3462 = vmatpush1.bf16.msra.mxu0 %v3401
        %3463 = vmatprep.subr.bf16.mxu0 0
        %3464 = vmatpush1.bf16.msra.mxu0 %v3402
        %3465 = vmatprep.subr.bf16.mxu0 0
        %3466 = vmatpush1.bf16.msra.mxu0 %v3403
        %3467 = vmatprep.subr.bf16.mxu0 0
        %3468 = vmatpush1.bf16.msra.mxu0 %v3404
        %3469 = vmatprep.mubr.bf16.mxu0 %v3276
        %3470 = vmatmul.mubr.bf16.gmra.mrb[0].mxu0 %v3275
        %v3471 = vpop.f32.mrb[0].mxu0
        %v3472 = vadd.f32 0.0, %v3471
        %v3473 = vpop.f32.mrb[0].mxu0
        %v3474 = vpop.f32.mrb[0].mxu0
        %v3475 = vadd.f32 0.0, %v3474
        %v3476 = vpop.f32.mrb[0].mxu0
        %3477 = vmatprep.mubr.bf16.mxu0 %v3278
        %3478 = vmatmul.mubr.bf16.gmra.mrb[0].mxu0 %v3277
        %v3479 = vpop.f32.mrb[0].mxu0
        %v3480 = vadd.f32 0.0, %v3479
        %v3481 = vpop.f32.mrb[0].mxu0
        %v3482 = vpop.f32.mrb[0].mxu0
        %v3483 = vadd.f32 0.0, %v3482
        %v3484 = vpop.f32.mrb[0].mxu0
        %3485 = vmatprep.mubr.bf16.mxu0 %v3280
        %3486 = vmatmul.mubr.bf16.gmra.mrb[0].mxu0 %v3279
        %v3487 = vpop.f32.mrb[0].mxu0
        %v3488 = vadd.f32 0.0, %v3487
        %v3489 = vpop.f32.mrb[0].mxu0
        %v3490 = vpop.f32.mrb[0].mxu0
        %v3491 = vadd.f32 0.0, %v3490
        %v3492 = vpop.f32.mrb[0].mxu0
        %3493 = vmatprep.mubr.bf16.mxu0 %v3282
        %3494 = vmatmul.mubr.bf16.gmra.mrb[0].mxu0 %v3281
        %v3495 = vpop.f32.mrb[0].mxu0
        %v3496 = vadd.f32 0.0, %v3495
        %v3497 = vpop.f32.mrb[0].mxu0
        %v3498 = vpop.f32.mrb[0].mxu0
        %v3499 = vadd.f32 0.0, %v3498
        %v3500 = vpop.f32.mrb[0].mxu0
        %3501 = vdwg.mxu0
        %3502 = vmatprep.subr.bf16.mxu0 0
        %3503 = vmatpush1.bf16.msra.mxu0 %v3405
        %3504 = vmatprep.subr.bf16.mxu0 0
        %3505 = vmatpush1.bf16.msra.mxu0 %v3406
        %3506 = vmatprep.subr.bf16.mxu0 0
        %3507 = vmatpush1.bf16.msra.mxu0 %v3407
        %3508 = vmatprep.subr.bf16.mxu0 0
        %3509 = vmatpush1.bf16.msra.mxu0 %v3408
        %3510 = vmatprep.subr.bf16.mxu0 0
        %3511 = vmatpush1.bf16.msra.mxu0 %v3409
        %3512 = vmatprep.subr.bf16.mxu0 0
        %3513 = vmatpush1.bf16.msra.mxu0 %v3410
        %3514 = vmatprep.subr.bf16.mxu0 0
        %3515 = vmatpush1.bf16.msra.mxu0 %v3411
        %3516 = vmatprep.subr.bf16.mxu0 0
        %3517 = vmatpush1.bf16.msra.mxu0 %v3412
        %3518 = vmatprep.subr.bf16.mxu0 0
        %3519 = vmatpush1.bf16.msra.mxu0 0
        %3520 = vmatprep.subr.bf16.mxu0 0
        %3521 = vmatpush1.bf16.msra.mxu0 0
        %3522 = vmatprep.subr.bf16.mxu0 0
        %3523 = vmatpush1.bf16.msra.mxu0 0
        %3524 = vmatprep.subr.bf16.mxu0 0
        %3525 = vmatpush1.bf16.msra.mxu0 0
        %3526 = vmatprep.subr.bf16.mxu0 0
        %3527 = vmatpush1.bf16.msra.mxu0 0
        %3528 = vmatprep.subr.bf16.mxu0 0
        %3529 = vmatpush1.bf16.msra.mxu0 0
        %3530 = vmatprep.subr.bf16.mxu0 0
        %3531 = vmatpush1.bf16.msra.mxu0 0
        %3532 = vmatprep.subr.bf16.mxu0 0
        %3533 = vmatpush1.bf16.msra.mxu0 0
        %3534 = vmatprep.mubr.bf16.mxu0 0
        %3535 = vmatmul.mubr.bf16.gmra.mrb[0].mxu0 %v3277
        %v3536 = vpop.f32.mrb[0].mxu0
        %v3537 = vadd.f32 %v3472, %v3536
        %v3538 = vpop.f32.mrb[0].mxu0
        %v3539 = vpop.f32.mrb[0].mxu0
        %v3540 = vadd.f32 %v3475, %v3539
        %v3541 = vpop.f32.mrb[0].mxu0
        %3542 = vmatprep.mubr.bf16.mxu0 0
        %3543 = vmatmul.mubr.bf16.gmra.mrb[0].mxu0 %v3279
        %v3544 = vpop.f32.mrb[0].mxu0
        %v3545 = vadd.f32 %v3480, %v3544
        %v3546 = vpop.f32.mrb[0].mxu0
        %v3547 = vpop.f32.mrb[0].mxu0
        %v3548 = vadd.f32 %v3483, %v3547
        %v3549 = vpop.f32.mrb[0].mxu0
        %3550 = vmatprep.mubr.bf16.mxu0 0
        %3551 = vmatmul.mubr.bf16.gmra.mrb[0].mxu0 %v3281
        %v3552 = vpop.f32.mrb[0].mxu0
        %v3553 = vadd.f32 %v3488, %v3552
        %v3554 = vpop.f32.mrb[0].mxu0
        %v3555 = vpop.f32.mrb[0].mxu0
        %v3556 = vadd.f32 %v3491, %v3555
        %v3557 = vpop.f32.mrb[0].mxu0
        %3558 = vmatprep.mubr.bf16.mxu0 0
        %3559 = vmatmul.mubr.bf16.gmra.mrb[0].mxu0 %v3283
        %v3560 = vpop.f32.mrb[0].mxu0
        %v3561 = vadd.f32 %v3496, %v3560
        %v3562 = vpop.f32.mrb[0].mxu0
        %v3563 = vpop.f32.mrb[0].mxu0
        %v3564 = vadd.f32 %v3499, %v3563
        %v3565 = vpop.f32.mrb[0].mxu0
        %3566 = vdwg.mxu0
        %v3567 = vadd.f32 %v3167, %v3537
        %v3568 = vadd.f32 %v3170, %v3540
        %v3569 = vadd.f32 %v3175, %v3545
        %v3570 = vadd.f32 %v3178, %v3548
        %v3571 = vadd.f32 %v3183, %v3553
        %v3572 = vadd.f32 %v3186, %v3556
        %v3573 = vadd.f32 %v3191, %v3561
        %v3574 = vadd.f32 %v3194, %v3564
        %v3575 = vld [vmem:[#allocation2] sm:$0xf]
        %v3576 = vld [vmem:[#allocation2 + $0x4] sm:$0x1]
        %v3577 = vld [vmem:[#allocation2 + $0x8] sm:$0xf]
        %v3578 = vld [vmem:[#allocation2 + $0xc] sm:$0x1]
        %v3579 = vld [vmem:[#allocation2 + $0x10] sm:$0xf]
        %v3580 = vld [vmem:[#allocation2 + $0x14] sm:$0x1]
        %v3581 = vld [vmem:[#allocation2 + $0x18] sm:$0xf]
        %v3582 = vld [vmem:[#allocation2 + $0x1c] sm:$0x1]
        %v3583 = vld [vmem:[#allocation2 + $0x20] sm:$0xf]
        %v3584 = vld [vmem:[#allocation2 + $0x24] sm:$0x1]
        %v3585 = vld [vmem:[#allocation2 + $0x28] sm:$0xf]
        %v3586 = vld [vmem:[#allocation2 + $0x2c] sm:$0x1]
        %v3587 = vld [vmem:[#allocation2 + $0x30] sm:$0xf]
        %v3588 = vld [vmem:[#allocation2 + $0x34] sm:$0x1]
        %v3589 = vld [vmem:[#allocation2 + $0x38] sm:$0xf]
        %v3590 = vld [vmem:[#allocation2 + $0x3c] sm:$0x1]
        %v3591 = vld [vmem:[#allocation2 + $0x40] sm:$0xf]
        %v3592 = vld [vmem:[#allocation2 + $0x44] sm:$0x1]
        %v3593 = vld [vmem:[#allocation2 + $0x48] sm:$0xf]
        %v3594 = vld [vmem:[#allocation2 + $0x4c] sm:$0x1]
        %v3611 = vunpack.c.l.b16 %v3575
        %v3612 = vunpack.c.l.b16 %v3576
        %v3613 = vunpack.c.l.b16 %v3577
        %v3614 = vunpack.c.l.b16 %v3578
        %v3615 = vunpack.c.l.b16 %v3579
        %v3616 = vunpack.c.l.b16 %v3580
        %v3617 = vunpack.c.l.b16 %v3581
        %v3618 = vunpack.c.l.b16 %v3582
        %v3619 = vunpack.c.l.b16 %v3583
        %v3620 = vunpack.c.l.b16 %v3584
        %v3621 = vunpack.c.l.b16 %v3585
        %v3622 = vunpack.c.l.b16 %v3586
        %v3623 = vunpack.c.l.b16 %v3587
        %v3624 = vunpack.c.l.b16 %v3588
        %v3625 = vunpack.c.l.b16 %v3589
        %v3626 = vunpack.c.l.b16 %v3590
        %v3629 = vunpack.c.l.b16 %v3591
        %v3630 = vunpack.c.l.b16 %v3592
        %v3633 = vunpack.c.l.b16 %v3593
        %v3634 = vunpack.c.l.b16 %v3594
        %v3635 = vpack.c.b16 %v3613, %v3611
        %v3636 = vpack.c.b16 %v3615, %v3615
        %v3637 = vpack.c.b16 %v3614, %v3612
        %v3638 = vpack.c.b16 %v3616, %v3616
        %v3639 = vpack.c.b16 %v3615, %v3613
        %v3640 = vpack.c.b16 %v3617, %v3617
        %v3641 = vpack.c.b16 %v3616, %v3614
        %v3642 = vpack.c.b16 %v3618, %v3618
        %v3643 = vpack.c.b16 %v3617, %v3615
        %v3644 = vpack.c.b16 %v3619, %v3619
        %v3645 = vpack.c.b16 %v3618, %v3616
        %v3646 = vpack.c.b16 %v3620, %v3620
        %v3647 = vpack.c.b16 %v3619, %v3617
        %v3648 = vpack.c.b16 %v3621, %v3621
        %v3649 = vpack.c.b16 %v3620, %v3618
        %v3650 = vpack.c.b16 %v3622, %v3622
        %v3651 = vpack.c.b16 %v3621, %v3619
        %v3652 = vpack.c.b16 %v3623, %v3623
        %v3653 = vpack.c.b16 %v3622, %v3620
        %v3654 = vpack.c.b16 %v3624, %v3624
        %v3655 = vpack.c.b16 %v3623, %v3621
        %v3656 = vpack.c.b16 %v3625, %v3625
        %v3657 = vpack.c.b16 %v3624, %v3622
        %v3658 = vpack.c.b16 %v3626, %v3626
        %v3659 = vpack.c.b16 %v3625, %v3623
        %v3660 = vpack.c.b16 %v3629, %v3629
        %v3661 = vpack.c.b16 %v3626, %v3624
        %v3662 = vpack.c.b16 %v3630, %v3630
        %v3663 = vpack.c.b16 %v3629, %v3625
        %v3664 = vpack.c.b16 %v3633, %v3633
        %v3665 = vpack.c.b16 %v3630, %v3626
        %v3666 = vpack.c.b16 %v3634, %v3634
        %v3668 = vshrl.u32 %v3635, 16
        %v3670 = vrot.slane %v3668, 4
        %v3671 = vshll.u32 %v3635, 16
        %v3673 = vrot.slane %v3671, 5
        %v3674 = vor.u32 %v3670, %v3673
        %v3675 = vrot.slane %v3674, 4
        %v3677 = vshll.u32 %v3637, 16
        %v3679 = vrot.slane %v3677, 5
        %v3680 = vsel %vm1163, %v3675, %v3679
        %v3682 = vshrl.u32 %v3636, 16
        %v3684 = vrot.slane %v3682, 4
        %v3685 = vshll.u32 %v3636, 16
        %v3687 = vrot.slane %v3685, 5
        %v3688 = vor.u32 %v3684, %v3687
        %v3689 = vrot.slane %v3688, 4
        %v3691 = vshll.u32 %v3638, 16
        %v3693 = vrot.slane %v3691, 5
        %v3694 = vsel %vm1163, %v3689, %v3693
        %v3696 = vshrl.u32 %v3639, 16
        %v3698 = vrot.slane %v3696, 4
        %v3699 = vshll.u32 %v3639, 16
        %v3701 = vrot.slane %v3699, 5
        %v3702 = vor.u32 %v3698, %v3701
        %v3703 = vrot.slane %v3702, 4
        %v3705 = vshll.u32 %v3641, 16
        %v3707 = vrot.slane %v3705, 5
        %v3708 = vsel %vm1163, %v3703, %v3707
        %v3710 = vshrl.u32 %v3640, 16
        %v3712 = vrot.slane %v3710, 4
        %v3713 = vshll.u32 %v3640, 16
        %v3715 = vrot.slane %v3713, 5
        %v3716 = vor.u32 %v3712, %v3715
        %v3717 = vrot.slane %v3716, 4
        %v3719 = vshll.u32 %v3642, 16
        %v3721 = vrot.slane %v3719, 5
        %v3722 = vsel %vm1163, %v3717, %v3721
        %v3724 = vshrl.u32 %v3643, 16
        %v3726 = vrot.slane %v3724, 4
        %v3727 = vshll.u32 %v3643, 16
        %v3729 = vrot.slane %v3727, 5
        %v3730 = vor.u32 %v3726, %v3729
        %v3731 = vrot.slane %v3730, 4
        %v3733 = vshll.u32 %v3645, 16
        %v3735 = vrot.slane %v3733, 5
        %v3736 = vsel %vm1163, %v3731, %v3735
        %v3738 = vshrl.u32 %v3644, 16
        %v3740 = vrot.slane %v3738, 4
        %v3741 = vshll.u32 %v3644, 16
        %v3743 = vrot.slane %v3741, 5
        %v3744 = vor.u32 %v3740, %v3743
        %v3745 = vrot.slane %v3744, 4
        %v3747 = vshll.u32 %v3646, 16
        %v3749 = vrot.slane %v3747, 5
        %v3750 = vsel %vm1163, %v3745, %v3749
        %v3752 = vshrl.u32 %v3647, 16
        %v3754 = vrot.slane %v3752, 4
        %v3755 = vshll.u32 %v3647, 16
        %v3757 = vrot.slane %v3755, 5
        %v3758 = vor.u32 %v3754, %v3757
        %v3759 = vrot.slane %v3758, 4
        %v3761 = vshll.u32 %v3649, 16
        %v3763 = vrot.slane %v3761, 5
        %v3764 = vsel %vm1163, %v3759, %v3763
        %v3766 = vshrl.u32 %v3648, 16
        %v3768 = vrot.slane %v3766, 4
        %v3769 = vshll.u32 %v3648, 16
        %v3771 = vrot.slane %v3769, 5
        %v3772 = vor.u32 %v3768, %v3771
        %v3773 = vrot.slane %v3772, 4
        %v3775 = vshll.u32 %v3650, 16
        %v3777 = vrot.slane %v3775, 5
        %v3778 = vsel %vm1163, %v3773, %v3777
        %v3780 = vshrl.u32 %v3651, 16
        %v3782 = vrot.slane %v3780, 4
        %v3783 = vshll.u32 %v3651, 16
        %v3785 = vrot.slane %v3783, 5
        %v3786 = vor.u32 %v3782, %v3785
        %v3787 = vrot.slane %v3786, 4
        %v3789 = vshll.u32 %v3653, 16
        %v3791 = vrot.slane %v3789, 5
        %v3792 = vsel %vm1163, %v3787, %v3791
        %v3794 = vshrl.u32 %v3652, 16
        %v3796 = vrot.slane %v3794, 4
        %v3797 = vshll.u32 %v3652, 16
        %v3799 = vrot.slane %v3797, 5
        %v3800 = vor.u32 %v3796, %v3799
        %v3801 = vrot.slane %v3800, 4
        %v3803 = vshll.u32 %v3654, 16
        %v3805 = vrot.slane %v3803, 5
        %v3806 = vsel %vm1163, %v3801, %v3805
        %v3808 = vshrl.u32 %v3655, 16
        %v3810 = vrot.slane %v3808, 4
        %v3811 = vshll.u32 %v3655, 16
        %v3813 = vrot.slane %v3811, 5
        %v3814 = vor.u32 %v3810, %v3813
        %v3815 = vrot.slane %v3814, 4
        %v3817 = vshll.u32 %v3657, 16
        %v3819 = vrot.slane %v3817, 5
        %v3820 = vsel %vm1163, %v3815, %v3819
        %v3822 = vshrl.u32 %v3656, 16
        %v3824 = vrot.slane %v3822, 4
        %v3825 = vshll.u32 %v3656, 16
        %v3827 = vrot.slane %v3825, 5
        %v3828 = vor.u32 %v3824, %v3827
        %v3829 = vrot.slane %v3828, 4
        %v3831 = vshll.u32 %v3658, 16
        %v3833 = vrot.slane %v3831, 5
        %v3834 = vsel %vm1163, %v3829, %v3833
        %v3836 = vshrl.u32 %v3659, 16
        %v3838 = vrot.slane %v3836, 4
        %v3839 = vshll.u32 %v3659, 16
        %v3841 = vrot.slane %v3839, 5
        %v3842 = vor.u32 %v3838, %v3841
        %v3843 = vrot.slane %v3842, 4
        %v3845 = vshll.u32 %v3661, 16
        %v3847 = vrot.slane %v3845, 5
        %v3848 = vsel %vm1163, %v3843, %v3847
        %v3850 = vshrl.u32 %v3660, 16
        %v3852 = vrot.slane %v3850, 4
        %v3853 = vshll.u32 %v3660, 16
        %v3855 = vrot.slane %v3853, 5
        %v3856 = vor.u32 %v3852, %v3855
        %v3857 = vrot.slane %v3856, 4
        %v3859 = vshll.u32 %v3662, 16
        %v3861 = vrot.slane %v3859, 5
        %v3862 = vsel %vm1163, %v3857, %v3861
        %v3864 = vshrl.u32 %v3663, 16
        %v3866 = vrot.slane %v3864, 4
        %v3867 = vshll.u32 %v3663, 16
        %v3869 = vrot.slane %v3867, 5
        %v3870 = vor.u32 %v3866, %v3869
        %v3871 = vrot.slane %v3870, 4
        %v3873 = vshll.u32 %v3665, 16
        %v3875 = vrot.slane %v3873, 5
        %v3876 = vsel %vm1163, %v3871, %v3875
        %v3878 = vshrl.u32 %v3664, 16
        %v3880 = vrot.slane %v3878, 4
        %v3881 = vshll.u32 %v3664, 16
        %v3883 = vrot.slane %v3881, 5
        %v3884 = vor.u32 %v3880, %v3883
        %v3885 = vrot.slane %v3884, 4
        %v3887 = vshll.u32 %v3666, 16
        %v3889 = vrot.slane %v3887, 5
        %v3890 = vsel %vm1163, %v3885, %v3889
        %s3891 = scalar_lea.vmem [#allocation11], 192
        %v3892 = vld [vmem:[%s3891] sm:$0xf]
        %v3893 = vld [vmem:[%s3891 + $0x4] sm:$0xf]
        %v3894 = vld [vmem:[%s3891 + $0x8] sm:$0xf]
        %v3895 = vld [vmem:[%s3891 + $0xc] sm:$0xf]
        %v3896 = vld [vmem:[%s3891 + $0x10] sm:$0xf]
        %v3897 = vld [vmem:[%s3891 + $0x14] sm:$0xf]
        %v3898 = vld [vmem:[%s3891 + $0x18] sm:$0xf]
        %v3899 = vld [vmem:[%s3891 + $0x1c] sm:$0xf]
        %v3900 = vld [vmem:[%s3891 + $0x20] sm:$0xf]
        %v3901 = vld [vmem:[%s3891 + $0x24] sm:$0xf]
        %v3902 = vld [vmem:[%s3891 + $0x28] sm:$0xf]
        %v3903 = vld [vmem:[%s3891 + $0x2c] sm:$0xf]
        %v3904 = vld [vmem:[%s3891 + $0x30] sm:$0xf]
        %v3905 = vld [vmem:[%s3891 + $0x34] sm:$0xf]
        %v3906 = vld [vmem:[%s3891 + $0x38] sm:$0xf]
        %v3907 = vld [vmem:[%s3891 + $0x3c] sm:$0xf]
        %v3908 = vld [vmem:[%s3891 + $0x40] sm:$0xf]
        %v3909 = vld [vmem:[%s3891 + $0x44] sm:$0xf]
        %v3910 = vld [vmem:[%s3891 + $0x48] sm:$0xf]
        %v3911 = vld [vmem:[%s3891 + $0x4c] sm:$0xf]
        %v3912 = vld [vmem:[%s3891 + $0x50] sm:$0xf]
        %v3913 = vld [vmem:[%s3891 + $0x54] sm:$0xf]
        %v3914 = vld [vmem:[%s3891 + $0x58] sm:$0xf]
        %v3915 = vld [vmem:[%s3891 + $0x5c] sm:$0xf]
        %v3916 = vld [vmem:[%s3891 + $0x60] sm:$0xf]
        %v3917 = vld [vmem:[%s3891 + $0x64] sm:$0xf]
        %v3918 = vld [vmem:[%s3891 + $0x68] sm:$0xf]
        %v3919 = vld [vmem:[%s3891 + $0x6c] sm:$0xf]
        %v3920 = vld [vmem:[%s3891 + $0x70] sm:$0xf]
        %v3921 = vld [vmem:[%s3891 + $0x74] sm:$0xf]
        %v3922 = vld [vmem:[%s3891 + $0x78] sm:$0xf]
        %v3923 = vld [vmem:[%s3891 + $0x7c] sm:$0xf]
        %v3924 = vld [vmem:[%s3891 + $0x80] sm:$0xf]
        %v3925 = vld [vmem:[%s3891 + $0x84] sm:$0xf]
        %v3926 = vld [vmem:[%s3891 + $0x88] sm:$0xf]
        %v3927 = vld [vmem:[%s3891 + $0x8c] sm:$0xf]
        %v3928 = vld [vmem:[%s3891 + $0x90] sm:$0xf]
        %v3929 = vld [vmem:[%s3891 + $0x94] sm:$0xf]
        %v3930 = vld [vmem:[%s3891 + $0x98] sm:$0xf]
        %v3931 = vld [vmem:[%s3891 + $0x9c] sm:$0xf]
        %v3932 = vld [vmem:[%s3891 + $0xa0] sm:$0xf]
        %v3933 = vld [vmem:[%s3891 + $0xa4] sm:$0xf]
        %v3934 = vld [vmem:[%s3891 + $0xa8] sm:$0xf]
        %v3935 = vld [vmem:[%s3891 + $0xac] sm:$0xf]
        %v3936 = vld [vmem:[%s3891 + $0xb0] sm:$0xf]
        %v3937 = vld [vmem:[%s3891 + $0xb4] sm:$0xf]
        %v3938 = vld [vmem:[%s3891 + $0xb8] sm:$0xf]
        %v3939 = vld [vmem:[%s3891 + $0xbc] sm:$0xf]
        %v3940 = vunpack.c.l.b16 %v3680
        %v3941 = vunpack.c.h.b16 %v3680
        %v3942 = vunpack.c.l.b16 %v3694
        %v3943 = vunpack.c.l.b16 %v3708
        %v3944 = vunpack.c.h.b16 %v3708
        %v3945 = vunpack.c.l.b16 %v3722
        %v3946 = vunpack.c.l.b16 %v3736
        %v3947 = vunpack.c.h.b16 %v3736
        %v3948 = vunpack.c.l.b16 %v3750
        %v3949 = vunpack.c.l.b16 %v3764
        %v3950 = vunpack.c.h.b16 %v3764
        %v3951 = vunpack.c.l.b16 %v3778
        %v3952 = vunpack.c.l.b16 %v3792
        %v3953 = vunpack.c.h.b16 %v3792
        %v3954 = vunpack.c.l.b16 %v3806
        %v3955 = vunpack.c.l.b16 %v3820
        %v3956 = vunpack.c.h.b16 %v3820
        %v3957 = vunpack.c.l.b16 %v3834
        %v3958 = vunpack.c.l.b16 %v3848
        %v3959 = vunpack.c.h.b16 %v3848
        %v3960 = vunpack.c.l.b16 %v3862
        %v3961 = vunpack.c.l.b16 %v3876
        %v3962 = vunpack.c.h.b16 %v3876
        %v3963 = vunpack.c.l.b16 %v3890
        %v3964 = vpack.c.b16 %v3943, %v3940
        %v3965 = vpack.c.b16 %v3944, %v3941
        %v3966 = vpack.c.b16 %v3945, %v3942
        %v3967 = vpack.c.b16 %v3949, %v3946
        %v3968 = vpack.c.b16 %v3950, %v3947
        %v3969 = vpack.c.b16 %v3951, %v3948
        %v3970 = vpack.c.b16 %v3955, %v3952
        %v3971 = vpack.c.b16 %v3956, %v3953
        %v3972 = vpack.c.b16 %v3957, %v3954
        %v3973 = vpack.c.b16 %v3961, %v3958
        %v3974 = vpack.c.b16 %v3962, %v3959
        %v3975 = vpack.c.b16 %v3963, %v3960
        %v4036 = vunpack.c.l.b16 %v3892
        %v4037 = vunpack.c.l.b16 %v3893
        %v4038 = vunpack.c.l.b16 %v3894
        %v4039 = vunpack.c.l.b16 %v3895
        %v4040 = vunpack.c.l.b16 %v3896
        %v4041 = vunpack.c.l.b16 %v3897
        %v4042 = vunpack.c.l.b16 %v3898
        %v4043 = vunpack.c.l.b16 %v3899
        %v4044 = vunpack.c.l.b16 %v3900
        %v4045 = vunpack.c.l.b16 %v3901
        %v4046 = vunpack.c.l.b16 %v3902
        %v4047 = vunpack.c.l.b16 %v3903
        %v4048 = vunpack.c.l.b16 %v3904
        %v4049 = vunpack.c.l.b16 %v3905
        %v4050 = vunpack.c.l.b16 %v3906
        %v4051 = vunpack.c.l.b16 %v3907
        %v4052 = vunpack.c.l.b16 %v3908
        %v4053 = vunpack.c.l.b16 %v3909
        %v4054 = vunpack.c.l.b16 %v3910
        %v4055 = vunpack.c.l.b16 %v3911
        %v4056 = vunpack.c.l.b16 %v3912
        %v4057 = vunpack.c.l.b16 %v3913
        %v4058 = vunpack.c.l.b16 %v3914
        %v4059 = vunpack.c.l.b16 %v3915
        %v4060 = vunpack.c.l.b16 %v3916
        %v4061 = vunpack.c.l.b16 %v3917
        %v4062 = vunpack.c.l.b16 %v3918
        %v4063 = vunpack.c.l.b16 %v3919
        %v4064 = vunpack.c.l.b16 %v3920
        %v4065 = vunpack.c.l.b16 %v3921
        %v4066 = vunpack.c.l.b16 %v3922
        %v4067 = vunpack.c.l.b16 %v3923
        %v4068 = vunpack.c.l.b16 %v3924
        %v4069 = vunpack.c.l.b16 %v3925
        %v4070 = vunpack.c.l.b16 %v3926
        %v4071 = vunpack.c.l.b16 %v3927
        %v4072 = vunpack.c.l.b16 %v3928
        %v4073 = vunpack.c.l.b16 %v3929
        %v4074 = vunpack.c.l.b16 %v3930
        %v4075 = vunpack.c.l.b16 %v3931
        %v4076 = vunpack.c.l.b16 %v3932
        %v4077 = vunpack.c.l.b16 %v3933
        %v4078 = vunpack.c.l.b16 %v3934
        %v4079 = vunpack.c.l.b16 %v3935
        %v4080 = vunpack.c.l.b16 %v3936
        %v4081 = vunpack.c.l.b16 %v3937
        %v4082 = vunpack.c.l.b16 %v3938
        %v4083 = vunpack.c.l.b16 %v3939
        %v4084 = vpack.c.b16 %v4037, %v4036
        %v4085 = vpack.c.b16 %v4039, %v4038
        %v4086 = vpack.c.b16 %v4041, %v4040
        %v4087 = vpack.c.b16 %v4043, %v4042
        %v4088 = vpack.c.b16 %v4045, %v4044
        %v4089 = vpack.c.b16 %v4047, %v4046
        %v4090 = vpack.c.b16 %v4049, %v4048
        %v4091 = vpack.c.b16 %v4051, %v4050
        %v4092 = vpack.c.b16 %v4053, %v4052
        %v4093 = vpack.c.b16 %v4055, %v4054
        %v4094 = vpack.c.b16 %v4057, %v4056
        %v4095 = vpack.c.b16 %v4059, %v4058
        %v4096 = vpack.c.b16 %v4061, %v4060
        %v4097 = vpack.c.b16 %v4063, %v4062
        %v4098 = vpack.c.b16 %v4065, %v4064
        %v4099 = vpack.c.b16 %v4067, %v4066
        %v4100 = vpack.c.b16 %v4069, %v4068
        %v4101 = vpack.c.b16 %v4071, %v4070
        %v4102 = vpack.c.b16 %v4073, %v4072
        %v4103 = vpack.c.b16 %v4075, %v4074
        %v4104 = vpack.c.b16 %v4077, %v4076
        %v4105 = vpack.c.b16 %v4079, %v4078
        %v4106 = vpack.c.b16 %v4081, %v4080
        %v4107 = vpack.c.b16 %v4083, %v4082
        %4132 = vmatprep.subr.bf16.mxu0 0
        %4133 = vmatpush1.bf16.msra.mxu0 %v4084
        %4134 = vmatprep.subr.bf16.mxu0 0
        %4135 = vmatpush1.bf16.msra.mxu0 %v4085
        %4136 = vmatprep.subr.bf16.mxu0 0
        %4137 = vmatpush1.bf16.msra.mxu0 %v4086
        %4138 = vmatprep.subr.bf16.mxu0 0
        %4139 = vmatpush1.bf16.msra.mxu0 %v4087
        %4140 = vmatprep.subr.bf16.mxu0 0
        %4141 = vmatpush1.bf16.msra.mxu0 %v4088
        %4142 = vmatprep.subr.bf16.mxu0 0
        %4143 = vmatpush1.bf16.msra.mxu0 %v4089
        %4144 = vmatprep.subr.bf16.mxu0 0
        %4145 = vmatpush1.bf16.msra.mxu0 %v4090
        %4146 = vmatprep.subr.bf16.mxu0 0
        %4147 = vmatpush1.bf16.msra.mxu0 %v4091
        %4148 = vmatprep.subr.bf16.mxu0 0
        %4149 = vmatpush1.bf16.msra.mxu0 %v4092
        %4150 = vmatprep.subr.bf16.mxu0 0
        %4151 = vmatpush1.bf16.msra.mxu0 %v4093
        %4152 = vmatprep.subr.bf16.mxu0 0
        %4153 = vmatpush1.bf16.msra.mxu0 %v4094
        %4154 = vmatprep.subr.bf16.mxu0 0
        %4155 = vmatpush1.bf16.msra.mxu0 %v4095
        %4156 = vmatprep.subr.bf16.mxu0 0
        %4157 = vmatpush1.bf16.msra.mxu0 %v4096
        %4158 = vmatprep.subr.bf16.mxu0 0
        %4159 = vmatpush1.bf16.msra.mxu0 %v4097
        %4160 = vmatprep.subr.bf16.mxu0 0
        %4161 = vmatpush1.bf16.msra.mxu0 %v4098
        %4162 = vmatprep.subr.bf16.mxu0 0
        %4163 = vmatpush1.bf16.msra.mxu0 %v4099
        %4164 = vmatprep.mubr.bf16.mxu0 %v3965
        %4165 = vmatmul.mubr.bf16.gmra.mrb[0].mxu0 %v3964
        %v4166 = vpop.f32.mrb[0].mxu0
        %v4167 = vadd.f32 0.0, %v4166
        %v4168 = vpop.f32.mrb[0].mxu0
        %v4169 = vpop.f32.mrb[0].mxu0
        %v4170 = vadd.f32 0.0, %v4169
        %v4171 = vpop.f32.mrb[0].mxu0
        %4172 = vmatprep.mubr.bf16.mxu0 %v3968
        %4173 = vmatmul.mubr.bf16.gmra.mrb[0].mxu0 %v3967
        %v4174 = vpop.f32.mrb[0].mxu0
        %v4175 = vadd.f32 0.0, %v4174
        %v4176 = vpop.f32.mrb[0].mxu0
        %v4177 = vpop.f32.mrb[0].mxu0
        %v4178 = vadd.f32 0.0, %v4177
        %v4179 = vpop.f32.mrb[0].mxu0
        %4180 = vmatprep.mubr.bf16.mxu0 %v3971
        %4181 = vmatmul.mubr.bf16.gmra.mrb[0].mxu0 %v3970
        %v4182 = vpop.f32.mrb[0].mxu0
        %v4183 = vadd.f32 0.0, %v4182
        %v4184 = vpop.f32.mrb[0].mxu0
        %v4185 = vpop.f32.mrb[0].mxu0
        %v4186 = vadd.f32 0.0, %v4185
        %v4187 = vpop.f32.mrb[0].mxu0
        %4188 = vmatprep.mubr.bf16.mxu0 %v3974
        %4189 = vmatmul.mubr.bf16.gmra.mrb[0].mxu0 %v3973
        %v4190 = vpop.f32.mrb[0].mxu0
        %v4191 = vadd.f32 0.0, %v4190
        %v4192 = vpop.f32.mrb[0].mxu0
        %v4193 = vpop.f32.mrb[0].mxu0
        %v4194 = vadd.f32 0.0, %v4193
        %v4195 = vpop.f32.mrb[0].mxu0
        %4196 = vdwg.mxu0
        %4197 = vmatprep.subr.bf16.mxu0 0
        %4198 = vmatpush1.bf16.msra.mxu0 %v4100
        %4199 = vmatprep.subr.bf16.mxu0 0
        %4200 = vmatpush1.bf16.msra.mxu0 %v4101
        %4201 = vmatprep.subr.bf16.mxu0 0
        %4202 = vmatpush1.bf16.msra.mxu0 %v4102
        %4203 = vmatprep.subr.bf16.mxu0 0
        %4204 = vmatpush1.bf16.msra.mxu0 %v4103
        %4205 = vmatprep.subr.bf16.mxu0 0
        %4206 = vmatpush1.bf16.msra.mxu0 %v4104
        %4207 = vmatprep.subr.bf16.mxu0 0
        %4208 = vmatpush1.bf16.msra.mxu0 %v4105
        %4209 = vmatprep.subr.bf16.mxu0 0
        %4210 = vmatpush1.bf16.msra.mxu0 %v4106
        %4211 = vmatprep.subr.bf16.mxu0 0
        %4212 = vmatpush1.bf16.msra.mxu0 %v4107
        %4213 = vmatprep.subr.bf16.mxu0 0
        %4214 = vmatpush1.bf16.msra.mxu0 0
        %4215 = vmatprep.subr.bf16.mxu0 0
        %4216 = vmatpush1.bf16.msra.mxu0 0
        %4217 = vmatprep.subr.bf16.mxu0 0
        %4218 = vmatpush1.bf16.msra.mxu0 0
        %4219 = vmatprep.subr.bf16.mxu0 0
        %4220 = vmatpush1.bf16.msra.mxu0 0
        %4221 = vmatprep.subr.bf16.mxu0 0
        %4222 = vmatpush1.bf16.msra.mxu0 0
        %4223 = vmatprep.subr.bf16.mxu0 0
        %4224 = vmatpush1.bf16.msra.mxu0 0
        %4225 = vmatprep.subr.bf16.mxu0 0
        %4226 = vmatpush1.bf16.msra.mxu0 0
        %4227 = vmatprep.subr.bf16.mxu0 0
        %4228 = vmatpush1.bf16.msra.mxu0 0
        %4229 = vmatprep.mubr.bf16.mxu0 0
        %4230 = vmatmul.mubr.bf16.gmra.mrb[0].mxu0 %v3966
        %v4231 = vpop.f32.mrb[0].mxu0
        %v4232 = vadd.f32 %v4167, %v4231
        %v4233 = vpop.f32.mrb[0].mxu0
        %v4234 = vpop.f32.mrb[0].mxu0
        %v4235 = vadd.f32 %v4170, %v4234
        %v4236 = vpop.f32.mrb[0].mxu0
        %4237 = vmatprep.mubr.bf16.mxu0 0
        %4238 = vmatmul.mubr.bf16.gmra.mrb[0].mxu0 %v3969
        %v4239 = vpop.f32.mrb[0].mxu0
        %v4240 = vadd.f32 %v4175, %v4239
        %v4241 = vpop.f32.mrb[0].mxu0
        %v4242 = vpop.f32.mrb[0].mxu0
        %v4243 = vadd.f32 %v4178, %v4242
        %v4244 = vpop.f32.mrb[0].mxu0
        %4245 = vmatprep.mubr.bf16.mxu0 0
        %4246 = vmatmul.mubr.bf16.gmra.mrb[0].mxu0 %v3972
        %v4247 = vpop.f32.mrb[0].mxu0
        %v4248 = vadd.f32 %v4183, %v4247
        %v4249 = vpop.f32.mrb[0].mxu0
        %v4250 = vpop.f32.mrb[0].mxu0
        %v4251 = vadd.f32 %v4186, %v4250
        %v4252 = vpop.f32.mrb[0].mxu0
        %4253 = vmatprep.mubr.bf16.mxu0 0
        %4254 = vmatmul.mubr.bf16.gmra.mrb[0].mxu0 %v3975
        %v4255 = vpop.f32.mrb[0].mxu0
        %v4256 = vadd.f32 %v4191, %v4255
        %v4257 = vpop.f32.mrb[0].mxu0
        %v4258 = vpop.f32.mrb[0].mxu0
        %v4259 = vadd.f32 %v4194, %v4258
        %v4260 = vpop.f32.mrb[0].mxu0
        %4261 = vdwg.mxu0
        %v4262 = vadd.f32 %v3567, %v4232
        %v4263 = vadd.f32 %v3568, %v4235
        %v4264 = vadd.f32 %v3569, %v4240
        %v4265 = vadd.f32 %v3570, %v4243
        %v4266 = vadd.f32 %v3571, %v4248
        %v4267 = vadd.f32 %v3572, %v4251
        %v4268 = vadd.f32 %v3573, %v4256
        %v4269 = vadd.f32 %v3574, %v4259
        %v4270 = vld [vmem:[#allocation2] sm:$0xe]
        %v4271 = vld [vmem:[#allocation2 + $0x8] sm:$0xe]
        %v4272 = vld [vmem:[#allocation2 + $0x10] sm:$0xe]
        %v4273 = vld [vmem:[#allocation2 + $0x18] sm:$0xe]
        %v4274 = vld [vmem:[#allocation2 + $0x20] sm:$0xe]
        %v4275 = vld [vmem:[#allocation2 + $0x28] sm:$0xe]
        %v4276 = vld [vmem:[#allocation2 + $0x30] sm:$0xe]
        %v4277 = vld [vmem:[#allocation2 + $0x38] sm:$0xe]
        %v4278 = vld [vmem:[#allocation2 + $0x40] sm:$0xe]
        %v4279 = vld [vmem:[#allocation2 + $0x48] sm:$0xe]
        %v4288 = vunpack.c.l.b16 %v4270
        %v4289 = vunpack.c.l.b16 %v4271
        %v4290 = vunpack.c.l.b16 %v4272
        %v4291 = vunpack.c.l.b16 %v4273
        %v4292 = vunpack.c.l.b16 %v4274
        %v4293 = vunpack.c.l.b16 %v4275
        %v4294 = vunpack.c.l.b16 %v4276
        %v4295 = vunpack.c.l.b16 %v4277
        %v4297 = vunpack.c.l.b16 %v4278
        %v4299 = vunpack.c.l.b16 %v4279
        %v4300 = vpack.c.b16 %v4289, %v4288
        %v4301 = vpack.c.b16 %v4290, %v4290
        %v4302 = vpack.c.b16 %v4290, %v4289
        %v4303 = vpack.c.b16 %v4291, %v4291
        %v4304 = vpack.c.b16 %v4291, %v4290
        %v4305 = vpack.c.b16 %v4292, %v4292
        %v4306 = vpack.c.b16 %v4292, %v4291
        %v4307 = vpack.c.b16 %v4293, %v4293
        %v4308 = vpack.c.b16 %v4293, %v4292
        %v4309 = vpack.c.b16 %v4294, %v4294
        %v4310 = vpack.c.b16 %v4294, %v4293
        %v4311 = vpack.c.b16 %v4295, %v4295
        %v4312 = vpack.c.b16 %v4295, %v4294
        %v4313 = vpack.c.b16 %v4297, %v4297
        %v4314 = vpack.c.b16 %v4297, %v4295
        %v4315 = vpack.c.b16 %v4299, %v4299
        %v4316 = vrot.slane %v4300, 5
        %v4317 = vrot.slane %v4316, 4
        %v4318 = vrot.slane %v3637, 5
        %v4319 = vsel %vm2091, %v4317, %v4318
        %v4320 = vrot.slane %v4301, 5
        %v4321 = vrot.slane %v4320, 4
        %v4322 = vrot.slane %v3638, 5
        %v4323 = vsel %vm2091, %v4321, %v4322
        %v4324 = vrot.slane %v4302, 5
        %v4325 = vrot.slane %v4324, 4
        %v4326 = vrot.slane %v3641, 5
        %v4327 = vsel %vm2091, %v4325, %v4326
        %v4328 = vrot.slane %v4303, 5
        %v4329 = vrot.slane %v4328, 4
        %v4330 = vrot.slane %v3642, 5
        %v4331 = vsel %vm2091, %v4329, %v4330
        %v4332 = vrot.slane %v4304, 5
        %v4333 = vrot.slane %v4332, 4
        %v4334 = vrot.slane %v3645, 5
        %v4335 = vsel %vm2091, %v4333, %v4334
        %v4336 = vrot.slane %v4305, 5
        %v4337 = vrot.slane %v4336, 4
        %v4338 = vrot.slane %v3646, 5
        %v4339 = vsel %vm2091, %v4337, %v4338
        %v4340 = vrot.slane %v4306, 5
        %v4341 = vrot.slane %v4340, 4
        %v4342 = vrot.slane %v3649, 5
        %v4343 = vsel %vm2091, %v4341, %v4342
        %v4344 = vrot.slane %v4307, 5
        %v4345 = vrot.slane %v4344, 4
        %v4346 = vrot.slane %v3650, 5
        %v4347 = vsel %vm2091, %v4345, %v4346
        %v4348 = vrot.slane %v4308, 5
        %v4349 = vrot.slane %v4348, 4
        %v4350 = vrot.slane %v3653, 5
        %v4351 = vsel %vm2091, %v4349, %v4350
        %v4352 = vrot.slane %v4309, 5
        %v4353 = vrot.slane %v4352, 4
        %v4354 = vrot.slane %v3654, 5
        %v4355 = vsel %vm2091, %v4353, %v4354
        %v4356 = vrot.slane %v4310, 5
        %v4357 = vrot.slane %v4356, 4
        %v4358 = vrot.slane %v3657, 5
        %v4359 = vsel %vm2091, %v4357, %v4358
        %v4360 = vrot.slane %v4311, 5
        %v4361 = vrot.slane %v4360, 4
        %v4362 = vrot.slane %v3658, 5
        %v4363 = vsel %vm2091, %v4361, %v4362
        %v4364 = vrot.slane %v4312, 5
        %v4365 = vrot.slane %v4364, 4
        %v4366 = vrot.slane %v3661, 5
        %v4367 = vsel %vm2091, %v4365, %v4366
        %v4368 = vrot.slane %v4313, 5
        %v4369 = vrot.slane %v4368, 4
        %v4370 = vrot.slane %v3662, 5
        %v4371 = vsel %vm2091, %v4369, %v4370
        %v4372 = vrot.slane %v4314, 5
        %v4373 = vrot.slane %v4372, 4
        %v4374 = vrot.slane %v3665, 5
        %v4375 = vsel %vm2091, %v4373, %v4374
        %v4376 = vrot.slane %v4315, 5
        %v4377 = vrot.slane %v4376, 4
        %v4378 = vrot.slane %v3666, 5
        %v4379 = vsel %vm2091, %v4377, %v4378
        %s4380 = scalar_lea.vmem [#allocation11], 384
        %v4381 = vld [vmem:[%s4380] sm:$0xf]
        %v4382 = vld [vmem:[%s4380 + $0x4] sm:$0xf]
        %v4383 = vld [vmem:[%s4380 + $0x8] sm:$0xf]
        %v4384 = vld [vmem:[%s4380 + $0xc] sm:$0xf]
        %v4385 = vld [vmem:[%s4380 + $0x10] sm:$0xf]
        %v4386 = vld [vmem:[%s4380 + $0x14] sm:$0xf]
        %v4387 = vld [vmem:[%s4380 + $0x18] sm:$0xf]
        %v4388 = vld [vmem:[%s4380 + $0x1c] sm:$0xf]
        %v4389 = vld [vmem:[%s4380 + $0x20] sm:$0xf]
        %v4390 = vld [vmem:[%s4380 + $0x24] sm:$0xf]
        %v4391 = vld [vmem:[%s4380 + $0x28] sm:$0xf]
        %v4392 = vld [vmem:[%s4380 + $0x2c] sm:$0xf]
        %v4393 = vld [vmem:[%s4380 + $0x30] sm:$0xf]
        %v4394 = vld [vmem:[%s4380 + $0x34] sm:$0xf]
        %v4395 = vld [vmem:[%s4380 + $0x38] sm:$0xf]
        %v4396 = vld [vmem:[%s4380 + $0x3c] sm:$0xf]
        %v4397 = vld [vmem:[%s4380 + $0x40] sm:$0xf]
        %v4398 = vld [vmem:[%s4380 + $0x44] sm:$0xf]
        %v4399 = vld [vmem:[%s4380 + $0x48] sm:$0xf]
        %v4400 = vld [vmem:[%s4380 + $0x4c] sm:$0xf]
        %v4401 = vld [vmem:[%s4380 + $0x50] sm:$0xf]
        %v4402 = vld [vmem:[%s4380 + $0x54] sm:$0xf]
        %v4403 = vld [vmem:[%s4380 + $0x58] sm:$0xf]
        %v4404 = vld [vmem:[%s4380 + $0x5c] sm:$0xf]
        %v4405 = vld [vmem:[%s4380 + $0x60] sm:$0xf]
        %v4406 = vld [vmem:[%s4380 + $0x64] sm:$0xf]
        %v4407 = vld [vmem:[%s4380 + $0x68] sm:$0xf]
        %v4408 = vld [vmem:[%s4380 + $0x6c] sm:$0xf]
        %v4409 = vld [vmem:[%s4380 + $0x70] sm:$0xf]
        %v4410 = vld [vmem:[%s4380 + $0x74] sm:$0xf]
        %v4411 = vld [vmem:[%s4380 + $0x78] sm:$0xf]
        %v4412 = vld [vmem:[%s4380 + $0x7c] sm:$0xf]
        %v4413 = vld [vmem:[%s4380 + $0x80] sm:$0xf]
        %v4414 = vld [vmem:[%s4380 + $0x84] sm:$0xf]
        %v4415 = vld [vmem:[%s4380 + $0x88] sm:$0xf]
        %v4416 = vld [vmem:[%s4380 + $0x8c] sm:$0xf]
        %v4417 = vld [vmem:[%s4380 + $0x90] sm:$0xf]
        %v4418 = vld [vmem:[%s4380 + $0x94] sm:$0xf]
        %v4419 = vld [vmem:[%s4380 + $0x98] sm:$0xf]
        %v4420 = vld [vmem:[%s4380 + $0x9c] sm:$0xf]
        %v4421 = vld [vmem:[%s4380 + $0xa0] sm:$0xf]
        %v4422 = vld [vmem:[%s4380 + $0xa4] sm:$0xf]
        %v4423 = vld [vmem:[%s4380 + $0xa8] sm:$0xf]
        %v4424 = vld [vmem:[%s4380 + $0xac] sm:$0xf]
        %v4425 = vld [vmem:[%s4380 + $0xb0] sm:$0xf]
        %v4426 = vld [vmem:[%s4380 + $0xb4] sm:$0xf]
        %v4427 = vld [vmem:[%s4380 + $0xb8] sm:$0xf]
        %v4428 = vld [vmem:[%s4380 + $0xbc] sm:$0xf]
        %v4429 = vunpack.c.l.b16 %v4319
        %v4430 = vunpack.c.h.b16 %v4319
        %v4431 = vunpack.c.l.b16 %v4323
        %v4432 = vunpack.c.l.b16 %v4327
        %v4433 = vunpack.c.h.b16 %v4327
        %v4434 = vunpack.c.l.b16 %v4331
        %v4435 = vunpack.c.l.b16 %v4335
        %v4436 = vunpack.c.h.b16 %v4335
        %v4437 = vunpack.c.l.b16 %v4339
        %v4438 = vunpack.c.l.b16 %v4343
        %v4439 = vunpack.c.h.b16 %v4343
        %v4440 = vunpack.c.l.b16 %v4347
        %v4441 = vunpack.c.l.b16 %v4351
        %v4442 = vunpack.c.h.b16 %v4351
        %v4443 = vunpack.c.l.b16 %v4355
        %v4444 = vunpack.c.l.b16 %v4359
        %v4445 = vunpack.c.h.b16 %v4359
        %v4446 = vunpack.c.l.b16 %v4363
        %v4447 = vunpack.c.l.b16 %v4367
        %v4448 = vunpack.c.h.b16 %v4367
        %v4449 = vunpack.c.l.b16 %v4371
        %v4450 = vunpack.c.l.b16 %v4375
        %v4451 = vunpack.c.h.b16 %v4375
        %v4452 = vunpack.c.l.b16 %v4379
        %v4453 = vpack.c.b16 %v4432, %v4429
        %v4454 = vpack.c.b16 %v4433, %v4430
        %v4455 = vpack.c.b16 %v4434, %v4431
        %v4456 = vpack.c.b16 %v4438, %v4435
        %v4457 = vpack.c.b16 %v4439, %v4436
        %v4458 = vpack.c.b16 %v4440, %v4437
        %v4459 = vpack.c.b16 %v4444, %v4441
        %v4460 = vpack.c.b16 %v4445, %v4442
        %v4461 = vpack.c.b16 %v4446, %v4443
        %v4462 = vpack.c.b16 %v4450, %v4447
        %v4463 = vpack.c.b16 %v4451, %v4448
        %v4464 = vpack.c.b16 %v4452, %v4449
        %v4525 = vunpack.c.l.b16 %v4381
        %v4526 = vunpack.c.l.b16 %v4382
        %v4527 = vunpack.c.l.b16 %v4383
        %v4528 = vunpack.c.l.b16 %v4384
        %v4529 = vunpack.c.l.b16 %v4385
        %v4530 = vunpack.c.l.b16 %v4386
        %v4531 = vunpack.c.l.b16 %v4387
        %v4532 = vunpack.c.l.b16 %v4388
        %v4533 = vunpack.c.l.b16 %v4389
        %v4534 = vunpack.c.l.b16 %v4390
        %v4535 = vunpack.c.l.b16 %v4391
        %v4536 = vunpack.c.l.b16 %v4392
        %v4537 = vunpack.c.l.b16 %v4393
        %v4538 = vunpack.c.l.b16 %v4394
        %v4539 = vunpack.c.l.b16 %v4395
        %v4540 = vunpack.c.l.b16 %v4396
        %v4541 = vunpack.c.l.b16 %v4397
        %v4542 = vunpack.c.l.b16 %v4398
        %v4543 = vunpack.c.l.b16 %v4399
        %v4544 = vunpack.c.l.b16 %v4400
        %v4545 = vunpack.c.l.b16 %v4401
        %v4546 = vunpack.c.l.b16 %v4402
        %v4547 = vunpack.c.l.b16 %v4403
        %v4548 = vunpack.c.l.b16 %v4404
        %v4549 = vunpack.c.l.b16 %v4405
        %v4550 = vunpack.c.l.b16 %v4406
        %v4551 = vunpack.c.l.b16 %v4407
        %v4552 = vunpack.c.l.b16 %v4408
        %v4553 = vunpack.c.l.b16 %v4409
        %v4554 = vunpack.c.l.b16 %v4410
        %v4555 = vunpack.c.l.b16 %v4411
        %v4556 = vunpack.c.l.b16 %v4412
        %v4557 = vunpack.c.l.b16 %v4413
        %v4558 = vunpack.c.l.b16 %v4414
        %v4559 = vunpack.c.l.b16 %v4415
        %v4560 = vunpack.c.l.b16 %v4416
        %v4561 = vunpack.c.l.b16 %v4417
        %v4562 = vunpack.c.l.b16 %v4418
        %v4563 = vunpack.c.l.b16 %v4419
        %v4564 = vunpack.c.l.b16 %v4420
        %v4565 = vunpack.c.l.b16 %v4421
        %v4566 = vunpack.c.l.b16 %v4422
        %v4567 = vunpack.c.l.b16 %v4423
        %v4568 = vunpack.c.l.b16 %v4424
        %v4569 = vunpack.c.l.b16 %v4425
        %v4570 = vunpack.c.l.b16 %v4426
        %v4571 = vunpack.c.l.b16 %v4427
        %v4572 = vunpack.c.l.b16 %v4428
        %v4573 = vpack.c.b16 %v4526, %v4525
        %v4574 = vpack.c.b16 %v4528, %v4527
        %v4575 = vpack.c.b16 %v4530, %v4529
        %v4576 = vpack.c.b16 %v4532, %v4531
        %v4577 = vpack.c.b16 %v4534, %v4533
        %v4578 = vpack.c.b16 %v4536, %v4535
        %v4579 = vpack.c.b16 %v4538, %v4537
        %v4580 = vpack.c.b16 %v4540, %v4539
        %v4581 = vpack.c.b16 %v4542, %v4541
        %v4582 = vpack.c.b16 %v4544, %v4543
        %v4583 = vpack.c.b16 %v4546, %v4545
        %v4584 = vpack.c.b16 %v4548, %v4547
        %v4585 = vpack.c.b16 %v4550, %v4549
        %v4586 = vpack.c.b16 %v4552, %v4551
        %v4587 = vpack.c.b16 %v4554, %v4553
        %v4588 = vpack.c.b16 %v4556, %v4555
        %v4589 = vpack.c.b16 %v4558, %v4557
        %v4590 = vpack.c.b16 %v4560, %v4559
        %v4591 = vpack.c.b16 %v4562, %v4561
        %v4592 = vpack.c.b16 %v4564, %v4563
        %v4593 = vpack.c.b16 %v4566, %v4565
        %v4594 = vpack.c.b16 %v4568, %v4567
        %v4595 = vpack.c.b16 %v4570, %v4569
        %v4596 = vpack.c.b16 %v4572, %v4571
        %4621 = vmatprep.subr.bf16.mxu0 0
        %4622 = vmatpush1.bf16.msra.mxu0 %v4573
        %4623 = vmatprep.subr.bf16.mxu0 0
        %4624 = vmatpush1.bf16.msra.mxu0 %v4574
        %4625 = vmatprep.subr.bf16.mxu0 0
        %4626 = vmatpush1.bf16.msra.mxu0 %v4575
        %4627 = vmatprep.subr.bf16.mxu0 0
        %4628 = vmatpush1.bf16.msra.mxu0 %v4576
        %4629 = vmatprep.subr.bf16.mxu0 0
        %4630 = vmatpush1.bf16.msra.mxu0 %v4577
        %4631 = vmatprep.subr.bf16.mxu0 0
        %4632 = vmatpush1.bf16.msra.mxu0 %v4578
        %4633 = vmatprep.subr.bf16.mxu0 0
        %4634 = vmatpush1.bf16.msra.mxu0 %v4579
        %4635 = vmatprep.subr.bf16.mxu0 0
        %4636 = vmatpush1.bf16.msra.mxu0 %v4580
        %4637 = vmatprep.subr.bf16.mxu0 0
        %4638 = vmatpush1.bf16.msra.mxu0 %v4581
        %4639 = vmatprep.subr.bf16.mxu0 0
        %4640 = vmatpush1.bf16.msra.mxu0 %v4582
        %4641 = vmatprep.subr.bf16.mxu0 0
        %4642 = vmatpush1.bf16.msra.mxu0 %v4583
        %4643 = vmatprep.subr.bf16.mxu0 0
        %4644 = vmatpush1.bf16.msra.mxu0 %v4584
        %4645 = vmatprep.subr.bf16.mxu0 0
        %4646 = vmatpush1.bf16.msra.mxu0 %v4585
        %4647 = vmatprep.subr.bf16.mxu0 0
        %4648 = vmatpush1.bf16.msra.mxu0 %v4586
        %4649 = vmatprep.subr.bf16.mxu0 0
        %4650 = vmatpush1.bf16.msra.mxu0 %v4587
        %4651 = vmatprep.subr.bf16.mxu0 0
        %4652 = vmatpush1.bf16.msra.mxu0 %v4588
        %4653 = vmatprep.mubr.bf16.mxu0 %v4454
        %4654 = vmatmul.mubr.bf16.gmra.mrb[0].mxu0 %v4453
        %v4655 = vpop.f32.mrb[0].mxu0
        %v4656 = vadd.f32 0.0, %v4655
        %v4657 = vpop.f32.mrb[0].mxu0
        %v4658 = vpop.f32.mrb[0].mxu0
        %v4659 = vadd.f32 0.0, %v4658
        %v4660 = vpop.f32.mrb[0].mxu0
        %4661 = vmatprep.mubr.bf16.mxu0 %v4457
        %4662 = vmatmul.mubr.bf16.gmra.mrb[0].mxu0 %v4456
        %v4663 = vpop.f32.mrb[0].mxu0
        %v4664 = vadd.f32 0.0, %v4663
        %v4665 = vpop.f32.mrb[0].mxu0
        %v4666 = vpop.f32.mrb[0].mxu0
        %v4667 = vadd.f32 0.0, %v4666
        %v4668 = vpop.f32.mrb[0].mxu0
        %4669 = vmatprep.mubr.bf16.mxu0 %v4460
        %4670 = vmatmul.mubr.bf16.gmra.mrb[0].mxu0 %v4459
        %v4671 = vpop.f32.mrb[0].mxu0
        %v4672 = vadd.f32 0.0, %v4671
        %v4673 = vpop.f32.mrb[0].mxu0
        %v4674 = vpop.f32.mrb[0].mxu0
        %v4675 = vadd.f32 0.0, %v4674
        %v4676 = vpop.f32.mrb[0].mxu0
        %4677 = vmatprep.mubr.bf16.mxu0 %v4463
        %4678 = vmatmul.mubr.bf16.gmra.mrb[0].mxu0 %v4462
        %v4679 = vpop.f32.mrb[0].mxu0
        %v4680 = vadd.f32 0.0, %v4679
        %v4681 = vpop.f32.mrb[0].mxu0
        %v4682 = vpop.f32.mrb[0].mxu0
        %v4683 = vadd.f32 0.0, %v4682
        %v4684 = vpop.f32.mrb[0].mxu0
        %4685 = vdwg.mxu0
        %4686 = vmatprep.subr.bf16.mxu0 0
        %4687 = vmatpush1.bf16.msra.mxu0 %v4589
        %4688 = vmatprep.subr.bf16.mxu0 0
        %4689 = vmatpush1.bf16.msra.mxu0 %v4590
        %4690 = vmatprep.subr.bf16.mxu0 0
        %4691 = vmatpush1.bf16.msra.mxu0 %v4591
        %4692 = vmatprep.subr.bf16.mxu0 0
        %4693 = vmatpush1.bf16.msra.mxu0 %v4592
        %4694 = vmatprep.subr.bf16.mxu0 0
        %4695 = vmatpush1.bf16.msra.mxu0 %v4593
        %4696 = vmatprep.subr.bf16.mxu0 0
        %4697 = vmatpush1.bf16.msra.mxu0 %v4594
        %4698 = vmatprep.subr.bf16.mxu0 0
        %4699 = vmatpush1.bf16.msra.mxu0 %v4595
        %4700 = vmatprep.subr.bf16.mxu0 0
        %4701 = vmatpush1.bf16.msra.mxu0 %v4596
        %4702 = vmatprep.subr.bf16.mxu0 0
        %4703 = vmatpush1.bf16.msra.mxu0 0
        %4704 = vmatprep.subr.bf16.mxu0 0
        %4705 = vmatpush1.bf16.msra.mxu0 0
        %4706 = vmatprep.subr.bf16.mxu0 0
        %4707 = vmatpush1.bf16.msra.mxu0 0
        %4708 = vmatprep.subr.bf16.mxu0 0
        %4709 = vmatpush1.bf16.msra.mxu0 0
        %4710 = vmatprep.subr.bf16.mxu0 0
        %4711 = vmatpush1.bf16.msra.mxu0 0
        %4712 = vmatprep.subr.bf16.mxu0 0
        %4713 = vmatpush1.bf16.msra.mxu0 0
        %4714 = vmatprep.subr.bf16.mxu0 0
        %4715 = vmatpush1.bf16.msra.mxu0 0
        %4716 = vmatprep.subr.bf16.mxu0 0
        %4717 = vmatpush1.bf16.msra.mxu0 0
        %4718 = vmatprep.mubr.bf16.mxu0 0
        %4719 = vmatmul.mubr.bf16.gmra.mrb[0].mxu0 %v4455
        %v4720 = vpop.f32.mrb[0].mxu0
        %v4721 = vadd.f32 %v4656, %v4720
        %v4722 = vpop.f32.mrb[0].mxu0
        %v4723 = vpop.f32.mrb[0].mxu0
        %v4724 = vadd.f32 %v4659, %v4723
        %v4725 = vpop.f32.mrb[0].mxu0
        %4726 = vmatprep.mubr.bf16.mxu0 0
        %4727 = vmatmul.mubr.bf16.gmra.mrb[0].mxu0 %v4458
        %v4728 = vpop.f32.mrb[0].mxu0
        %v4729 = vadd.f32 %v4664, %v4728
        %v4730 = vpop.f32.mrb[0].mxu0
        %v4731 = vpop.f32.mrb[0].mxu0
        %v4732 = vadd.f32 %v4667, %v4731
        %v4733 = vpop.f32.mrb[0].mxu0
        %4734 = vmatprep.mubr.bf16.mxu0 0
        %4735 = vmatmul.mubr.bf16.gmra.mrb[0].mxu0 %v4461
        %v4736 = vpop.f32.mrb[0].mxu0
        %v4737 = vadd.f32 %v4672, %v4736
        %v4738 = vpop.f32.mrb[0].mxu0
        %v4739 = vpop.f32.mrb[0].mxu0
        %v4740 = vadd.f32 %v4675, %v4739
        %v4741 = vpop.f32.mrb[0].mxu0
        %4742 = vmatprep.mubr.bf16.mxu0 0
        %4743 = vmatmul.mubr.bf16.gmra.mrb[0].mxu0 %v4464
        %v4744 = vpop.f32.mrb[0].mxu0
        %v4745 = vadd.f32 %v4680, %v4744
        %v4746 = vpop.f32.mrb[0].mxu0
        %v4747 = vpop.f32.mrb[0].mxu0
        %v4748 = vadd.f32 %v4683, %v4747
        %v4749 = vpop.f32.mrb[0].mxu0
        %4750 = vdwg.mxu0
        %v4751 = vadd.f32 %v4262, %v4721
        %v4752 = vadd.f32 %v4263, %v4724
        %v4753 = vadd.f32 %v4264, %v4729
        %v4754 = vadd.f32 %v4265, %v4732
        %v4755 = vadd.f32 %v4266, %v4737
        %v4756 = vadd.f32 %v4267, %v4740
        %v4757 = vadd.f32 %v4268, %v4745
        %v4758 = vadd.f32 %v4269, %v4748
        %v4759 = vpack.c.bf16 %v4751, %v4751
        %v4760 = vpack.c.bf16 %v4752, %v4752
        %v4761 = vpack.c.bf16 %v4753, %v4753
        %v4762 = vpack.c.bf16 %v4754, %v4754
        %v4763 = vpack.c.bf16 %v4755, %v4755
        %v4764 = vpack.c.bf16 %v4756, %v4756
        %v4765 = vpack.c.bf16 %v4757, %v4757
        %v4766 = vpack.c.bf16 %v4758, %v4758
        %4767 = vst [vmem:[%s515] sm:$0xf] %v4759
        %4768 = vst [vmem:[%s515 + $0x4] sm:$0xf] %v4760
        %4769 = vst [vmem:[%s515 + $0x8] sm:$0xf] %v4761
        %4770 = vst [vmem:[%s515 + $0xc] sm:$0xf] %v4762
        %4771 = vst [vmem:[%s515 + $0x10] sm:$0xf] %v4763
        %4772 = vst [vmem:[%s515 + $0x14] sm:$0xf] %v4764
        %4773 = vst [vmem:[%s515 + $0x18] sm:$0xf] %v4765
        %4774 = vst [vmem:[%s515 + $0x1c] sm:$0xf] %v4766
        %s4775 = sand.u32 %s302, 1
        %s4776 = scalar_lea.sflag [#allocation5], %s4775
        %s4777 = sand.u32 %s302, 1
        %s4778 = smul.addr %s4777, 32
        %s4779 = scalar_lea.vmem [#allocation14], %s4778
        // Predicated region
        $region93: #{tpu_custom_call.1} parent=67 // pred_check
          %p4780 = pneg %p312
        $region94: #{tpu_custom_call.1} parent=67 // pred_check_branch
          %4782 = sbr.rel (%p4780) target = $region96
        $region95: #{tpu_custom_call.1} parent=67 // pred_region
          %s4784 = ssub.s32 512, 512
          %4785 = vsyncadd %s4776, %s4784
          %s4786 = smul.addr %s32, 8
          %s4787 = smul.addr %s4786, 64
          %s4788 = scalar_lea.hbm %s12, %s4787
          %s4789 = sshll.u32 %s4779, 4
          %s4790 = int_to_ptr.vmem [resolvable:$true] %s4789
          %4795 = dma.vmem_to_hbm [thread:$0]  %s4790, 512, %s4788, %s4776, 64, 64, 4
        $region96: #{tpu_custom_call.1} parent=67 // pred_fallthru
          _
      $region68: #{tpu_custom_call.1} parent=5 // pred_fallthru
        _
      %p4796 = scmp.le.s32.totalorder 2, %s27
      // Predicated region
      $region97: #{tpu_custom_call.1} parent=5 // pred_check
        %p4797 = pneg %p4796
      $region98: #{tpu_custom_call.1} parent=5 // pred_check_branch
        %4799 = sbr.rel (%p4797) target = $region100
      $region99: #{tpu_custom_call.1} parent=5 // pred_region
        %s4800 = ssub.s32 %s27, 2
        // Predicated region
        $region101: #{tpu_custom_call.1} parent=99 // pred_check
          %p4801 = pneg %p318
        $region102: #{tpu_custom_call.1} parent=99 // pred_check_branch
          %4803 = sbr.rel (%p4801) target = $region104
        $region103: #{tpu_custom_call.1} parent=99 // pred_region
          %s4804 = sand.u32 %s303, 1
          %s4805 = scalar_lea.sflag [#allocation5], %s4804
          %s4806 = sand.u32 %s303, 1
          %s4807 = smul.addr %s4806, 32
          %s4808 = scalar_lea.vmem [#allocation14], %s4807
          %4809 = dma.done %s4805, 512
        $region104: #{tpu_custom_call.1} parent=99 // pred_fallthru
          _
      $region100: #{tpu_custom_call.1} parent=5 // pred_fallthru
        _
    $region6: #{tpu_custom_call.1} parent=1 // loop_footer
      %s31 = sadd.s32 1, %s27
    $region7: #{tpu_custom_call.1} parent=1 // loop_footer_branch
      %26 = sbr.rel target = $region3
    $region8: #{tpu_custom_call.1} parent=1 // loop_exit
      _
    %4810 = vsyncpa [#allocation4], 1
    %s4811 = scalar_lea.sflag [#allocation4], 1
    %4812 = vsyncpa %s4811, 1
    %4813 = vsyncpa [#allocation7], 1
    %4814 = vsyncpa [#allocation10], 1
    %4815 = vsyncpa [#allocation13], 1
    %4816 = vsyncpa [#allocation5], 1
    %s4817 = scalar_lea.sflag [#allocation5], 1
    %4818 = vsyncpa %s4817, 1

// kernel: tpu_custom_call.1
$region0: #{tpu_custom_call.1}
  #allocation0 [shape = 'u32[]', space=smem, size = 0x4, offset = 0x4, fixed_abs, tag = 'smem constant byte address 0x4 - core index']
  #allocation1 [shape = 'u32[144,128]{1,0:T(1,128)}', space=vmem, size = 0x12000, scoped, tag = 'internal scratch']
  #allocation2 [shape = 'bf16[1,10,10,128]{3,2,1,0:T(8,128)(2,1)}', space=vmem, size = 0xa000, scoped, tag = 'scratch operand']
  %s0 = inlined_call_operand.hbm [shape: bf16[2,8,8,128], index: 0, kind: input, shape index: {}]
  %s1 = inlined_call_operand.vmem [shape: f32[2,1,128], index: 1, kind: input, shape index: {}]
  %s2 = inlined_call_operand.vmem [shape: f32[1,128], index: 2, kind: input, shape index: {}]
  %s3 = inlined_call_operand.vmem [shape: f32[1,128], index: 3, kind: input, shape index: {}]
  %s4 = inlined_call_operand.hbm [shape: f32[128,128], index: 4, kind: input, shape index: {}]
  %s5 = inlined_call_operand.hbm [shape: bf16[3,384,128], index: 5, kind: input, shape index: {}]
  %s6 = inlined_call_operand.vmem [shape: f32[1,128], index: 6, kind: input, shape index: {}]
  %s7 = inlined_call_operand.vmem [shape: f32[1,128], index: 7, kind: input, shape index: {}]
  %s8 = inlined_call_operand.hbm [shape: f32[128,128], index: 8, kind: input, shape index: {}]
  %s9 = inlined_call_operand.hbm [shape: bf16[3,384,128], index: 9, kind: input, shape index: {}]
  %s10 = inlined_call_operand.vmem [shape: f32[1,128], index: 10, kind: input, shape index: {}]
  %s11 = inlined_call_operand.hbm [shape: bf16[128,128], index: 11, kind: input, shape index: {}]
  %s12 = inlined_call_operand.hbm [shape: bf16[2,8,8,128], index: 12, kind: output, shape index: {}]
  %s13 = sld [smem:[#allocation0]]
  $region105: #{tpu_custom_call.1} parent=0
    _
  %s15 = ssub.s32 1, %s13
  %s16 = scalar_select 0, %s15, %s13
  $region1: #{tpu_custom_call.1} parent=0
    #allocation3 [shape = 'u8[32768]{0}', space=vmem, size = 0x8000, scoped, tag = 'input window, operand 0']
    #allocation4 [shape = 's32[2]{0}', space=sflag, size = 0x8, scoped, tag = 'scoped memory for tpu_custom_call.1']
    #allocation5 [shape = 's32[2]{0}', space=sflag, size = 0x8, scoped, tag = 'scoped memory for tpu_custom_call.1']
    #allocation6 [shape = 'u8[65536]{0}', space=vmem, size = 0x10000, scoped, tag = 'input window, operand 4, single buffered']
    #allocation7 [shape = 's32[1]{0}', space=sflag, size = 0x4, scoped, tag = 'scoped memory for tpu_custom_call.1']
    #allocation8 [shape = 'u8[294912]{0}', space=vmem, size = 0x48000, scoped, tag = 'input window, operand 5, single buffered']
    #allocation9 [shape = 'u8[65536]{0}', space=vmem, size = 0x10000, scoped, tag = 'input window, operand 8, single buffered']
    #allocation10 [shape = 's32[1]{0}', space=sflag, size = 0x4, scoped, tag = 'scoped memory for tpu_custom_call.1']
    #allocation11 [shape = 'u8[294912]{0}', space=vmem, size = 0x48000, scoped, tag = 'input window, operand 9, single buffered']
    #allocation12 [shape = 'u8[32768]{0}', space=vmem, size = 0x8000, scoped, tag = 'input window, operand 11, single buffered']
    #allocation13 [shape = 's32[1]{0}', space=sflag, size = 0x4, scoped, tag = 'scoped memory for tpu_custom_call.1']
    #allocation14 [shape = 'u8[32768]{0}', space=vmem, size = 0x8000, scoped, tag = 'output window, operand 0']
    %17 = vsyncpa [#allocation4], 0
    %s18 = scalar_lea.sflag [#allocation4], 1
    %19 = vsyncpa %s18, 0
    %20 = vsyncpa [#allocation7], 0
    %21 = vsyncpa [#allocation10], 0
    %22 = vsyncpa [#allocation13], 0
    %23 = vsyncpa [#allocation5], 0
    %s24 = scalar_lea.sflag [#allocation5], 1
    %25 = vsyncpa %s24, 0
    loop: start=0, step=1, limit=4
    $region2: #{tpu_custom_call.1} parent=1 // loop_pre_header
      _
    $region3: #{tpu_custom_call.1} parent=1 // loop_header
      %s27 = sphi 0, %s31
      %p28 = scmp.ge.s32.totalorder %s27, 4
      %s37 = sphi 0, %s39
      %s40 = sphi 0, %s37
      %s41 = sphi 0, %s40
      %s57 = sphi 0, %s41
      %s63 = sphi 0, %s65
      %s66 = sphi 0, %s63
      %s67 = sphi 0, %s66
      %s83 = sphi 0, %s67
      %s87 = sphi 0, %s87
      %s89 = sphi 0, %s87
      %s90 = sphi 0, %s89
      %s104 = sphi 0, %s90
      %s108 = sphi 0, %s108
      %s110 = sphi 0, %s108
      %s111 = sphi 0, %s110
      %s125 = sphi 0, %s111
      %s129 = sphi 0, %s129
      %s131 = sphi 0, %s129
      %s132 = sphi 0, %s131
      %s146 = sphi 0, %s132
      %s150 = sphi 0, %s150
      %s152 = sphi 0, %s150
      %s153 = sphi 0, %s152
      %s167 = sphi 0, %s153
      %s171 = sphi 0, %s171
      %s173 = sphi 0, %s171
      %s174 = sphi 0, %s173
      %s188 = sphi 0, %s174
      %s192 = sphi 0, %s192
      %s194 = sphi 0, %s192
      %s195 = sphi 0, %s194
      %s209 = sphi 0, %s195
      %s213 = sphi 0, %s213
      %s215 = sphi 0, %s213
      %s216 = sphi 0, %s215
      %s230 = sphi 0, %s216
      %s234 = sphi 0, %s234
      %s236 = sphi 0, %s234
      %s237 = sphi 0, %s236
      %s251 = sphi 0, %s237
      %s255 = sphi 0, %s255
      %s257 = sphi 0, %s255
      %s258 = sphi 0, %s257
      %s272 = sphi 0, %s258
      %s276 = sphi 0, %s276
      %s278 = sphi 0, %s276
      %s279 = sphi 0, %s278
      %s293 = sphi 0, %s279
      %s299 = sphi 0, %s301
      %s302 = sphi 0, %s299
      %s303 = sphi 0, %s302
      %s319 = sphi 0, %s303
    $region4: #{tpu_custom_call.1} parent=1 // loop_header_branch
      %30 = sbr.rel (%p28) target = $region8
    $region5: #{tpu_custom_call.1} parent=1 // loop_body
      %s32 = ssub.s32 %s27, 1
      %s33 = ssub.s32 %s27, 2
      %s34 = sadd.s32 %s27, 1
      %s35 = ssub.s32 %s27, %s34
      %p36 = scmp.eq.s32.totalorder %s35, 0
      %s38 = sadd.s32 %s37, 1
      %s39 = scalar_select %p36, %s37, %s38
      %p42 = pneg %p36
      %p43 = scmp.eq.s32.totalorder %s27, 1
      %p44 = por %p42, %p43
      %p45 = scmp.ne.s32.totalorder %s37, %s40
      %p46 = scmp.eq.s32.totalorder %s27, 0
      %p47 = por %p45, %p46
      %p48 = scmp.ne.s32.totalorder %s37, %s40
      %p49 = scmp.eq.s32.totalorder %s32, 1
      %p50 = por %p48, %p49
      %p51 = scmp.ne.s32.totalorder %s40, %s41
      %p52 = scmp.eq.s32.totalorder %s32, 0
      %p53 = por %p51, %p52
      %p54 = scmp.ne.s32.totalorder %s40, %s41
      %p55 = scmp.eq.s32.totalorder %s33, 1
      %p56 = por %p54, %p55
      %p58 = scmp.ne.s32.totalorder %s41, %s57
      %p59 = scmp.eq.s32.totalorder %s33, 0
      %p60 = por %p58, %p59
      %s61 = ssub.s32 %s27, %s34
      %p62 = scmp.eq.s32.totalorder %s61, 0
      %s64 = sadd.s32 %s63, 1
      %s65 = scalar_select %p62, %s63, %s64
      %p68 = pneg %p62
      %p69 = scmp.eq.s32.totalorder %s27, 1
      %p70 = por %p68, %p69
      %p71 = scmp.ne.s32.totalorder %s63, %s66
      %p72 = scmp.eq.s32.totalorder %s27, 0
      %p73 = por %p71, %p72
      %p74 = scmp.ne.s32.totalorder %s63, %s66
      %p75 = scmp.eq.s32.totalorder %s32, 1
      %p76 = por %p74, %p75
      %p77 = scmp.ne.s32.totalorder %s66, %s67
      %p78 = scmp.eq.s32.totalorder %s32, 0
      %p79 = por %p77, %p78
      %p80 = scmp.ne.s32.totalorder %s66, %s67
      %p81 = scmp.eq.s32.totalorder %s33, 1
      %p82 = por %p80, %p81
      %p84 = scmp.ne.s32.totalorder %s67, %s83
      %p85 = scmp.eq.s32.totalorder %s33, 0
      %p86 = por %p84, %p85
      %s88 = sadd.s32 %s87, 1
      %p91 = scmp.eq.s32.totalorder %s27, 1
      %p92 = scmp.ne.s32.totalorder %s87, %s89
      %p93 = scmp.eq.s32.totalorder %s27, 0
      %p94 = por %p92, %p93
      %p95 = scmp.ne.s32.totalorder %s87, %s89
      %p96 = scmp.eq.s32.totalorder %s32, 1
      %p97 = por %p95, %p96
      %p98 = scmp.ne.s32.totalorder %s89, %s90
      %p99 = scmp.eq.s32.totalorder %s32, 0
      %p100 = por %p98, %p99
      %p101 = scmp.ne.s32.totalorder %s89, %s90
      %p102 = scmp.eq.s32.totalorder %s33, 1
      %p103 = por %p101, %p102
      %p105 = scmp.ne.s32.totalorder %s90, %s104
      %p106 = scmp.eq.s32.totalorder %s33, 0
      %p107 = por %p105, %p106
      %s109 = sadd.s32 %s108, 1
      %p112 = scmp.eq.s32.totalorder %s27, 1
      %p113 = scmp.ne.s32.totalorder %s108, %s110
      %p114 = scmp.eq.s32.totalorder %s27, 0
      %p115 = por %p113, %p114
      %p116 = scmp.ne.s32.totalorder %s108, %s110
      %p117 = scmp.eq.s32.totalorder %s32, 1
      %p118 = por %p116, %p117
      %p119 = scmp.ne.s32.totalorder %s110, %s111
      %p120 = scmp.eq.s32.totalorder %s32, 0
      %p121 = por %p119, %p120
      %p122 = scmp.ne.s32.totalorder %s110, %s111
      %p123 = scmp.eq.s32.totalorder %s33, 1
      %p124 = por %p122, %p123
      %p126 = scmp.ne.s32.totalorder %s111, %s125
      %p127 = scmp.eq.s32.totalorder %s33, 0
      %p128 = por %p126, %p127
      %s130 = sadd.s32 %s129, 1
      %p133 = scmp.eq.s32.totalorder %s27, 1
      %p134 = scmp.ne.s32.totalorder %s129, %s131
      %p135 = scmp.eq.s32.totalorder %s27, 0
      %p136 = por %p134, %p135
      %p137 = scmp.ne.s32.totalorder %s129, %s131
      %p138 = scmp.eq.s32.totalorder %s32, 1
      %p139 = por %p137, %p138
      %p140 = scmp.ne.s32.totalorder %s131, %s132
      %p141 = scmp.eq.s32.totalorder %s32, 0
      %p142 = por %p140, %p141
      %p143 = scmp.ne.s32.totalorder %s131, %s132
      %p144 = scmp.eq.s32.totalorder %s33, 1
      %p145 = por %p143, %p144
      %p147 = scmp.ne.s32.totalorder %s132, %s146
      %p148 = scmp.eq.s32.totalorder %s33, 0
      %p149 = por %p147, %p148
      %s151 = sadd.s32 %s150, 1
      %p154 = scmp.eq.s32.totalorder %s27, 1
      %p155 = scmp.ne.s32.totalorder %s150, %s152
      %p156 = scmp.eq.s32.totalorder %s27, 0
      %p157 = por %p155, %p156
      %p158 = scmp.ne.s32.totalorder %s150, %s152
      %p159 = scmp.eq.s32.totalorder %s32, 1
      %p160 = por %p158, %p159
      %p161 = scmp.ne.s32.totalorder %s152, %s153
      %p162 = scmp.eq.s32.totalorder %s32, 0
      %p163 = por %p161, %p162
      %p164 = scmp.ne.s32.totalorder %s152, %s153
      %p165 = scmp.eq.s32.totalorder %s33, 1
      %p166 = por %p164, %p165
      %p168 = scmp.ne.s32.totalorder %s153, %s167
      %p169 = scmp.eq.s32.totalorder %s33, 0
      %p170 = por %p168, %p169
      %s172 = sadd.s32 %s171, 1
      %p175 = scmp.eq.s32.totalorder %s27, 1
      %p176 = scmp.ne.s32.totalorder %s171, %s173
      %p177 = scmp.eq.s32.totalorder %s27, 0
      %p178 = por %p176, %p177
      %p179 = scmp.ne.s32.totalorder %s171, %s173
      %p180 = scmp.eq.s32.totalorder %s32, 1
      %p181 = por %p179, %p180
      %p182 = scmp.ne.s32.totalorder %s173, %s174
      %p183 = scmp.eq.s32.totalorder %s32, 0
      %p184 = por %p182, %p183
      %p185 = scmp.ne.s32.totalorder %s173, %s174
      %p186 = scmp.eq.s32.totalorder %s33, 1
      %p187 = por %p185, %p186
      %p189 = scmp.ne.s32.totalorder %s174, %s188
      %p190 = scmp.eq.s32.totalorder %s33, 0
      %p191 = por %p189, %p190
      %s193 = sadd.s32 %s192, 1
      %p196 = scmp.eq.s32.totalorder %s27, 1
      %p197 = scmp.ne.s32.totalorder %s192, %s194
      %p198 = scmp.eq.s32.totalorder %s27, 0
      %p199 = por %p197, %p198
      %p200 = scmp.ne.s32.totalorder %s192, %s194
      %p201 = scmp.eq.s32.totalorder %s32, 1
      %p202 = por %p200, %p201
      %p203 = scmp.ne.s32.totalorder %s194, %s195
      %p204 = scmp.eq.s32.totalorder %s32, 0
      %p205 = por %p203, %p204
      %p206 = scmp.ne.s32.totalorder %s194, %s195
      %p207 = scmp.eq.s32.totalorder %s33, 1
      %p208 = por %p206, %p207
      %p210 = scmp.ne.s32.totalorder %s195, %s209
      %p211 = scmp.eq.s32.totalorder %s33, 0
      %p212 = por %p210, %p211
      %s214 = sadd.s32 %s213, 1
      %p217 = scmp.eq.s32.totalorder %s27, 1
      %p218 = scmp.ne.s32.totalorder %s213, %s215
      %p219 = scmp.eq.s32.totalorder %s27, 0
      %p220 = por %p218, %p219
      %p221 = scmp.ne.s32.totalorder %s213, %s215
      %p222 = scmp.eq.s32.totalorder %s32, 1
      %p223 = por %p221, %p222
      %p224 = scmp.ne.s32.totalorder %s215, %s216
      %p225 = scmp.eq.s32.totalorder %s32, 0
      %p226 = por %p224, %p225
      %p227 = scmp.ne.s32.totalorder %s215, %s216
      %p228 = scmp.eq.s32.totalorder %s33, 1
      %p229 = por %p227, %p228
      %p231 = scmp.ne.s32.totalorder %s216, %s230
      %p232 = scmp.eq.s32.totalorder %s33, 0
      %p233 = por %p231, %p232
      %s235 = sadd.s32 %s234, 1
      %p238 = scmp.eq.s32.totalorder %s27, 1
      %p239 = scmp.ne.s32.totalorder %s234, %s236
      %p240 = scmp.eq.s32.totalorder %s27, 0
      %p241 = por %p239, %p240
      %p242 = scmp.ne.s32.totalorder %s234, %s236
      %p243 = scmp.eq.s32.totalorder %s32, 1
      %p244 = por %p242, %p243
      %p245 = scmp.ne.s32.totalorder %s236, %s237
      %p246 = scmp.eq.s32.totalorder %s32, 0
      %p247 = por %p245, %p246
      %p248 = scmp.ne.s32.totalorder %s236, %s237
      %p249 = scmp.eq.s32.totalorder %s33, 1
      %p250 = por %p248, %p249
      %p252 = scmp.ne.s32.totalorder %s237, %s251
      %p253 = scmp.eq.s32.totalorder %s33, 0
      %p254 = por %p252, %p253
      %s256 = sadd.s32 %s255, 1
      %p259 = scmp.eq.s32.totalorder %s27, 1
      %p260 = scmp.ne.s32.totalorder %s255, %s257
      %p261 = scmp.eq.s32.totalorder %s27, 0
      %p262 = por %p260, %p261
      %p263 = scmp.ne.s32.totalorder %s255, %s257
      %p264 = scmp.eq.s32.totalorder %s32, 1
      %p265 = por %p263, %p264
      %p266 = scmp.ne.s32.totalorder %s257, %s258
      %p267 = scmp.eq.s32.totalorder %s32, 0
      %p268 = por %p266, %p267
      %p269 = scmp.ne.s32.totalorder %s257, %s258
      %p270 = scmp.eq.s32.totalorder %s33, 1
      %p271 = por %p269, %p270
      %p273 = scmp.ne.s32.totalorder %s258, %s272
      %p274 = scmp.eq.s32.totalorder %s33, 0
      %p275 = por %p273, %p274
      %s277 = sadd.s32 %s276, 1
      %p280 = scmp.eq.s32.totalorder %s27, 1
      %p281 = scmp.ne.s32.totalorder %s276, %s278
      %p282 = scmp.eq.s32.totalorder %s27, 0
      %p283 = por %p281, %p282
      %p284 = scmp.ne.s32.totalorder %s276, %s278
      %p285 = scmp.eq.s32.totalorder %s32, 1
      %p286 = por %p284, %p285
      %p287 = scmp.ne.s32.totalorder %s278, %s279
      %p288 = scmp.eq.s32.totalorder %s32, 0
      %p289 = por %p287, %p288
      %p290 = scmp.ne.s32.totalorder %s278, %s279
      %p291 = scmp.eq.s32.totalorder %s33, 1
      %p292 = por %p290, %p291
      %p294 = scmp.ne.s32.totalorder %s279, %s293
      %p295 = scmp.eq.s32.totalorder %s33, 0
      %p296 = por %p294, %p295
      %s297 = ssub.s32 %s27, %s34
      %p298 = scmp.eq.s32.totalorder %s297, 0
      %s300 = sadd.s32 %s299, 1
      %s301 = scalar_select %p298, %s299, %s300
      %p304 = pneg %p298
      %p305 = scmp.eq.s32.totalorder %s27, 1
      %p306 = por %p304, %p305
      %p307 = scmp.ne.s32.totalorder %s299, %s302
      %p308 = scmp.eq.s32.totalorder %s27, 0
      %p309 = por %p307, %p308
      %p310 = scmp.ne.s32.totalorder %s299, %s302
      %p311 = scmp.eq.s32.totalorder %s32, 1
      %p312 = por %p310, %p311
      %p313 = scmp.ne.s32.totalorder %s302, %s303
      %p314 = scmp.eq.s32.totalorder %s32, 0
      %p315 = por %p313, %p314
      %p316 = scmp.ne.s32.totalorder %s302, %s303
      %p317 = scmp.eq.s32.totalorder %s33, 1
      %p318 = por %p316, %p317
      %p320 = scmp.ne.s32.totalorder %s303, %s319
      %p321 = scmp.eq.s32.totalorder %s33, 0
      %p322 = por %p320, %p321
      %p323 = scmp.le.s32.totalorder 1, %s27
      %p324 = scmp.lt.s32.totalorder %s27, 3
      %p325 = pnand %p323, %p324
      %p326 = pneg %p325
      // Predicated region
      $region9: #{tpu_custom_call.1} parent=5 // pred_check
        _
      $region10: #{tpu_custom_call.1} parent=5 // pred_check_branch
        %328 = sbr.rel (%p325) target = $region12
      $region11: #{tpu_custom_call.1} parent=5 // pred_region
        %s329 = ssub.s32 %s27, 1
        // Predicated region
        $region13: #{tpu_custom_call.1} parent=11 // pred_check
          %p330 = pneg %p100
        $region14: #{tpu_custom_call.1} parent=11 // pred_check_branch
          %332 = sbr.rel (%p330) target = $region16
        $region15: #{tpu_custom_call.1} parent=11 // pred_region
          _
        $region16: #{tpu_custom_call.1} parent=11 // pred_fallthru
          _
        // Predicated region
        $region17: #{tpu_custom_call.1} parent=11 // pred_check
          %p333 = pneg %p121
        $region18: #{tpu_custom_call.1} parent=11 // pred_check_branch
          %335 = sbr.rel (%p333) target = $region20
        $region19: #{tpu_custom_call.1} parent=11 // pred_region
          _
        $region20: #{tpu_custom_call.1} parent=11 // pred_fallthru
          _
        // Predicated region
        $region21: #{tpu_custom_call.1} parent=11 // pred_check
          %p336 = pneg %p142
        $region22: #{tpu_custom_call.1} parent=11 // pred_check_branch
          %338 = sbr.rel (%p336) target = $region24
        $region23: #{tpu_custom_call.1} parent=11 // pred_region
          %s340 = ssub.s32 2048, 2048
          %341 = vsyncadd [#allocation7], %s340
          %s342 = sshll.u32 [#allocation6], 4
          %s343 = int_to_ptr.vmem [resolvable:$true] %s342
          %348 = dma.hbm_to_vmem [thread:$0]  %s4, 2048, %s343, [#allocation7], 128, 128, 8
        $region24: #{tpu_custom_call.1} parent=11 // pred_fallthru
          _
        // Predicated region
        $region25: #{tpu_custom_call.1} parent=11 // pred_check
          %p349 = pneg %p163
        $region26: #{tpu_custom_call.1} parent=11 // pred_check_branch
          %351 = sbr.rel (%p349) target = $region28
        $region27: #{tpu_custom_call.1} parent=11 // pred_region
          %s353 = ssub.s32 9216, 9216
          %354 = vsyncadd [#allocation7], %s353
          %s355 = sshll.u32 [#allocation8], 4
          %s356 = int_to_ptr.vmem [resolvable:$true] %s355
          %361 = dma.hbm_to_vmem [thread:$0]  %s5, 9216, %s356, [#allocation7], 64, 64, 4
        $region28: #{tpu_custom_call.1} parent=11 // pred_fallthru
          _
        // Predicated region
        $region29: #{tpu_custom_call.1} parent=11 // pred_check
          %p362 = pneg %p184
        $region30: #{tpu_custom_call.1} parent=11 // pred_check_branch
          %364 = sbr.rel (%p362) target = $region32
        $region31: #{tpu_custom_call.1} parent=11 // pred_region
          _
        $region32: #{tpu_custom_call.1} parent=11 // pred_fallthru
          _
        // Predicated region
        $region33: #{tpu_custom_call.1} parent=11 // pred_check
          %p365 = pneg %p205
        $region34: #{tpu_custom_call.1} parent=11 // pred_check_branch
          %367 = sbr.rel (%p365) target = $region36
        $region35: #{tpu_custom_call.1} parent=11 // pred_region
          _
        $region36: #{tpu_custom_call.1} parent=11 // pred_fallthru
          _
        // Predicated region
        $region37: #{tpu_custom_call.1} parent=11 // pred_check
          %p368 = pneg %p226
        $region38: #{tpu_custom_call.1} parent=11 // pred_check_branch
          %370 = sbr.rel (%p368) target = $region40
        $region39: #{tpu_custom_call.1} parent=11 // pred_region
          %s372 = ssub.s32 2048, 2048
          %373 = vsyncadd [#allocation10], %s372
          %s374 = sshll.u32 [#allocation9], 4
          %s375 = int_to_ptr.vmem [resolvable:$true] %s374
          %380 = dma.hbm_to_vmem [thread:$0]  %s8, 2048, %s375, [#allocation10], 128, 128, 8
        $region40: #{tpu_custom_call.1} parent=11 // pred_fallthru
          _
        // Predicated region
        $region41: #{tpu_custom_call.1} parent=11 // pred_check
          %p381 = pneg %p247
        $region42: #{tpu_custom_call.1} parent=11 // pred_check_branch
          %383 = sbr.rel (%p381) target = $region44
        $region43: #{tpu_custom_call.1} parent=11 // pred_region
          %s385 = ssub.s32 9216, 9216
          %386 = vsyncadd [#allocation10], %s385
          %s387 = sshll.u32 [#allocation11], 4
          %s388 = int_to_ptr.vmem [resolvable:$true] %s387
          %393 = dma.hbm_to_vmem [thread:$0]  %s9, 9216, %s388, [#allocation10], 64, 64, 4
        $region44: #{tpu_custom_call.1} parent=11 // pred_fallthru
          _
        // Predicated region
        $region45: #{tpu_custom_call.1} parent=11 // pred_check
          %p394 = pneg %p268
        $region46: #{tpu_custom_call.1} parent=11 // pred_check_branch
          %396 = sbr.rel (%p394) target = $region48
        $region47: #{tpu_custom_call.1} parent=11 // pred_region
          _
        $region48: #{tpu_custom_call.1} parent=11 // pred_fallthru
          _
        // Predicated region
        $region49: #{tpu_custom_call.1} parent=11 // pred_check
          %p397 = pneg %p289
        $region50: #{tpu_custom_call.1} parent=11 // pred_check_branch
          %399 = sbr.rel (%p397) target = $region52
        $region51: #{tpu_custom_call.1} parent=11 // pred_region
          %s401 = ssub.s32 1024, 1024
          %402 = vsyncadd [#allocation13], %s401
          %s403 = sshll.u32 [#allocation12], 4
          %s404 = int_to_ptr.vmem [resolvable:$true] %s403
          %409 = dma.hbm_to_vmem [thread:$0]  %s11, 1024, %s404, [#allocation13], 64, 64, 4
        $region52: #{tpu_custom_call.1} parent=11 // pred_fallthru
          _
      $region12: #{tpu_custom_call.1} parent=5 // pred_fallthru
        _
      %p410 = scmp.lt.s32.totalorder %s27, 2
      // Predicated region
      $region53: #{tpu_custom_call.1} parent=5 // pred_check
        %p411 = pneg %p410
      $region54: #{tpu_custom_call.1} parent=5 // pred_check_branch
        %413 = sbr.rel (%p411) target = $region56
      $region55: #{tpu_custom_call.1} parent=5 // pred_region
        // Predicated region
        $region57: #{tpu_custom_call.1} parent=55 // pred_check
          %p414 = pneg %p47
        $region58: #{tpu_custom_call.1} parent=55 // pred_check_branch
          %416 = sbr.rel (%p414) target = $region60
        $region59: #{tpu_custom_call.1} parent=55 // pred_region
          %s417 = sand.u32 %s37, 1
          %s418 = scalar_lea.sflag [#allocation4], %s417
          %s419 = sand.u32 %s37, 1
          %s420 = smul.addr %s419, 32
          %s421 = scalar_lea.vmem [#allocation3], %s420
          %s423 = ssub.s32 512, 512
          %424 = vsyncadd %s418, %s423
          %s425 = smul.addr %s27, 8
          %s426 = smul.addr %s425, 64
          %s427 = scalar_lea.hbm %s0, %s426
          %s428 = sshll.u32 %s421, 4
          %s429 = int_to_ptr.vmem [resolvable:$true] %s428
          %434 = dma.hbm_to_vmem [thread:$0]  %s427, 512, %s429, %s418, 64, 64, 4
        $region60: #{tpu_custom_call.1} parent=55 // pred_fallthru
          _
        // Predicated region
        $region61: #{tpu_custom_call.1} parent=55 // pred_check
          %p435 = pneg %p73
        $region62: #{tpu_custom_call.1} parent=55 // pred_check_branch
          %437 = sbr.rel (%p435) target = $region64
        $region63: #{tpu_custom_call.1} parent=55 // pred_region
          %p438 = scmp.lt.s32.totalorder %s27, 1
          %s439 = scalar_select %p438, %s27, 1
          %s440 = scalar_lea.vmem %s1, %s439
        $region64: #{tpu_custom_call.1} parent=55 // pred_fallthru
          _
      $region56: #{tpu_custom_call.1} parent=5 // pred_fallthru
        _
      %p441 = scmp.le.s32.totalorder 1, %s27
      %p442 = scmp.lt.s32.totalorder %s27, 3
      %p443 = pnand %p441, %p442
      %p444 = pneg %p443
      // Predicated region
      $region65: #{tpu_custom_call.1} parent=5 // pred_check
        _
      $region66: #{tpu_custom_call.1} parent=5 // pred_check_branch
        %446 = sbr.rel (%p443) target = $region68
      $region67: #{tpu_custom_call.1} parent=5 // pred_region
        %s447 = ssub.s32 %s27, 1
        %s448 = sand.u32 %s40, 1
        %s449 = scalar_lea.sflag [#allocation4], %s448
        %s450 = sand.u32 %s40, 1
        %s451 = smul.addr %s450, 32
        %s452 = scalar_lea.vmem [#allocation3], %s451
        // Predicated region
        $region69: #{tpu_custom_call.1} parent=67 // pred_check
          %p453 = pneg %p53
        $region70: #{tpu_custom_call.1} parent=67 // pred_check_branch
          %455 = sbr.rel (%p453) target = $region72
        $region71: #{tpu_custom_call.1} parent=67 // pred_region
          %456 = dma.done %s449, 512
        $region72: #{tpu_custom_call.1} parent=67 // pred_fallthru
          _
        // Predicated region
        $region73: #{tpu_custom_call.1} parent=67 // pred_check
          %p457 = pneg %p142
        $region74: #{tpu_custom_call.1} parent=67 // pred_check_branch
          %459 = sbr.rel (%p457) target = $region76
        $region75: #{tpu_custom_call.1} parent=67 // pred_region
          %460 = dma.done [#allocation7], 2048
        $region76: #{tpu_custom_call.1} parent=67 // pred_fallthru
          _
        // Predicated region
        $region77: #{tpu_custom_call.1} parent=67 // pred_check
          %p461 = pneg %p163
        $region78: #{tpu_custom_call.1} parent=67 // pred_check_branch
          %463 = sbr.rel (%p461) target = $region80
        $region79: #{tpu_custom_call.1} parent=67 // pred_region
          %464 = dma.done [#allocation7], 9216
        $region80: #{tpu_custom_call.1} parent=67 // pred_fallthru
          _
        // Predicated region
        $region81: #{tpu_custom_call.1} parent=67 // pred_check
          %p465 = pneg %p226
        $region82: #{tpu_custom_call.1} parent=67 // pred_check_branch
          %467 = sbr.rel (%p465) target = $region84
        $region83: #{tpu_custom_call.1} parent=67 // pred_region
          %468 = dma.done [#allocation10], 2048
        $region84: #{tpu_custom_call.1} parent=67 // pred_fallthru
          _
        // Predicated region
        $region85: #{tpu_custom_call.1} parent=67 // pred_check
          %p469 = pneg %p247
        $region86: #{tpu_custom_call.1} parent=67 // pred_check_branch
          %471 = sbr.rel (%p469) target = $region88
        $region87: #{tpu_custom_call.1} parent=67 // pred_region
          %472 = dma.done [#allocation10], 9216
        $region88: #{tpu_custom_call.1} parent=67 // pred_fallthru
          _
        // Predicated region
        $region89: #{tpu_custom_call.1} parent=67 // pred_check
          %p473 = pneg %p289
        $region90: #{tpu_custom_call.1} parent=67 // pred_check_branch
          %475 = sbr.rel (%p473) target = $region92
        $region91: #{tpu_custom_call.1} parent=67 // pred_region
          %476 = dma.done [#allocation13], 1024
        $region92: #{tpu_custom_call.1} parent=67 // pred_fallthru
          _
        %s477 = sand.u32 %s40, 1
        %s478 = scalar_lea.sflag [#allocation4], %s477
        %s479 = sand.u32 %s40, 1
        %s480 = smul.addr %s479, 32
        %s481 = scalar_lea.vmem [#allocation3], %s480
        %p482 = pneg %p53
        %p483 = pneg %p50
        %p484 = scmp.lt.s32.totalorder %s32, 1
        %s485 = scalar_select %p484, %s32, 1
        %s486 = scalar_lea.vmem %s1, %s485
        %p487 = pneg %p79
        %p488 = pneg %p76
        %p489 = pneg %p100
        %p490 = pneg %p97
        %p491 = pneg %p121
        %p492 = pneg %p118
        %p493 = pneg %p142
        %p494 = pneg %p139
        %p495 = pneg %p163
        %p496 = pneg %p160
        %p497 = pneg %p184
        %p498 = pneg %p181
        %p499 = pneg %p205
        %p500 = pneg %p202
        %p501 = pneg %p226
        %p502 = pneg %p223
        %p503 = pneg %p247
        %p504 = pneg %p244
        %p505 = pneg %p268
        %p506 = pneg %p265
        %p507 = pneg %p289
        %p508 = pneg %p286
        %p509 = pneg %p315
        %p510 = pneg %p312
        %s511 = sand.u32 %s302, 1
        %s512 = scalar_lea.sflag [#allocation5], %s511
        %s513 = sand.u32 %s302, 1
        %s514 = smul.addr %s513, 32
        %s515 = scalar_lea.vmem [#allocation14], %s514
        %p516 = scmp.lt.s32.totalorder %s32, 1
        %s517 = scalar_select %p516, %s32, 1
        %s518 = scalar_lea.vmem %s1, %s517
        %v520 = vld [vmem:[%s452] sm:$0xf]
        %v521 = vld [vmem:[%s452 + $0x4] sm:$0xf]
        %v522 = vld [vmem:[%s452 + $0x8] sm:$0xf]
        %v523 = vld [vmem:[%s452 + $0xc] sm:$0xf]
        %v524 = vld [vmem:[%s452 + $0x10] sm:$0xf]
        %v525 = vld [vmem:[%s452 + $0x14] sm:$0xf]
        %v526 = vld [vmem:[%s452 + $0x18] sm:$0xf]
        %v527 = vld [vmem:[%s452 + $0x1c] sm:$0xf]
        %v528 = vunpack.c.l.bf16 %v520
        %v529 = vunpack.c.l.bf16 %v521
        %v530 = vunpack.c.l.bf16 %v522
        %v531 = vunpack.c.l.bf16 %v523
        %v532 = vunpack.c.l.bf16 %v524
        %v533 = vunpack.c.l.bf16 %v525
        %v534 = vunpack.c.l.bf16 %v526
        %v535 = vunpack.c.l.bf16 %v527
        %v536 = vadd.f32 %v528, %v529
        %v537 = vadd.f32 %v536, %v530
        %v538 = vadd.f32 %v537, %v531
        %v539 = vadd.f32 %v538, %v532
        %v540 = vadd.f32 %v539, %v533
        %v541 = vadd.f32 %v540, %v534
        %v542 = vadd.f32 %v541, %v535
        %v543 = vrot.slane %v542, 4
        %v544 = vadd.f32 %v542, %v543
        %v545 = vrot.slane %v544, 2
        %v546 = vadd.f32 %v544, %v545
        %v547 = vrot.slane %v546, 1
        %v548 = vadd.f32 %v546, %v547
        %v549 = vmul.f32 %v528, %v528
        %v550 = vmul.f32 %v529, %v529
        %v551 = vmul.f32 %v530, %v530
        %v552 = vmul.f32 %v531, %v531
        %v553 = vmul.f32 %v532, %v532
        %v554 = vmul.f32 %v533, %v533
        %v555 = vmul.f32 %v534, %v534
        %v556 = vmul.f32 %v535, %v535
        %v557 = vadd.f32 %v549, %v550
        %v558 = vadd.f32 %v557, %v551
        %v559 = vadd.f32 %v558, %v552
        %v560 = vadd.f32 %v559, %v553
        %v561 = vadd.f32 %v560, %v554
        %v562 = vadd.f32 %v561, %v555
        %v563 = vadd.f32 %v562, %v556
        %v564 = vrot.slane %v563, 4
        %v565 = vadd.f32 %v563, %v564
        %v566 = vrot.slane %v565, 2
        %v567 = vadd.f32 %v565, %v566
        %v568 = vrot.slane %v567, 1
        %v569 = vadd.f32 %v567, %v568
        %v570 = vld [vmem:[#allocation6] sm:$0xff]
        %v571 = vld [vmem:[#allocation6 + $0x8] sm:$0xff]
        %v572 = vld [vmem:[#allocation6 + $0x10] sm:$0xff]
        %v573 = vld [vmem:[#allocation6 + $0x18] sm:$0xff]
        %v574 = vld [vmem:[#allocation6 + $0x20] sm:$0xff]
        %v575 = vld [vmem:[#allocation6 + $0x28] sm:$0xff]
        %v576 = vld [vmem:[#allocation6 + $0x30] sm:$0xff]
        %v577 = vld [vmem:[#allocation6 + $0x38] sm:$0xff]
        %v578 = vld [vmem:[#allocation6 + $0x40] sm:$0xff]
        %v579 = vld [vmem:[#allocation6 + $0x48] sm:$0xff]
        %v580 = vld [vmem:[#allocation6 + $0x50] sm:$0xff]
        %v581 = vld [vmem:[#allocation6 + $0x58] sm:$0xff]
        %v582 = vld [vmem:[#allocation6 + $0x60] sm:$0xff]
        %v583 = vld [vmem:[#allocation6 + $0x68] sm:$0xff]
        %v584 = vld [vmem:[#allocation6 + $0x70] sm:$0xff]
        %v585 = vld [vmem:[#allocation6 + $0x78] sm:$0xff]
        %586 = vmatprep.subr.mxu0 0.0
        %587 = vmatpush1.msra.mxu0 %v570
        %588 = vmatprep.subr.mxu0 0.0
        %589 = vmatpush1.msra.mxu0 %v571
        %590 = vmatprep.subr.mxu0 0.0
        %591 = vmatpush1.msra.mxu0 %v572
        %592 = vmatprep.subr.mxu0 0.0
        %593 = vmatpush1.msra.mxu0 %v573
        %594 = vmatprep.subr.mxu0 0.0
        %595 = vmatpush1.msra.mxu0 %v574
        %596 = vmatprep.subr.mxu0 0.0
        %597 = vmatpush1.msra.mxu0 %v575
        %598 = vmatprep.subr.mxu0 0.0
        %599 = vmatpush1.msra.mxu0 %v576
        %600 = vmatprep.subr.mxu0 0.0
        %601 = vmatpush1.msra.mxu0 %v577
        %602 = vmatprep.subr.mxu0 0.0
        %603 = vmatpush1.msra.mxu0 %v578
        %604 = vmatprep.subr.mxu0 0.0
        %605 = vmatpush1.msra.mxu0 %v579
        %606 = vmatprep.subr.mxu0 0.0
        %607 = vmatpush1.msra.mxu0 %v580
        %608 = vmatprep.subr.mxu0 0.0
        %609 = vmatpush1.msra.mxu0 %v581
        %610 = vmatprep.subr.mxu0 0.0
        %611 = vmatpush1.msra.mxu0 %v582
        %612 = vmatprep.subr.mxu0 0.0
        %613 = vmatpush1.msra.mxu0 %v583
        %614 = vmatprep.subr.mxu0 0.0
        %615 = vmatpush1.msra.mxu0 %v584
        %616 = vmatprep.subr.mxu0 0.0
        %617 = vmatpush1.msra.mxu0 %v585
        %618 = vmatprep.subr.mxu0 0.0
        %619 = vmatpush1.msra.mxu0 0.0
        %620 = vmatprep.subr.mxu0 0.0
        %621 = vmatpush1.msra.mxu0 0.0
        %622 = vmatprep.subr.mxu0 0.0
        %623 = vmatpush1.msra.mxu0 0.0
        %624 = vmatprep.subr.mxu0 0.0
        %625 = vmatpush1.msra.mxu0 0.0
        %626 = vmatprep.subr.mxu0 0.0
        %627 = vmatpush1.msra.mxu0 0.0
        %628 = vmatprep.subr.mxu0 0.0
        %629 = vmatpush1.msra.mxu0 0.0
        %630 = vmatprep.subr.mxu0 0.0
        %631 = vmatpush1.msra.mxu0 0.0
        %632 = vmatprep.subr.mxu0 0.0
        %633 = vmatpush1.msra.mxu0 0.0
        %634 = vmatprep.subr.mxu0 0.0
        %635 = vmatpush1.msra.mxu0 0.0
        %636 = vmatprep.subr.mxu0 0.0
        %637 = vmatpush1.msra.mxu0 0.0
        %638 = vmatprep.subr.mxu0 0.0
        %639 = vmatpush1.msra.mxu0 0.0
        %640 = vmatprep.subr.mxu0 0.0
        %641 = vmatpush1.msra.mxu0 0.0
        %642 = vmatprep.subr.mxu0 0.0
        %643 = vmatpush1.msra.mxu0 0.0
        %644 = vmatprep.subr.mxu0 0.0
        %645 = vmatpush1.msra.mxu0 0.0
        %646 = vmatprep.subr.mxu0 0.0
        %647 = vmatpush1.msra.mxu0 0.0
        %648 = vmatprep.subr.mxu0 0.0
        %649 = vmatpush1.msra.mxu0 0.0
        %650 = vmatprep.mubr.f32.mxu0 0.0
        %651 = vmatmul.mubr.f32.gmra.mrb[0].mxu0 %v548
        %v652 = vpop.f32.mrb[0].mxu0
        %v653 = vadd.f32 0.0, %v652
        %v654 = vpop.f32.mrb[0].mxu0
        %655 = vdwg.mxu0
        %v656 = vmul.f32 %v653, 0.0078125
        %657 = vmatprep.subr.mxu0 0.0
        %658 = vmatpush1.msra.mxu0 %v570
        %659 = vmatprep.subr.mxu0 0.0
        %660 = vmatpush1.msra.mxu0 %v571
        %661 = vmatprep.subr.mxu0 0.0
        %662 = vmatpush1.msra.mxu0 %v572
        %663 = vmatprep.subr.mxu0 0.0
        %664 = vmatpush1.msra.mxu0 %v573
        %665 = vmatprep.subr.mxu0 0.0
        %666 = vmatpush1.msra.mxu0 %v574
        %667 = vmatprep.subr.mxu0 0.0
        %668 = vmatpush1.msra.mxu0 %v575
        %669 = vmatprep.subr.mxu0 0.0
        %670 = vmatpush1.msra.mxu0 %v576
        %671 = vmatprep.subr.mxu0 0.0
        %672 = vmatpush1.msra.mxu0 %v577
        %673 = vmatprep.subr.mxu0 0.0
        %674 = vmatpush1.msra.mxu0 %v578
        %675 = vmatprep.subr.mxu0 0.0
        %676 = vmatpush1.msra.mxu0 %v579
        %677 = vmatprep.subr.mxu0 0.0
        %678 = vmatpush1.msra.mxu0 %v580
        %679 = vmatprep.subr.mxu0 0.0
        %680 = vmatpush1.msra.mxu0 %v581
        %681 = vmatprep.subr.mxu0 0.0
        %682 = vmatpush1.msra.mxu0 %v582
        %683 = vmatprep.subr.mxu0 0.0
        %684 = vmatpush1.msra.mxu0 %v583
        %685 = vmatprep.subr.mxu0 0.0
        %686 = vmatpush1.msra.mxu0 %v584
        %687 = vmatprep.subr.mxu0 0.0
        %688 = vmatpush1.msra.mxu0 %v585
        %689 = vmatprep.subr.mxu0 0.0
        %690 = vmatpush1.msra.mxu0 0.0
        %691 = vmatprep.subr.mxu0 0.0
        %692 = vmatpush1.msra.mxu0 0.0
        %693 = vmatprep.subr.mxu0 0.0
        %694 = vmatpush1.msra.mxu0 0.0
        %695 = vmatprep.subr.mxu0 0.0
        %696 = vmatpush1.msra.mxu0 0.0
        %697 = vmatprep.subr.mxu0 0.0
        %698 = vmatpush1.msra.mxu0 0.0
        %699 = vmatprep.subr.mxu0 0.0
        %700 = vmatpush1.msra.mxu0 0.0
        %701 = vmatprep.subr.mxu0 0.0
        %702 = vmatpush1.msra.mxu0 0.0
        %703 = vmatprep.subr.mxu0 0.0
        %704 = vmatpush1.msra.mxu0 0.0
        %705 = vmatprep.subr.mxu0 0.0
        %706 = vmatpush1.msra.mxu0 0.0
        %707 = vmatprep.subr.mxu0 0.0
        %708 = vmatpush1.msra.mxu0 0.0
        %709 = vmatprep.subr.mxu0 0.0
        %710 = vmatpush1.msra.mxu0 0.0
        %711 = vmatprep.subr.mxu0 0.0
        %712 = vmatpush1.msra.mxu0 0.0
        %713 = vmatprep.subr.mxu0 0.0
        %714 = vmatpush1.msra.mxu0 0.0
        %715 = vmatprep.subr.mxu0 0.0
        %716 = vmatpush1.msra.mxu0 0.0
        %717 = vmatprep.subr.mxu0 0.0
        %718 = vmatpush1.msra.mxu0 0.0
        %719 = vmatprep.subr.mxu0 0.0
        %720 = vmatpush1.msra.mxu0 0.0
        %721 = vmatprep.mubr.f32.mxu0 0.0
        %722 = vmatmul.mubr.f32.gmra.mrb[0].mxu0 %v569
        %v723 = vpop.f32.mrb[0].mxu0
        %v724 = vadd.f32 0.0, %v723
        %v725 = vpop.f32.mrb[0].mxu0
        %726 = vdwg.mxu0
        %v727 = vmul.f32 %v724, 0.0078125
        %v728 = vmul.f32 %v656, %v656
        %v729 = vsub.f32 %v727, %v728
        %v730 = vadd.f32 %v729, 1e-06
        %v731 = vrsqrt.pop %v730
        %v732 = vld [vmem:[%s2] sm:$0x1]
        %v733 = vmul.f32 %v731, %v732
        %v734 = vld [vmem:[%s3] sm:$0x1]
        %v735 = vmul.f32 %v656, %v733
        %v736 = vsub.f32 %v734, %v735
        %v737 = vlaneseq
        %v738 = vshrl.u32 %v737, 7
        %v739 = vsub.s32 0, %v738
        %v740 = vrot.slane %v733, %v739
        %v741 = vmul.f32 %v528, %v740
        %v742 = vmul.f32 %v529, %v740
        %v743 = vmul.f32 %v530, %v740
        %v744 = vmul.f32 %v531, %v740
        %v745 = vmul.f32 %v532, %v740
        %v746 = vmul.f32 %v533, %v740
        %v747 = vmul.f32 %v534, %v740
        %v748 = vmul.f32 %v535, %v740
        %v750 = vlaneseq
        %v751 = vshrl.u32 %v750, 7
        %v752 = vsub.s32 0, %v751
        %v753 = vrot.slane %v736, %v752
        %v755 = vadd.f32 %v741, %v753
        %v756 = vadd.f32 %v742, %v753
        %v757 = vadd.f32 %v743, %v753
        %v758 = vadd.f32 %v744, %v753
        %v759 = vadd.f32 %v745, %v753
        %v760 = vadd.f32 %v746, %v753
        %v761 = vadd.f32 %v747, %v753
        %v762 = vadd.f32 %v748, %v753
        %v763 = vxor.u32 %v755, 2147483648
        %v764 = vxor.u32 %v756, 2147483648
        %v765 = vxor.u32 %v757, 2147483648
        %v766 = vxor.u32 %v758, 2147483648
        %v767 = vxor.u32 %v759, 2147483648
        %v768 = vxor.u32 %v760, 2147483648
        %v769 = vxor.u32 %v761, 2147483648
        %v770 = vxor.u32 %v762, 2147483648
        %v771 = vmul.f32 %v763, 1.442695
        %v772 = vpow.pop %v771
        %v773 = vmul.f32 %v764, 1.442695
        %v774 = vpow.pop %v773
        %v775 = vmul.f32 %v765, 1.442695
        %v776 = vpow.pop %v775
        %v777 = vmul.f32 %v766, 1.442695
        %v778 = vpow.pop %v777
        %v779 = vmul.f32 %v767, 1.442695
        %v780 = vpow.pop %v779
        %v781 = vmul.f32 %v768, 1.442695
        %v782 = vpow.pop %v781
        %v783 = vmul.f32 %v769, 1.442695
        %v784 = vpow.pop %v783
        %v785 = vmul.f32 %v770, 1.442695
        %v786 = vpow.pop %v785
        %v787 = vadd.f32 %v772, 1.0
        %v788 = vadd.f32 %v774, 1.0
        %v789 = vadd.f32 %v776, 1.0
        %v790 = vadd.f32 %v778, 1.0
        %v791 = vadd.f32 %v780, 1.0
        %v792 = vadd.f32 %v782, 1.0
        %v793 = vadd.f32 %v784, 1.0
        %v794 = vadd.f32 %v786, 1.0
        %v795 = vrcp.pop %v787
        %v796 = vmul.f32 1.0, %v795
        %v797 = vrcp.pop %v788
        %v798 = vmul.f32 1.0, %v797
        %v799 = vrcp.pop %v789
        %v800 = vmul.f32 1.0, %v799
        %v801 = vrcp.pop %v790
        %v802 = vmul.f32 1.0, %v801
        %v803 = vrcp.pop %v791
        %v804 = vmul.f32 1.0, %v803
        %v805 = vrcp.pop %v792
        %v806 = vmul.f32 1.0, %v805
        %v807 = vrcp.pop %v793
        %v808 = vmul.f32 1.0, %v807
        %v809 = vrcp.pop %v794
        %v810 = vmul.f32 1.0, %v809
        %v811 = vmul.f32 %v755, %v796
        %v812 = vmul.f32 %v756, %v798
        %v813 = vmul.f32 %v757, %v800
        %v814 = vmul.f32 %v758, %v802
        %v815 = vmul.f32 %v759, %v804
        %v816 = vmul.f32 %v760, %v806
        %v817 = vmul.f32 %v761, %v808
        %v818 = vmul.f32 %v762, %v810
        %v819 = vpack.c.bf16 %v811, %v811
        %v820 = vpack.c.bf16 %v812, %v812
        %v821 = vpack.c.bf16 %v813, %v813
        %v822 = vpack.c.bf16 %v814, %v814
        %v823 = vpack.c.bf16 %v815, %v815
        %v824 = vpack.c.bf16 %v816, %v816
        %v825 = vpack.c.bf16 %v817, %v817
        %v826 = vpack.c.bf16 %v818, %v818
        %v828 = vshrl.u32 %v826, 16
        %v830 = vrot.slane %v828, 3
        %v832 = vshrl.u32 %v819, 16
        %v834 = vrot.slane %v832, 3
        %v836 = vshrl.u32 %v820, 16
        %v838 = vrot.slane %v836, 3
        %v840 = vshrl.u32 %v821, 16
        %v842 = vrot.slane %v840, 3
        %v844 = vshrl.u32 %v822, 16
        %v846 = vrot.slane %v844, 3
        %v848 = vshrl.u32 %v823, 16
        %v850 = vrot.slane %v848, 3
        %v852 = vshrl.u32 %v824, 16
        %v854 = vrot.slane %v852, 3
        %v856 = vshrl.u32 %v825, 16
        %v858 = vrot.slane %v856, 3
        %v867 = vrot.slane %v828, 7
        %v868 = vshll.u32 %v826, 16
        %v870 = vor.u32 %v867, %v868
        %v871 = vrot.slane %v832, 7
        %v872 = vshll.u32 %v819, 16
        %v874 = vor.u32 %v871, %v872
        %v875 = vrot.slane %v836, 7
        %v876 = vshll.u32 %v820, 16
        %v878 = vor.u32 %v875, %v876
        %v879 = vrot.slane %v840, 7
        %v880 = vshll.u32 %v821, 16
        %v882 = vor.u32 %v879, %v880
        %v883 = vrot.slane %v844, 7
        %v884 = vshll.u32 %v822, 16
        %v886 = vor.u32 %v883, %v884
        %v887 = vrot.slane %v848, 7
        %v888 = vshll.u32 %v823, 16
        %v890 = vor.u32 %v887, %v888
        %v891 = vrot.slane %v852, 7
        %v892 = vshll.u32 %v824, 16
        %v894 = vor.u32 %v891, %v892
        %v895 = vrot.slane %v856, 7
        %v896 = vshll.u32 %v825, 16
        %v898 = vor.u32 %v895, %v896
        %v907 = vrot.slane %v868, 4
        %v908 = vrot.slane %v872, 4
        %v909 = vrot.slane %v876, 4
        %v910 = vrot.slane %v880, 4
        %v911 = vrot.slane %v884, 4
        %v912 = vrot.slane %v888, 4
        %v913 = vrot.slane %v892, 4
        %v914 = vrot.slane %v896, 4
        %vm923 = vcmask 1040384
        %vm924 = vsmask.f32 256
        %vm925 = vmand %vm923, %vm924
        %v926 = vsel %vm925, %v830, %v870
        %v927 = vsel %vm925, %v834, %v874
        %v928 = vsel %vm925, %v838, %v878
        %v929 = vsel %vm925, %v842, %v882
        %v930 = vsel %vm925, %v846, %v886
        %v931 = vsel %vm925, %v850, %v890
        %v932 = vsel %vm925, %v854, %v894
        %v933 = vsel %vm925, %v858, %v898
        %vm934 = vcmask 1044480
        %vm935 = vsmask.f32 4352
        %vm936 = vmand %vm934, %vm935
        %v937 = vsel %vm936, %v926, %v907
        %v938 = vsel %vm936, %v927, %v908
        %v939 = vsel %vm936, %v928, %v909
        %v940 = vsel %vm936, %v929, %v910
        %v941 = vsel %vm936, %v930, %v911
        %v942 = vsel %vm936, %v931, %v912
        %v943 = vsel %vm936, %v932, %v913
        %v944 = vsel %vm936, %v933, %v914
        %v953 = vunpack.c.l.b16 %v937
        %v954 = vunpack.c.h.b16 %v937
        %v955 = vunpack.c.l.b16 %v938
        %v956 = vunpack.c.h.b16 %v938
        %v957 = vunpack.c.l.b16 %v939
        %v958 = vunpack.c.h.b16 %v939
        %v959 = vunpack.c.l.b16 %v940
        %v960 = vunpack.c.h.b16 %v940
        %v961 = vunpack.c.l.b16 %v941
        %v962 = vunpack.c.h.b16 %v941
        %v963 = vunpack.c.l.b16 %v942
        %v964 = vunpack.c.h.b16 %v942
        %v965 = vunpack.c.l.b16 %v943
        %v966 = vunpack.c.h.b16 %v943
        %v967 = vunpack.c.l.b16 %v944
        %v968 = vunpack.c.h.b16 %v944
        %v969 = vpack.c.b16 %v953, %v953
        %v970 = vpack.c.b16 %v954, %v954
        %v971 = vpack.c.b16 %v955, %v955
        %v972 = vpack.c.b16 %v956, %v956
        %v973 = vpack.c.b16 %v957, %v957
        %v974 = vpack.c.b16 %v958, %v958
        %v975 = vpack.c.b16 %v959, %v959
        %v976 = vpack.c.b16 %v960, %v960
        %v977 = vpack.c.b16 %v961, %v961
        %v978 = vpack.c.b16 %v962, %v962
        %v979 = vpack.c.b16 %v963, %v963
        %v980 = vpack.c.b16 %v964, %v964
        %v981 = vpack.c.b16 %v965, %v965
        %v982 = vpack.c.b16 %v966, %v966
        %v983 = vpack.c.b16 %v967, %v967
        %v984 = vpack.c.b16 %v968, %v968
        %1001 = vst [vmem:[#allocation2] sm:$0xf] %v969
        %1002 = vst [vmem:[#allocation2 + $0x4] sm:$0x1] %v970
        %1003 = vst [vmem:[#allocation2 + $0x8] sm:$0xf] %v971
        %1004 = vst [vmem:[#allocation2 + $0xc] sm:$0x1] %v972
        %1005 = vst [vmem:[#allocation2 + $0x10] sm:$0xf] %v973
        %1006 = vst [vmem:[#allocation2 + $0x14] sm:$0x1] %v974
        %1007 = vst [vmem:[#allocation2 + $0x18] sm:$0xf] %v975
        %1008 = vst [vmem:[#allocation2 + $0x1c] sm:$0x1] %v976
        %1009 = vst [vmem:[#allocation2 + $0x20] sm:$0xf] %v977
        %1010 = vst [vmem:[#allocation2 + $0x24] sm:$0x1] %v978
        %1011 = vst [vmem:[#allocation2 + $0x28] sm:$0xf] %v979
        %1012 = vst [vmem:[#allocation2 + $0x2c] sm:$0x1] %v980
        %1013 = vst [vmem:[#allocation2 + $0x30] sm:$0xf] %v981
        %1014 = vst [vmem:[#allocation2 + $0x34] sm:$0x1] %v982
        %1015 = vst [vmem:[#allocation2 + $0x38] sm:$0xf] %v983
        %1016 = vst [vmem:[#allocation2 + $0x3c] sm:$0x1] %v984
        %1017 = vst [vmem:[#allocation2 + $0x40] sm:$0xf] %v969
        %1018 = vst [vmem:[#allocation2 + $0x44] sm:$0x1] %v970
        %1019 = vst [vmem:[#allocation2 + $0x48] sm:$0xf] %v971
        %1020 = vst [vmem:[#allocation2 + $0x4c] sm:$0x1] %v972
        %v1021 = vld [vmem:[#allocation2] sm:$0xf]
        %v1022 = vld [vmem:[#allocation2 + $0x8] sm:$0xf]
        %v1023 = vld [vmem:[#allocation2 + $0x10] sm:$0xf]
        %v1024 = vld [vmem:[#allocation2 + $0x18] sm:$0xf]
        %v1025 = vld [vmem:[#allocation2 + $0x20] sm:$0xf]
        %v1026 = vld [vmem:[#allocation2 + $0x28] sm:$0xf]
        %v1027 = vld [vmem:[#allocation2 + $0x30] sm:$0xf]
        %v1028 = vld [vmem:[#allocation2 + $0x38] sm:$0xf]
        %v1029 = vld [vmem:[#allocation2 + $0x40] sm:$0xf]
        %v1030 = vld [vmem:[#allocation2 + $0x48] sm:$0xf]
        %v1041 = vunpack.c.l.b16 %v1021
        %v1042 = vunpack.c.l.b16 %v1022
        %v1043 = vunpack.c.l.b16 %v1023
        %v1044 = vunpack.c.l.b16 %v1024
        %v1045 = vunpack.c.l.b16 %v1025
        %v1046 = vunpack.c.l.b16 %v1026
        %v1047 = vunpack.c.l.b16 %v1027
        %v1048 = vunpack.c.l.b16 %v1028
        %v1049 = vunpack.c.l.b16 %v1029
        %v1050 = vunpack.c.l.b16 %v1030
        %v1051 = vld [vmem:[#allocation8] sm:$0xf]
        %v1052 = vld [vmem:[#allocation8 + $0x4] sm:$0xf]
        %v1053 = vld [vmem:[#allocation8 + $0x8] sm:$0xf]
        %v1054 = vld [vmem:[#allocation8 + $0xc] sm:$0xf]
        %v1055 = vld [vmem:[#allocation8 + $0x10] sm:$0xf]
        %v1056 = vld [vmem:[#allocation8 + $0x14] sm:$0xf]
        %v1057 = vld [vmem:[#allocation8 + $0x18] sm:$0xf]
        %v1058 = vld [vmem:[#allocation8 + $0x1c] sm:$0xf]
        %v1059 = vld [vmem:[#allocation8 + $0x20] sm:$0xf]
        %v1060 = vld [vmem:[#allocation8 + $0x24] sm:$0xf]
        %v1061 = vld [vmem:[#allocation8 + $0x28] sm:$0xf]
        %v1062 = vld [vmem:[#allocation8 + $0x2c] sm:$0xf]
        %v1063 = vld [vmem:[#allocation8 + $0x30] sm:$0xf]
        %v1064 = vld [vmem:[#allocation8 + $0x34] sm:$0xf]
        %v1065 = vld [vmem:[#allocation8 + $0x38] sm:$0xf]
        %v1066 = vld [vmem:[#allocation8 + $0x3c] sm:$0xf]
        %v1067 = vld [vmem:[#allocation8 + $0x40] sm:$0xf]
        %v1068 = vld [vmem:[#allocation8 + $0x44] sm:$0xf]
        %v1069 = vld [vmem:[#allocation8 + $0x48] sm:$0xf]
        %v1070 = vld [vmem:[#allocation8 + $0x4c] sm:$0xf]
        %v1071 = vld [vmem:[#allocation8 + $0x50] sm:$0xf]
        %v1072 = vld [vmem:[#allocation8 + $0x54] sm:$0xf]
        %v1073 = vld [vmem:[#allocation8 + $0x58] sm:$0xf]
        %v1074 = vld [vmem:[#allocation8 + $0x5c] sm:$0xf]
        %v1075 = vld [vmem:[#allocation8 + $0x60] sm:$0xf]
        %v1076 = vld [vmem:[#allocation8 + $0x64] sm:$0xf]
        %v1077 = vld [vmem:[#allocation8 + $0x68] sm:$0xf]
        %v1078 = vld [vmem:[#allocation8 + $0x6c] sm:$0xf]
        %v1079 = vld [vmem:[#allocation8 + $0x70] sm:$0xf]
        %v1080 = vld [vmem:[#allocation8 + $0x74] sm:$0xf]
        %v1081 = vld [vmem:[#allocation8 + $0x78] sm:$0xf]
        %v1082 = vld [vmem:[#allocation8 + $0x7c] sm:$0xf]
        %v1083 = vld [vmem:[#allocation8 + $0x80] sm:$0xf]
        %v1084 = vld [vmem:[#allocation8 + $0x84] sm:$0xf]
        %v1085 = vld [vmem:[#allocation8 + $0x88] sm:$0xf]
        %v1086 = vld [vmem:[#allocation8 + $0x8c] sm:$0xf]
        %v1087 = vld [vmem:[#allocation8 + $0x90] sm:$0xf]
        %v1088 = vld [vmem:[#allocation8 + $0x94] sm:$0xf]
        %v1089 = vld [vmem:[#allocation8 + $0x98] sm:$0xf]
        %v1090 = vld [vmem:[#allocation8 + $0x9c] sm:$0xf]
        %v1091 = vld [vmem:[#allocation8 + $0xa0] sm:$0xf]
        %v1092 = vld [vmem:[#allocation8 + $0xa4] sm:$0xf]
        %v1093 = vld [vmem:[#allocation8 + $0xa8] sm:$0xf]
        %v1094 = vld [vmem:[#allocation8 + $0xac] sm:$0xf]
        %v1095 = vld [vmem:[#allocation8 + $0xb0] sm:$0xf]
        %v1096 = vld [vmem:[#allocation8 + $0xb4] sm:$0xf]
        %v1097 = vld [vmem:[#allocation8 + $0xb8] sm:$0xf]
        %v1098 = vld [vmem:[#allocation8 + $0xbc] sm:$0xf]
        %v1099 = vld [vmem:[#allocation2 + $0x4] sm:$0x1]
        %v1100 = vld [vmem:[#allocation2 + $0xc] sm:$0x1]
        %v1101 = vld [vmem:[#allocation2 + $0x14] sm:$0x1]
        %v1102 = vld [vmem:[#allocation2 + $0x1c] sm:$0x1]
        %v1103 = vld [vmem:[#allocation2 + $0x24] sm:$0x1]
        %v1104 = vld [vmem:[#allocation2 + $0x2c] sm:$0x1]
        %v1105 = vld [vmem:[#allocation2 + $0x34] sm:$0x1]
        %v1106 = vld [vmem:[#allocation2 + $0x3c] sm:$0x1]
        %v1107 = vld [vmem:[#allocation2 + $0x44] sm:$0x1]
        %v1108 = vld [vmem:[#allocation2 + $0x4c] sm:$0x1]
        %v1117 = vunpack.c.l.b16 %v1099
        %v1118 = vunpack.c.l.b16 %v1100
        %v1119 = vunpack.c.l.b16 %v1101
        %v1120 = vunpack.c.l.b16 %v1102
        %v1121 = vunpack.c.l.b16 %v1103
        %v1122 = vunpack.c.l.b16 %v1104
        %v1123 = vunpack.c.l.b16 %v1105
        %v1124 = vunpack.c.l.b16 %v1106
        %v1126 = vunpack.c.l.b16 %v1107
        %v1128 = vunpack.c.l.b16 %v1108
        %v1129 = vpack.c.b16 %v1042, %v1041
        %v1130 = vpack.c.b16 %v1043, %v1043
        %v1131 = vpack.c.b16 %v1118, %v1117
        %v1132 = vpack.c.b16 %v1119, %v1119
        %v1133 = vpack.c.b16 %v1043, %v1042
        %v1134 = vpack.c.b16 %v1044, %v1044
        %v1135 = vpack.c.b16 %v1119, %v1118
        %v1136 = vpack.c.b16 %v1120, %v1120
        %v1137 = vpack.c.b16 %v1044, %v1043
        %v1138 = vpack.c.b16 %v1045, %v1045
        %v1139 = vpack.c.b16 %v1120, %v1119
        %v1140 = vpack.c.b16 %v1121, %v1121
        %v1141 = vpack.c.b16 %v1045, %v1044
        %v1142 = vpack.c.b16 %v1046, %v1046
        %v1143 = vpack.c.b16 %v1121, %v1120
        %v1144 = vpack.c.b16 %v1122, %v1122
        %v1145 = vpack.c.b16 %v1046, %v1045
        %v1146 = vpack.c.b16 %v1047, %v1047
        %v1147 = vpack.c.b16 %v1122, %v1121
        %v1148 = vpack.c.b16 %v1123, %v1123
        %v1149 = vpack.c.b16 %v1047, %v1046
        %v1150 = vpack.c.b16 %v1048, %v1048
        %v1151 = vpack.c.b16 %v1123, %v1122
        %v1152 = vpack.c.b16 %v1124, %v1124
        %v1153 = vpack.c.b16 %v1048, %v1047
        %v1154 = vpack.c.b16 %v1049, %v1049
        %v1155 = vpack.c.b16 %v1124, %v1123
        %v1156 = vpack.c.b16 %v1126, %v1126
        %v1157 = vpack.c.b16 %v1049, %v1048
        %v1158 = vpack.c.b16 %v1050, %v1050
        %v1159 = vpack.c.b16 %v1126, %v1124
        %v1160 = vpack.c.b16 %v1128, %v1128
        %vm1161 = vsmask.f32 3328
        %vm1162 = vsmask.f32 7440
        %vm1163 = vmor %vm1161, %vm1162
        %v1165 = vshrl.u32 %v1129, 16
        %v1167 = vrot.slane %v1165, 4
        %v1168 = vshll.u32 %v1129, 16
        %v1170 = vrot.slane %v1168, 5
        %v1171 = vor.u32 %v1167, %v1170
        %v1172 = vrot.slane %v1171, 4
        %v1174 = vshll.u32 %v1131, 16
        %v1176 = vrot.slane %v1174, 5
        %v1177 = vsel %vm1163, %v1172, %v1176
        %v1179 = vshrl.u32 %v1130, 16
        %v1181 = vrot.slane %v1179, 4
        %v1182 = vshll.u32 %v1130, 16
        %v1184 = vrot.slane %v1182, 5
        %v1185 = vor.u32 %v1181, %v1184
        %v1186 = vrot.slane %v1185, 4
        %v1188 = vshll.u32 %v1132, 16
        %v1190 = vrot.slane %v1188, 5
        %v1191 = vsel %vm1163, %v1186, %v1190
        %v1193 = vshrl.u32 %v1133, 16
        %v1195 = vrot.slane %v1193, 4
        %v1196 = vshll.u32 %v1133, 16
        %v1198 = vrot.slane %v1196, 5
        %v1199 = vor.u32 %v1195, %v1198
        %v1200 = vrot.slane %v1199, 4
        %v1202 = vshll.u32 %v1135, 16
        %v1204 = vrot.slane %v1202, 5
        %v1205 = vsel %vm1163, %v1200, %v1204
        %v1207 = vshrl.u32 %v1134, 16
        %v1209 = vrot.slane %v1207, 4
        %v1210 = vshll.u32 %v1134, 16
        %v1212 = vrot.slane %v1210, 5
        %v1213 = vor.u32 %v1209, %v1212
        %v1214 = vrot.slane %v1213, 4
        %v1216 = vshll.u32 %v1136, 16
        %v1218 = vrot.slane %v1216, 5
        %v1219 = vsel %vm1163, %v1214, %v1218
        %v1221 = vshrl.u32 %v1137, 16
        %v1223 = vrot.slane %v1221, 4
        %v1224 = vshll.u32 %v1137, 16
        %v1226 = vrot.slane %v1224, 5
        %v1227 = vor.u32 %v1223, %v1226
        %v1228 = vrot.slane %v1227, 4
        %v1230 = vshll.u32 %v1139, 16
        %v1232 = vrot.slane %v1230, 5
        %v1233 = vsel %vm1163, %v1228, %v1232
        %v1235 = vshrl.u32 %v1138, 16
        %v1237 = vrot.slane %v1235, 4
        %v1238 = vshll.u32 %v1138, 16
        %v1240 = vrot.slane %v1238, 5
        %v1241 = vor.u32 %v1237, %v1240
        %v1242 = vrot.slane %v1241, 4
        %v1244 = vshll.u32 %v1140, 16
        %v1246 = vrot.slane %v1244, 5
        %v1247 = vsel %vm1163, %v1242, %v1246
        %v1249 = vshrl.u32 %v1141, 16
        %v1251 = vrot.slane %v1249, 4
        %v1252 = vshll.u32 %v1141, 16
        %v1254 = vrot.slane %v1252, 5
        %v1255 = vor.u32 %v1251, %v1254
        %v1256 = vrot.slane %v1255, 4
        %v1258 = vshll.u32 %v1143, 16
        %v1260 = vrot.slane %v1258, 5
        %v1261 = vsel %vm1163, %v1256, %v1260
        %v1263 = vshrl.u32 %v1142, 16
        %v1265 = vrot.slane %v1263, 4
        %v1266 = vshll.u32 %v1142, 16
        %v1268 = vrot.slane %v1266, 5
        %v1269 = vor.u32 %v1265, %v1268
        %v1270 = vrot.slane %v1269, 4
        %v1272 = vshll.u32 %v1144, 16
        %v1274 = vrot.slane %v1272, 5
        %v1275 = vsel %vm1163, %v1270, %v1274
        %v1277 = vshrl.u32 %v1145, 16
        %v1279 = vrot.slane %v1277, 4
        %v1280 = vshll.u32 %v1145, 16
        %v1282 = vrot.slane %v1280, 5
        %v1283 = vor.u32 %v1279, %v1282
        %v1284 = vrot.slane %v1283, 4
        %v1286 = vshll.u32 %v1147, 16
        %v1288 = vrot.slane %v1286, 5
        %v1289 = vsel %vm1163, %v1284, %v1288
        %v1291 = vshrl.u32 %v1146, 16
        %v1293 = vrot.slane %v1291, 4
        %v1294 = vshll.u32 %v1146, 16
        %v1296 = vrot.slane %v1294, 5
        %v1297 = vor.u32 %v1293, %v1296
        %v1298 = vrot.slane %v1297, 4
        %v1300 = vshll.u32 %v1148, 16
        %v1302 = vrot.slane %v1300, 5
        %v1303 = vsel %vm1163, %v1298, %v1302
        %v1305 = vshrl.u32 %v1149, 16
        %v1307 = vrot.slane %v1305, 4
        %v1308 = vshll.u32 %v1149, 16
        %v1310 = vrot.slane %v1308, 5
        %v1311 = vor.u32 %v1307, %v1310
        %v1312 = vrot.slane %v1311, 4
        %v1314 = vshll.u32 %v1151, 16
        %v1316 = vrot.slane %v1314, 5
        %v1317 = vsel %vm1163, %v1312, %v1316
        %v1319 = vshrl.u32 %v1150, 16
        %v1321 = vrot.slane %v1319, 4
        %v1322 = vshll.u32 %v1150, 16
        %v1324 = vrot.slane %v1322, 5
        %v1325 = vor.u32 %v1321, %v1324
        %v1326 = vrot.slane %v1325, 4
        %v1328 = vshll.u32 %v1152, 16
        %v1330 = vrot.slane %v1328, 5
        %v1331 = vsel %vm1163, %v1326, %v1330
        %v1333 = vshrl.u32 %v1153, 16
        %v1335 = vrot.slane %v1333, 4
        %v1336 = vshll.u32 %v1153, 16
        %v1338 = vrot.slane %v1336, 5
        %v1339 = vor.u32 %v1335, %v1338
        %v1340 = vrot.slane %v1339, 4
        %v1342 = vshll.u32 %v1155, 16
        %v1344 = vrot.slane %v1342, 5
        %v1345 = vsel %vm1163, %v1340, %v1344
        %v1347 = vshrl.u32 %v1154, 16
        %v1349 = vrot.slane %v1347, 4
        %v1350 = vshll.u32 %v1154, 16
        %v1352 = vrot.slane %v1350, 5
        %v1353 = vor.u32 %v1349, %v1352
        %v1354 = vrot.slane %v1353, 4
        %v1356 = vshll.u32 %v1156, 16
        %v1358 = vrot.slane %v1356, 5
        %v1359 = vsel %vm1163, %v1354, %v1358
        %v1361 = vshrl.u32 %v1157, 16
        %v1363 = vrot.slane %v1361, 4
        %v1364 = vshll.u32 %v1157, 16
        %v1366 = vrot.slane %v1364, 5
        %v1367 = vor.u32 %v1363, %v1366
        %v1368 = vrot.slane %v1367, 4
        %v1370 = vshll.u32 %v1159, 16
        %v1372 = vrot.slane %v1370, 5
        %v1373 = vsel %vm1163, %v1368, %v1372
        %v1375 = vshrl.u32 %v1158, 16
        %v1377 = vrot.slane %v1375, 4
        %v1378 = vshll.u32 %v1158, 16
        %v1380 = vrot.slane %v1378, 5
        %v1381 = vor.u32 %v1377, %v1380
        %v1382 = vrot.slane %v1381, 4
        %v1384 = vshll.u32 %v1160, 16
        %v1386 = vrot.slane %v1384, 5
        %v1387 = vsel %vm1163, %v1382, %v1386
        %s1388 = scalar_lea.vmem [#allocation8], 192
        %v1389 = vld [vmem:[%s1388] sm:$0xf]
        %v1390 = vld [vmem:[%s1388 + $0x4] sm:$0xf]
        %v1391 = vld [vmem:[%s1388 + $0x8] sm:$0xf]
        %v1392 = vld [vmem:[%s1388 + $0xc] sm:$0xf]
        %v1393 = vld [vmem:[%s1388 + $0x10] sm:$0xf]
        %v1394 = vld [vmem:[%s1388 + $0x14] sm:$0xf]
        %v1395 = vld [vmem:[%s1388 + $0x18] sm:$0xf]
        %v1396 = vld [vmem:[%s1388 + $0x1c] sm:$0xf]
        %v1397 = vld [vmem:[%s1388 + $0x20] sm:$0xf]
        %v1398 = vld [vmem:[%s1388 + $0x24] sm:$0xf]
        %v1399 = vld [vmem:[%s1388 + $0x28] sm:$0xf]
        %v1400 = vld [vmem:[%s1388 + $0x2c] sm:$0xf]
        %v1401 = vld [vmem:[%s1388 + $0x30] sm:$0xf]
        %v1402 = vld [vmem:[%s1388 + $0x34] sm:$0xf]
        %v1403 = vld [vmem:[%s1388 + $0x38] sm:$0xf]
        %v1404 = vld [vmem:[%s1388 + $0x3c] sm:$0xf]
        %v1405 = vld [vmem:[%s1388 + $0x40] sm:$0xf]
        %v1406 = vld [vmem:[%s1388 + $0x44] sm:$0xf]
        %v1407 = vld [vmem:[%s1388 + $0x48] sm:$0xf]
        %v1408 = vld [vmem:[%s1388 + $0x4c] sm:$0xf]
        %v1409 = vld [vmem:[%s1388 + $0x50] sm:$0xf]
        %v1410 = vld [vmem:[%s1388 + $0x54] sm:$0xf]
        %v1411 = vld [vmem:[%s1388 + $0x58] sm:$0xf]
        %v1412 = vld [vmem:[%s1388 + $0x5c] sm:$0xf]
        %v1413 = vld [vmem:[%s1388 + $0x60] sm:$0xf]
        %v1414 = vld [vmem:[%s1388 + $0x64] sm:$0xf]
        %v1415 = vld [vmem:[%s1388 + $0x68] sm:$0xf]
        %v1416 = vld [vmem:[%s1388 + $0x6c] sm:$0xf]
        %v1417 = vld [vmem:[%s1388 + $0x70] sm:$0xf]
        %v1418 = vld [vmem:[%s1388 + $0x74] sm:$0xf]
        %v1419 = vld [vmem:[%s1388 + $0x78] sm:$0xf]
        %v1420 = vld [vmem:[%s1388 + $0x7c] sm:$0xf]
        %v1421 = vld [vmem:[%s1388 + $0x80] sm:$0xf]
        %v1422 = vld [vmem:[%s1388 + $0x84] sm:$0xf]
        %v1423 = vld [vmem:[%s1388 + $0x88] sm:$0xf]
        %v1424 = vld [vmem:[%s1388 + $0x8c] sm:$0xf]
        %v1425 = vld [vmem:[%s1388 + $0x90] sm:$0xf]
        %v1426 = vld [vmem:[%s1388 + $0x94] sm:$0xf]
        %v1427 = vld [vmem:[%s1388 + $0x98] sm:$0xf]
        %v1428 = vld [vmem:[%s1388 + $0x9c] sm:$0xf]
        %v1429 = vld [vmem:[%s1388 + $0xa0] sm:$0xf]
        %v1430 = vld [vmem:[%s1388 + $0xa4] sm:$0xf]
        %v1431 = vld [vmem:[%s1388 + $0xa8] sm:$0xf]
        %v1432 = vld [vmem:[%s1388 + $0xac] sm:$0xf]
        %v1433 = vld [vmem:[%s1388 + $0xb0] sm:$0xf]
        %v1434 = vld [vmem:[%s1388 + $0xb4] sm:$0xf]
        %v1435 = vld [vmem:[%s1388 + $0xb8] sm:$0xf]
        %v1436 = vld [vmem:[%s1388 + $0xbc] sm:$0xf]
        %v1437 = vunpack.c.l.b16 %v1177
        %v1438 = vunpack.c.h.b16 %v1177
        %v1439 = vunpack.c.l.b16 %v1191
        %v1440 = vunpack.c.l.b16 %v1205
        %v1441 = vunpack.c.h.b16 %v1205
        %v1442 = vunpack.c.l.b16 %v1219
        %v1443 = vunpack.c.l.b16 %v1233
        %v1444 = vunpack.c.h.b16 %v1233
        %v1445 = vunpack.c.l.b16 %v1247
        %v1446 = vunpack.c.l.b16 %v1261
        %v1447 = vunpack.c.h.b16 %v1261
        %v1448 = vunpack.c.l.b16 %v1275
        %v1449 = vunpack.c.l.b16 %v1289
        %v1450 = vunpack.c.h.b16 %v1289
        %v1451 = vunpack.c.l.b16 %v1303
        %v1452 = vunpack.c.l.b16 %v1317
        %v1453 = vunpack.c.h.b16 %v1317
        %v1454 = vunpack.c.l.b16 %v1331
        %v1455 = vunpack.c.l.b16 %v1345
        %v1456 = vunpack.c.h.b16 %v1345
        %v1457 = vunpack.c.l.b16 %v1359
        %v1458 = vunpack.c.l.b16 %v1373
        %v1459 = vunpack.c.h.b16 %v1373
        %v1460 = vunpack.c.l.b16 %v1387
        %v1461 = vpack.c.b16 %v1440, %v1437
        %v1462 = vpack.c.b16 %v1441, %v1438
        %v1463 = vpack.c.b16 %v1442, %v1439
        %v1464 = vpack.c.b16 %v1446, %v1443
        %v1465 = vpack.c.b16 %v1447, %v1444
        %v1466 = vpack.c.b16 %v1448, %v1445
        %v1467 = vpack.c.b16 %v1452, %v1449
        %v1468 = vpack.c.b16 %v1453, %v1450
        %v1469 = vpack.c.b16 %v1454, %v1451
        %v1470 = vpack.c.b16 %v1458, %v1455
        %v1471 = vpack.c.b16 %v1459, %v1456
        %v1472 = vpack.c.b16 %v1460, %v1457
        %v1533 = vunpack.c.l.b16 %v1389
        %v1534 = vunpack.c.l.b16 %v1390
        %v1535 = vunpack.c.l.b16 %v1391
        %v1536 = vunpack.c.l.b16 %v1392
        %v1537 = vunpack.c.l.b16 %v1393
        %v1538 = vunpack.c.l.b16 %v1394
        %v1539 = vunpack.c.l.b16 %v1395
        %v1540 = vunpack.c.l.b16 %v1396
        %v1541 = vunpack.c.l.b16 %v1397
        %v1542 = vunpack.c.l.b16 %v1398
        %v1543 = vunpack.c.l.b16 %v1399
        %v1544 = vunpack.c.l.b16 %v1400
        %v1545 = vunpack.c.l.b16 %v1401
        %v1546 = vunpack.c.l.b16 %v1402
        %v1547 = vunpack.c.l.b16 %v1403
        %v1548 = vunpack.c.l.b16 %v1404
        %v1549 = vunpack.c.l.b16 %v1405
        %v1550 = vunpack.c.l.b16 %v1406
        %v1551 = vunpack.c.l.b16 %v1407
        %v1552 = vunpack.c.l.b16 %v1408
        %v1553 = vunpack.c.l.b16 %v1409
        %v1554 = vunpack.c.l.b16 %v1410
        %v1555 = vunpack.c.l.b16 %v1411
        %v1556 = vunpack.c.l.b16 %v1412
        %v1557 = vunpack.c.l.b16 %v1413
        %v1558 = vunpack.c.l.b16 %v1414
        %v1559 = vunpack.c.l.b16 %v1415
        %v1560 = vunpack.c.l.b16 %v1416
        %v1561 = vunpack.c.l.b16 %v1417
        %v1562 = vunpack.c.l.b16 %v1418
        %v1563 = vunpack.c.l.b16 %v1419
        %v1564 = vunpack.c.l.b16 %v1420
        %v1565 = vunpack.c.l.b16 %v1421
        %v1566 = vunpack.c.l.b16 %v1422
        %v1567 = vunpack.c.l.b16 %v1423
        %v1568 = vunpack.c.l.b16 %v1424
        %v1569 = vunpack.c.l.b16 %v1425
        %v1570 = vunpack.c.l.b16 %v1426
        %v1571 = vunpack.c.l.b16 %v1427
        %v1572 = vunpack.c.l.b16 %v1428
        %v1573 = vunpack.c.l.b16 %v1429
        %v1574 = vunpack.c.l.b16 %v1430
        %v1575 = vunpack.c.l.b16 %v1431
        %v1576 = vunpack.c.l.b16 %v1432
        %v1577 = vunpack.c.l.b16 %v1433
        %v1578 = vunpack.c.l.b16 %v1434
        %v1579 = vunpack.c.l.b16 %v1435
        %v1580 = vunpack.c.l.b16 %v1436
        %v1581 = vpack.c.b16 %v1534, %v1533
        %v1582 = vpack.c.b16 %v1536, %v1535
        %v1583 = vpack.c.b16 %v1538, %v1537
        %v1584 = vpack.c.b16 %v1540, %v1539
        %v1585 = vpack.c.b16 %v1542, %v1541
        %v1586 = vpack.c.b16 %v1544, %v1543
        %v1587 = vpack.c.b16 %v1546, %v1545
        %v1588 = vpack.c.b16 %v1548, %v1547
        %v1589 = vpack.c.b16 %v1550, %v1549
        %v1590 = vpack.c.b16 %v1552, %v1551
        %v1591 = vpack.c.b16 %v1554, %v1553
        %v1592 = vpack.c.b16 %v1556, %v1555
        %v1593 = vpack.c.b16 %v1558, %v1557
        %v1594 = vpack.c.b16 %v1560, %v1559
        %v1595 = vpack.c.b16 %v1562, %v1561
        %v1596 = vpack.c.b16 %v1564, %v1563
        %v1597 = vpack.c.b16 %v1566, %v1565
        %v1598 = vpack.c.b16 %v1568, %v1567
        %v1599 = vpack.c.b16 %v1570, %v1569
        %v1600 = vpack.c.b16 %v1572, %v1571
        %v1601 = vpack.c.b16 %v1574, %v1573
        %v1602 = vpack.c.b16 %v1576, %v1575
        %v1603 = vpack.c.b16 %v1578, %v1577
        %v1604 = vpack.c.b16 %v1580, %v1579
        %1629 = vmatprep.subr.bf16.mxu0 0
        %1630 = vmatpush1.bf16.msra.mxu0 %v1581
        %1631 = vmatprep.subr.bf16.mxu0 0
        %1632 = vmatpush1.bf16.msra.mxu0 %v1582
        %1633 = vmatprep.subr.bf16.mxu0 0
        %1634 = vmatpush1.bf16.msra.mxu0 %v1583
        %1635 = vmatprep.subr.bf16.mxu0 0
        %1636 = vmatpush1.bf16.msra.mxu0 %v1584
        %1637 = vmatprep.subr.bf16.mxu0 0
        %1638 = vmatpush1.bf16.msra.mxu0 %v1585
        %1639 = vmatprep.subr.bf16.mxu0 0
        %1640 = vmatpush1.bf16.msra.mxu0 %v1586
        %1641 = vmatprep.subr.bf16.mxu0 0
        %1642 = vmatpush1.bf16.msra.mxu0 %v1587
        %1643 = vmatprep.subr.bf16.mxu0 0
        %1644 = vmatpush1.bf16.msra.mxu0 %v1588
        %1645 = vmatprep.subr.bf16.mxu0 0
        %1646 = vmatpush1.bf16.msra.mxu0 %v1589
        %1647 = vmatprep.subr.bf16.mxu0 0
        %1648 = vmatpush1.bf16.msra.mxu0 %v1590
        %1649 = vmatprep.subr.bf16.mxu0 0
        %1650 = vmatpush1.bf16.msra.mxu0 %v1591
        %1651 = vmatprep.subr.bf16.mxu0 0
        %1652 = vmatpush1.bf16.msra.mxu0 %v1592
        %1653 = vmatprep.subr.bf16.mxu0 0
        %1654 = vmatpush1.bf16.msra.mxu0 %v1593
        %1655 = vmatprep.subr.bf16.mxu0 0
        %1656 = vmatpush1.bf16.msra.mxu0 %v1594
        %1657 = vmatprep.subr.bf16.mxu0 0
        %1658 = vmatpush1.bf16.msra.mxu0 %v1595
        %1659 = vmatprep.subr.bf16.mxu0 0
        %1660 = vmatpush1.bf16.msra.mxu0 %v1596
        %1661 = vmatprep.mubr.bf16.mxu0 %v1462
        %1662 = vmatmul.mubr.bf16.gmra.mrb[0].mxu0 %v1461
        %v1663 = vpop.f32.mrb[0].mxu0
        %v1664 = vadd.f32 0.0, %v1663
        %v1665 = vpop.f32.mrb[0].mxu0
        %v1666 = vpop.f32.mrb[0].mxu0
        %v1667 = vadd.f32 0.0, %v1666
        %v1668 = vpop.f32.mrb[0].mxu0
        %1669 = vmatprep.mubr.bf16.mxu0 %v1465
        %1670 = vmatmul.mubr.bf16.gmra.mrb[0].mxu0 %v1464
        %v1671 = vpop.f32.mrb[0].mxu0
        %v1672 = vadd.f32 0.0, %v1671
        %v1673 = vpop.f32.mrb[0].mxu0
        %v1674 = vpop.f32.mrb[0].mxu0
        %v1675 = vadd.f32 0.0, %v1674
        %v1676 = vpop.f32.mrb[0].mxu0
        %1677 = vmatprep.mubr.bf16.mxu0 %v1468
        %1678 = vmatmul.mubr.bf16.gmra.mrb[0].mxu0 %v1467
        %v1679 = vpop.f32.mrb[0].mxu0
        %v1680 = vadd.f32 0.0, %v1679
        %v1681 = vpop.f32.mrb[0].mxu0
        %v1682 = vpop.f32.mrb[0].mxu0
        %v1683 = vadd.f32 0.0, %v1682
        %v1684 = vpop.f32.mrb[0].mxu0
        %1685 = vmatprep.mubr.bf16.mxu0 %v1471
        %1686 = vmatmul.mubr.bf16.gmra.mrb[0].mxu0 %v1470
        %v1687 = vpop.f32.mrb[0].mxu0
        %v1688 = vadd.f32 0.0, %v1687
        %v1689 = vpop.f32.mrb[0].mxu0
        %v1690 = vpop.f32.mrb[0].mxu0
        %v1691 = vadd.f32 0.0, %v1690
        %v1692 = vpop.f32.mrb[0].mxu0
        %1693 = vdwg.mxu0
        %1694 = vmatprep.subr.bf16.mxu0 0
        %1695 = vmatpush1.bf16.msra.mxu0 %v1597
        %1696 = vmatprep.subr.bf16.mxu0 0
        %1697 = vmatpush1.bf16.msra.mxu0 %v1598
        %1698 = vmatprep.subr.bf16.mxu0 0
        %1699 = vmatpush1.bf16.msra.mxu0 %v1599
        %1700 = vmatprep.subr.bf16.mxu0 0
        %1701 = vmatpush1.bf16.msra.mxu0 %v1600
        %1702 = vmatprep.subr.bf16.mxu0 0
        %1703 = vmatpush1.bf16.msra.mxu0 %v1601
        %1704 = vmatprep.subr.bf16.mxu0 0
        %1705 = vmatpush1.bf16.msra.mxu0 %v1602
        %1706 = vmatprep.subr.bf16.mxu0 0
        %1707 = vmatpush1.bf16.msra.mxu0 %v1603
        %1708 = vmatprep.subr.bf16.mxu0 0
        %1709 = vmatpush1.bf16.msra.mxu0 %v1604
        %1710 = vmatprep.subr.bf16.mxu0 0
        %1711 = vmatpush1.bf16.msra.mxu0 0
        %1712 = vmatprep.subr.bf16.mxu0 0
        %1713 = vmatpush1.bf16.msra.mxu0 0
        %1714 = vmatprep.subr.bf16.mxu0 0
        %1715 = vmatpush1.bf16.msra.mxu0 0
        %1716 = vmatprep.subr.bf16.mxu0 0
        %1717 = vmatpush1.bf16.msra.mxu0 0
        %1718 = vmatprep.subr.bf16.mxu0 0
        %1719 = vmatpush1.bf16.msra.mxu0 0
        %1720 = vmatprep.subr.bf16.mxu0 0
        %1721 = vmatpush1.bf16.msra.mxu0 0
        %1722 = vmatprep.subr.bf16.mxu0 0
        %1723 = vmatpush1.bf16.msra.mxu0 0
        %1724 = vmatprep.subr.bf16.mxu0 0
        %1725 = vmatpush1.bf16.msra.mxu0 0
        %1726 = vmatprep.mubr.bf16.mxu0 0
        %1727 = vmatmul.mubr.bf16.gmra.mrb[0].mxu0 %v1463
        %v1728 = vpop.f32.mrb[0].mxu0
        %v1729 = vadd.f32 %v1664, %v1728
        %v1730 = vpop.f32.mrb[0].mxu0
        %v1731 = vpop.f32.mrb[0].mxu0
        %v1732 = vadd.f32 %v1667, %v1731
        %v1733 = vpop.f32.mrb[0].mxu0
        %1734 = vmatprep.mubr.bf16.mxu0 0
        %1735 = vmatmul.mubr.bf16.gmra.mrb[0].mxu0 %v1466
        %v1736 = vpop.f32.mrb[0].mxu0
        %v1737 = vadd.f32 %v1672, %v1736
        %v1738 = vpop.f32.mrb[0].mxu0
        %v1739 = vpop.f32.mrb[0].mxu0
        %v1740 = vadd.f32 %v1675, %v1739
        %v1741 = vpop.f32.mrb[0].mxu0
        %1742 = vmatprep.mubr.bf16.mxu0 0
        %1743 = vmatmul.mubr.bf16.gmra.mrb[0].mxu0 %v1469
        %v1744 = vpop.f32.mrb[0].mxu0
        %v1745 = vadd.f32 %v1680, %v1744
        %v1746 = vpop.f32.mrb[0].mxu0
        %v1747 = vpop.f32.mrb[0].mxu0
        %v1748 = vadd.f32 %v1683, %v1747
        %v1749 = vpop.f32.mrb[0].mxu0
        %1750 = vmatprep.mubr.bf16.mxu0 0
        %1751 = vmatmul.mubr.bf16.gmra.mrb[0].mxu0 %v1472
        %v1752 = vpop.f32.mrb[0].mxu0
        %v1753 = vadd.f32 %v1688, %v1752
        %v1754 = vpop.f32.mrb[0].mxu0
        %v1755 = vpop.f32.mrb[0].mxu0
        %v1756 = vadd.f32 %v1691, %v1755
        %v1757 = vpop.f32.mrb[0].mxu0
        %1758 = vdwg.mxu0
        %v1759 = vpack.c.b16 %v1050, %v1049
        %v1817 = vunpack.c.l.b16 %v1051
        %v1818 = vunpack.c.l.b16 %v1052
        %v1819 = vunpack.c.l.b16 %v1053
        %v1820 = vunpack.c.l.b16 %v1054
        %v1821 = vunpack.c.l.b16 %v1055
        %v1822 = vunpack.c.l.b16 %v1056
        %v1823 = vunpack.c.l.b16 %v1057
        %v1824 = vunpack.c.l.b16 %v1058
        %v1825 = vunpack.c.l.b16 %v1059
        %v1826 = vunpack.c.l.b16 %v1060
        %v1827 = vunpack.c.l.b16 %v1061
        %v1828 = vunpack.c.l.b16 %v1062
        %v1829 = vunpack.c.l.b16 %v1063
        %v1830 = vunpack.c.l.b16 %v1064
        %v1831 = vunpack.c.l.b16 %v1065
        %v1832 = vunpack.c.l.b16 %v1066
        %v1833 = vunpack.c.l.b16 %v1067
        %v1834 = vunpack.c.l.b16 %v1068
        %v1835 = vunpack.c.l.b16 %v1069
        %v1836 = vunpack.c.l.b16 %v1070
        %v1837 = vunpack.c.l.b16 %v1071
        %v1838 = vunpack.c.l.b16 %v1072
        %v1839 = vunpack.c.l.b16 %v1073
        %v1840 = vunpack.c.l.b16 %v1074
        %v1841 = vunpack.c.l.b16 %v1075
        %v1842 = vunpack.c.l.b16 %v1076
        %v1843 = vunpack.c.l.b16 %v1077
        %v1844 = vunpack.c.l.b16 %v1078
        %v1845 = vunpack.c.l.b16 %v1079
        %v1846 = vunpack.c.l.b16 %v1080
        %v1847 = vunpack.c.l.b16 %v1081
        %v1848 = vunpack.c.l.b16 %v1082
        %v1849 = vunpack.c.l.b16 %v1083
        %v1850 = vunpack.c.l.b16 %v1084
        %v1851 = vunpack.c.l.b16 %v1085
        %v1852 = vunpack.c.l.b16 %v1086
        %v1853 = vunpack.c.l.b16 %v1087
        %v1854 = vunpack.c.l.b16 %v1088
        %v1855 = vunpack.c.l.b16 %v1089
        %v1856 = vunpack.c.l.b16 %v1090
        %v1857 = vunpack.c.l.b16 %v1091
        %v1858 = vunpack.c.l.b16 %v1092
        %v1859 = vunpack.c.l.b16 %v1093
        %v1860 = vunpack.c.l.b16 %v1094
        %v1861 = vunpack.c.l.b16 %v1095
        %v1862 = vunpack.c.l.b16 %v1096
        %v1863 = vunpack.c.l.b16 %v1097
        %v1864 = vunpack.c.l.b16 %v1098
        %v1865 = vpack.c.b16 %v1818, %v1817
        %v1866 = vpack.c.b16 %v1820, %v1819
        %v1867 = vpack.c.b16 %v1822, %v1821
        %v1868 = vpack.c.b16 %v1824, %v1823
        %v1869 = vpack.c.b16 %v1826, %v1825
        %v1870 = vpack.c.b16 %v1828, %v1827
        %v1871 = vpack.c.b16 %v1830, %v1829
        %v1872 = vpack.c.b16 %v1832, %v1831
        %v1873 = vpack.c.b16 %v1834, %v1833
        %v1874 = vpack.c.b16 %v1836, %v1835
        %v1875 = vpack.c.b16 %v1838, %v1837
        %v1876 = vpack.c.b16 %v1840, %v1839
        %v1877 = vpack.c.b16 %v1842, %v1841
        %v1878 = vpack.c.b16 %v1844, %v1843
        %v1879 = vpack.c.b16 %v1846, %v1845
        %v1880 = vpack.c.b16 %v1848, %v1847
        %v1881 = vpack.c.b16 %v1850, %v1849
        %v1882 = vpack.c.b16 %v1852, %v1851
        %v1883 = vpack.c.b16 %v1854, %v1853
        %v1884 = vpack.c.b16 %v1856, %v1855
        %v1885 = vpack.c.b16 %v1858, %v1857
        %v1886 = vpack.c.b16 %v1860, %v1859
        %v1887 = vpack.c.b16 %v1862, %v1861
        %v1888 = vpack.c.b16 %v1864, %v1863
        %1913 = vmatprep.subr.bf16.mxu0 0
        %1914 = vmatpush1.bf16.msra.mxu0 %v1865
        %1915 = vmatprep.subr.bf16.mxu0 0
        %1916 = vmatpush1.bf16.msra.mxu0 %v1866
        %1917 = vmatprep.subr.bf16.mxu0 0
        %1918 = vmatpush1.bf16.msra.mxu0 %v1867
        %1919 = vmatprep.subr.bf16.mxu0 0
        %1920 = vmatpush1.bf16.msra.mxu0 %v1868
        %1921 = vmatprep.subr.bf16.mxu0 0
        %1922 = vmatpush1.bf16.msra.mxu0 %v1869
        %1923 = vmatprep.subr.bf16.mxu0 0
        %1924 = vmatpush1.bf16.msra.mxu0 %v1870
        %1925 = vmatprep.subr.bf16.mxu0 0
        %1926 = vmatpush1.bf16.msra.mxu0 %v1871
        %1927 = vmatprep.subr.bf16.mxu0 0
        %1928 = vmatpush1.bf16.msra.mxu0 %v1872
        %1929 = vmatprep.subr.bf16.mxu0 0
        %1930 = vmatpush1.bf16.msra.mxu0 %v1873
        %1931 = vmatprep.subr.bf16.mxu0 0
        %1932 = vmatpush1.bf16.msra.mxu0 %v1874
        %1933 = vmatprep.subr.bf16.mxu0 0
        %1934 = vmatpush1.bf16.msra.mxu0 %v1875
        %1935 = vmatprep.subr.bf16.mxu0 0
        %1936 = vmatpush1.bf16.msra.mxu0 %v1876
        %1937 = vmatprep.subr.bf16.mxu0 0
        %1938 = vmatpush1.bf16.msra.mxu0 %v1877
        %1939 = vmatprep.subr.bf16.mxu0 0
        %1940 = vmatpush1.bf16.msra.mxu0 %v1878
        %1941 = vmatprep.subr.bf16.mxu0 0
        %1942 = vmatpush1.bf16.msra.mxu0 %v1879
        %1943 = vmatprep.subr.bf16.mxu0 0
        %1944 = vmatpush1.bf16.msra.mxu0 %v1880
        %1945 = vmatprep.mubr.bf16.mxu0 %v1133
        %1946 = vmatmul.mubr.bf16.gmra.mrb[0].mxu0 %v1129
        %v1947 = vpop.f32.mrb[0].mxu0
        %v1948 = vadd.f32 %v1729, %v1947
        %v1949 = vpop.f32.mrb[0].mxu0
        %v1950 = vpop.f32.mrb[0].mxu0
        %v1951 = vadd.f32 %v1732, %v1950
        %v1952 = vpop.f32.mrb[0].mxu0
        %1953 = vmatprep.mubr.bf16.mxu0 %v1141
        %1954 = vmatmul.mubr.bf16.gmra.mrb[0].mxu0 %v1137
        %v1955 = vpop.f32.mrb[0].mxu0
        %v1956 = vadd.f32 %v1737, %v1955
        %v1957 = vpop.f32.mrb[0].mxu0
        %v1958 = vpop.f32.mrb[0].mxu0
        %v1959 = vadd.f32 %v1740, %v1958
        %v1960 = vpop.f32.mrb[0].mxu0
        %1961 = vmatprep.mubr.bf16.mxu0 %v1149
        %1962 = vmatmul.mubr.bf16.gmra.mrb[0].mxu0 %v1145
        %v1963 = vpop.f32.mrb[0].mxu0
        %v1964 = vadd.f32 %v1745, %v1963
        %v1965 = vpop.f32.mrb[0].mxu0
        %v1966 = vpop.f32.mrb[0].mxu0
        %v1967 = vadd.f32 %v1748, %v1966
        %v1968 = vpop.f32.mrb[0].mxu0
        %1969 = vmatprep.mubr.bf16.mxu0 %v1157
        %1970 = vmatmul.mubr.bf16.gmra.mrb[0].mxu0 %v1153
        %v1971 = vpop.f32.mrb[0].mxu0
        %v1972 = vadd.f32 %v1753, %v1971
        %v1973 = vpop.f32.mrb[0].mxu0
        %v1974 = vpop.f32.mrb[0].mxu0
        %v1975 = vadd.f32 %v1756, %v1974
        %v1976 = vpop.f32.mrb[0].mxu0
        %1977 = vdwg.mxu0
        %1978 = vmatprep.subr.bf16.mxu0 0
        %1979 = vmatpush1.bf16.msra.mxu0 %v1881
        %1980 = vmatprep.subr.bf16.mxu0 0
        %1981 = vmatpush1.bf16.msra.mxu0 %v1882
        %1982 = vmatprep.subr.bf16.mxu0 0
        %1983 = vmatpush1.bf16.msra.mxu0 %v1883
        %1984 = vmatprep.subr.bf16.mxu0 0
        %1985 = vmatpush1.bf16.msra.mxu0 %v1884
        %1986 = vmatprep.subr.bf16.mxu0 0
        %1987 = vmatpush1.bf16.msra.mxu0 %v1885
        %1988 = vmatprep.subr.bf16.mxu0 0
        %1989 = vmatpush1.bf16.msra.mxu0 %v1886
        %1990 = vmatprep.subr.bf16.mxu0 0
        %1991 = vmatpush1.bf16.msra.mxu0 %v1887
        %1992 = vmatprep.subr.bf16.mxu0 0
        %1993 = vmatpush1.bf16.msra.mxu0 %v1888
        %1994 = vmatprep.subr.bf16.mxu0 0
        %1995 = vmatpush1.bf16.msra.mxu0 0
        %1996 = vmatprep.subr.bf16.mxu0 0
        %1997 = vmatpush1.bf16.msra.mxu0 0
        %1998 = vmatprep.subr.bf16.mxu0 0
        %1999 = vmatpush1.bf16.msra.mxu0 0
        %2000 = vmatprep.subr.bf16.mxu0 0
        %2001 = vmatpush1.bf16.msra.mxu0 0
        %2002 = vmatprep.subr.bf16.mxu0 0
        %2003 = vmatpush1.bf16.msra.mxu0 0
        %2004 = vmatprep.subr.bf16.mxu0 0
        %2005 = vmatpush1.bf16.msra.mxu0 0
        %2006 = vmatprep.subr.bf16.mxu0 0
        %2007 = vmatpush1.bf16.msra.mxu0 0
        %2008 = vmatprep.subr.bf16.mxu0 0
        %2009 = vmatpush1.bf16.msra.mxu0 0
        %2010 = vmatprep.mubr.bf16.mxu0 0
        %2011 = vmatmul.mubr.bf16.gmra.mrb[0].mxu0 %v1137
        %v2012 = vpop.f32.mrb[0].mxu0
        %v2013 = vadd.f32 %v1948, %v2012
        %v2014 = vpop.f32.mrb[0].mxu0
        %v2015 = vpop.f32.mrb[0].mxu0
        %v2016 = vadd.f32 %v1951, %v2015
        %v2017 = vpop.f32.mrb[0].mxu0
        %2018 = vmatprep.mubr.bf16.mxu0 0
        %2019 = vmatmul.mubr.bf16.gmra.mrb[0].mxu0 %v1145
        %v2020 = vpop.f32.mrb[0].mxu0
        %v2021 = vadd.f32 %v1956, %v2020
        %v2022 = vpop.f32.mrb[0].mxu0
        %v2023 = vpop.f32.mrb[0].mxu0
        %v2024 = vadd.f32 %v1959, %v2023
        %v2025 = vpop.f32.mrb[0].mxu0
        %2026 = vmatprep.mubr.bf16.mxu0 0
        %2027 = vmatmul.mubr.bf16.gmra.mrb[0].mxu0 %v1153
        %v2028 = vpop.f32.mrb[0].mxu0
        %v2029 = vadd.f32 %v1964, %v2028
        %v2030 = vpop.f32.mrb[0].mxu0
        %v2031 = vpop.f32.mrb[0].mxu0
        %v2032 = vadd.f32 %v1967, %v2031
        %v2033 = vpop.f32.mrb[0].mxu0
        %2034 = vmatprep.mubr.bf16.mxu0 0
        %2035 = vmatmul.mubr.bf16.gmra.mrb[0].mxu0 %v1759
        %v2036 = vpop.f32.mrb[0].mxu0
        %v2037 = vadd.f32 %v1972, %v2036
        %v2038 = vpop.f32.mrb[0].mxu0
        %v2039 = vpop.f32.mrb[0].mxu0
        %v2040 = vadd.f32 %v1975, %v2039
        %v2041 = vpop.f32.mrb[0].mxu0
        %2042 = vdwg.mxu0
        %v2043 = vld [vmem:[#allocation2] sm:$0xe]
        %v2044 = vld [vmem:[#allocation2 + $0x8] sm:$0xe]
        %v2045 = vld [vmem:[#allocation2 + $0x10] sm:$0xe]
        %v2046 = vld [vmem:[#allocation2 + $0x18] sm:$0xe]
        %v2047 = vld [vmem:[#allocation2 + $0x20] sm:$0xe]
        %v2048 = vld [vmem:[#allocation2 + $0x28] sm:$0xe]
        %v2049 = vld [vmem:[#allocation2 + $0x30] sm:$0xe]
        %v2050 = vld [vmem:[#allocation2 + $0x38] sm:$0xe]
        %v2051 = vld [vmem:[#allocation2 + $0x40] sm:$0xe]
        %v2052 = vld [vmem:[#allocation2 + $0x48] sm:$0xe]
        %v2061 = vunpack.c.l.b16 %v2043
        %v2062 = vunpack.c.l.b16 %v2044
        %v2063 = vunpack.c.l.b16 %v2045
        %v2064 = vunpack.c.l.b16 %v2046
        %v2065 = vunpack.c.l.b16 %v2047
        %v2066 = vunpack.c.l.b16 %v2048
        %v2067 = vunpack.c.l.b16 %v2049
        %v2068 = vunpack.c.l.b16 %v2050
        %v2070 = vunpack.c.l.b16 %v2051
        %v2072 = vunpack.c.l.b16 %v2052
        %v2073 = vpack.c.b16 %v2062, %v2061
        %v2074 = vpack.c.b16 %v2063, %v2063
        %v2075 = vpack.c.b16 %v2063, %v2062
        %v2076 = vpack.c.b16 %v2064, %v2064
        %v2077 = vpack.c.b16 %v2064, %v2063
        %v2078 = vpack.c.b16 %v2065, %v2065
        %v2079 = vpack.c.b16 %v2065, %v2064
        %v2080 = vpack.c.b16 %v2066, %v2066
        %v2081 = vpack.c.b16 %v2066, %v2065
        %v2082 = vpack.c.b16 %v2067, %v2067
        %v2083 = vpack.c.b16 %v2067, %v2066
        %v2084 = vpack.c.b16 %v2068, %v2068
        %v2085 = vpack.c.b16 %v2068, %v2067
        %v2086 = vpack.c.b16 %v2070, %v2070
        %v2087 = vpack.c.b16 %v2070, %v2068
        %v2088 = vpack.c.b16 %v2072, %v2072
        %vm2089 = vcmask 1042432
        %vm2090 = vcmask 1046532
        %vm2091 = vmor %vm2089, %vm2090
        %v2092 = vrot.slane %v2073, 5
        %v2093 = vrot.slane %v2092, 4
        %v2094 = vrot.slane %v1131, 5
        %v2095 = vsel %vm2091, %v2093, %v2094
        %v2096 = vrot.slane %v2074, 5
        %v2097 = vrot.slane %v2096, 4
        %v2098 = vrot.slane %v1132, 5
        %v2099 = vsel %vm2091, %v2097, %v2098
        %v2100 = vrot.slane %v2075, 5
        %v2101 = vrot.slane %v2100, 4
        %v2102 = vrot.slane %v1135, 5
        %v2103 = vsel %vm2091, %v2101, %v2102
        %v2104 = vrot.slane %v2076, 5
        %v2105 = vrot.slane %v2104, 4
        %v2106 = vrot.slane %v1136, 5
        %v2107 = vsel %vm2091, %v2105, %v2106
        %v2108 = vrot.slane %v2077, 5
        %v2109 = vrot.slane %v2108, 4
        %v2110 = vrot.slane %v1139, 5
        %v2111 = vsel %vm2091, %v2109, %v2110
        %v2112 = vrot.slane %v2078, 5
        %v2113 = vrot.slane %v2112, 4
        %v2114 = vrot.slane %v1140, 5
        %v2115 = vsel %vm2091, %v2113, %v2114
        %v2116 = vrot.slane %v2079, 5
        %v2117 = vrot.slane %v2116, 4
        %v2118 = vrot.slane %v1143, 5
        %v2119 = vsel %vm2091, %v2117, %v2118
        %v2120 = vrot.slane %v2080, 5
        %v2121 = vrot.slane %v2120, 4
        %v2122 = vrot.slane %v1144, 5
        %v2123 = vsel %vm2091, %v2121, %v2122
        %v2124 = vrot.slane %v2081, 5
        %v2125 = vrot.slane %v2124, 4
        %v2126 = vrot.slane %v1147, 5
        %v2127 = vsel %vm2091, %v2125, %v2126
        %v2128 = vrot.slane %v2082, 5
        %v2129 = vrot.slane %v2128, 4
        %v2130 = vrot.slane %v1148, 5
        %v2131 = vsel %vm2091, %v2129, %v2130
        %v2132 = vrot.slane %v2083, 5
        %v2133 = vrot.slane %v2132, 4
        %v2134 = vrot.slane %v1151, 5
        %v2135 = vsel %vm2091, %v2133, %v2134
        %v2136 = vrot.slane %v2084, 5
        %v2137 = vrot.slane %v2136, 4
        %v2138 = vrot.slane %v1152, 5
        %v2139 = vsel %vm2091, %v2137, %v2138
        %v2140 = vrot.slane %v2085, 5
        %v2141 = vrot.slane %v2140, 4
        %v2142 = vrot.slane %v1155, 5
        %v2143 = vsel %vm2091, %v2141, %v2142
        %v2144 = vrot.slane %v2086, 5
        %v2145 = vrot.slane %v2144, 4
        %v2146 = vrot.slane %v1156, 5
        %v2147 = vsel %vm2091, %v2145, %v2146
        %v2148 = vrot.slane %v2087, 5
        %v2149 = vrot.slane %v2148, 4
        %v2150 = vrot.slane %v1159, 5
        %v2151 = vsel %vm2091, %v2149, %v2150
        %v2152 = vrot.slane %v2088, 5
        %v2153 = vrot.slane %v2152, 4
        %v2154 = vrot.slane %v1160, 5
        %v2155 = vsel %vm2091, %v2153, %v2154
        %s2156 = scalar_lea.vmem [#allocation8], 384
        %v2157 = vld [vmem:[%s2156] sm:$0xf]
        %v2158 = vld [vmem:[%s2156 + $0x4] sm:$0xf]
        %v2159 = vld [vmem:[%s2156 + $0x8] sm:$0xf]
        %v2160 = vld [vmem:[%s2156 + $0xc] sm:$0xf]
        %v2161 = vld [vmem:[%s2156 + $0x10] sm:$0xf]
        %v2162 = vld [vmem:[%s2156 + $0x14] sm:$0xf]
        %v2163 = vld [vmem:[%s2156 + $0x18] sm:$0xf]
        %v2164 = vld [vmem:[%s2156 + $0x1c] sm:$0xf]
        %v2165 = vld [vmem:[%s2156 + $0x20] sm:$0xf]
        %v2166 = vld [vmem:[%s2156 + $0x24] sm:$0xf]
        %v2167 = vld [vmem:[%s2156 + $0x28] sm:$0xf]
        %v2168 = vld [vmem:[%s2156 + $0x2c] sm:$0xf]
        %v2169 = vld [vmem:[%s2156 + $0x30] sm:$0xf]
        %v2170 = vld [vmem:[%s2156 + $0x34] sm:$0xf]
        %v2171 = vld [vmem:[%s2156 + $0x38] sm:$0xf]
        %v2172 = vld [vmem:[%s2156 + $0x3c] sm:$0xf]
        %v2173 = vld [vmem:[%s2156 + $0x40] sm:$0xf]
        %v2174 = vld [vmem:[%s2156 + $0x44] sm:$0xf]
        %v2175 = vld [vmem:[%s2156 + $0x48] sm:$0xf]
        %v2176 = vld [vmem:[%s2156 + $0x4c] sm:$0xf]
        %v2177 = vld [vmem:[%s2156 + $0x50] sm:$0xf]
        %v2178 = vld [vmem:[%s2156 + $0x54] sm:$0xf]
        %v2179 = vld [vmem:[%s2156 + $0x58] sm:$0xf]
        %v2180 = vld [vmem:[%s2156 + $0x5c] sm:$0xf]
        %v2181 = vld [vmem:[%s2156 + $0x60] sm:$0xf]
        %v2182 = vld [vmem:[%s2156 + $0x64] sm:$0xf]
        %v2183 = vld [vmem:[%s2156 + $0x68] sm:$0xf]
        %v2184 = vld [vmem:[%s2156 + $0x6c] sm:$0xf]
        %v2185 = vld [vmem:[%s2156 + $0x70] sm:$0xf]
        %v2186 = vld [vmem:[%s2156 + $0x74] sm:$0xf]
        %v2187 = vld [vmem:[%s2156 + $0x78] sm:$0xf]
        %v2188 = vld [vmem:[%s2156 + $0x7c] sm:$0xf]
        %v2189 = vld [vmem:[%s2156 + $0x80] sm:$0xf]
        %v2190 = vld [vmem:[%s2156 + $0x84] sm:$0xf]
        %v2191 = vld [vmem:[%s2156 + $0x88] sm:$0xf]
        %v2192 = vld [vmem:[%s2156 + $0x8c] sm:$0xf]
        %v2193 = vld [vmem:[%s2156 + $0x90] sm:$0xf]
        %v2194 = vld [vmem:[%s2156 + $0x94] sm:$0xf]
        %v2195 = vld [vmem:[%s2156 + $0x98] sm:$0xf]
        %v2196 = vld [vmem:[%s2156 + $0x9c] sm:$0xf]
        %v2197 = vld [vmem:[%s2156 + $0xa0] sm:$0xf]
        %v2198 = vld [vmem:[%s2156 + $0xa4] sm:$0xf]
        %v2199 = vld [vmem:[%s2156 + $0xa8] sm:$0xf]
        %v2200 = vld [vmem:[%s2156 + $0xac] sm:$0xf]
        %v2201 = vld [vmem:[%s2156 + $0xb0] sm:$0xf]
        %v2202 = vld [vmem:[%s2156 + $0xb4] sm:$0xf]
        %v2203 = vld [vmem:[%s2156 + $0xb8] sm:$0xf]
        %v2204 = vld [vmem:[%s2156 + $0xbc] sm:$0xf]
        %v2205 = vunpack.c.l.b16 %v2095
        %v2206 = vunpack.c.h.b16 %v2095
        %v2207 = vunpack.c.l.b16 %v2099
        %v2208 = vunpack.c.l.b16 %v2103
        %v2209 = vunpack.c.h.b16 %v2103
        %v2210 = vunpack.c.l.b16 %v2107
        %v2211 = vunpack.c.l.b16 %v2111
        %v2212 = vunpack.c.h.b16 %v2111
        %v2213 = vunpack.c.l.b16 %v2115
        %v2214 = vunpack.c.l.b16 %v2119
        %v2215 = vunpack.c.h.b16 %v2119
        %v2216 = vunpack.c.l.b16 %v2123
        %v2217 = vunpack.c.l.b16 %v2127
        %v2218 = vunpack.c.h.b16 %v2127
        %v2219 = vunpack.c.l.b16 %v2131
        %v2220 = vunpack.c.l.b16 %v2135
        %v2221 = vunpack.c.h.b16 %v2135
        %v2222 = vunpack.c.l.b16 %v2139
        %v2223 = vunpack.c.l.b16 %v2143
        %v2224 = vunpack.c.h.b16 %v2143
        %v2225 = vunpack.c.l.b16 %v2147
        %v2226 = vunpack.c.l.b16 %v2151
        %v2227 = vunpack.c.h.b16 %v2151
        %v2228 = vunpack.c.l.b16 %v2155
        %v2229 = vpack.c.b16 %v2208, %v2205
        %v2230 = vpack.c.b16 %v2209, %v2206
        %v2231 = vpack.c.b16 %v2210, %v2207
        %v2232 = vpack.c.b16 %v2214, %v2211
        %v2233 = vpack.c.b16 %v2215, %v2212
        %v2234 = vpack.c.b16 %v2216, %v2213
        %v2235 = vpack.c.b16 %v2220, %v2217
        %v2236 = vpack.c.b16 %v2221, %v2218
        %v2237 = vpack.c.b16 %v2222, %v2219
        %v2238 = vpack.c.b16 %v2226, %v2223
        %v2239 = vpack.c.b16 %v2227, %v2224
        %v2240 = vpack.c.b16 %v2228, %v2225
        %v2301 = vunpack.c.l.b16 %v2157
        %v2302 = vunpack.c.l.b16 %v2158
        %v2303 = vunpack.c.l.b16 %v2159
        %v2304 = vunpack.c.l.b16 %v2160
        %v2305 = vunpack.c.l.b16 %v2161
        %v2306 = vunpack.c.l.b16 %v2162
        %v2307 = vunpack.c.l.b16 %v2163
        %v2308 = vunpack.c.l.b16 %v2164
        %v2309 = vunpack.c.l.b16 %v2165
        %v2310 = vunpack.c.l.b16 %v2166
        %v2311 = vunpack.c.l.b16 %v2167
        %v2312 = vunpack.c.l.b16 %v2168
        %v2313 = vunpack.c.l.b16 %v2169
        %v2314 = vunpack.c.l.b16 %v2170
        %v2315 = vunpack.c.l.b16 %v2171
        %v2316 = vunpack.c.l.b16 %v2172
        %v2317 = vunpack.c.l.b16 %v2173
        %v2318 = vunpack.c.l.b16 %v2174
        %v2319 = vunpack.c.l.b16 %v2175
        %v2320 = vunpack.c.l.b16 %v2176
        %v2321 = vunpack.c.l.b16 %v2177
        %v2322 = vunpack.c.l.b16 %v2178
        %v2323 = vunpack.c.l.b16 %v2179
        %v2324 = vunpack.c.l.b16 %v2180
        %v2325 = vunpack.c.l.b16 %v2181
        %v2326 = vunpack.c.l.b16 %v2182
        %v2327 = vunpack.c.l.b16 %v2183
        %v2328 = vunpack.c.l.b16 %v2184
        %v2329 = vunpack.c.l.b16 %v2185
        %v2330 = vunpack.c.l.b16 %v2186
        %v2331 = vunpack.c.l.b16 %v2187
        %v2332 = vunpack.c.l.b16 %v2188
        %v2333 = vunpack.c.l.b16 %v2189
        %v2334 = vunpack.c.l.b16 %v2190
        %v2335 = vunpack.c.l.b16 %v2191
        %v2336 = vunpack.c.l.b16 %v2192
        %v2337 = vunpack.c.l.b16 %v2193
        %v2338 = vunpack.c.l.b16 %v2194
        %v2339 = vunpack.c.l.b16 %v2195
        %v2340 = vunpack.c.l.b16 %v2196
        %v2341 = vunpack.c.l.b16 %v2197
        %v2342 = vunpack.c.l.b16 %v2198
        %v2343 = vunpack.c.l.b16 %v2199
        %v2344 = vunpack.c.l.b16 %v2200
        %v2345 = vunpack.c.l.b16 %v2201
        %v2346 = vunpack.c.l.b16 %v2202
        %v2347 = vunpack.c.l.b16 %v2203
        %v2348 = vunpack.c.l.b16 %v2204
        %v2349 = vpack.c.b16 %v2302, %v2301
        %v2350 = vpack.c.b16 %v2304, %v2303
        %v2351 = vpack.c.b16 %v2306, %v2305
        %v2352 = vpack.c.b16 %v2308, %v2307
        %v2353 = vpack.c.b16 %v2310, %v2309
        %v2354 = vpack.c.b16 %v2312, %v2311
        %v2355 = vpack.c.b16 %v2314, %v2313
        %v2356 = vpack.c.b16 %v2316, %v2315
        %v2357 = vpack.c.b16 %v2318, %v2317
        %v2358 = vpack.c.b16 %v2320, %v2319
        %v2359 = vpack.c.b16 %v2322, %v2321
        %v2360 = vpack.c.b16 %v2324, %v2323
        %v2361 = vpack.c.b16 %v2326, %v2325
        %v2362 = vpack.c.b16 %v2328, %v2327
        %v2363 = vpack.c.b16 %v2330, %v2329
        %v2364 = vpack.c.b16 %v2332, %v2331
        %v2365 = vpack.c.b16 %v2334, %v2333
        %v2366 = vpack.c.b16 %v2336, %v2335
        %v2367 = vpack.c.b16 %v2338, %v2337
        %v2368 = vpack.c.b16 %v2340, %v2339
        %v2369 = vpack.c.b16 %v2342, %v2341
        %v2370 = vpack.c.b16 %v2344, %v2343
        %v2371 = vpack.c.b16 %v2346, %v2345
        %v2372 = vpack.c.b16 %v2348, %v2347
        %2397 = vmatprep.subr.bf16.mxu0 0
        %2398 = vmatpush1.bf16.msra.mxu0 %v2349
        %2399 = vmatprep.subr.bf16.mxu0 0
        %2400 = vmatpush1.bf16.msra.mxu0 %v2350
        %2401 = vmatprep.subr.bf16.mxu0 0
        %2402 = vmatpush1.bf16.msra.mxu0 %v2351
        %2403 = vmatprep.subr.bf16.mxu0 0
        %2404 = vmatpush1.bf16.msra.mxu0 %v2352
        %2405 = vmatprep.subr.bf16.mxu0 0
        %2406 = vmatpush1.bf16.msra.mxu0 %v2353
        %2407 = vmatprep.subr.bf16.mxu0 0
        %2408 = vmatpush1.bf16.msra.mxu0 %v2354
        %2409 = vmatprep.subr.bf16.mxu0 0
        %2410 = vmatpush1.bf16.msra.mxu0 %v2355
        %2411 = vmatprep.subr.bf16.mxu0 0
        %2412 = vmatpush1.bf16.msra.mxu0 %v2356
        %2413 = vmatprep.subr.bf16.mxu0 0
        %2414 = vmatpush1.bf16.msra.mxu0 %v2357
        %2415 = vmatprep.subr.bf16.mxu0 0
        %2416 = vmatpush1.bf16.msra.mxu0 %v2358
        %2417 = vmatprep.subr.bf16.mxu0 0
        %2418 = vmatpush1.bf16.msra.mxu0 %v2359
        %2419 = vmatprep.subr.bf16.mxu0 0
        %2420 = vmatpush1.bf16.msra.mxu0 %v2360
        %2421 = vmatprep.subr.bf16.mxu0 0
        %2422 = vmatpush1.bf16.msra.mxu0 %v2361
        %2423 = vmatprep.subr.bf16.mxu0 0
        %2424 = vmatpush1.bf16.msra.mxu0 %v2362
        %2425 = vmatprep.subr.bf16.mxu0 0
        %2426 = vmatpush1.bf16.msra.mxu0 %v2363
        %2427 = vmatprep.subr.bf16.mxu0 0
        %2428 = vmatpush1.bf16.msra.mxu0 %v2364
        %2429 = vmatprep.mubr.bf16.mxu0 %v2230
        %2430 = vmatmul.mubr.bf16.gmra.mrb[0].mxu0 %v2229
        %v2431 = vpop.f32.mrb[0].mxu0
        %v2432 = vadd.f32 0.0, %v2431
        %v2433 = vpop.f32.mrb[0].mxu0
        %v2434 = vpop.f32.mrb[0].mxu0
        %v2435 = vadd.f32 0.0, %v2434
        %v2436 = vpop.f32.mrb[0].mxu0
        %2437 = vmatprep.mubr.bf16.mxu0 %v2233
        %2438 = vmatmul.mubr.bf16.gmra.mrb[0].mxu0 %v2232
        %v2439 = vpop.f32.mrb[0].mxu0
        %v2440 = vadd.f32 0.0, %v2439
        %v2441 = vpop.f32.mrb[0].mxu0
        %v2442 = vpop.f32.mrb[0].mxu0
        %v2443 = vadd.f32 0.0, %v2442
        %v2444 = vpop.f32.mrb[0].mxu0
        %2445 = vmatprep.mubr.bf16.mxu0 %v2236
        %2446 = vmatmul.mubr.bf16.gmra.mrb[0].mxu0 %v2235
        %v2447 = vpop.f32.mrb[0].mxu0
        %v2448 = vadd.f32 0.0, %v2447
        %v2449 = vpop.f32.mrb[0].mxu0
        %v2450 = vpop.f32.mrb[0].mxu0
        %v2451 = vadd.f32 0.0, %v2450
        %v2452 = vpop.f32.mrb[0].mxu0
        %2453 = vmatprep.mubr.bf16.mxu0 %v2239
        %2454 = vmatmul.mubr.bf16.gmra.mrb[0].mxu0 %v2238
        %v2455 = vpop.f32.mrb[0].mxu0
        %v2456 = vadd.f32 0.0, %v2455
        %v2457 = vpop.f32.mrb[0].mxu0
        %v2458 = vpop.f32.mrb[0].mxu0
        %v2459 = vadd.f32 0.0, %v2458
        %v2460 = vpop.f32.mrb[0].mxu0
        %2461 = vdwg.mxu0
        %2462 = vmatprep.subr.bf16.mxu0 0
        %2463 = vmatpush1.bf16.msra.mxu0 %v2365
        %2464 = vmatprep.subr.bf16.mxu0 0
        %2465 = vmatpush1.bf16.msra.mxu0 %v2366
        %2466 = vmatprep.subr.bf16.mxu0 0
        %2467 = vmatpush1.bf16.msra.mxu0 %v2367
        %2468 = vmatprep.subr.bf16.mxu0 0
        %2469 = vmatpush1.bf16.msra.mxu0 %v2368
        %2470 = vmatprep.subr.bf16.mxu0 0
        %2471 = vmatpush1.bf16.msra.mxu0 %v2369
        %2472 = vmatprep.subr.bf16.mxu0 0
        %2473 = vmatpush1.bf16.msra.mxu0 %v2370
        %2474 = vmatprep.subr.bf16.mxu0 0
        %2475 = vmatpush1.bf16.msra.mxu0 %v2371
        %2476 = vmatprep.subr.bf16.mxu0 0
        %2477 = vmatpush1.bf16.msra.mxu0 %v2372
        %2478 = vmatprep.subr.bf16.mxu0 0
        %2479 = vmatpush1.bf16.msra.mxu0 0
        %2480 = vmatprep.subr.bf16.mxu0 0
        %2481 = vmatpush1.bf16.msra.mxu0 0
        %2482 = vmatprep.subr.bf16.mxu0 0
        %2483 = vmatpush1.bf16.msra.mxu0 0
        %2484 = vmatprep.subr.bf16.mxu0 0
        %2485 = vmatpush1.bf16.msra.mxu0 0
        %2486 = vmatprep.subr.bf16.mxu0 0
        %2487 = vmatpush1.bf16.msra.mxu0 0
        %2488 = vmatprep.subr.bf16.mxu0 0
        %2489 = vmatpush1.bf16.msra.mxu0 0
        %2490 = vmatprep.subr.bf16.mxu0 0
        %2491 = vmatpush1.bf16.msra.mxu0 0
        %2492 = vmatprep.subr.bf16.mxu0 0
        %2493 = vmatpush1.bf16.msra.mxu0 0
        %2494 = vmatprep.mubr.bf16.mxu0 0
        %2495 = vmatmul.mubr.bf16.gmra.mrb[0].mxu0 %v2231
        %v2496 = vpop.f32.mrb[0].mxu0
        %v2497 = vadd.f32 %v2432, %v2496
        %v2498 = vpop.f32.mrb[0].mxu0
        %v2499 = vpop.f32.mrb[0].mxu0
        %v2500 = vadd.f32 %v2435, %v2499
        %v2501 = vpop.f32.mrb[0].mxu0
        %2502 = vmatprep.mubr.bf16.mxu0 0
        %2503 = vmatmul.mubr.bf16.gmra.mrb[0].mxu0 %v2234
        %v2504 = vpop.f32.mrb[0].mxu0
        %v2505 = vadd.f32 %v2440, %v2504
        %v2506 = vpop.f32.mrb[0].mxu0
        %v2507 = vpop.f32.mrb[0].mxu0
        %v2508 = vadd.f32 %v2443, %v2507
        %v2509 = vpop.f32.mrb[0].mxu0
        %2510 = vmatprep.mubr.bf16.mxu0 0
        %2511 = vmatmul.mubr.bf16.gmra.mrb[0].mxu0 %v2237
        %v2512 = vpop.f32.mrb[0].mxu0
        %v2513 = vadd.f32 %v2448, %v2512
        %v2514 = vpop.f32.mrb[0].mxu0
        %v2515 = vpop.f32.mrb[0].mxu0
        %v2516 = vadd.f32 %v2451, %v2515
        %v2517 = vpop.f32.mrb[0].mxu0
        %2518 = vmatprep.mubr.bf16.mxu0 0
        %2519 = vmatmul.mubr.bf16.gmra.mrb[0].mxu0 %v2240
        %v2520 = vpop.f32.mrb[0].mxu0
        %v2521 = vadd.f32 %v2456, %v2520
        %v2522 = vpop.f32.mrb[0].mxu0
        %v2523 = vpop.f32.mrb[0].mxu0
        %v2524 = vadd.f32 %v2459, %v2523
        %v2525 = vpop.f32.mrb[0].mxu0
        %2526 = vdwg.mxu0
        %v2527 = vadd.f32 %v2013, %v2497
        %v2528 = vadd.f32 %v2016, %v2500
        %v2529 = vadd.f32 %v2021, %v2505
        %v2530 = vadd.f32 %v2024, %v2508
        %v2531 = vadd.f32 %v2029, %v2513
        %v2532 = vadd.f32 %v2032, %v2516
        %v2533 = vadd.f32 %v2037, %v2521
        %v2534 = vadd.f32 %v2040, %v2524
        %v2535 = vld [vmem:[%s518] sm:$0x1]
        %v2537 = vlaneseq
        %v2538 = vshrl.u32 %v2537, 7
        %v2539 = vsub.s32 0, %v2538
        %v2540 = vrot.slane %v2535, %v2539
        %v2542 = vadd.f32 %v2527, %v2540
        %v2543 = vadd.f32 %v2528, %v2540
        %v2544 = vadd.f32 %v2529, %v2540
        %v2545 = vadd.f32 %v2530, %v2540
        %v2546 = vadd.f32 %v2531, %v2540
        %v2547 = vadd.f32 %v2532, %v2540
        %v2548 = vadd.f32 %v2533, %v2540
        %v2549 = vadd.f32 %v2534, %v2540
        %v2550 = vadd.f32 %v2542, %v2543
        %v2551 = vadd.f32 %v2550, %v2544
        %v2552 = vadd.f32 %v2551, %v2545
        %v2553 = vadd.f32 %v2552, %v2546
        %v2554 = vadd.f32 %v2553, %v2547
        %v2555 = vadd.f32 %v2554, %v2548
        %v2556 = vadd.f32 %v2555, %v2549
        %v2557 = vrot.slane %v2556, 4
        %v2558 = vadd.f32 %v2556, %v2557
        %v2559 = vrot.slane %v2558, 2
        %v2560 = vadd.f32 %v2558, %v2559
        %v2561 = vrot.slane %v2560, 1
        %v2562 = vadd.f32 %v2560, %v2561
        %v2563 = vmul.f32 %v2542, %v2542
        %v2564 = vmul.f32 %v2543, %v2543
        %v2565 = vmul.f32 %v2544, %v2544
        %v2566 = vmul.f32 %v2545, %v2545
        %v2567 = vmul.f32 %v2546, %v2546
        %v2568 = vmul.f32 %v2547, %v2547
        %v2569 = vmul.f32 %v2548, %v2548
        %v2570 = vmul.f32 %v2549, %v2549
        %v2571 = vadd.f32 %v2563, %v2564
        %v2572 = vadd.f32 %v2571, %v2565
        %v2573 = vadd.f32 %v2572, %v2566
        %v2574 = vadd.f32 %v2573, %v2567
        %v2575 = vadd.f32 %v2574, %v2568
        %v2576 = vadd.f32 %v2575, %v2569
        %v2577 = vadd.f32 %v2576, %v2570
        %v2578 = vrot.slane %v2577, 4
        %v2579 = vadd.f32 %v2577, %v2578
        %v2580 = vrot.slane %v2579, 2
        %v2581 = vadd.f32 %v2579, %v2580
        %v2582 = vrot.slane %v2581, 1
        %v2583 = vadd.f32 %v2581, %v2582
        %v2584 = vld [vmem:[#allocation9] sm:$0xff]
        %v2585 = vld [vmem:[#allocation9 + $0x8] sm:$0xff]
        %v2586 = vld [vmem:[#allocation9 + $0x10] sm:$0xff]
        %v2587 = vld [vmem:[#allocation9 + $0x18] sm:$0xff]
        %v2588 = vld [vmem:[#allocation9 + $0x20] sm:$0xff]
        %v2589 = vld [vmem:[#allocation9 + $0x28] sm:$0xff]
        %v2590 = vld [vmem:[#allocation9 + $0x30] sm:$0xff]
        %v2591 = vld [vmem:[#allocation9 + $0x38] sm:$0xff]
        %v2592 = vld [vmem:[#allocation9 + $0x40] sm:$0xff]
        %v2593 = vld [vmem:[#allocation9 + $0x48] sm:$0xff]
        %v2594 = vld [vmem:[#allocation9 + $0x50] sm:$0xff]
        %v2595 = vld [vmem:[#allocation9 + $0x58] sm:$0xff]
        %v2596 = vld [vmem:[#allocation9 + $0x60] sm:$0xff]
        %v2597 = vld [vmem:[#allocation9 + $0x68] sm:$0xff]
        %v2598 = vld [vmem:[#allocation9 + $0x70] sm:$0xff]
        %v2599 = vld [vmem:[#allocation9 + $0x78] sm:$0xff]
        %2600 = vmatprep.subr.mxu0 0.0
        %2601 = vmatpush1.msra.mxu0 %v2584
        %2602 = vmatprep.subr.mxu0 0.0
        %2603 = vmatpush1.msra.mxu0 %v2585
        %2604 = vmatprep.subr.mxu0 0.0
        %2605 = vmatpush1.msra.mxu0 %v2586
        %2606 = vmatprep.subr.mxu0 0.0
        %2607 = vmatpush1.msra.mxu0 %v2587
        %2608 = vmatprep.subr.mxu0 0.0
        %2609 = vmatpush1.msra.mxu0 %v2588
        %2610 = vmatprep.subr.mxu0 0.0
        %2611 = vmatpush1.msra.mxu0 %v2589
        %2612 = vmatprep.subr.mxu0 0.0
        %2613 = vmatpush1.msra.mxu0 %v2590
        %2614 = vmatprep.subr.mxu0 0.0
        %2615 = vmatpush1.msra.mxu0 %v2591
        %2616 = vmatprep.subr.mxu0 0.0
        %2617 = vmatpush1.msra.mxu0 %v2592
        %2618 = vmatprep.subr.mxu0 0.0
        %2619 = vmatpush1.msra.mxu0 %v2593
        %2620 = vmatprep.subr.mxu0 0.0
        %2621 = vmatpush1.msra.mxu0 %v2594
        %2622 = vmatprep.subr.mxu0 0.0
        %2623 = vmatpush1.msra.mxu0 %v2595
        %2624 = vmatprep.subr.mxu0 0.0
        %2625 = vmatpush1.msra.mxu0 %v2596
        %2626 = vmatprep.subr.mxu0 0.0
        %2627 = vmatpush1.msra.mxu0 %v2597
        %2628 = vmatprep.subr.mxu0 0.0
        %2629 = vmatpush1.msra.mxu0 %v2598
        %2630 = vmatprep.subr.mxu0 0.0
        %2631 = vmatpush1.msra.mxu0 %v2599
        %2632 = vmatprep.subr.mxu0 0.0
        %2633 = vmatpush1.msra.mxu0 0.0
        %2634 = vmatprep.subr.mxu0 0.0
        %2635 = vmatpush1.msra.mxu0 0.0
        %2636 = vmatprep.subr.mxu0 0.0
        %2637 = vmatpush1.msra.mxu0 0.0
        %2638 = vmatprep.subr.mxu0 0.0
        %2639 = vmatpush1.msra.mxu0 0.0
        %2640 = vmatprep.subr.mxu0 0.0
        %2641 = vmatpush1.msra.mxu0 0.0
        %2642 = vmatprep.subr.mxu0 0.0
        %2643 = vmatpush1.msra.mxu0 0.0
        %2644 = vmatprep.subr.mxu0 0.0
        %2645 = vmatpush1.msra.mxu0 0.0
        %2646 = vmatprep.subr.mxu0 0.0
        %2647 = vmatpush1.msra.mxu0 0.0
        %2648 = vmatprep.subr.mxu0 0.0
        %2649 = vmatpush1.msra.mxu0 0.0
        %2650 = vmatprep.subr.mxu0 0.0
        %2651 = vmatpush1.msra.mxu0 0.0
        %2652 = vmatprep.subr.mxu0 0.0
        %2653 = vmatpush1.msra.mxu0 0.0
        %2654 = vmatprep.subr.mxu0 0.0
        %2655 = vmatpush1.msra.mxu0 0.0
        %2656 = vmatprep.subr.mxu0 0.0
        %2657 = vmatpush1.msra.mxu0 0.0
        %2658 = vmatprep.subr.mxu0 0.0
        %2659 = vmatpush1.msra.mxu0 0.0
        %2660 = vmatprep.subr.mxu0 0.0
        %2661 = vmatpush1.msra.mxu0 0.0
        %2662 = vmatprep.subr.mxu0 0.0
        %2663 = vmatpush1.msra.mxu0 0.0
        %2664 = vmatprep.mubr.f32.mxu0 0.0
        %2665 = vmatmul.mubr.f32.gmra.mrb[0].mxu0 %v2562
        %v2666 = vpop.f32.mrb[0].mxu0
        %v2667 = vadd.f32 0.0, %v2666
        %v2668 = vpop.f32.mrb[0].mxu0
        %2669 = vdwg.mxu0
        %v2670 = vmul.f32 %v2667, 0.00390625
        %2671 = vmatprep.subr.mxu0 0.0
        %2672 = vmatpush1.msra.mxu0 %v2584
        %2673 = vmatprep.subr.mxu0 0.0
        %2674 = vmatpush1.msra.mxu0 %v2585
        %2675 = vmatprep.subr.mxu0 0.0
        %2676 = vmatpush1.msra.mxu0 %v2586
        %2677 = vmatprep.subr.mxu0 0.0
        %2678 = vmatpush1.msra.mxu0 %v2587
        %2679 = vmatprep.subr.mxu0 0.0
        %2680 = vmatpush1.msra.mxu0 %v2588
        %2681 = vmatprep.subr.mxu0 0.0
        %2682 = vmatpush1.msra.mxu0 %v2589
        %2683 = vmatprep.subr.mxu0 0.0
        %2684 = vmatpush1.msra.mxu0 %v2590
        %2685 = vmatprep.subr.mxu0 0.0
        %2686 = vmatpush1.msra.mxu0 %v2591
        %2687 = vmatprep.subr.mxu0 0.0
        %2688 = vmatpush1.msra.mxu0 %v2592
        %2689 = vmatprep.subr.mxu0 0.0
        %2690 = vmatpush1.msra.mxu0 %v2593
        %2691 = vmatprep.subr.mxu0 0.0
        %2692 = vmatpush1.msra.mxu0 %v2594
        %2693 = vmatprep.subr.mxu0 0.0
        %2694 = vmatpush1.msra.mxu0 %v2595
        %2695 = vmatprep.subr.mxu0 0.0
        %2696 = vmatpush1.msra.mxu0 %v2596
        %2697 = vmatprep.subr.mxu0 0.0
        %2698 = vmatpush1.msra.mxu0 %v2597
        %2699 = vmatprep.subr.mxu0 0.0
        %2700 = vmatpush1.msra.mxu0 %v2598
        %2701 = vmatprep.subr.mxu0 0.0
        %2702 = vmatpush1.msra.mxu0 %v2599
        %2703 = vmatprep.subr.mxu0 0.0
        %2704 = vmatpush1.msra.mxu0 0.0
        %2705 = vmatprep.subr.mxu0 0.0
        %2706 = vmatpush1.msra.mxu0 0.0
        %2707 = vmatprep.subr.mxu0 0.0
        %2708 = vmatpush1.msra.mxu0 0.0
        %2709 = vmatprep.subr.mxu0 0.0
        %2710 = vmatpush1.msra.mxu0 0.0
        %2711 = vmatprep.subr.mxu0 0.0
        %2712 = vmatpush1.msra.mxu0 0.0
        %2713 = vmatprep.subr.mxu0 0.0
        %2714 = vmatpush1.msra.mxu0 0.0
        %2715 = vmatprep.subr.mxu0 0.0
        %2716 = vmatpush1.msra.mxu0 0.0
        %2717 = vmatprep.subr.mxu0 0.0
        %2718 = vmatpush1.msra.mxu0 0.0
        %2719 = vmatprep.subr.mxu0 0.0
        %2720 = vmatpush1.msra.mxu0 0.0
        %2721 = vmatprep.subr.mxu0 0.0
        %2722 = vmatpush1.msra.mxu0 0.0
        %2723 = vmatprep.subr.mxu0 0.0
        %2724 = vmatpush1.msra.mxu0 0.0
        %2725 = vmatprep.subr.mxu0 0.0
        %2726 = vmatpush1.msra.mxu0 0.0
        %2727 = vmatprep.subr.mxu0 0.0
        %2728 = vmatpush1.msra.mxu0 0.0
        %2729 = vmatprep.subr.mxu0 0.0
        %2730 = vmatpush1.msra.mxu0 0.0
        %2731 = vmatprep.subr.mxu0 0.0
        %2732 = vmatpush1.msra.mxu0 0.0
        %2733 = vmatprep.subr.mxu0 0.0
        %2734 = vmatpush1.msra.mxu0 0.0
        %2735 = vmatprep.mubr.f32.mxu0 0.0
        %2736 = vmatmul.mubr.f32.gmra.mrb[0].mxu0 %v2583
        %v2737 = vpop.f32.mrb[0].mxu0
        %v2738 = vadd.f32 0.0, %v2737
        %v2739 = vpop.f32.mrb[0].mxu0
        %2740 = vdwg.mxu0
        %v2741 = vmul.f32 %v2738, 0.00390625
        %v2742 = vmul.f32 %v2670, %v2670
        %v2743 = vsub.f32 %v2741, %v2742
        %v2744 = vadd.f32 %v2743, 1e-06
        %v2745 = vrsqrt.pop %v2744
        %v2746 = vld [vmem:[%s6] sm:$0x1]
        %v2747 = vmul.f32 %v2745, %v2746
        %v2748 = vld [vmem:[%s7] sm:$0x1]
        %v2749 = vmul.f32 %v2670, %v2747
        %v2750 = vsub.f32 %v2748, %v2749
        %v2751 = vlaneseq
        %v2752 = vshrl.u32 %v2751, 7
        %v2753 = vsub.s32 0, %v2752
        %v2754 = vrot.slane %v2747, %v2753
        %v2755 = vmul.f32 %v2542, %v2754
        %v2756 = vmul.f32 %v2543, %v2754
        %v2757 = vmul.f32 %v2544, %v2754
        %v2758 = vmul.f32 %v2545, %v2754
        %v2759 = vmul.f32 %v2546, %v2754
        %v2760 = vmul.f32 %v2547, %v2754
        %v2761 = vmul.f32 %v2548, %v2754
        %v2762 = vmul.f32 %v2549, %v2754
        %v2764 = vlaneseq
        %v2765 = vshrl.u32 %v2764, 7
        %v2766 = vsub.s32 0, %v2765
        %v2767 = vrot.slane %v2750, %v2766
        %v2769 = vadd.f32 %v2755, %v2767
        %v2770 = vadd.f32 %v2756, %v2767
        %v2771 = vadd.f32 %v2757, %v2767
        %v2772 = vadd.f32 %v2758, %v2767
        %v2773 = vadd.f32 %v2759, %v2767
        %v2774 = vadd.f32 %v2760, %v2767
        %v2775 = vadd.f32 %v2761, %v2767
        %v2776 = vadd.f32 %v2762, %v2767
        %v2777 = vxor.u32 %v2769, 2147483648
        %v2778 = vxor.u32 %v2770, 2147483648
        %v2779 = vxor.u32 %v2771, 2147483648
        %v2780 = vxor.u32 %v2772, 2147483648
        %v2781 = vxor.u32 %v2773, 2147483648
        %v2782 = vxor.u32 %v2774, 2147483648
        %v2783 = vxor.u32 %v2775, 2147483648
        %v2784 = vxor.u32 %v2776, 2147483648
        %v2785 = vmul.f32 %v2777, 1.442695
        %v2786 = vpow.pop %v2785
        %v2787 = vmul.f32 %v2778, 1.442695
        %v2788 = vpow.pop %v2787
        %v2789 = vmul.f32 %v2779, 1.442695
        %v2790 = vpow.pop %v2789
        %v2791 = vmul.f32 %v2780, 1.442695
        %v2792 = vpow.pop %v2791
        %v2793 = vmul.f32 %v2781, 1.442695
        %v2794 = vpow.pop %v2793
        %v2795 = vmul.f32 %v2782, 1.442695
        %v2796 = vpow.pop %v2795
        %v2797 = vmul.f32 %v2783, 1.442695
        %v2798 = vpow.pop %v2797
        %v2799 = vmul.f32 %v2784, 1.442695
        %v2800 = vpow.pop %v2799
        %v2801 = vadd.f32 %v2786, 1.0
        %v2802 = vadd.f32 %v2788, 1.0
        %v2803 = vadd.f32 %v2790, 1.0
        %v2804 = vadd.f32 %v2792, 1.0
        %v2805 = vadd.f32 %v2794, 1.0
        %v2806 = vadd.f32 %v2796, 1.0
        %v2807 = vadd.f32 %v2798, 1.0
        %v2808 = vadd.f32 %v2800, 1.0
        %v2809 = vrcp.pop %v2801
        %v2810 = vmul.f32 1.0, %v2809
        %v2811 = vrcp.pop %v2802
        %v2812 = vmul.f32 1.0, %v2811
        %v2813 = vrcp.pop %v2803
        %v2814 = vmul.f32 1.0, %v2813
        %v2815 = vrcp.pop %v2804
        %v2816 = vmul.f32 1.0, %v2815
        %v2817 = vrcp.pop %v2805
        %v2818 = vmul.f32 1.0, %v2817
        %v2819 = vrcp.pop %v2806
        %v2820 = vmul.f32 1.0, %v2819
        %v2821 = vrcp.pop %v2807
        %v2822 = vmul.f32 1.0, %v2821
        %v2823 = vrcp.pop %v2808
        %v2824 = vmul.f32 1.0, %v2823
        %v2825 = vmul.f32 %v2769, %v2810
        %v2826 = vmul.f32 %v2770, %v2812
        %v2827 = vmul.f32 %v2771, %v2814
        %v2828 = vmul.f32 %v2772, %v2816
        %v2829 = vmul.f32 %v2773, %v2818
        %v2830 = vmul.f32 %v2774, %v2820
        %v2831 = vmul.f32 %v2775, %v2822
        %v2832 = vmul.f32 %v2776, %v2824
        %v2833 = vld [vmem:[%s452] sm:$0xf]
        %v2834 = vld [vmem:[%s452 + $0x4] sm:$0xf]
        %v2835 = vld [vmem:[%s452 + $0x8] sm:$0xf]
        %v2836 = vld [vmem:[%s452 + $0xc] sm:$0xf]
        %v2837 = vld [vmem:[%s452 + $0x10] sm:$0xf]
        %v2838 = vld [vmem:[%s452 + $0x14] sm:$0xf]
        %v2839 = vld [vmem:[%s452 + $0x18] sm:$0xf]
        %v2840 = vld [vmem:[%s452 + $0x1c] sm:$0xf]
        %v2841 = vld [vmem:[#allocation12] sm:$0xf]
        %v2842 = vld [vmem:[#allocation12 + $0x4] sm:$0xf]
        %v2843 = vld [vmem:[#allocation12 + $0x8] sm:$0xf]
        %v2844 = vld [vmem:[#allocation12 + $0xc] sm:$0xf]
        %v2845 = vld [vmem:[#allocation12 + $0x10] sm:$0xf]
        %v2846 = vld [vmem:[#allocation12 + $0x14] sm:$0xf]
        %v2847 = vld [vmem:[#allocation12 + $0x18] sm:$0xf]
        %v2848 = vld [vmem:[#allocation12 + $0x1c] sm:$0xf]
        %v2849 = vld [vmem:[#allocation12 + $0x20] sm:$0xf]
        %v2850 = vld [vmem:[#allocation12 + $0x24] sm:$0xf]
        %v2851 = vld [vmem:[#allocation12 + $0x28] sm:$0xf]
        %v2852 = vld [vmem:[#allocation12 + $0x2c] sm:$0xf]
        %v2853 = vld [vmem:[#allocation12 + $0x30] sm:$0xf]
        %v2854 = vld [vmem:[#allocation12 + $0x34] sm:$0xf]
        %v2855 = vld [vmem:[#allocation12 + $0x38] sm:$0xf]
        %v2856 = vld [vmem:[#allocation12 + $0x3c] sm:$0xf]
        %v2857 = vpack.c.bf16 %v2825, %v2825
        %v2858 = vpack.c.bf16 %v2826, %v2826
        %v2859 = vpack.c.bf16 %v2827, %v2827
        %v2860 = vpack.c.bf16 %v2828, %v2828
        %v2861 = vpack.c.bf16 %v2829, %v2829
        %v2862 = vpack.c.bf16 %v2830, %v2830
        %v2863 = vpack.c.bf16 %v2831, %v2831
        %v2864 = vpack.c.bf16 %v2832, %v2832
        %v2866 = vshrl.u32 %v2864, 16
        %v2868 = vrot.slane %v2866, 3
        %v2870 = vshrl.u32 %v2857, 16
        %v2872 = vrot.slane %v2870, 3
        %v2874 = vshrl.u32 %v2858, 16
        %v2876 = vrot.slane %v2874, 3
        %v2878 = vshrl.u32 %v2859, 16
        %v2880 = vrot.slane %v2878, 3
        %v2882 = vshrl.u32 %v2860, 16
        %v2884 = vrot.slane %v2882, 3
        %v2886 = vshrl.u32 %v2861, 16
        %v2888 = vrot.slane %v2886, 3
        %v2890 = vshrl.u32 %v2862, 16
        %v2892 = vrot.slane %v2890, 3
        %v2894 = vshrl.u32 %v2863, 16
        %v2896 = vrot.slane %v2894, 3
        %v2905 = vrot.slane %v2866, 7
        %v2906 = vshll.u32 %v2864, 16
        %v2908 = vor.u32 %v2905, %v2906
        %v2909 = vrot.slane %v2870, 7
        %v2910 = vshll.u32 %v2857, 16
        %v2912 = vor.u32 %v2909, %v2910
        %v2913 = vrot.slane %v2874, 7
        %v2914 = vshll.u32 %v2858, 16
        %v2916 = vor.u32 %v2913, %v2914
        %v2917 = vrot.slane %v2878, 7
        %v2918 = vshll.u32 %v2859, 16
        %v2920 = vor.u32 %v2917, %v2918
        %v2921 = vrot.slane %v2882, 7
        %v2922 = vshll.u32 %v2860, 16
        %v2924 = vor.u32 %v2921, %v2922
        %v2925 = vrot.slane %v2886, 7
        %v2926 = vshll.u32 %v2861, 16
        %v2928 = vor.u32 %v2925, %v2926
        %v2929 = vrot.slane %v2890, 7
        %v2930 = vshll.u32 %v2862, 16
        %v2932 = vor.u32 %v2929, %v2930
        %v2933 = vrot.slane %v2894, 7
        %v2934 = vshll.u32 %v2863, 16
        %v2936 = vor.u32 %v2933, %v2934
        %v2945 = vrot.slane %v2906, 4
        %v2946 = vrot.slane %v2910, 4
        %v2947 = vrot.slane %v2914, 4
        %v2948 = vrot.slane %v2918, 4
        %v2949 = vrot.slane %v2922, 4
        %v2950 = vrot.slane %v2926, 4
        %v2951 = vrot.slane %v2930, 4
        %v2952 = vrot.slane %v2934, 4
        %v2961 = vsel %vm925, %v2868, %v2908
        %v2962 = vsel %vm925, %v2872, %v2912
        %v2963 = vsel %vm925, %v2876, %v2916
        %v2964 = vsel %vm925, %v2880, %v2920
        %v2965 = vsel %vm925, %v2884, %v2924
        %v2966 = vsel %vm925, %v2888, %v2928
        %v2967 = vsel %vm925, %v2892, %v2932
        %v2968 = vsel %vm925, %v2896, %v2936
        %v2969 = vsel %vm936, %v2961, %v2945
        %v2970 = vsel %vm936, %v2962, %v2946
        %v2971 = vsel %vm936, %v2963, %v2947
        %v2972 = vsel %vm936, %v2964, %v2948
        %v2973 = vsel %vm936, %v2965, %v2949
        %v2974 = vsel %vm936, %v2966, %v2950
        %v2975 = vsel %vm936, %v2967, %v2951
        %v2976 = vsel %vm936, %v2968, %v2952
        %v2985 = vunpack.c.l.b16 %v2969
        %v2986 = vunpack.c.h.b16 %v2969
        %v2987 = vunpack.c.l.b16 %v2970
        %v2988 = vunpack.c.h.b16 %v2970
        %v2989 = vunpack.c.l.b16 %v2971
        %v2990 = vunpack.c.h.b16 %v2971
        %v2991 = vunpack.c.l.b16 %v2972
        %v2992 = vunpack.c.h.b16 %v2972
        %v2993 = vunpack.c.l.b16 %v2973
        %v2994 = vunpack.c.h.b16 %v2973
        %v2995 = vunpack.c.l.b16 %v2974
        %v2996 = vunpack.c.h.b16 %v2974
        %v2997 = vunpack.c.l.b16 %v2975
        %v2998 = vunpack.c.h.b16 %v2975
        %v2999 = vunpack.c.l.b16 %v2976
        %v3000 = vunpack.c.h.b16 %v2976
        %v3001 = vpack.c.b16 %v2985, %v2985
        %v3002 = vpack.c.b16 %v2986, %v2986
        %v3003 = vpack.c.b16 %v2987, %v2987
        %v3004 = vpack.c.b16 %v2988, %v2988
        %v3005 = vpack.c.b16 %v2989, %v2989
        %v3006 = vpack.c.b16 %v2990, %v2990
        %v3007 = vpack.c.b16 %v2991, %v2991
        %v3008 = vpack.c.b16 %v2992, %v2992
        %v3009 = vpack.c.b16 %v2993, %v2993
        %v3010 = vpack.c.b16 %v2994, %v2994
        %v3011 = vpack.c.b16 %v2995, %v2995
        %v3012 = vpack.c.b16 %v2996, %v2996
        %v3013 = vpack.c.b16 %v2997, %v2997
        %v3014 = vpack.c.b16 %v2998, %v2998
        %v3015 = vpack.c.b16 %v2999, %v2999
        %v3016 = vpack.c.b16 %v3000, %v3000
        %3033 = vst [vmem:[#allocation2] sm:$0xf] %v3001
        %3034 = vst [vmem:[#allocation2 + $0x4] sm:$0x1] %v3002
        %3035 = vst [vmem:[#allocation2 + $0x8] sm:$0xf] %v3003
        %3036 = vst [vmem:[#allocation2 + $0xc] sm:$0x1] %v3004
        %3037 = vst [vmem:[#allocation2 + $0x10] sm:$0xf] %v3005
        %3038 = vst [vmem:[#allocation2 + $0x14] sm:$0x1] %v3006
        %3039 = vst [vmem:[#allocation2 + $0x18] sm:$0xf] %v3007
        %3040 = vst [vmem:[#allocation2 + $0x1c] sm:$0x1] %v3008
        %3041 = vst [vmem:[#allocation2 + $0x20] sm:$0xf] %v3009
        %3042 = vst [vmem:[#allocation2 + $0x24] sm:$0x1] %v3010
        %3043 = vst [vmem:[#allocation2 + $0x28] sm:$0xf] %v3011
        %3044 = vst [vmem:[#allocation2 + $0x2c] sm:$0x1] %v3012
        %3045 = vst [vmem:[#allocation2 + $0x30] sm:$0xf] %v3013
        %3046 = vst [vmem:[#allocation2 + $0x34] sm:$0x1] %v3014
        %3047 = vst [vmem:[#allocation2 + $0x38] sm:$0xf] %v3015
        %3048 = vst [vmem:[#allocation2 + $0x3c] sm:$0x1] %v3016
        %3049 = vst [vmem:[#allocation2 + $0x40] sm:$0xf] %v3001
        %3050 = vst [vmem:[#allocation2 + $0x44] sm:$0x1] %v3002
        %3051 = vst [vmem:[#allocation2 + $0x48] sm:$0xf] %v3003
        %3052 = vst [vmem:[#allocation2 + $0x4c] sm:$0x1] %v3004
        %v3053 = vld [vmem:[%s10] sm:$0x1]
        %v3055 = vlaneseq
        %v3056 = vshrl.u32 %v3055, 7
        %v3057 = vsub.s32 0, %v3056
        %v3058 = vrot.slane %v3053, %v3057
        %v3068 = vunpack.c.l.b16 %v2833
        %v3069 = vunpack.c.l.b16 %v2834
        %v3070 = vunpack.c.l.b16 %v2835
        %v3071 = vunpack.c.l.b16 %v2836
        %v3072 = vunpack.c.l.b16 %v2837
        %v3073 = vunpack.c.l.b16 %v2838
        %v3074 = vunpack.c.l.b16 %v2839
        %v3075 = vunpack.c.l.b16 %v2840
        %v3076 = vpack.c.b16 %v3069, %v3068
        %v3077 = vpack.c.b16 %v3071, %v3070
        %v3078 = vpack.c.b16 %v3073, %v3072
        %v3079 = vpack.c.b16 %v3075, %v3074
        %v3100 = vunpack.c.l.b16 %v2841
        %v3101 = vunpack.c.l.b16 %v2842
        %v3102 = vunpack.c.l.b16 %v2843
        %v3103 = vunpack.c.l.b16 %v2844
        %v3104 = vunpack.c.l.b16 %v2845
        %v3105 = vunpack.c.l.b16 %v2846
        %v3106 = vunpack.c.l.b16 %v2847
        %v3107 = vunpack.c.l.b16 %v2848
        %v3108 = vunpack.c.l.b16 %v2849
        %v3109 = vunpack.c.l.b16 %v2850
        %v3110 = vunpack.c.l.b16 %v2851
        %v3111 = vunpack.c.l.b16 %v2852
        %v3112 = vunpack.c.l.b16 %v2853
        %v3113 = vunpack.c.l.b16 %v2854
        %v3114 = vunpack.c.l.b16 %v2855
        %v3115 = vunpack.c.l.b16 %v2856
        %v3116 = vpack.c.b16 %v3101, %v3100
        %v3117 = vpack.c.b16 %v3103, %v3102
        %v3118 = vpack.c.b16 %v3105, %v3104
        %v3119 = vpack.c.b16 %v3107, %v3106
        %v3120 = vpack.c.b16 %v3109, %v3108
        %v3121 = vpack.c.b16 %v3111, %v3110
        %v3122 = vpack.c.b16 %v3113, %v3112
        %v3123 = vpack.c.b16 %v3115, %v3114
        %3132 = vmatprep.subr.bf16.mxu0 0
        %3133 = vmatpush1.bf16.msra.mxu0 %v3116
        %3134 = vmatprep.subr.bf16.mxu0 0
        %3135 = vmatpush1.bf16.msra.mxu0 %v3117
        %3136 = vmatprep.subr.bf16.mxu0 0
        %3137 = vmatpush1.bf16.msra.mxu0 %v3118
        %3138 = vmatprep.subr.bf16.mxu0 0
        %3139 = vmatpush1.bf16.msra.mxu0 %v3119
        %3140 = vmatprep.subr.bf16.mxu0 0
        %3141 = vmatpush1.bf16.msra.mxu0 %v3120
        %3142 = vmatprep.subr.bf16.mxu0 0
        %3143 = vmatpush1.bf16.msra.mxu0 %v3121
        %3144 = vmatprep.subr.bf16.mxu0 0
        %3145 = vmatpush1.bf16.msra.mxu0 %v3122
        %3146 = vmatprep.subr.bf16.mxu0 0
        %3147 = vmatpush1.bf16.msra.mxu0 %v3123
        %3148 = vmatprep.subr.bf16.mxu0 0
        %3149 = vmatpush1.bf16.msra.mxu0 0
        %3150 = vmatprep.subr.bf16.mxu0 0
        %3151 = vmatpush1.bf16.msra.mxu0 0
        %3152 = vmatprep.subr.bf16.mxu0 0
        %3153 = vmatpush1.bf16.msra.mxu0 0
        %3154 = vmatprep.subr.bf16.mxu0 0
        %3155 = vmatpush1.bf16.msra.mxu0 0
        %3156 = vmatprep.subr.bf16.mxu0 0
        %3157 = vmatpush1.bf16.msra.mxu0 0
        %3158 = vmatprep.subr.bf16.mxu0 0
        %3159 = vmatpush1.bf16.msra.mxu0 0
        %3160 = vmatprep.subr.bf16.mxu0 0
        %3161 = vmatpush1.bf16.msra.mxu0 0
        %3162 = vmatprep.subr.bf16.mxu0 0
        %3163 = vmatpush1.bf16.msra.mxu0 0
        %3164 = vmatprep.mubr.bf16.mxu0 0
        %3165 = vmatmul.mubr.bf16.gmra.mrb[0].mxu0 %v3076
        %v3166 = vpop.f32.mrb[0].mxu0
        %v3167 = vadd.f32 %v3058, %v3166
        %v3168 = vpop.f32.mrb[0].mxu0
        %v3169 = vpop.f32.mrb[0].mxu0
        %v3170 = vadd.f32 %v3058, %v3169
        %v3171 = vpop.f32.mrb[0].mxu0
        %3172 = vmatprep.mubr.bf16.mxu0 0
        %3173 = vmatmul.mubr.bf16.gmra.mrb[0].mxu0 %v3077
        %v3174 = vpop.f32.mrb[0].mxu0
        %v3175 = vadd.f32 %v3058, %v3174
        %v3176 = vpop.f32.mrb[0].mxu0
        %v3177 = vpop.f32.mrb[0].mxu0
        %v3178 = vadd.f32 %v3058, %v3177
        %v3179 = vpop.f32.mrb[0].mxu0
        %3180 = vmatprep.mubr.bf16.mxu0 0
        %3181 = vmatmul.mubr.bf16.gmra.mrb[0].mxu0 %v3078
        %v3182 = vpop.f32.mrb[0].mxu0
        %v3183 = vadd.f32 %v3058, %v3182
        %v3184 = vpop.f32.mrb[0].mxu0
        %v3185 = vpop.f32.mrb[0].mxu0
        %v3186 = vadd.f32 %v3058, %v3185
        %v3187 = vpop.f32.mrb[0].mxu0
        %3188 = vmatprep.mubr.bf16.mxu0 0
        %3189 = vmatmul.mubr.bf16.gmra.mrb[0].mxu0 %v3079
        %v3190 = vpop.f32.mrb[0].mxu0
        %v3191 = vadd.f32 %v3058, %v3190
        %v3192 = vpop.f32.mrb[0].mxu0
        %v3193 = vpop.f32.mrb[0].mxu0
        %v3194 = vadd.f32 %v3058, %v3193
        %v3195 = vpop.f32.mrb[0].mxu0
        %3196 = vdwg.mxu0
        %v3197 = vld [vmem:[#allocation2] sm:$0xf]
        %v3198 = vld [vmem:[#allocation2 + $0x8] sm:$0xf]
        %v3199 = vld [vmem:[#allocation2 + $0x10] sm:$0xf]
        %v3200 = vld [vmem:[#allocation2 + $0x18] sm:$0xf]
        %v3201 = vld [vmem:[#allocation2 + $0x20] sm:$0xf]
        %v3202 = vld [vmem:[#allocation2 + $0x28] sm:$0xf]
        %v3203 = vld [vmem:[#allocation2 + $0x30] sm:$0xf]
        %v3204 = vld [vmem:[#allocation2 + $0x38] sm:$0xf]
        %v3205 = vld [vmem:[#allocation2 + $0x40] sm:$0xf]
        %v3206 = vld [vmem:[#allocation2 + $0x48] sm:$0xf]
        %v3217 = vunpack.c.l.b16 %v3197
        %v3218 = vunpack.c.l.b16 %v3198
        %v3219 = vunpack.c.l.b16 %v3199
        %v3220 = vunpack.c.l.b16 %v3200
        %v3221 = vunpack.c.l.b16 %v3201
        %v3222 = vunpack.c.l.b16 %v3202
        %v3223 = vunpack.c.l.b16 %v3203
        %v3224 = vunpack.c.l.b16 %v3204
        %v3225 = vunpack.c.l.b16 %v3205
        %v3226 = vunpack.c.l.b16 %v3206
        %v3227 = vld [vmem:[#allocation11] sm:$0xf]
        %v3228 = vld [vmem:[#allocation11 + $0x4] sm:$0xf]
        %v3229 = vld [vmem:[#allocation11 + $0x8] sm:$0xf]
        %v3230 = vld [vmem:[#allocation11 + $0xc] sm:$0xf]
        %v3231 = vld [vmem:[#allocation11 + $0x10] sm:$0xf]
        %v3232 = vld [vmem:[#allocation11 + $0x14] sm:$0xf]
        %v3233 = vld [vmem:[#allocation11 + $0x18] sm:$0xf]
        %v3234 = vld [vmem:[#allocation11 + $0x1c] sm:$0xf]
        %v3235 = vld [vmem:[#allocation11 + $0x20] sm:$0xf]
        %v3236 = vld [vmem:[#allocation11 + $0x24] sm:$0xf]
        %v3237 = vld [vmem:[#allocation11 + $0x28] sm:$0xf]
        %v3238 = vld [vmem:[#allocation11 + $0x2c] sm:$0xf]
        %v3239 = vld [vmem:[#allocation11 + $0x30] sm:$0xf]
        %v3240 = vld [vmem:[#allocation11 + $0x34] sm:$0xf]
        %v3241 = vld [vmem:[#allocation11 + $0x38] sm:$0xf]
        %v3242 = vld [vmem:[#allocation11 + $0x3c] sm:$0xf]
        %v3243 = vld [vmem:[#allocation11 + $0x40] sm:$0xf]
        %v3244 = vld [vmem:[#allocation11 + $0x44] sm:$0xf]
        %v3245 = vld [vmem:[#allocation11 + $0x48] sm:$0xf]
        %v3246 = vld [vmem:[#allocation11 + $0x4c] sm:$0xf]
        %v3247 = vld [vmem:[#allocation11 + $0x50] sm:$0xf]
        %v3248 = vld [vmem:[#allocation11 + $0x54] sm:$0xf]
        %v3249 = vld [vmem:[#allocation11 + $0x58] sm:$0xf]
        %v3250 = vld [vmem:[#allocation11 + $0x5c] sm:$0xf]
        %v3251 = vld [vmem:[#allocation11 + $0x60] sm:$0xf]
        %v3252 = vld [vmem:[#allocation11 + $0x64] sm:$0xf]
        %v3253 = vld [vmem:[#allocation11 + $0x68] sm:$0xf]
        %v3254 = vld [vmem:[#allocation11 + $0x6c] sm:$0xf]
        %v3255 = vld [vmem:[#allocation11 + $0x70] sm:$0xf]
        %v3256 = vld [vmem:[#allocation11 + $0x74] sm:$0xf]
        %v3257 = vld [vmem:[#allocation11 + $0x78] sm:$0xf]
        %v3258 = vld [vmem:[#allocation11 + $0x7c] sm:$0xf]
        %v3259 = vld [vmem:[#allocation11 + $0x80] sm:$0xf]
        %v3260 = vld [vmem:[#allocation11 + $0x84] sm:$0xf]
        %v3261 = vld [vmem:[#allocation11 + $0x88] sm:$0xf]
        %v3262 = vld [vmem:[#allocation11 + $0x8c] sm:$0xf]
        %v3263 = vld [vmem:[#allocation11 + $0x90] sm:$0xf]
        %v3264 = vld [vmem:[#allocation11 + $0x94] sm:$0xf]
        %v3265 = vld [vmem:[#allocation11 + $0x98] sm:$0xf]
        %v3266 = vld [vmem:[#allocation11 + $0x9c] sm:$0xf]
        %v3267 = vld [vmem:[#allocation11 + $0xa0] sm:$0xf]
        %v3268 = vld [vmem:[#allocation11 + $0xa4] sm:$0xf]
        %v3269 = vld [vmem:[#allocation11 + $0xa8] sm:$0xf]
        %v3270 = vld [vmem:[#allocation11 + $0xac] sm:$0xf]
        %v3271 = vld [vmem:[#allocation11 + $0xb0] sm:$0xf]
        %v3272 = vld [vmem:[#allocation11 + $0xb4] sm:$0xf]
        %v3273 = vld [vmem:[#allocation11 + $0xb8] sm:$0xf]
        %v3274 = vld [vmem:[#allocation11 + $0xbc] sm:$0xf]
        %v3275 = vpack.c.b16 %v3218, %v3217
        %v3276 = vpack.c.b16 %v3219, %v3218
        %v3277 = vpack.c.b16 %v3220, %v3219
        %v3278 = vpack.c.b16 %v3221, %v3220
        %v3279 = vpack.c.b16 %v3222, %v3221
        %v3280 = vpack.c.b16 %v3223, %v3222
        %v3281 = vpack.c.b16 %v3224, %v3223
        %v3282 = vpack.c.b16 %v3225, %v3224
        %v3283 = vpack.c.b16 %v3226, %v3225
        %v3341 = vunpack.c.l.b16 %v3227
        %v3342 = vunpack.c.l.b16 %v3228
        %v3343 = vunpack.c.l.b16 %v3229
        %v3344 = vunpack.c.l.b16 %v3230
        %v3345 = vunpack.c.l.b16 %v3231
        %v3346 = vunpack.c.l.b16 %v3232
        %v3347 = vunpack.c.l.b16 %v3233
        %v3348 = vunpack.c.l.b16 %v3234
        %v3349 = vunpack.c.l.b16 %v3235
        %v3350 = vunpack.c.l.b16 %v3236
        %v3351 = vunpack.c.l.b16 %v3237
        %v3352 = vunpack.c.l.b16 %v3238
        %v3353 = vunpack.c.l.b16 %v3239
        %v3354 = vunpack.c.l.b16 %v3240
        %v3355 = vunpack.c.l.b16 %v3241
        %v3356 = vunpack.c.l.b16 %v3242
        %v3357 = vunpack.c.l.b16 %v3243
        %v3358 = vunpack.c.l.b16 %v3244
        %v3359 = vunpack.c.l.b16 %v3245
        %v3360 = vunpack.c.l.b16 %v3246
        %v3361 = vunpack.c.l.b16 %v3247
        %v3362 = vunpack.c.l.b16 %v3248
        %v3363 = vunpack.c.l.b16 %v3249
        %v3364 = vunpack.c.l.b16 %v3250
        %v3365 = vunpack.c.l.b16 %v3251
        %v3366 = vunpack.c.l.b16 %v3252
        %v3367 = vunpack.c.l.b16 %v3253
        %v3368 = vunpack.c.l.b16 %v3254
        %v3369 = vunpack.c.l.b16 %v3255
        %v3370 = vunpack.c.l.b16 %v3256
        %v3371 = vunpack.c.l.b16 %v3257
        %v3372 = vunpack.c.l.b16 %v3258
        %v3373 = vunpack.c.l.b16 %v3259
        %v3374 = vunpack.c.l.b16 %v3260
        %v3375 = vunpack.c.l.b16 %v3261
        %v3376 = vunpack.c.l.b16 %v3262
        %v3377 = vunpack.c.l.b16 %v3263
        %v3378 = vunpack.c.l.b16 %v3264
        %v3379 = vunpack.c.l.b16 %v3265
        %v3380 = vunpack.c.l.b16 %v3266
        %v3381 = vunpack.c.l.b16 %v3267
        %v3382 = vunpack.c.l.b16 %v3268
        %v3383 = vunpack.c.l.b16 %v3269
        %v3384 = vunpack.c.l.b16 %v3270
        %v3385 = vunpack.c.l.b16 %v3271
        %v3386 = vunpack.c.l.b16 %v3272
        %v3387 = vunpack.c.l.b16 %v3273
        %v3388 = vunpack.c.l.b16 %v3274
        %v3389 = vpack.c.b16 %v3342, %v3341
        %v3390 = vpack.c.b16 %v3344, %v3343
        %v3391 = vpack.c.b16 %v3346, %v3345
        %v3392 = vpack.c.b16 %v3348, %v3347
        %v3393 = vpack.c.b16 %v3350, %v3349
        %v3394 = vpack.c.b16 %v3352, %v3351
        %v3395 = vpack.c.b16 %v3354, %v3353
        %v3396 = vpack.c.b16 %v3356, %v3355
        %v3397 = vpack.c.b16 %v3358, %v3357
        %v3398 = vpack.c.b16 %v3360, %v3359
        %v3399 = vpack.c.b16 %v3362, %v3361
        %v3400 = vpack.c.b16 %v3364, %v3363
        %v3401 = vpack.c.b16 %v3366, %v3365
        %v3402 = vpack.c.b16 %v3368, %v3367
        %v3403 = vpack.c.b16 %v3370, %v3369
        %v3404 = vpack.c.b16 %v3372, %v3371
        %v3405 = vpack.c.b16 %v3374, %v3373
        %v3406 = vpack.c.b16 %v3376, %v3375
        %v3407 = vpack.c.b16 %v3378, %v3377
        %v3408 = vpack.c.b16 %v3380, %v3379
        %v3409 = vpack.c.b16 %v3382, %v3381
        %v3410 = vpack.c.b16 %v3384, %v3383
        %v3411 = vpack.c.b16 %v3386, %v3385
        %v3412 = vpack.c.b16 %v3388, %v3387
        %3437 = vmatprep.subr.bf16.mxu0 0
        %3438 = vmatpush1.bf16.msra.mxu0 %v3389
        %3439 = vmatprep.subr.bf16.mxu0 0
        %3440 = vmatpush1.bf16.msra.mxu0 %v3390
        %3441 = vmatprep.subr.bf16.mxu0 0
        %3442 = vmatpush1.bf16.msra.mxu0 %v3391
        %3443 = vmatprep.subr.bf16.mxu0 0
        %3444 = vmatpush1.bf16.msra.mxu0 %v3392
        %3445 = vmatprep.subr.bf16.mxu0 0
        %3446 = vmatpush1.bf16.msra.mxu0 %v3393
        %3447 = vmatprep.subr.bf16.mxu0 0
        %3448 = vmatpush1.bf16.msra.mxu0 %v3394
        %3449 = vmatprep.subr.bf16.mxu0 0
        %3450 = vmatpush1.bf16.msra.mxu0 %v3395
        %3451 = vmatprep.subr.bf16.mxu0 0
        %3452 = vmatpush1.bf16.msra.mxu0 %v3396
        %3453 = vmatprep.subr.bf16.mxu0 0
        %3454 = vmatpush1.bf16.msra.mxu0 %v3397
        %3455 = vmatprep.subr.bf16.mxu0 0
        %3456 = vmatpush1.bf16.msra.mxu0 %v3398
        %3457 = vmatprep.subr.bf16.mxu0 0
        %3458 = vmatpush1.bf16.msra.mxu0 %v3399
        %3459 = vmatprep.subr.bf16.mxu0 0
        %3460 = vmatpush1.bf16.msra.mxu0 %v3400
        %3461 = vmatprep.subr.bf16.mxu0 0
        %3462 = vmatpush1.bf16.msra.mxu0 %v3401
        %3463 = vmatprep.subr.bf16.mxu0 0
        %3464 = vmatpush1.bf16.msra.mxu0 %v3402
        %3465 = vmatprep.subr.bf16.mxu0 0
        %3466 = vmatpush1.bf16.msra.mxu0 %v3403
        %3467 = vmatprep.subr.bf16.mxu0 0
        %3468 = vmatpush1.bf16.msra.mxu0 %v3404
        %3469 = vmatprep.mubr.bf16.mxu0 %v3276
        %3470 = vmatmul.mubr.bf16.gmra.mrb[0].mxu0 %v3275
        %v3471 = vpop.f32.mrb[0].mxu0
        %v3472 = vadd.f32 0.0, %v3471
        %v3473 = vpop.f32.mrb[0].mxu0
        %v3474 = vpop.f32.mrb[0].mxu0
        %v3475 = vadd.f32 0.0, %v3474
        %v3476 = vpop.f32.mrb[0].mxu0
        %3477 = vmatprep.mubr.bf16.mxu0 %v3278
        %3478 = vmatmul.mubr.bf16.gmra.mrb[0].mxu0 %v3277
        %v3479 = vpop.f32.mrb[0].mxu0
        %v3480 = vadd.f32 0.0, %v3479
        %v3481 = vpop.f32.mrb[0].mxu0
        %v3482 = vpop.f32.mrb[0].mxu0
        %v3483 = vadd.f32 0.0, %v3482
        %v3484 = vpop.f32.mrb[0].mxu0
        %3485 = vmatprep.mubr.bf16.mxu0 %v3280
        %3486 = vmatmul.mubr.bf16.gmra.mrb[0].mxu0 %v3279
        %v3487 = vpop.f32.mrb[0].mxu0
        %v3488 = vadd.f32 0.0, %v3487
        %v3489 = vpop.f32.mrb[0].mxu0
        %v3490 = vpop.f32.mrb[0].mxu0
        %v3491 = vadd.f32 0.0, %v3490
        %v3492 = vpop.f32.mrb[0].mxu0
        %3493 = vmatprep.mubr.bf16.mxu0 %v3282
        %3494 = vmatmul.mubr.bf16.gmra.mrb[0].mxu0 %v3281
        %v3495 = vpop.f32.mrb[0].mxu0
        %v3496 = vadd.f32 0.0, %v3495
        %v3497 = vpop.f32.mrb[0].mxu0
        %v3498 = vpop.f32.mrb[0].mxu0
        %v3499 = vadd.f32 0.0, %v3498
        %v3500 = vpop.f32.mrb[0].mxu0
        %3501 = vdwg.mxu0
        %3502 = vmatprep.subr.bf16.mxu0 0
        %3503 = vmatpush1.bf16.msra.mxu0 %v3405
        %3504 = vmatprep.subr.bf16.mxu0 0
        %3505 = vmatpush1.bf16.msra.mxu0 %v3406
        %3506 = vmatprep.subr.bf16.mxu0 0
        %3507 = vmatpush1.bf16.msra.mxu0 %v3407
        %3508 = vmatprep.subr.bf16.mxu0 0
        %3509 = vmatpush1.bf16.msra.mxu0 %v3408
        %3510 = vmatprep.subr.bf16.mxu0 0
        %3511 = vmatpush1.bf16.msra.mxu0 %v3409
        %3512 = vmatprep.subr.bf16.mxu0 0
        %3513 = vmatpush1.bf16.msra.mxu0 %v3410
        %3514 = vmatprep.subr.bf16.mxu0 0
        %3515 = vmatpush1.bf16.msra.mxu0 %v3411
        %3516 = vmatprep.subr.bf16.mxu0 0
        %3517 = vmatpush1.bf16.msra.mxu0 %v3412
        %3518 = vmatprep.subr.bf16.mxu0 0
        %3519 = vmatpush1.bf16.msra.mxu0 0
        %3520 = vmatprep.subr.bf16.mxu0 0
        %3521 = vmatpush1.bf16.msra.mxu0 0
        %3522 = vmatprep.subr.bf16.mxu0 0
        %3523 = vmatpush1.bf16.msra.mxu0 0
        %3524 = vmatprep.subr.bf16.mxu0 0
        %3525 = vmatpush1.bf16.msra.mxu0 0
        %3526 = vmatprep.subr.bf16.mxu0 0
        %3527 = vmatpush1.bf16.msra.mxu0 0
        %3528 = vmatprep.subr.bf16.mxu0 0
        %3529 = vmatpush1.bf16.msra.mxu0 0
        %3530 = vmatprep.subr.bf16.mxu0 0
        %3531 = vmatpush1.bf16.msra.mxu0 0
        %3532 = vmatprep.subr.bf16.mxu0 0
        %3533 = vmatpush1.bf16.msra.mxu0 0
        %3534 = vmatprep.mubr.bf16.mxu0 0
        %3535 = vmatmul.mubr.bf16.gmra.mrb[0].mxu0 %v3277
        %v3536 = vpop.f32.mrb[0].mxu0
        %v3537 = vadd.f32 %v3472, %v3536
        %v3538 = vpop.f32.mrb[0].mxu0
        %v3539 = vpop.f32.mrb[0].mxu0
        %v3540 = vadd.f32 %v3475, %v3539
        %v3541 = vpop.f32.mrb[0].mxu0
        %3542 = vmatprep.mubr.bf16.mxu0 0
        %3543 = vmatmul.mubr.bf16.gmra.mrb[0].mxu0 %v3279
        %v3544 = vpop.f32.mrb[0].mxu0
        %v3545 = vadd.f32 %v3480, %v3544
        %v3546 = vpop.f32.mrb[0].mxu0
        %v3547 = vpop.f32.mrb[0].mxu0
        %v3548 = vadd.f32 %v3483, %v3547
        %v3549 = vpop.f32.mrb[0].mxu0
        %3550 = vmatprep.mubr.bf16.mxu0 0
        %3551 = vmatmul.mubr.bf16.gmra.mrb[0].mxu0 %v3281
        %v3552 = vpop.f32.mrb[0].mxu0
        %v3553 = vadd.f32 %v3488, %v3552
        %v3554 = vpop.f32.mrb[0].mxu0
        %v3555 = vpop.f32.mrb[0].mxu0
        %v3556 = vadd.f32 %v3491, %v3555
        %v3557 = vpop.f32.mrb[0].mxu0
        %3558 = vmatprep.mubr.bf16.mxu0 0
        %3559 = vmatmul.mubr.bf16.gmra.mrb[0].mxu0 %v3283
        %v3560 = vpop.f32.mrb[0].mxu0
        %v3561 = vadd.f32 %v3496, %v3560
        %v3562 = vpop.f32.mrb[0].mxu0
        %v3563 = vpop.f32.mrb[0].mxu0
        %v3564 = vadd.f32 %v3499, %v3563
        %v3565 = vpop.f32.mrb[0].mxu0
        %3566 = vdwg.mxu0
        %v3567 = vadd.f32 %v3167, %v3537
        %v3568 = vadd.f32 %v3170, %v3540
        %v3569 = vadd.f32 %v3175, %v3545
        %v3570 = vadd.f32 %v3178, %v3548
        %v3571 = vadd.f32 %v3183, %v3553
        %v3572 = vadd.f32 %v3186, %v3556
        %v3573 = vadd.f32 %v3191, %v3561
        %v3574 = vadd.f32 %v3194, %v3564
        %v3575 = vld [vmem:[#allocation2] sm:$0xf]
        %v3576 = vld [vmem:[#allocation2 + $0x4] sm:$0x1]
        %v3577 = vld [vmem:[#allocation2 + $0x8] sm:$0xf]
        %v3578 = vld [vmem:[#allocation2 + $0xc] sm:$0x1]
        %v3579 = vld [vmem:[#allocation2 + $0x10] sm:$0xf]
        %v3580 = vld [vmem:[#allocation2 + $0x14] sm:$0x1]
        %v3581 = vld [vmem:[#allocation2 + $0x18] sm:$0xf]
        %v3582 = vld [vmem:[#allocation2 + $0x1c] sm:$0x1]
        %v3583 = vld [vmem:[#allocation2 + $0x20] sm:$0xf]
        %v3584 = vld [vmem:[#allocation2 + $0x24] sm:$0x1]
        %v3585 = vld [vmem:[#allocation2 + $0x28] sm:$0xf]
        %v3586 = vld [vmem:[#allocation2 + $0x2c] sm:$0x1]
        %v3587 = vld [vmem:[#allocation2 + $0x30] sm:$0xf]
        %v3588 = vld [vmem:[#allocation2 + $0x34] sm:$0x1]
        %v3589 = vld [vmem:[#allocation2 + $0x38] sm:$0xf]
        %v3590 = vld [vmem:[#allocation2 + $0x3c] sm:$0x1]
        %v3591 = vld [vmem:[#allocation2 + $0x40] sm:$0xf]
        %v3592 = vld [vmem:[#allocation2 + $0x44] sm:$0x1]
        %v3593 = vld [vmem:[#allocation2 + $0x48] sm:$0xf]
        %v3594 = vld [vmem:[#allocation2 + $0x4c] sm:$0x1]
        %v3611 = vunpack.c.l.b16 %v3575
        %v3612 = vunpack.c.l.b16 %v3576
        %v3613 = vunpack.c.l.b16 %v3577
        %v3614 = vunpack.c.l.b16 %v3578
        %v3615 = vunpack.c.l.b16 %v3579
        %v3616 = vunpack.c.l.b16 %v3580
        %v3617 = vunpack.c.l.b16 %v3581
        %v3618 = vunpack.c.l.b16 %v3582
        %v3619 = vunpack.c.l.b16 %v3583
        %v3620 = vunpack.c.l.b16 %v3584
        %v3621 = vunpack.c.l.b16 %v3585
        %v3622 = vunpack.c.l.b16 %v3586
        %v3623 = vunpack.c.l.b16 %v3587
        %v3624 = vunpack.c.l.b16 %v3588
        %v3625 = vunpack.c.l.b16 %v3589
        %v3626 = vunpack.c.l.b16 %v3590
        %v3629 = vunpack.c.l.b16 %v3591
        %v3630 = vunpack.c.l.b16 %v3592
        %v3633 = vunpack.c.l.b16 %v3593
        %v3634 = vunpack.c.l.b16 %v3594
        %v3635 = vpack.c.b16 %v3613, %v3611
        %v3636 = vpack.c.b16 %v3615, %v3615
        %v3637 = vpack.c.b16 %v3614, %v3612
        %v3638 = vpack.c.b16 %v3616, %v3616
        %v3639 = vpack.c.b16 %v3615, %v3613
        %v3640 = vpack.c.b16 %v3617, %v3617
        %v3641 = vpack.c.b16 %v3616, %v3614
        %v3642 = vpack.c.b16 %v3618, %v3618
        %v3643 = vpack.c.b16 %v3617, %v3615
        %v3644 = vpack.c.b16 %v3619, %v3619
        %v3645 = vpack.c.b16 %v3618, %v3616
        %v3646 = vpack.c.b16 %v3620, %v3620
        %v3647 = vpack.c.b16 %v3619, %v3617
        %v3648 = vpack.c.b16 %v3621, %v3621
        %v3649 = vpack.c.b16 %v3620, %v3618
        %v3650 = vpack.c.b16 %v3622, %v3622
        %v3651 = vpack.c.b16 %v3621, %v3619
        %v3652 = vpack.c.b16 %v3623, %v3623
        %v3653 = vpack.c.b16 %v3622, %v3620
        %v3654 = vpack.c.b16 %v3624, %v3624
        %v3655 = vpack.c.b16 %v3623, %v3621
        %v3656 = vpack.c.b16 %v3625, %v3625
        %v3657 = vpack.c.b16 %v3624, %v3622
        %v3658 = vpack.c.b16 %v3626, %v3626
        %v3659 = vpack.c.b16 %v3625, %v3623
        %v3660 = vpack.c.b16 %v3629, %v3629
        %v3661 = vpack.c.b16 %v3626, %v3624
        %v3662 = vpack.c.b16 %v3630, %v3630
        %v3663 = vpack.c.b16 %v3629, %v3625
        %v3664 = vpack.c.b16 %v3633, %v3633
        %v3665 = vpack.c.b16 %v3630, %v3626
        %v3666 = vpack.c.b16 %v3634, %v3634
        %v3668 = vshrl.u32 %v3635, 16
        %v3670 = vrot.slane %v3668, 4
        %v3671 = vshll.u32 %v3635, 16
        %v3673 = vrot.slane %v3671, 5
        %v3674 = vor.u32 %v3670, %v3673
        %v3675 = vrot.slane %v3674, 4
        %v3677 = vshll.u32 %v3637, 16
        %v3679 = vrot.slane %v3677, 5
        %v3680 = vsel %vm1163, %v3675, %v3679
        %v3682 = vshrl.u32 %v3636, 16
        %v3684 = vrot.slane %v3682, 4
        %v3685 = vshll.u32 %v3636, 16
        %v3687 = vrot.slane %v3685, 5
        %v3688 = vor.u32 %v3684, %v3687
        %v3689 = vrot.slane %v3688, 4
        %v3691 = vshll.u32 %v3638, 16
        %v3693 = vrot.slane %v3691, 5
        %v3694 = vsel %vm1163, %v3689, %v3693
        %v3696 = vshrl.u32 %v3639, 16
        %v3698 = vrot.slane %v3696, 4
        %v3699 = vshll.u32 %v3639, 16
        %v3701 = vrot.slane %v3699, 5
        %v3702 = vor.u32 %v3698, %v3701
        %v3703 = vrot.slane %v3702, 4
        %v3705 = vshll.u32 %v3641, 16
        %v3707 = vrot.slane %v3705, 5
        %v3708 = vsel %vm1163, %v3703, %v3707
        %v3710 = vshrl.u32 %v3640, 16
        %v3712 = vrot.slane %v3710, 4
        %v3713 = vshll.u32 %v3640, 16
        %v3715 = vrot.slane %v3713, 5
        %v3716 = vor.u32 %v3712, %v3715
        %v3717 = vrot.slane %v3716, 4
        %v3719 = vshll.u32 %v3642, 16
        %v3721 = vrot.slane %v3719, 5
        %v3722 = vsel %vm1163, %v3717, %v3721
        %v3724 = vshrl.u32 %v3643, 16
        %v3726 = vrot.slane %v3724, 4
        %v3727 = vshll.u32 %v3643, 16
        %v3729 = vrot.slane %v3727, 5
        %v3730 = vor.u32 %v3726, %v3729
        %v3731 = vrot.slane %v3730, 4
        %v3733 = vshll.u32 %v3645, 16
        %v3735 = vrot.slane %v3733, 5
        %v3736 = vsel %vm1163, %v3731, %v3735
        %v3738 = vshrl.u32 %v3644, 16
        %v3740 = vrot.slane %v3738, 4
        %v3741 = vshll.u32 %v3644, 16
        %v3743 = vrot.slane %v3741, 5
        %v3744 = vor.u32 %v3740, %v3743
        %v3745 = vrot.slane %v3744, 4
        %v3747 = vshll.u32 %v3646, 16
        %v3749 = vrot.slane %v3747, 5
        %v3750 = vsel %vm1163, %v3745, %v3749
        %v3752 = vshrl.u32 %v3647, 16
        %v3754 = vrot.slane %v3752, 4
        %v3755 = vshll.u32 %v3647, 16
        %v3757 = vrot.slane %v3755, 5
        %v3758 = vor.u32 %v3754, %v3757
        %v3759 = vrot.slane %v3758, 4
        %v3761 = vshll.u32 %v3649, 16
        %v3763 = vrot.slane %v3761, 5
        %v3764 = vsel %vm1163, %v3759, %v3763
        %v3766 = vshrl.u32 %v3648, 16
        %v3768 = vrot.slane %v3766, 4
        %v3769 = vshll.u32 %v3648, 16
        %v3771 = vrot.slane %v3769, 5
        %v3772 = vor.u32 %v3768, %v3771
        %v3773 = vrot.slane %v3772, 4
        %v3775 = vshll.u32 %v3650, 16
        %v3777 = vrot.slane %v3775, 5
        %v3778 = vsel %vm1163, %v3773, %v3777
        %v3780 = vshrl.u32 %v3651, 16
        %v3782 = vrot.slane %v3780, 4
        %v3783 = vshll.u32 %v3651, 16
        %v3785 = vrot.slane %v3783, 5
        %v3786 = vor.u32 %v3782, %v3785
        %v3787 = vrot.slane %v3786, 4
        %v3789 = vshll.u32 %v3653, 16
        %v3791 = vrot.slane %v3789, 5
        %v3792 = vsel %vm1163, %v3787, %v3791
        %v3794 = vshrl.u32 %v3652, 16
        %v3796 = vrot.slane %v3794, 4
        %v3797 = vshll.u32 %v3652, 16
        %v3799 = vrot.slane %v3797, 5
        %v3800 = vor.u32 %v3796, %v3799
        %v3801 = vrot.slane %v3800, 4
        %v3803 = vshll.u32 %v3654, 16
        %v3805 = vrot.slane %v3803, 5
        %v3806 = vsel %vm1163, %v3801, %v3805
        %v3808 = vshrl.u32 %v3655, 16
        %v3810 = vrot.slane %v3808, 4
        %v3811 = vshll.u32 %v3655, 16
        %v3813 = vrot.slane %v3811, 5
        %v3814 = vor.u32 %v3810, %v3813
        %v3815 = vrot.slane %v3814, 4
        %v3817 = vshll.u32 %v3657, 16
        %v3819 = vrot.slane %v3817, 5
        %v3820 = vsel %vm1163, %v3815, %v3819
        %v3822 = vshrl.u32 %v3656, 16
        %v3824 = vrot.slane %v3822, 4
        %v3825 = vshll.u32 %v3656, 16
        %v3827 = vrot.slane %v3825, 5
        %v3828 = vor.u32 %v3824, %v3827
        %v3829 = vrot.slane %v3828, 4
        %v3831 = vshll.u32 %v3658, 16
        %v3833 = vrot.slane %v3831, 5
        %v3834 = vsel %vm1163, %v3829, %v3833
        %v3836 = vshrl.u32 %v3659, 16
        %v3838 = vrot.slane %v3836, 4
        %v3839 = vshll.u32 %v3659, 16
        %v3841 = vrot.slane %v3839, 5
        %v3842 = vor.u32 %v3838, %v3841
        %v3843 = vrot.slane %v3842, 4
        %v3845 = vshll.u32 %v3661, 16
        %v3847 = vrot.slane %v3845, 5
        %v3848 = vsel %vm1163, %v3843, %v3847
        %v3850 = vshrl.u32 %v3660, 16
        %v3852 = vrot.slane %v3850, 4
        %v3853 = vshll.u32 %v3660, 16
        %v3855 = vrot.slane %v3853, 5
        %v3856 = vor.u32 %v3852, %v3855
        %v3857 = vrot.slane %v3856, 4
        %v3859 = vshll.u32 %v3662, 16
        %v3861 = vrot.slane %v3859, 5
        %v3862 = vsel %vm1163, %v3857, %v3861
        %v3864 = vshrl.u32 %v3663, 16
        %v3866 = vrot.slane %v3864, 4
        %v3867 = vshll.u32 %v3663, 16
        %v3869 = vrot.slane %v3867, 5
        %v3870 = vor.u32 %v3866, %v3869
        %v3871 = vrot.slane %v3870, 4
        %v3873 = vshll.u32 %v3665, 16
        %v3875 = vrot.slane %v3873, 5
        %v3876 = vsel %vm1163, %v3871, %v3875
        %v3878 = vshrl.u32 %v3664, 16
        %v3880 = vrot.slane %v3878, 4
        %v3881 = vshll.u32 %v3664, 16
        %v3883 = vrot.slane %v3881, 5
        %v3884 = vor.u32 %v3880, %v3883
        %v3885 = vrot.slane %v3884, 4
        %v3887 = vshll.u32 %v3666, 16
        %v3889 = vrot.slane %v3887, 5
        %v3890 = vsel %vm1163, %v3885, %v3889
        %s3891 = scalar_lea.vmem [#allocation11], 192
        %v3892 = vld [vmem:[%s3891] sm:$0xf]
        %v3893 = vld [vmem:[%s3891 + $0x4] sm:$0xf]
        %v3894 = vld [vmem:[%s3891 + $0x8] sm:$0xf]
        %v3895 = vld [vmem:[%s3891 + $0xc] sm:$0xf]
        %v3896 = vld [vmem:[%s3891 + $0x10] sm:$0xf]
        %v3897 = vld [vmem:[%s3891 + $0x14] sm:$0xf]
        %v3898 = vld [vmem:[%s3891 + $0x18] sm:$0xf]
        %v3899 = vld [vmem:[%s3891 + $0x1c] sm:$0xf]
        %v3900 = vld [vmem:[%s3891 + $0x20] sm:$0xf]
        %v3901 = vld [vmem:[%s3891 + $0x24] sm:$0xf]
        %v3902 = vld [vmem:[%s3891 + $0x28] sm:$0xf]
        %v3903 = vld [vmem:[%s3891 + $0x2c] sm:$0xf]
        %v3904 = vld [vmem:[%s3891 + $0x30] sm:$0xf]
        %v3905 = vld [vmem:[%s3891 + $0x34] sm:$0xf]
        %v3906 = vld [vmem:[%s3891 + $0x38] sm:$0xf]
        %v3907 = vld [vmem:[%s3891 + $0x3c] sm:$0xf]
        %v3908 = vld [vmem:[%s3891 + $0x40] sm:$0xf]
        %v3909 = vld [vmem:[%s3891 + $0x44] sm:$0xf]
        %v3910 = vld [vmem:[%s3891 + $0x48] sm:$0xf]
        %v3911 = vld [vmem:[%s3891 + $0x4c] sm:$0xf]
        %v3912 = vld [vmem:[%s3891 + $0x50] sm:$0xf]
        %v3913 = vld [vmem:[%s3891 + $0x54] sm:$0xf]
        %v3914 = vld [vmem:[%s3891 + $0x58] sm:$0xf]
        %v3915 = vld [vmem:[%s3891 + $0x5c] sm:$0xf]
        %v3916 = vld [vmem:[%s3891 + $0x60] sm:$0xf]
        %v3917 = vld [vmem:[%s3891 + $0x64] sm:$0xf]
        %v3918 = vld [vmem:[%s3891 + $0x68] sm:$0xf]
        %v3919 = vld [vmem:[%s3891 + $0x6c] sm:$0xf]
        %v3920 = vld [vmem:[%s3891 + $0x70] sm:$0xf]
        %v3921 = vld [vmem:[%s3891 + $0x74] sm:$0xf]
        %v3922 = vld [vmem:[%s3891 + $0x78] sm:$0xf]
        %v3923 = vld [vmem:[%s3891 + $0x7c] sm:$0xf]
        %v3924 = vld [vmem:[%s3891 + $0x80] sm:$0xf]
        %v3925 = vld [vmem:[%s3891 + $0x84] sm:$0xf]
        %v3926 = vld [vmem:[%s3891 + $0x88] sm:$0xf]
        %v3927 = vld [vmem:[%s3891 + $0x8c] sm:$0xf]
        %v3928 = vld [vmem:[%s3891 + $0x90] sm:$0xf]
        %v3929 = vld [vmem:[%s3891 + $0x94] sm:$0xf]
        %v3930 = vld [vmem:[%s3891 + $0x98] sm:$0xf]
        %v3931 = vld [vmem:[%s3891 + $0x9c] sm:$0xf]
        %v3932 = vld [vmem:[%s3891 + $0xa0] sm:$0xf]
        %v3933 = vld [vmem:[%s3891 + $0xa4] sm:$0xf]
        %v3934 = vld [vmem:[%s3891 + $0xa8] sm:$0xf]
        %v3935 = vld [vmem:[%s3891 + $0xac] sm:$0xf]
        %v3936 = vld [vmem:[%s3891 + $0xb0] sm:$0xf]
        %v3937 = vld [vmem:[%s3891 + $0xb4] sm:$0xf]
        %v3938 = vld [vmem:[%s3891 + $0xb8] sm:$0xf]
        %v3939 = vld [vmem:[%s3891 + $0xbc] sm:$0xf]
        %v3940 = vunpack.c.l.b16 %v3680
        %v3941 = vunpack.c.h.b16 %v3680
        %v3942 = vunpack.c.l.b16 %v3694
        %v3943 = vunpack.c.l.b16 %v3708
        %v3944 = vunpack.c.h.b16 %v3708
        %v3945 = vunpack.c.l.b16 %v3722
        %v3946 = vunpack.c.l.b16 %v3736
        %v3947 = vunpack.c.h.b16 %v3736
        %v3948 = vunpack.c.l.b16 %v3750
        %v3949 = vunpack.c.l.b16 %v3764
        %v3950 = vunpack.c.h.b16 %v3764
        %v3951 = vunpack.c.l.b16 %v3778
        %v3952 = vunpack.c.l.b16 %v3792
        %v3953 = vunpack.c.h.b16 %v3792
        %v3954 = vunpack.c.l.b16 %v3806
        %v3955 = vunpack.c.l.b16 %v3820
        %v3956 = vunpack.c.h.b16 %v3820
        %v3957 = vunpack.c.l.b16 %v3834
        %v3958 = vunpack.c.l.b16 %v3848
        %v3959 = vunpack.c.h.b16 %v3848
        %v3960 = vunpack.c.l.b16 %v3862
        %v3961 = vunpack.c.l.b16 %v3876
        %v3962 = vunpack.c.h.b16 %v3876
        %v3963 = vunpack.c.l.b16 %v3890
        %v3964 = vpack.c.b16 %v3943, %v3940
        %v3965 = vpack.c.b16 %v3944, %v3941
        %v3966 = vpack.c.b16 %v3945, %v3942
        %v3967 = vpack.c.b16 %v3949, %v3946
        %v3968 = vpack.c.b16 %v3950, %v3947
        %v3969 = vpack.c.b16 %v3951, %v3948
        %v3970 = vpack.c.b16 %v3955, %v3952
        %v3971 = vpack.c.b16 %v3956, %v3953
        %v3972 = vpack.c.b16 %v3957, %v3954
        %v3973 = vpack.c.b16 %v3961, %v3958
        %v3974 = vpack.c.b16 %v3962, %v3959
        %v3975 = vpack.c.b16 %v3963, %v3960
        %v4036 = vunpack.c.l.b16 %v3892
        %v4037 = vunpack.c.l.b16 %v3893
        %v4038 = vunpack.c.l.b16 %v3894
        %v4039 = vunpack.c.l.b16 %v3895
        %v4040 = vunpack.c.l.b16 %v3896
        %v4041 = vunpack.c.l.b16 %v3897
        %v4042 = vunpack.c.l.b16 %v3898
        %v4043 = vunpack.c.l.b16 %v3899
        %v4044 = vunpack.c.l.b16 %v3900
        %v4045 = vunpack.c.l.b16 %v3901
        %v4046 = vunpack.c.l.b16 %v3902
        %v4047 = vunpack.c.l.b16 %v3903
        %v4048 = vunpack.c.l.b16 %v3904
        %v4049 = vunpack.c.l.b16 %v3905
        %v4050 = vunpack.c.l.b16 %v3906
        %v4051 = vunpack.c.l.b16 %v3907
        %v4052 = vunpack.c.l.b16 %v3908
        %v4053 = vunpack.c.l.b16 %v3909
        %v4054 = vunpack.c.l.b16 %v3910
        %v4055 = vunpack.c.l.b16 %v3911
        %v4056 = vunpack.c.l.b16 %v3912
        %v4057 = vunpack.c.l.b16 %v3913
        %v4058 = vunpack.c.l.b16 %v3914
        %v4059 = vunpack.c.l.b16 %v3915
        %v4060 = vunpack.c.l.b16 %v3916
        %v4061 = vunpack.c.l.b16 %v3917
        %v4062 = vunpack.c.l.b16 %v3918
        %v4063 = vunpack.c.l.b16 %v3919
        %v4064 = vunpack.c.l.b16 %v3920
        %v4065 = vunpack.c.l.b16 %v3921
        %v4066 = vunpack.c.l.b16 %v3922
        %v4067 = vunpack.c.l.b16 %v3923
        %v4068 = vunpack.c.l.b16 %v3924
        %v4069 = vunpack.c.l.b16 %v3925
        %v4070 = vunpack.c.l.b16 %v3926
        %v4071 = vunpack.c.l.b16 %v3927
        %v4072 = vunpack.c.l.b16 %v3928
        %v4073 = vunpack.c.l.b16 %v3929
        %v4074 = vunpack.c.l.b16 %v3930
        %v4075 = vunpack.c.l.b16 %v3931
        %v4076 = vunpack.c.l.b16 %v3932
        %v4077 = vunpack.c.l.b16 %v3933
        %v4078 = vunpack.c.l.b16 %v3934
        %v4079 = vunpack.c.l.b16 %v3935
        %v4080 = vunpack.c.l.b16 %v3936
        %v4081 = vunpack.c.l.b16 %v3937
        %v4082 = vunpack.c.l.b16 %v3938
        %v4083 = vunpack.c.l.b16 %v3939
        %v4084 = vpack.c.b16 %v4037, %v4036
        %v4085 = vpack.c.b16 %v4039, %v4038
        %v4086 = vpack.c.b16 %v4041, %v4040
        %v4087 = vpack.c.b16 %v4043, %v4042
        %v4088 = vpack.c.b16 %v4045, %v4044
        %v4089 = vpack.c.b16 %v4047, %v4046
        %v4090 = vpack.c.b16 %v4049, %v4048
        %v4091 = vpack.c.b16 %v4051, %v4050
        %v4092 = vpack.c.b16 %v4053, %v4052
        %v4093 = vpack.c.b16 %v4055, %v4054
        %v4094 = vpack.c.b16 %v4057, %v4056
        %v4095 = vpack.c.b16 %v4059, %v4058
        %v4096 = vpack.c.b16 %v4061, %v4060
        %v4097 = vpack.c.b16 %v4063, %v4062
        %v4098 = vpack.c.b16 %v4065, %v4064
        %v4099 = vpack.c.b16 %v4067, %v4066
        %v4100 = vpack.c.b16 %v4069, %v4068
        %v4101 = vpack.c.b16 %v4071, %v4070
        %v4102 = vpack.c.b16 %v4073, %v4072
        %v4103 = vpack.c.b16 %v4075, %v4074
        %v4104 = vpack.c.b16 %v4077, %v4076
        %v4105 = vpack.c.b16 %v4079, %v4078
        %v4106 = vpack.c.b16 %v4081, %v4080
        %v4107 = vpack.c.b16 %v4083, %v4082
        %4132 = vmatprep.subr.bf16.mxu0 0
        %4133 = vmatpush1.bf16.msra.mxu0 %v4084
        %4134 = vmatprep.subr.bf16.mxu0 0
        %4135 = vmatpush1.bf16.msra.mxu0 %v4085
        %4136 = vmatprep.subr.bf16.mxu0 0
        %4137 = vmatpush1.bf16.msra.mxu0 %v4086
        %4138 = vmatprep.subr.bf16.mxu0 0
        %4139 = vmatpush1.bf16.msra.mxu0 %v4087
        %4140 = vmatprep.subr.bf16.mxu0 0
        %4141 = vmatpush1.bf16.msra.mxu0 %v4088
        %4142 = vmatprep.subr.bf16.mxu0 0
        %4143 = vmatpush1.bf16.msra.mxu0 %v4089
        %4144 = vmatprep.subr.bf16.mxu0 0
        %4145 = vmatpush1.bf16.msra.mxu0 %v4090
        %4146 = vmatprep.subr.bf16.mxu0 0
        %4147 = vmatpush1.bf16.msra.mxu0 %v4091
        %4148 = vmatprep.subr.bf16.mxu0 0
        %4149 = vmatpush1.bf16.msra.mxu0 %v4092
        %4150 = vmatprep.subr.bf16.mxu0 0
        %4151 = vmatpush1.bf16.msra.mxu0 %v4093
        %4152 = vmatprep.subr.bf16.mxu0 0
        %4153 = vmatpush1.bf16.msra.mxu0 %v4094
        %4154 = vmatprep.subr.bf16.mxu0 0
        %4155 = vmatpush1.bf16.msra.mxu0 %v4095
        %4156 = vmatprep.subr.bf16.mxu0 0
        %4157 = vmatpush1.bf16.msra.mxu0 %v4096
        %4158 = vmatprep.subr.bf16.mxu0 0
        %4159 = vmatpush1.bf16.msra.mxu0 %v4097
        %4160 = vmatprep.subr.bf16.mxu0 0
        %4161 = vmatpush1.bf16.msra.mxu0 %v4098
        %4162 = vmatprep.subr.bf16.mxu0 0
        %4163 = vmatpush1.bf16.msra.mxu0 %v4099
        %4164 = vmatprep.mubr.bf16.mxu0 %v3965
        %4165 = vmatmul.mubr.bf16.gmra.mrb[0].mxu0 %v3964
        %v4166 = vpop.f32.mrb[0].mxu0
        %v4167 = vadd.f32 0.0, %v4166
        %v4168 = vpop.f32.mrb[0].mxu0
        %v4169 = vpop.f32.mrb[0].mxu0
        %v4170 = vadd.f32 0.0, %v4169
        %v4171 = vpop.f32.mrb[0].mxu0
        %4172 = vmatprep.mubr.bf16.mxu0 %v3968
        %4173 = vmatmul.mubr.bf16.gmra.mrb[0].mxu0 %v3967
        %v4174 = vpop.f32.mrb[0].mxu0
        %v4175 = vadd.f32 0.0, %v4174
        %v4176 = vpop.f32.mrb[0].mxu0
        %v4177 = vpop.f32.mrb[0].mxu0
        %v4178 = vadd.f32 0.0, %v4177
        %v4179 = vpop.f32.mrb[0].mxu0
        %4180 = vmatprep.mubr.bf16.mxu0 %v3971
        %4181 = vmatmul.mubr.bf16.gmra.mrb[0].mxu0 %v3970
        %v4182 = vpop.f32.mrb[0].mxu0
        %v4183 = vadd.f32 0.0, %v4182
        %v4184 = vpop.f32.mrb[0].mxu0
        %v4185 = vpop.f32.mrb[0].mxu0
        %v4186 = vadd.f32 0.0, %v4185
        %v4187 = vpop.f32.mrb[0].mxu0
        %4188 = vmatprep.mubr.bf16.mxu0 %v3974
        %4189 = vmatmul.mubr.bf16.gmra.mrb[0].mxu0 %v3973
        %v4190 = vpop.f32.mrb[0].mxu0
        %v4191 = vadd.f32 0.0, %v4190
        %v4192 = vpop.f32.mrb[0].mxu0
        %v4193 = vpop.f32.mrb[0].mxu0
        %v4194 = vadd.f32 0.0, %v4193
        %v4195 = vpop.f32.mrb[0].mxu0
        %4196 = vdwg.mxu0
        %4197 = vmatprep.subr.bf16.mxu0 0
        %4198 = vmatpush1.bf16.msra.mxu0 %v4100
        %4199 = vmatprep.subr.bf16.mxu0 0
        %4200 = vmatpush1.bf16.msra.mxu0 %v4101
        %4201 = vmatprep.subr.bf16.mxu0 0
        %4202 = vmatpush1.bf16.msra.mxu0 %v4102
        %4203 = vmatprep.subr.bf16.mxu0 0
        %4204 = vmatpush1.bf16.msra.mxu0 %v4103
        %4205 = vmatprep.subr.bf16.mxu0 0
        %4206 = vmatpush1.bf16.msra.mxu0 %v4104
        %4207 = vmatprep.subr.bf16.mxu0 0
        %4208 = vmatpush1.bf16.msra.mxu0 %v4105
        %4209 = vmatprep.subr.bf16.mxu0 0
        %4210 = vmatpush1.bf16.msra.mxu0 %v4106
        %4211 = vmatprep.subr.bf16.mxu0 0
        %4212 = vmatpush1.bf16.msra.mxu0 %v4107
        %4213 = vmatprep.subr.bf16.mxu0 0
        %4214 = vmatpush1.bf16.msra.mxu0 0
        %4215 = vmatprep.subr.bf16.mxu0 0
        %4216 = vmatpush1.bf16.msra.mxu0 0
        %4217 = vmatprep.subr.bf16.mxu0 0
        %4218 = vmatpush1.bf16.msra.mxu0 0
        %4219 = vmatprep.subr.bf16.mxu0 0
        %4220 = vmatpush1.bf16.msra.mxu0 0
        %4221 = vmatprep.subr.bf16.mxu0 0
        %4222 = vmatpush1.bf16.msra.mxu0 0
        %4223 = vmatprep.subr.bf16.mxu0 0
        %4224 = vmatpush1.bf16.msra.mxu0 0
        %4225 = vmatprep.subr.bf16.mxu0 0
        %4226 = vmatpush1.bf16.msra.mxu0 0
        %4227 = vmatprep.subr.bf16.mxu0 0
        %4228 = vmatpush1.bf16.msra.mxu0 0
        %4229 = vmatprep.mubr.bf16.mxu0 0
        %4230 = vmatmul.mubr.bf16.gmra.mrb[0].mxu0 %v3966
        %v4231 = vpop.f32.mrb[0].mxu0
        %v4232 = vadd.f32 %v4167, %v4231
        %v4233 = vpop.f32.mrb[0].mxu0
        %v4234 = vpop.f32.mrb[0].mxu0
        %v4235 = vadd.f32 %v4170, %v4234
        %v4236 = vpop.f32.mrb[0].mxu0
        %4237 = vmatprep.mubr.bf16.mxu0 0
        %4238 = vmatmul.mubr.bf16.gmra.mrb[0].mxu0 %v3969
        %v4239 = vpop.f32.mrb[0].mxu0
        %v4240 = vadd.f32 %v4175, %v4239
        %v4241 = vpop.f32.mrb[0].mxu0
        %v4242 = vpop.f32.mrb[0].mxu0
        %v4243 = vadd.f32 %v4178, %v4242
        %v4244 = vpop.f32.mrb[0].mxu0
        %4245 = vmatprep.mubr.bf16.mxu0 0
        %4246 = vmatmul.mubr.bf16.gmra.mrb[0].mxu0 %v3972
        %v4247 = vpop.f32.mrb[0].mxu0
        %v4248 = vadd.f32 %v4183, %v4247
        %v4249 = vpop.f32.mrb[0].mxu0
        %v4250 = vpop.f32.mrb[0].mxu0
        %v4251 = vadd.f32 %v4186, %v4250
        %v4252 = vpop.f32.mrb[0].mxu0
        %4253 = vmatprep.mubr.bf16.mxu0 0
        %4254 = vmatmul.mubr.bf16.gmra.mrb[0].mxu0 %v3975
        %v4255 = vpop.f32.mrb[0].mxu0
        %v4256 = vadd.f32 %v4191, %v4255
        %v4257 = vpop.f32.mrb[0].mxu0
        %v4258 = vpop.f32.mrb[0].mxu0
        %v4259 = vadd.f32 %v4194, %v4258
        %v4260 = vpop.f32.mrb[0].mxu0
        %4261 = vdwg.mxu0
        %v4262 = vadd.f32 %v3567, %v4232
        %v4263 = vadd.f32 %v3568, %v4235
        %v4264 = vadd.f32 %v3569, %v4240
        %v4265 = vadd.f32 %v3570, %v4243
        %v4266 = vadd.f32 %v3571, %v4248
        %v4267 = vadd.f32 %v3572, %v4251
        %v4268 = vadd.f32 %v3573, %v4256
        %v4269 = vadd.f32 %v3574, %v4259
        %v4270 = vld [vmem:[#allocation2] sm:$0xe]
        %v4271 = vld [vmem:[#allocation2 + $0x8] sm:$0xe]
        %v4272 = vld [vmem:[#allocation2 + $0x10] sm:$0xe]
        %v4273 = vld [vmem:[#allocation2 + $0x18] sm:$0xe]
        %v4274 = vld [vmem:[#allocation2 + $0x20] sm:$0xe]
        %v4275 = vld [vmem:[#allocation2 + $0x28] sm:$0xe]
        %v4276 = vld [vmem:[#allocation2 + $0x30] sm:$0xe]
        %v4277 = vld [vmem:[#allocation2 + $0x38] sm:$0xe]
        %v4278 = vld [vmem:[#allocation2 + $0x40] sm:$0xe]
        %v4279 = vld [vmem:[#allocation2 + $0x48] sm:$0xe]
        %v4288 = vunpack.c.l.b16 %v4270
        %v4289 = vunpack.c.l.b16 %v4271
        %v4290 = vunpack.c.l.b16 %v4272
        %v4291 = vunpack.c.l.b16 %v4273
        %v4292 = vunpack.c.l.b16 %v4274
        %v4293 = vunpack.c.l.b16 %v4275
        %v4294 = vunpack.c.l.b16 %v4276
        %v4295 = vunpack.c.l.b16 %v4277
        %v4297 = vunpack.c.l.b16 %v4278
        %v4299 = vunpack.c.l.b16 %v4279
        %v4300 = vpack.c.b16 %v4289, %v4288
        %v4301 = vpack.c.b16 %v4290, %v4290
        %v4302 = vpack.c.b16 %v4290, %v4289
        %v4303 = vpack.c.b16 %v4291, %v4291
        %v4304 = vpack.c.b16 %v4291, %v4290
        %v4305 = vpack.c.b16 %v4292, %v4292
        %v4306 = vpack.c.b16 %v4292, %v4291
        %v4307 = vpack.c.b16 %v4293, %v4293
        %v4308 = vpack.c.b16 %v4293, %v4292
        %v4309 = vpack.c.b16 %v4294, %v4294
        %v4310 = vpack.c.b16 %v4294, %v4293
        %v4311 = vpack.c.b16 %v4295, %v4295
        %v4312 = vpack.c.b16 %v4295, %v4294
        %v4313 = vpack.c.b16 %v4297, %v4297
        %v4314 = vpack.c.b16 %v4297, %v4295
        %v4315 = vpack.c.b16 %v4299, %v4299
        %v4316 = vrot.slane %v4300, 5
        %v4317 = vrot.slane %v4316, 4
        %v4318 = vrot.slane %v3637, 5
        %v4319 = vsel %vm2091, %v4317, %v4318
        %v4320 = vrot.slane %v4301, 5
        %v4321 = vrot.slane %v4320, 4
        %v4322 = vrot.slane %v3638, 5
        %v4323 = vsel %vm2091, %v4321, %v4322
        %v4324 = vrot.slane %v4302, 5
        %v4325 = vrot.slane %v4324, 4
        %v4326 = vrot.slane %v3641, 5
        %v4327 = vsel %vm2091, %v4325, %v4326
        %v4328 = vrot.slane %v4303, 5
        %v4329 = vrot.slane %v4328, 4
        %v4330 = vrot.slane %v3642, 5
        %v4331 = vsel %vm2091, %v4329, %v4330
        %v4332 = vrot.slane %v4304, 5
        %v4333 = vrot.slane %v4332, 4
        %v4334 = vrot.slane %v3645, 5
        %v4335 = vsel %vm2091, %v4333, %v4334
        %v4336 = vrot.slane %v4305, 5
        %v4337 = vrot.slane %v4336, 4
        %v4338 = vrot.slane %v3646, 5
        %v4339 = vsel %vm2091, %v4337, %v4338
        %v4340 = vrot.slane %v4306, 5
        %v4341 = vrot.slane %v4340, 4
        %v4342 = vrot.slane %v3649, 5
        %v4343 = vsel %vm2091, %v4341, %v4342
        %v4344 = vrot.slane %v4307, 5
        %v4345 = vrot.slane %v4344, 4
        %v4346 = vrot.slane %v3650, 5
        %v4347 = vsel %vm2091, %v4345, %v4346
        %v4348 = vrot.slane %v4308, 5
        %v4349 = vrot.slane %v4348, 4
        %v4350 = vrot.slane %v3653, 5
        %v4351 = vsel %vm2091, %v4349, %v4350
        %v4352 = vrot.slane %v4309, 5
        %v4353 = vrot.slane %v4352, 4
        %v4354 = vrot.slane %v3654, 5
        %v4355 = vsel %vm2091, %v4353, %v4354
        %v4356 = vrot.slane %v4310, 5
        %v4357 = vrot.slane %v4356, 4
        %v4358 = vrot.slane %v3657, 5
        %v4359 = vsel %vm2091, %v4357, %v4358
        %v4360 = vrot.slane %v4311, 5
        %v4361 = vrot.slane %v4360, 4
        %v4362 = vrot.slane %v3658, 5
        %v4363 = vsel %vm2091, %v4361, %v4362
        %v4364 = vrot.slane %v4312, 5
        %v4365 = vrot.slane %v4364, 4
        %v4366 = vrot.slane %v3661, 5
        %v4367 = vsel %vm2091, %v4365, %v4366
        %v4368 = vrot.slane %v4313, 5
        %v4369 = vrot.slane %v4368, 4
        %v4370 = vrot.slane %v3662, 5
        %v4371 = vsel %vm2091, %v4369, %v4370
        %v4372 = vrot.slane %v4314, 5
        %v4373 = vrot.slane %v4372, 4
        %v4374 = vrot.slane %v3665, 5
        %v4375 = vsel %vm2091, %v4373, %v4374
        %v4376 = vrot.slane %v4315, 5
        %v4377 = vrot.slane %v4376, 4
        %v4378 = vrot.slane %v3666, 5
        %v4379 = vsel %vm2091, %v4377, %v4378
        %s4380 = scalar_lea.vmem [#allocation11], 384
        %v4381 = vld [vmem:[%s4380] sm:$0xf]
        %v4382 = vld [vmem:[%s4380 + $0x4] sm:$0xf]
        %v4383 = vld [vmem:[%s4380 + $0x8] sm:$0xf]
        %v4384 = vld [vmem:[%s4380 + $0xc] sm:$0xf]
        %v4385 = vld [vmem:[%s4380 + $0x10] sm:$0xf]
        %v4386 = vld [vmem:[%s4380 + $0x14] sm:$0xf]
        %v4387 = vld [vmem:[%s4380 + $0x18] sm:$0xf]
        %v4388 = vld [vmem:[%s4380 + $0x1c] sm:$0xf]
        %v4389 = vld [vmem:[%s4380 + $0x20] sm:$0xf]
        %v4390 = vld [vmem:[%s4380 + $0x24] sm:$0xf]
        %v4391 = vld [vmem:[%s4380 + $0x28] sm:$0xf]
        %v4392 = vld [vmem:[%s4380 + $0x2c] sm:$0xf]
        %v4393 = vld [vmem:[%s4380 + $0x30] sm:$0xf]
        %v4394 = vld [vmem:[%s4380 + $0x34] sm:$0xf]
        %v4395 = vld [vmem:[%s4380 + $0x38] sm:$0xf]
        %v4396 = vld [vmem:[%s4380 + $0x3c] sm:$0xf]
        %v4397 = vld [vmem:[%s4380 + $0x40] sm:$0xf]
        %v4398 = vld [vmem:[%s4380 + $0x44] sm:$0xf]
        %v4399 = vld [vmem:[%s4380 + $0x48] sm:$0xf]
        %v4400 = vld [vmem:[%s4380 + $0x4c] sm:$0xf]
        %v4401 = vld [vmem:[%s4380 + $0x50] sm:$0xf]
        %v4402 = vld [vmem:[%s4380 + $0x54] sm:$0xf]
        %v4403 = vld [vmem:[%s4380 + $0x58] sm:$0xf]
        %v4404 = vld [vmem:[%s4380 + $0x5c] sm:$0xf]
        %v4405 = vld [vmem:[%s4380 + $0x60] sm:$0xf]
        %v4406 = vld [vmem:[%s4380 + $0x64] sm:$0xf]
        %v4407 = vld [vmem:[%s4380 + $0x68] sm:$0xf]
        %v4408 = vld [vmem:[%s4380 + $0x6c] sm:$0xf]
        %v4409 = vld [vmem:[%s4380 + $0x70] sm:$0xf]
        %v4410 = vld [vmem:[%s4380 + $0x74] sm:$0xf]
        %v4411 = vld [vmem:[%s4380 + $0x78] sm:$0xf]
        %v4412 = vld [vmem:[%s4380 + $0x7c] sm:$0xf]
        %v4413 = vld [vmem:[%s4380 + $0x80] sm:$0xf]
        %v4414 = vld [vmem:[%s4380 + $0x84] sm:$0xf]
        %v4415 = vld [vmem:[%s4380 + $0x88] sm:$0xf]
        %v4416 = vld [vmem:[%s4380 + $0x8c] sm:$0xf]
        %v4417 = vld [vmem:[%s4380 + $0x90] sm:$0xf]
        %v4418 = vld [vmem:[%s4380 + $0x94] sm:$0xf]
        %v4419 = vld [vmem:[%s4380 + $0x98] sm:$0xf]
        %v4420 = vld [vmem:[%s4380 + $0x9c] sm:$0xf]
        %v4421 = vld [vmem:[%s4380 + $0xa0] sm:$0xf]
        %v4422 = vld [vmem:[%s4380 + $0xa4] sm:$0xf]
        %v4423 = vld [vmem:[%s4380 + $0xa8] sm:$0xf]
        %v4424 = vld [vmem:[%s4380 + $0xac] sm:$0xf]
        %v4425 = vld [vmem:[%s4380 + $0xb0] sm:$0xf]
        %v4426 = vld [vmem:[%s4380 + $0xb4] sm:$0xf]
        %v4427 = vld [vmem:[%s4380 + $0xb8] sm:$0xf]
        %v4428 = vld [vmem:[%s4380 + $0xbc] sm:$0xf]
        %v4429 = vunpack.c.l.b16 %v4319
        %v4430 = vunpack.c.h.b16 %v4319
        %v4431 = vunpack.c.l.b16 %v4323
        %v4432 = vunpack.c.l.b16 %v4327
        %v4433 = vunpack.c.h.b16 %v4327
        %v4434 = vunpack.c.l.b16 %v4331
        %v4435 = vunpack.c.l.b16 %v4335
        %v4436 = vunpack.c.h.b16 %v4335
        %v4437 = vunpack.c.l.b16 %v4339
        %v4438 = vunpack.c.l.b16 %v4343
        %v4439 = vunpack.c.h.b16 %v4343
        %v4440 = vunpack.c.l.b16 %v4347
        %v4441 = vunpack.c.l.b16 %v4351
        %v4442 = vunpack.c.h.b16 %v4351
        %v4443 = vunpack.c.l.b16 %v4355
        %v4444 = vunpack.c.l.b16 %v4359
        %v4445 = vunpack.c.h.b16 %v4359
        %v4446 = vunpack.c.l.b16 %v4363
        %v4447 = vunpack.c.l.b16 %v4367
        %v4448 = vunpack.c.h.b16 %v4367
        %v4449 = vunpack.c.l.b16 %v4371
        %v4450 = vunpack.c.l.b16 %v4375
        %v4451 = vunpack.c.h.b16 %v4375
        %v4452 = vunpack.c.l.b16 %v4379
        %v4453 = vpack.c.b16 %v4432, %v4429
        %v4454 = vpack.c.b16 %v4433, %v4430
        %v4455 = vpack.c.b16 %v4434, %v4431
        %v4456 = vpack.c.b16 %v4438, %v4435
        %v4457 = vpack.c.b16 %v4439, %v4436
        %v4458 = vpack.c.b16 %v4440, %v4437
        %v4459 = vpack.c.b16 %v4444, %v4441
        %v4460 = vpack.c.b16 %v4445, %v4442
        %v4461 = vpack.c.b16 %v4446, %v4443
        %v4462 = vpack.c.b16 %v4450, %v4447
        %v4463 = vpack.c.b16 %v4451, %v4448
        %v4464 = vpack.c.b16 %v4452, %v4449
        %v4525 = vunpack.c.l.b16 %v4381
        %v4526 = vunpack.c.l.b16 %v4382
        %v4527 = vunpack.c.l.b16 %v4383
        %v4528 = vunpack.c.l.b16 %v4384
        %v4529 = vunpack.c.l.b16 %v4385
        %v4530 = vunpack.c.l.b16 %v4386
        %v4531 = vunpack.c.l.b16 %v4387
        %v4532 = vunpack.c.l.b16 %v4388
        %v4533 = vunpack.c.l.b16 %v4389
        %v4534 = vunpack.c.l.b16 %v4390
        %v4535 = vunpack.c.l.b16 %v4391
        %v4536 = vunpack.c.l.b16 %v4392
        %v4537 = vunpack.c.l.b16 %v4393
        %v4538 = vunpack.c.l.b16 %v4394
        %v4539 = vunpack.c.l.b16 %v4395
        %v4540 = vunpack.c.l.b16 %v4396
        %v4541 = vunpack.c.l.b16 %v4397
        %v4542 = vunpack.c.l.b16 %v4398
        %v4543 = vunpack.c.l.b16 %v4399
        %v4544 = vunpack.c.l.b16 %v4400
        %v4545 = vunpack.c.l.b16 %v4401
        %v4546 = vunpack.c.l.b16 %v4402
        %v4547 = vunpack.c.l.b16 %v4403
        %v4548 = vunpack.c.l.b16 %v4404
        %v4549 = vunpack.c.l.b16 %v4405
        %v4550 = vunpack.c.l.b16 %v4406
        %v4551 = vunpack.c.l.b16 %v4407
        %v4552 = vunpack.c.l.b16 %v4408
        %v4553 = vunpack.c.l.b16 %v4409
        %v4554 = vunpack.c.l.b16 %v4410
        %v4555 = vunpack.c.l.b16 %v4411
        %v4556 = vunpack.c.l.b16 %v4412
        %v4557 = vunpack.c.l.b16 %v4413
        %v4558 = vunpack.c.l.b16 %v4414
        %v4559 = vunpack.c.l.b16 %v4415
        %v4560 = vunpack.c.l.b16 %v4416
        %v4561 = vunpack.c.l.b16 %v4417
        %v4562 = vunpack.c.l.b16 %v4418
        %v4563 = vunpack.c.l.b16 %v4419
        %v4564 = vunpack.c.l.b16 %v4420
        %v4565 = vunpack.c.l.b16 %v4421
        %v4566 = vunpack.c.l.b16 %v4422
        %v4567 = vunpack.c.l.b16 %v4423
        %v4568 = vunpack.c.l.b16 %v4424
        %v4569 = vunpack.c.l.b16 %v4425
        %v4570 = vunpack.c.l.b16 %v4426
        %v4571 = vunpack.c.l.b16 %v4427
        %v4572 = vunpack.c.l.b16 %v4428
        %v4573 = vpack.c.b16 %v4526, %v4525
        %v4574 = vpack.c.b16 %v4528, %v4527
        %v4575 = vpack.c.b16 %v4530, %v4529
        %v4576 = vpack.c.b16 %v4532, %v4531
        %v4577 = vpack.c.b16 %v4534, %v4533
        %v4578 = vpack.c.b16 %v4536, %v4535
        %v4579 = vpack.c.b16 %v4538, %v4537
        %v4580 = vpack.c.b16 %v4540, %v4539
        %v4581 = vpack.c.b16 %v4542, %v4541
        %v4582 = vpack.c.b16 %v4544, %v4543
        %v4583 = vpack.c.b16 %v4546, %v4545
        %v4584 = vpack.c.b16 %v4548, %v4547
        %v4585 = vpack.c.b16 %v4550, %v4549
        %v4586 = vpack.c.b16 %v4552, %v4551
        %v4587 = vpack.c.b16 %v4554, %v4553
        %v4588 = vpack.c.b16 %v4556, %v4555
        %v4589 = vpack.c.b16 %v4558, %v4557
        %v4590 = vpack.c.b16 %v4560, %v4559
        %v4591 = vpack.c.b16 %v4562, %v4561
        %v4592 = vpack.c.b16 %v4564, %v4563
        %v4593 = vpack.c.b16 %v4566, %v4565
        %v4594 = vpack.c.b16 %v4568, %v4567
        %v4595 = vpack.c.b16 %v4570, %v4569
        %v4596 = vpack.c.b16 %v4572, %v4571
        %4621 = vmatprep.subr.bf16.mxu0 0
        %4622 = vmatpush1.bf16.msra.mxu0 %v4573
        %4623 = vmatprep.subr.bf16.mxu0 0
        %4624 = vmatpush1.bf16.msra.mxu0 %v4574
        %4625 = vmatprep.subr.bf16.mxu0 0
        %4626 = vmatpush1.bf16.msra.mxu0 %v4575
        %4627 = vmatprep.subr.bf16.mxu0 0
        %4628 = vmatpush1.bf16.msra.mxu0 %v4576
        %4629 = vmatprep.subr.bf16.mxu0 0
        %4630 = vmatpush1.bf16.msra.mxu0 %v4577
        %4631 = vmatprep.subr.bf16.mxu0 0
        %4632 = vmatpush1.bf16.msra.mxu0 %v4578
        %4633 = vmatprep.subr.bf16.mxu0 0
        %4634 = vmatpush1.bf16.msra.mxu0 %v4579
        %4635 = vmatprep.subr.bf16.mxu0 0
        %4636 = vmatpush1.bf16.msra.mxu0 %v4580
        %4637 = vmatprep.subr.bf16.mxu0 0
        %4638 = vmatpush1.bf16.msra.mxu0 %v4581
        %4639 = vmatprep.subr.bf16.mxu0 0
        %4640 = vmatpush1.bf16.msra.mxu0 %v4582
        %4641 = vmatprep.subr.bf16.mxu0 0
        %4642 = vmatpush1.bf16.msra.mxu0 %v4583
        %4643 = vmatprep.subr.bf16.mxu0 0
        %4644 = vmatpush1.bf16.msra.mxu0 %v4584
        %4645 = vmatprep.subr.bf16.mxu0 0
        %4646 = vmatpush1.bf16.msra.mxu0 %v4585
        %4647 = vmatprep.subr.bf16.mxu0 0
        %4648 = vmatpush1.bf16.msra.mxu0 %v4586
        %4649 = vmatprep.subr.bf16.mxu0 0
        %4650 = vmatpush1.bf16.msra.mxu0 %v4587
        %4651 = vmatprep.subr.bf16.mxu0 0
        %4652 = vmatpush1.bf16.msra.mxu0 %v4588
        %4653 = vmatprep.mubr.bf16.mxu0 %v4454
        %4654 = vmatmul.mubr.bf16.gmra.mrb[0].mxu0 %v4453
        %v4655 = vpop.f32.mrb[0].mxu0
        %v4656 = vadd.f32 0.0, %v4655
        %v4657 = vpop.f32.mrb[0].mxu0
        %v4658 = vpop.f32.mrb[0].mxu0
        %v4659 = vadd.f32 0.0, %v4658
        %v4660 = vpop.f32.mrb[0].mxu0
        %4661 = vmatprep.mubr.bf16.mxu0 %v4457
        %4662 = vmatmul.mubr.bf16.gmra.mrb[0].mxu0 %v4456
        %v4663 = vpop.f32.mrb[0].mxu0
        %v4664 = vadd.f32 0.0, %v4663
        %v4665 = vpop.f32.mrb[0].mxu0
        %v4666 = vpop.f32.mrb[0].mxu0
        %v4667 = vadd.f32 0.0, %v4666
        %v4668 = vpop.f32.mrb[0].mxu0
        %4669 = vmatprep.mubr.bf16.mxu0 %v4460
        %4670 = vmatmul.mubr.bf16.gmra.mrb[0].mxu0 %v4459
        %v4671 = vpop.f32.mrb[0].mxu0
        %v4672 = vadd.f32 0.0, %v4671
        %v4673 = vpop.f32.mrb[0].mxu0
        %v4674 = vpop.f32.mrb[0].mxu0
        %v4675 = vadd.f32 0.0, %v4674
        %v4676 = vpop.f32.mrb[0].mxu0
        %4677 = vmatprep.mubr.bf16.mxu0 %v4463
        %4678 = vmatmul.mubr.bf16.gmra.mrb[0].mxu0 %v4462
        %v4679 = vpop.f32.mrb[0].mxu0
        %v4680 = vadd.f32 0.0, %v4679
        %v4681 = vpop.f32.mrb[0].mxu0
        %v4682 = vpop.f32.mrb[0].mxu0
        %v4683 = vadd.f32 0.0, %v4682
        %v4684 = vpop.f32.mrb[0].mxu0
        %4685 = vdwg.mxu0
        %4686 = vmatprep.subr.bf16.mxu0 0
        %4687 = vmatpush1.bf16.msra.mxu0 %v4589
        %4688 = vmatprep.subr.bf16.mxu0 0
        %4689 = vmatpush1.bf16.msra.mxu0 %v4590
        %4690 = vmatprep.subr.bf16.mxu0 0
        %4691 = vmatpush1.bf16.msra.mxu0 %v4591
        %4692 = vmatprep.subr.bf16.mxu0 0
        %4693 = vmatpush1.bf16.msra.mxu0 %v4592
        %4694 = vmatprep.subr.bf16.mxu0 0
        %4695 = vmatpush1.bf16.msra.mxu0 %v4593
        %4696 = vmatprep.subr.bf16.mxu0 0
        %4697 = vmatpush1.bf16.msra.mxu0 %v4594
        %4698 = vmatprep.subr.bf16.mxu0 0
        %4699 = vmatpush1.bf16.msra.mxu0 %v4595
        %4700 = vmatprep.subr.bf16.mxu0 0
        %4701 = vmatpush1.bf16.msra.mxu0 %v4596
        %4702 = vmatprep.subr.bf16.mxu0 0
        %4703 = vmatpush1.bf16.msra.mxu0 0
        %4704 = vmatprep.subr.bf16.mxu0 0
        %4705 = vmatpush1.bf16.msra.mxu0 0
        %4706 = vmatprep.subr.bf16.mxu0 0
        %4707 = vmatpush1.bf16.msra.mxu0 0
        %4708 = vmatprep.subr.bf16.mxu0 0
        %4709 = vmatpush1.bf16.msra.mxu0 0
        %4710 = vmatprep.subr.bf16.mxu0 0
        %4711 = vmatpush1.bf16.msra.mxu0 0
        %4712 = vmatprep.subr.bf16.mxu0 0
        %4713 = vmatpush1.bf16.msra.mxu0 0
        %4714 = vmatprep.subr.bf16.mxu0 0
        %4715 = vmatpush1.bf16.msra.mxu0 0
        %4716 = vmatprep.subr.bf16.mxu0 0
        %4717 = vmatpush1.bf16.msra.mxu0 0
        %4718 = vmatprep.mubr.bf16.mxu0 0
        %4719 = vmatmul.mubr.bf16.gmra.mrb[0].mxu0 %v4455
        %v4720 = vpop.f32.mrb[0].mxu0
        %v4721 = vadd.f32 %v4656, %v4720
        %v4722 = vpop.f32.mrb[0].mxu0
        %v4723 = vpop.f32.mrb[0].mxu0
        %v4724 = vadd.f32 %v4659, %v4723
        %v4725 = vpop.f32.mrb[0].mxu0
        %4726 = vmatprep.mubr.bf16.mxu0 0
        %4727 = vmatmul.mubr.bf16.gmra.mrb[0].mxu0 %v4458
        %v4728 = vpop.f32.mrb[0].mxu0
        %v4729 = vadd.f32 %v4664, %v4728
        %v4730 = vpop.f32.mrb[0].mxu0
        %v4731 = vpop.f32.mrb[0].mxu0
        %v4732 = vadd.f32 %v4667, %v4731
        %v4733 = vpop.f32.mrb[0].mxu0
        %4734 = vmatprep.mubr.bf16.mxu0 0
        %4735 = vmatmul.mubr.bf16.gmra.mrb[0].mxu0 %v4461
        %v4736 = vpop.f32.mrb[0].mxu0
        %v4737 = vadd.f32 %v4672, %v4736
        %v4738 = vpop.f32.mrb[0].mxu0
        %v4739 = vpop.f32.mrb[0].mxu0
        %v4740 = vadd.f32 %v4675, %v4739
        %v4741 = vpop.f32.mrb[0].mxu0
        %4742 = vmatprep.mubr.bf16.mxu0 0
        %4743 = vmatmul.mubr.bf16.gmra.mrb[0].mxu0 %v4464
        %v4744 = vpop.f32.mrb[0].mxu0
        %v4745 = vadd.f32 %v4680, %v4744
        %v4746 = vpop.f32.mrb[0].mxu0
        %v4747 = vpop.f32.mrb[0].mxu0
        %v4748 = vadd.f32 %v4683, %v4747
        %v4749 = vpop.f32.mrb[0].mxu0
        %4750 = vdwg.mxu0
        %v4751 = vadd.f32 %v4262, %v4721
        %v4752 = vadd.f32 %v4263, %v4724
        %v4753 = vadd.f32 %v4264, %v4729
        %v4754 = vadd.f32 %v4265, %v4732
        %v4755 = vadd.f32 %v4266, %v4737
        %v4756 = vadd.f32 %v4267, %v4740
        %v4757 = vadd.f32 %v4268, %v4745
        %v4758 = vadd.f32 %v4269, %v4748
        %v4759 = vpack.c.bf16 %v4751, %v4751
        %v4760 = vpack.c.bf16 %v4752, %v4752
        %v4761 = vpack.c.bf16 %v4753, %v4753
        %v4762 = vpack.c.bf16 %v4754, %v4754
        %v4763 = vpack.c.bf16 %v4755, %v4755
        %v4764 = vpack.c.bf16 %v4756, %v4756
        %v4765 = vpack.c.bf16 %v4757, %v4757
        %v4766 = vpack.c.bf16 %v4758, %v4758
        %4767 = vst [vmem:[%s515] sm:$0xf] %v4759
        %4768 = vst [vmem:[%s515 + $0x4] sm:$0xf] %v4760
        %4769 = vst [vmem:[%s515 + $0x8] sm:$0xf] %v4761
        %4770 = vst [vmem:[%s515 + $0xc] sm:$0xf] %v4762
        %4771 = vst [vmem:[%s515 + $0x10] sm:$0xf] %v4763
        %4772 = vst [vmem:[%s515 + $0x14] sm:$0xf] %v4764
        %4773 = vst [vmem:[%s515 + $0x18] sm:$0xf] %v4765
        %4774 = vst [vmem:[%s515 + $0x1c] sm:$0xf] %v4766
        %s4775 = sand.u32 %s302, 1
        %s4776 = scalar_lea.sflag [#allocation5], %s4775
        %s4777 = sand.u32 %s302, 1
        %s4778 = smul.addr %s4777, 32
        %s4779 = scalar_lea.vmem [#allocation14], %s4778
        // Predicated region
        $region93: #{tpu_custom_call.1} parent=67 // pred_check
          %p4780 = pneg %p312
        $region94: #{tpu_custom_call.1} parent=67 // pred_check_branch
          %4782 = sbr.rel (%p4780) target = $region96
        $region95: #{tpu_custom_call.1} parent=67 // pred_region
          %s4784 = ssub.s32 512, 512
          %4785 = vsyncadd %s4776, %s4784
          %s4786 = smul.addr %s32, 8
          %s4787 = smul.addr %s4786, 64
          %s4788 = scalar_lea.hbm %s12, %s4787
          %s4789 = sshll.u32 %s4779, 4
          %s4790 = int_to_ptr.vmem [resolvable:$true] %s4789
          %4795 = dma.vmem_to_hbm [thread:$0]  %s4790, 512, %s4788, %s4776, 64, 64, 4
        $region96: #{tpu_custom_call.1} parent=67 // pred_fallthru
          _
      $region68: #{tpu_custom_call.1} parent=5 // pred_fallthru
        _
      %p4796 = scmp.le.s32.totalorder 2, %s27
      // Predicated region
      $region97: #{tpu_custom_call.1} parent=5 // pred_check
        %p4797 = pneg %p4796
      $region98: #{tpu_custom_call.1} parent=5 // pred_check_branch
        %4799 = sbr.rel (%p4797) target = $region100
      $region99: #{tpu_custom_call.1} parent=5 // pred_region
        %s4800 = ssub.s32 %s27, 2
        // Predicated region
        $region101: #{tpu_custom_call.1} parent=99 // pred_check
          %p4801 = pneg %p318
        $region102: #{tpu_custom_call.1} parent=99 // pred_check_branch
          %4803 = sbr.rel (%p4801) target = $region104
        $region103: #{tpu_custom_call.1} parent=99 // pred_region
          %s4804 = sand.u32 %s303, 1
          %s4805 = scalar_lea.sflag [#allocation5], %s4804
          %s4806 = sand.u32 %s303, 1
          %s4807 = smul.addr %s4806, 32
          %s4808 = scalar_lea.vmem [#allocation14], %s4807
          %4809 = dma.done %s4805, 512
        $region104: #{tpu_custom_call.1} parent=99 // pred_fallthru
          _
      $region100: #{tpu_custom_call.1} parent=5 // pred_fallthru
        _
    $region6: #{tpu_custom_call.1} parent=1 // loop_footer
      %s31 = sadd.s32 1, %s27
    $region7: #{tpu_custom_call.1} parent=1 // loop_footer_branch
      %26 = sbr.rel target = $region3
    $region8: #{tpu_custom_call.1} parent=1 // loop_exit
      _
    %4810 = vsyncpa [#allocation4], 1
    %s4811 = scalar_lea.sflag [#allocation4], 1
    %4812 = vsyncpa %s4811, 1
    %4813 = vsyncpa [#allocation7], 1
    %4814 = vsyncpa [#allocation10], 1
    %4815 = vsyncpa [#allocation13], 1
    %4816 = vsyncpa [#allocation5], 1
    %s4817 = scalar_lea.sflag [#allocation5], 1
    %4818 = vsyncpa %s4817, 1

</llo_original>
